<compile_context>
chip_gen: v5e
topology: v5e:2x2
jax: 0.10.0
libtpu: 0.0.40
codegen_flags: <defaults>
</compile_context>

<pallas_src>
import functools

import jax
import jax.numpy as jnp
from jax.experimental import pallas as pl
from jax.experimental.pallas import tpu as pltpu


def _round_up(x, m):
    return (x + m - 1) // m * m


# ----------------------------------------------------------------------------
# Quad-paired packing (wrapper-side XLA, tiny tensors).
# For a conv layer with even input spatial (H, W) -> output (ho, wo):
# pad 1 top / 3 bottom, 1 left / 3 right, stack each 2x2 pixel block onto the
# channel axis and flatten the (Hd, Wq) grid (Hd = ho + 2, Wq = wo + 2):
#   xq[n, hd*Wq + wd, (2*ph + pw)*C + c] = xpad[n, 2*hd + ph, 2*wd + pw, c]
# Output pixel (oh, ow) reads flat rows {(oh+dh)*Wq + (ow+dw)} for dh,dw in
# {0,1}, so the stride-2 3x3 conv becomes 4 GEMMs over contiguous row windows.
# ----------------------------------------------------------------------------
def _quad_pack(x):
    n, h, w, c = x.shape
    assert h % 2 == 0 and w % 2 == 0
    hd, wq = h // 2 + 2, w // 2 + 2
    xp = jnp.pad(x, ((0, 0), (1, 3), (1, 3), (0, 0)))
    xq = xp.reshape(n, hd, 2, wq, 2, c).transpose(0, 1, 3, 2, 4, 5)
    return xq.reshape(n, hd * wq, 4 * c)


def _conv_acc(x_ref, w_ref, m, wq):
    """sum_t x[start_t : start_t + m, :] @ W_t (implicit-GEMM 3x3/stride-2 conv)."""
    cout = w_ref.shape[-1]
    acc = jnp.zeros((m, cout), jnp.float32)
    for t in range(4):
        dh, dw = t // 2, t % 2
        s = dh * wq + dw
        acc = acc + jnp.dot(x_ref[s:s + m, :], w_ref[t],
                            preferred_element_type=jnp.float32)
    return acc


def _conv_kernel(x_ref, w_ref, b_ref, o_ref, *, m, wq):
    # x_ref: (Hd*Wq, 4*Cin) bf16 (one batch element, quad-paired)
    # w_ref: (4, 4*Cin, Cout) bf16 ; b_ref: (1, Cout) f32
    # o_ref: (m, Cout) bf16, m = ho*Wq (columns >= wo are discarded by wrapper)
    y = _conv_acc(x_ref, w_ref, m, wq) + b_ref[...]
    y = jnp.where(y > 0.0, y, 0.2 * y)                     # LeakyReLU(0.2)
    # Dropout2d(0.25): identity in eval mode.
    o_ref[...] = y.astype(o_ref.dtype)


def _conv_fc_kernel(x_ref, w_ref, b_ref, fcw_ref, fcb_ref, o_ref, *, wq):
    # Final conv layer (1x1 spatial output) fused with Linear + Sigmoid.
    y = _conv_acc(x_ref, w_ref, 1, wq) + b_ref[...]
    y = jnp.where(y > 0.0, y, 0.2 * y)
    feat = y.astype(jnp.bfloat16)                          # (1, 512)
    logits = jnp.dot(feat, fcw_ref[...], preferred_element_type=jnp.float32)
    o_ref[...] = jax.nn.sigmoid(logits + fcb_ref[...])


def conv_block(xq, w4, b, *, m, wq):
    """One conv layer: xq (N, Hd*Wq, 4*Cin) bf16 -> (N, m, Cout) bf16, m = ho*Wq."""
    n, rows, kc = xq.shape
    cout = w4.shape[-1]
    flops = 2 * n * m * 4 * kc * cout
    bytes_accessed = 2 * (n * rows * kc + 4 * kc * cout + n * m * cout) + 4 * cout
    # TODO(synk): halo row-blocking of the x BlockSpec for large image sizes
    # (whole padded image per batch element is staged; fine at these shapes).
    return pl.pallas_call(
        functools.partial(_conv_kernel, m=m, wq=wq),
        out_shape=jax.ShapeDtypeStruct((n, m, cout), jnp.bfloat16),
        grid=(n,),
        in_specs=[
            pl.BlockSpec((None, rows, kc), lambda i: (i, 0, 0)),
            pl.BlockSpec((4, kc, cout), lambda i: (0, 0, 0)),
            pl.BlockSpec((1, cout), lambda i: (0, 0)),
        ],
        out_specs=pl.BlockSpec((None, m, cout), lambda i: (i, 0, 0)),
        compiler_params=pltpu.CompilerParams(dimension_semantics=("parallel",)),
        cost_estimate=pl.CostEstimate(
            flops=flops, transcendentals=0, bytes_accessed=bytes_accessed),
    )(xq, w4, b)


def conv_fc_block(xq, w4, b, fcw, fcb, *, wq):
    """Final conv layer (ds==1) + Linear + Sigmoid: -> (N, 1, Npad) f32."""
    n, rows, kc = xq.shape
    cout = w4.shape[-1]
    npad = fcw.shape[-1]
    flops = 2 * n * (4 * kc * cout + cout * npad)
    bytes_accessed = (2 * (n * rows * kc + 4 * kc * cout + cout * npad)
                      + 4 * (cout + npad + n * npad))
    return pl.pallas_call(
        functools.partial(_conv_fc_kernel, wq=wq),
        out_shape=jax.ShapeDtypeStruct((n, 1, npad), jnp.float32),
        grid=(n,),
        in_specs=[
            pl.BlockSpec((None, rows, kc), lambda i: (i, 0, 0)),
            pl.BlockSpec((4, kc, cout), lambda i: (0, 0, 0)),
            pl.BlockSpec((1, cout), lambda i: (0, 0)),
            pl.BlockSpec((cout, npad), lambda i: (0, 0)),
            pl.BlockSpec((1, npad), lambda i: (0, 0)),
        ],
        out_specs=pl.BlockSpec((None, 1, npad), lambda i: (i, 0, 0)),
        compiler_params=pltpu.CompilerParams(dimension_semantics=("parallel",)),
        cost_estimate=pl.CostEstimate(
            flops=flops, transcendentals=n * npad, bytes_accessed=bytes_accessed),
    )(xq, w4, b, fcw, fcb)


# ----------------------------------------------------------------------------
# Tiled, pipelined GEMM + bias + activation (used for the FC only when ds > 1).
# ----------------------------------------------------------------------------
def _gemm_bias_act_kernel(x_ref, w_ref, b_ref, o_ref, acc_ref, *, activation):
    k = pl.program_id(2)

    @pl.when(k == 0)
    def _():
        acc_ref[...] = jnp.zeros_like(acc_ref)

    acc_ref[...] += jnp.dot(x_ref[...], w_ref[...],
                            preferred_element_type=jnp.float32)

    @pl.when(k == pl.num_programs(2) - 1)
    def _():
        y = acc_ref[...] + b_ref[...]
        if activation == "sigmoid":
            y = jax.nn.sigmoid(y)
        elif activation == "leaky_relu":
            y = jnp.where(y > 0.0, y, 0.2 * y)
        o_ref[...] = y.astype(o_ref.dtype)


def fused_matmul(x, w, b, activation, tn=128, tk=512):
    """act(x @ w + b): x (M,K) bf16, w (K,Np) bf16 (Np mult of 128), b (1,Np) f32."""
    m, k = x.shape
    k2, np_ = w.shape
    assert k == k2 and np_ % tn == 0
    tk = min(tk, k)
    assert k % tk == 0
    tm = 128 if m >= 128 else _round_up(m, 8)
    mp = _round_up(m, tm)
    if mp != m:
        x = jnp.pad(x, ((0, mp - m), (0, 0)))
    grid = (mp // tm, np_ // tn, k // tk)
    out = pl.pallas_call(
        functools.partial(_gemm_bias_act_kernel, activation=activation),
        out_shape=jax.ShapeDtypeStruct((mp, np_), jnp.float32),
        grid=grid,
        in_specs=[
            pl.BlockSpec((tm, tk), lambda i, j, l: (i, l)),
            pl.BlockSpec((tk, tn), lambda i, j, l: (l, j)),
            pl.BlockSpec((1, tn), lambda i, j, l: (0, j)),
        ],
        out_specs=pl.BlockSpec((tm, tn), lambda i, j, l: (i, j)),
        scratch_shapes=[pltpu.VMEM((tm, tn), jnp.float32)],
        compiler_params=pltpu.CompilerParams(
            dimension_semantics=("parallel", "parallel", "arbitrary")),
        cost_estimate=pl.CostEstimate(
            flops=2 * mp * np_ * k, transcendentals=mp * np_,
            bytes_accessed=2 * (mp * k + k * np_) + 4 * (mp * np_ + np_)),
    )(x, w, b)
    return out[:m]


# ----------------------------------------------------------------------------
# Parameter construction: GEMM-ready (pre-transposed, pre-padded, bf16) layouts.
# ----------------------------------------------------------------------------
def _pack_conv_weight(w):
    # (Cout, Cin, 3, 3) -> (4, 4*Cin, Cout) quad-tap layout:
    # tap t = 2*dh + dw ; row (2*ph + pw)*Cin + c holds W[:, c, 2dh+ph, 2dw+pw]
    # (zeros for the phantom kh=3 / kw=3 taps).
    cout, cin = w.shape[0], w.shape[1]
    wt = jnp.transpose(w, (2, 3, 1, 0))                    # (kh, kw, Cin, Cout)
    wt = jnp.pad(wt, ((0, 1), (0, 1), (0, 0), (0, 0)))     # (4, 4, Cin, Cout)
    wt = wt.reshape(2, 2, 2, 2, cin, cout)                 # (dh, ph, dw, pw, ., .)
    wt = jnp.transpose(wt, (0, 2, 1, 3, 4, 5))             # (dh, dw, ph, pw, ., .)
    return wt.reshape(4, 4 * cin, cout).astype(jnp.bfloat16)


def _pack_fc_weight(fc_w, ds, n_pad):
    # torch Linear weight (num_class, 512*ds*ds) expects NCHW-flattened input;
    # permute columns to accept NHWC flatten, transpose to (K, N), pad N to 128.
    ncls, in_feat = fc_w.shape
    wt = fc_w.reshape(ncls, 512, ds, ds)
    wt = jnp.transpose(wt, (2, 3, 1, 0)).reshape(in_feat, ncls)
    wt = jnp.pad(wt, ((0, 0), (0, n_pad - ncls)))
    return wt.astype(jnp.bfloat16)


def init_raw_params(channel, img_size, num_class, key):
    chans = [channel, 64, 128, 256, 512]
    raw = {"convs": []}
    for i in range(4):
        key, k1, k2 = jax.random.split(key, 3)
        cin, cout = chans[i], chans[i + 1]
        fan_in = cin * 9
        w = jax.random.normal(k1, (cout, cin, 3, 3), jnp.float32) * fan_in ** -0.5
        b = jax.random.normal(k2, (cout,), jnp.float32) * 0.01
        raw["convs"].append((w, b))
    ds = img_size // 2 ** 4
    in_feat = 512 * ds * ds
    key, k1, k2 = jax.random.split(key, 3)
    raw["fc_w"] = jax.random.normal(k1, (num_class, in_feat), jnp.float32) * in_feat ** -0.5
    raw["fc_b"] = jax.random.normal(k2, (num_class,), jnp.float32) * 0.01
    return raw


def pack_params(raw, img_size, num_class):
    ds = img_size // 2 ** 4
    n_pad = _round_up(num_class, 128)
    params = {"convs": [(_pack_conv_weight(w), b.reshape(1, -1).astype(jnp.float32))
                        for w, b in raw["convs"]]}
    params["fc_w"] = _pack_fc_weight(raw["fc_w"], ds, n_pad)
    params["fc_b"] = jnp.pad(raw["fc_b"], (0, n_pad - num_class)).reshape(1, n_pad)
    return params


# ----------------------------------------------------------------------------
# Forward pass (ConvNet.forward, eval mode).
# ----------------------------------------------------------------------------
def convnet_forward(params, img_nchw, *, num_class, forward_feature=False):
    x = jnp.transpose(img_nchw, (0, 2, 3, 1)).astype(jnp.bfloat16)   # NCHW -> NHWC
    n = x.shape[0]
    convs = params["convs"]
    for li, (w4, b) in enumerate(convs):
        h, w = x.shape[1], x.shape[2]
        ho, wo = h // 2, w // 2
        wq = wo + 2
        xq = _quad_pack(x)                                  # (n, (ho+2)*wq, 4*cin)
        last = li == len(convs) - 1
        if last and ho == 1 and wo == 1 and not forward_feature:
            # Fused final conv + Linear + Sigmoid (ds == 1 path).
            out = conv_fc_block(xq, w4, b, params["fc_w"], params["fc_b"], wq=wq)
            return out[:, 0, :num_class]
        y = conv_block(xq, w4, b, m=ho * wq, wq=wq)         # (n, ho*wq, cout)
        x = y.reshape(n, ho, wq, -1)[:, :, :wo, :]          # drop junk columns
    if forward_feature:
        # Match PyTorch NCHW flatten ordering / f32 dtype.
        return jnp.transpose(x, (0, 3, 1, 2)).reshape(n, -1).astype(jnp.float32)
    feat = x.reshape(n, -1)   # NHWC flatten; FC weights pre-permuted at init
    out = fused_matmul(feat, params["fc_w"], params["fc_b"], activation="sigmoid")
    return out[:, :num_class]


# ----------------------------------------------------------------------------
# Pure-JAX reference (guards the layout / weight-packing math).
# ----------------------------------------------------------------------------
def reference_forward(raw, img):
    x = img
    for w, b in raw["convs"]:
        x = jax.lax.conv_general_dilated(
            x, w, window_strides=(2, 2), padding=((1, 1), (1, 1)),
            dimension_numbers=("NCHW", "OIHW", "NCHW"))
        x = x + b.reshape(1, -1, 1, 1)
        x = jnp.where(x > 0.0, x, 0.2 * x)
    feat = x.reshape(x.shape[0], -1)
    return jax.nn.sigmoid(feat @ raw["fc_w"].T + raw["fc_b"])


if __name__ == "__main__":
    channel, img_size, num_class, batch = 4, 16, 10, 2
    key = jax.random.PRNGKey(0)
    key, pkey, xkey = jax.random.split(key, 3)

    raw = init_raw_params(channel, img_size, num_class, pkey)
    params = pack_params(raw, img_size, num_class)
    img = jax.random.normal(xkey, (batch, channel, img_size, img_size), jnp.float32)

    fwd = jax.jit(convnet_forward, static_argnames=("num_class", "forward_feature"))
    out = jax.block_until_ready(fwd(params, img, num_class=num_class))
    assert out.shape == (batch, num_class), out.shape
    assert bool(jnp.all((out >= 0.0) & (out <= 1.0)))

    ref = reference_forward(raw, img)
    err = float(jnp.max(jnp.abs(out.astype(jnp.float32) - ref)))
    assert err < 5e-2, f"max abs err vs reference: {err}"
    print("KERNEL_OK")
</pallas_src>

<mosaic_0001>
module attributes {stable_mosaic.version = 11 : i64} {
  func.func @_conv_kernel(%arg0: i32, %arg1: memref<1x100x16xbf16, #tpu.memory_space<vmem>>, %arg2: memref<4x16x64xbf16, #tpu.memory_space<vmem>>, %arg3: memref<1x64xf32, #tpu.memory_space<vmem>>, %arg4: memref<1x80x64xbf16, #tpu.memory_space<vmem>>) attributes {dimension_semantics = [#tpu.dimension_semantics<parallel>], iteration_bounds = array<i64: 2>, scalar_prefetch = 0 : i64, scratch_operands = 0 : i64, tpu.core_type = #tpu.core_type<tc>, window_params = [{transform_indices = @transform_0, window_bounds = array<i64: 1, 100, 16>}, {pipeline_mode = #tpu.pipeline_mode<synchronous>, transform_indices = @transform_1, window_bounds = array<i64: 4, 16, 64>}, {pipeline_mode = #tpu.pipeline_mode<synchronous>, transform_indices = @transform_2, window_bounds = array<i64: 1, 64>}, {transform_indices = @transform_3, window_bounds = array<i64: 1, 80, 64>}]} {
    %cst = arith.constant 0.000000e+00 : f32
    %0 = vector.broadcast %cst : f32 to vector<80x64xf32>
    %c0 = arith.constant 0 : index
    %c0_0 = arith.constant 0 : index
    %c0_1 = arith.constant 0 : index
    %1 = vector.load %arg1[%c0, %c0_0, %c0_1] : memref<1x100x16xbf16, #tpu.memory_space<vmem>>, vector<1x80x16xbf16>
    %2 = vector.shape_cast %1 : vector<1x80x16xbf16> to vector<80x16xbf16>
    %c0_2 = arith.constant 0 : index
    %c0_3 = arith.constant 0 : index
    %c0_4 = arith.constant 0 : index
    %3 = vector.load %arg2[%c0_2, %c0_3, %c0_4] : memref<4x16x64xbf16, #tpu.memory_space<vmem>>, vector<1x16x64xbf16>
    %4 = vector.shape_cast %3 : vector<1x16x64xbf16> to vector<16x64xbf16>
    %cst_5 = arith.constant dense<0.000000e+00> : vector<80x64xf32>
    %5 = tpu.matmul %2, %4, %cst_5 {dimension_numbers = #tpu.dot_dimension_numbers<[1], [0], [0], [1], [0, 0, 1, 1], [], []>} : vector<80x16xbf16>, vector<16x64xbf16>, vector<80x64xf32> -> vector<80x64xf32>
    %6 = arith.addf %0, %5 : vector<80x64xf32>
    %c0_6 = arith.constant 0 : index
    %c1 = arith.constant 1 : index
    %c0_7 = arith.constant 0 : index
    %7 = vector.load %arg1[%c0_6, %c1, %c0_7] : memref<1x100x16xbf16, #tpu.memory_space<vmem>>, vector<1x80x16xbf16>
    %8 = vector.shape_cast %7 : vector<1x80x16xbf16> to vector<80x16xbf16>
    %c1_8 = arith.constant 1 : index
    %c0_9 = arith.constant 0 : index
    %c0_10 = arith.constant 0 : index
    %9 = vector.load %arg2[%c1_8, %c0_9, %c0_10] : memref<4x16x64xbf16, #tpu.memory_space<vmem>>, vector<1x16x64xbf16>
    %10 = vector.shape_cast %9 : vector<1x16x64xbf16> to vector<16x64xbf16>
    %cst_11 = arith.constant dense<0.000000e+00> : vector<80x64xf32>
    %11 = tpu.matmul %8, %10, %cst_11 {dimension_numbers = #tpu.dot_dimension_numbers<[1], [0], [0], [1], [0, 0, 1, 1], [], []>} : vector<80x16xbf16>, vector<16x64xbf16>, vector<80x64xf32> -> vector<80x64xf32>
    %12 = arith.addf %6, %11 : vector<80x64xf32>
    %c0_12 = arith.constant 0 : index
    %c10 = arith.constant 10 : index
    %c0_13 = arith.constant 0 : index
    %13 = vector.load %arg1[%c0_12, %c10, %c0_13] : memref<1x100x16xbf16, #tpu.memory_space<vmem>>, vector<1x80x16xbf16>
    %14 = vector.shape_cast %13 : vector<1x80x16xbf16> to vector<80x16xbf16>
    %c2 = arith.constant 2 : index
    %c0_14 = arith.constant 0 : index
    %c0_15 = arith.constant 0 : index
    %15 = vector.load %arg2[%c2, %c0_14, %c0_15] : memref<4x16x64xbf16, #tpu.memory_space<vmem>>, vector<1x16x64xbf16>
    %16 = vector.shape_cast %15 : vector<1x16x64xbf16> to vector<16x64xbf16>
    %cst_16 = arith.constant dense<0.000000e+00> : vector<80x64xf32>
    %17 = tpu.matmul %14, %16, %cst_16 {dimension_numbers = #tpu.dot_dimension_numbers<[1], [0], [0], [1], [0, 0, 1, 1], [], []>} : vector<80x16xbf16>, vector<16x64xbf16>, vector<80x64xf32> -> vector<80x64xf32>
    %18 = arith.addf %12, %17 : vector<80x64xf32>
    %c0_17 = arith.constant 0 : index
    %c11 = arith.constant 11 : index
    %c0_18 = arith.constant 0 : index
    %19 = vector.load %arg1[%c0_17, %c11, %c0_18] : memref<1x100x16xbf16, #tpu.memory_space<vmem>>, vector<1x80x16xbf16>
    %20 = vector.shape_cast %19 : vector<1x80x16xbf16> to vector<80x16xbf16>
    %c3 = arith.constant 3 : index
    %c0_19 = arith.constant 0 : index
    %c0_20 = arith.constant 0 : index
    %21 = vector.load %arg2[%c3, %c0_19, %c0_20] : memref<4x16x64xbf16, #tpu.memory_space<vmem>>, vector<1x16x64xbf16>
    %22 = vector.shape_cast %21 : vector<1x16x64xbf16> to vector<16x64xbf16>
    %cst_21 = arith.constant dense<0.000000e+00> : vector<80x64xf32>
    %23 = tpu.matmul %20, %22, %cst_21 {dimension_numbers = #tpu.dot_dimension_numbers<[1], [0], [0], [1], [0, 0, 1, 1], [], []>} : vector<80x16xbf16>, vector<16x64xbf16>, vector<80x64xf32> -> vector<80x64xf32>
    %24 = arith.addf %18, %23 : vector<80x64xf32>
    %c0_22 = arith.constant 0 : index
    %c0_23 = arith.constant 0 : index
    %25 = vector.load %arg3[%c0_22, %c0_23] : memref<1x64xf32, #tpu.memory_space<vmem>>, vector<1x64xf32>
    %26 = vector.broadcast %25 : vector<1x64xf32> to vector<80x64xf32>
    %27 = arith.addf %24, %26 : vector<80x64xf32>
    %cst_24 = arith.constant 0.000000e+00 : f32
    %28 = vector.broadcast %cst_24 : f32 to vector<80x64xf32>
    %29 = arith.cmpf ogt, %27, %28 : vector<80x64xf32>
    %cst_25 = arith.constant 2.000000e-01 : f32
    %30 = vector.broadcast %cst_25 : f32 to vector<80x64xf32>
    %31 = arith.mulf %30, %27 : vector<80x64xf32>
    %32 = arith.select %29, %27, %31 : vector<80x64xi1>, vector<80x64xf32>
    %33 = arith.truncf %32 : vector<80x64xf32> to vector<80x64xbf16>
    %c0_26 = arith.constant 0 : index
    %c0_27 = arith.constant 0 : index
    %c0_28 = arith.constant 0 : index
    %34 = vector.load %arg4[%c0_26, %c0_27, %c0_28] : memref<1x80x64xbf16, #tpu.memory_space<vmem>>, vector<1x80x64xbf16>
    %35 = vector.shape_cast %34 : vector<1x80x64xbf16> to vector<80x64xbf16>
    %36 = vector.shape_cast %33 : vector<80x64xbf16> to vector<1x80x64xbf16>
    tpu.vector_store %arg4[%c0_26, %c0_27, %c0_28], %36 {strides = array<i32>} : memref<1x80x64xbf16, #tpu.memory_space<vmem>>, vector<1x80x64xbf16>,
    return
  }
  func.func @transform_0(%arg0: i32) -> (i32, i32, i32) {
    %c0_i32 = arith.constant 0 : i32
    %c0_i32_0 = arith.constant 0 : i32
    %c0_i32_1 = arith.constant 0 : i32
    return %arg0, %c0_i32, %c0_i32_0 : i32, i32, i32
  }
  func.func @transform_1(%arg0: i32) -> (i32, i32, i32) {
    %c0_i32 = arith.constant 0 : i32
    %c0_i32_0 = arith.constant 0 : i32
    %c0_i32_1 = arith.constant 0 : i32
    %c0_i32_2 = arith.constant 0 : i32
    return %c0_i32, %c0_i32_0, %c0_i32_1 : i32, i32, i32
  }
  func.func @transform_2(%arg0: i32) -> (i32, i32) {
    %c0_i32 = arith.constant 0 : i32
    %c0_i32_0 = arith.constant 0 : i32
    %c0_i32_1 = arith.constant 0 : i32
    return %c0_i32, %c0_i32_0 : i32, i32
  }
  func.func @transform_3(%arg0: i32) -> (i32, i32, i32) {
    %c0_i32 = arith.constant 0 : i32
    %c0_i32_0 = arith.constant 0 : i32
    %c0_i32_1 = arith.constant 0 : i32
    return %arg0, %c0_i32, %c0_i32_0 : i32, i32, i32
  }
}

module attributes {stable_mosaic.version = 11 : i64} {
  func.func @_conv_kernel(%arg0: i32, %arg1: memref<1x36x256xbf16, #tpu.memory_space<vmem>>, %arg2: memref<4x256x128xbf16, #tpu.memory_space<vmem>>, %arg3: memref<1x128xf32, #tpu.memory_space<vmem>>, %arg4: memref<1x24x128xbf16, #tpu.memory_space<vmem>>) attributes {dimension_semantics = [#tpu.dimension_semantics<parallel>], iteration_bounds = array<i64: 2>, scalar_prefetch = 0 : i64, scratch_operands = 0 : i64, tpu.core_type = #tpu.core_type<tc>, window_params = [{transform_indices = @transform_0, window_bounds = array<i64: 1, 36, 256>}, {pipeline_mode = #tpu.pipeline_mode<synchronous>, transform_indices = @transform_1, window_bounds = array<i64: 4, 256, 128>}, {pipeline_mode = #tpu.pipeline_mode<synchronous>, transform_indices = @transform_2, window_bounds = array<i64: 1, 128>}, {transform_indices = @transform_3, window_bounds = array<i64: 1, 24, 128>}]} {
    %cst = arith.constant 0.000000e+00 : f32
    %0 = vector.broadcast %cst : f32 to vector<24x128xf32>
    %c0 = arith.constant 0 : index
    %c0_0 = arith.constant 0 : index
    %c0_1 = arith.constant 0 : index
    %1 = vector.load %arg1[%c0, %c0_0, %c0_1] : memref<1x36x256xbf16, #tpu.memory_space<vmem>>, vector<1x24x256xbf16>
    %2 = vector.shape_cast %1 : vector<1x24x256xbf16> to vector<24x256xbf16>
    %c0_2 = arith.constant 0 : index
    %c0_3 = arith.constant 0 : index
    %c0_4 = arith.constant 0 : index
    %3 = vector.load %arg2[%c0_2, %c0_3, %c0_4] : memref<4x256x128xbf16, #tpu.memory_space<vmem>>, vector<1x256x128xbf16>
    %4 = vector.shape_cast %3 : vector<1x256x128xbf16> to vector<256x128xbf16>
    %cst_5 = arith.constant dense<0.000000e+00> : vector<24x128xf32>
    %5 = tpu.matmul %2, %4, %cst_5 {dimension_numbers = #tpu.dot_dimension_numbers<[1], [0], [0], [1], [0, 0, 1, 1], [], []>} : vector<24x256xbf16>, vector<256x128xbf16>, vector<24x128xf32> -> vector<24x128xf32>
    %6 = arith.addf %0, %5 : vector<24x128xf32>
    %c0_6 = arith.constant 0 : index
    %c1 = arith.constant 1 : index
    %c0_7 = arith.constant 0 : index
    %7 = vector.load %arg1[%c0_6, %c1, %c0_7] : memref<1x36x256xbf16, #tpu.memory_space<vmem>>, vector<1x24x256xbf16>
    %8 = vector.shape_cast %7 : vector<1x24x256xbf16> to vector<24x256xbf16>
    %c1_8 = arith.constant 1 : index
    %c0_9 = arith.constant 0 : index
    %c0_10 = arith.constant 0 : index
    %9 = vector.load %arg2[%c1_8, %c0_9, %c0_10] : memref<4x256x128xbf16, #tpu.memory_space<vmem>>, vector<1x256x128xbf16>
    %10 = vector.shape_cast %9 : vector<1x256x128xbf16> to vector<256x128xbf16>
    %cst_11 = arith.constant dense<0.000000e+00> : vector<24x128xf32>
    %11 = tpu.matmul %8, %10, %cst_11 {dimension_numbers = #tpu.dot_dimension_numbers<[1], [0], [0], [1], [0, 0, 1, 1], [], []>} : vector<24x256xbf16>, vector<256x128xbf16>, vector<24x128xf32> -> vector<24x128xf32>
    %12 = arith.addf %6, %11 : vector<24x128xf32>
    %c0_12 = arith.constant 0 : index
    %c6 = arith.constant 6 : index
    %c0_13 = arith.constant 0 : index
    %13 = vector.load %arg1[%c0_12, %c6, %c0_13] : memref<1x36x256xbf16, #tpu.memory_space<vmem>>, vector<1x24x256xbf16>
    %14 = vector.shape_cast %13 : vector<1x24x256xbf16> to vector<24x256xbf16>
    %c2 = arith.constant 2 : index
    %c0_14 = arith.constant 0 : index
    %c0_15 = arith.constant 0 : index
    %15 = vector.load %arg2[%c2, %c0_14, %c0_15] : memref<4x256x128xbf16, #tpu.memory_space<vmem>>, vector<1x256x128xbf16>
    %16 = vector.shape_cast %15 : vector<1x256x128xbf16> to vector<256x128xbf16>
    %cst_16 = arith.constant dense<0.000000e+00> : vector<24x128xf32>
    %17 = tpu.matmul %14, %16, %cst_16 {dimension_numbers = #tpu.dot_dimension_numbers<[1], [0], [0], [1], [0, 0, 1, 1], [], []>} : vector<24x256xbf16>, vector<256x128xbf16>, vector<24x128xf32> -> vector<24x128xf32>
    %18 = arith.addf %12, %17 : vector<24x128xf32>
    %c0_17 = arith.constant 0 : index
    %c7 = arith.constant 7 : index
    %c0_18 = arith.constant 0 : index
    %19 = vector.load %arg1[%c0_17, %c7, %c0_18] : memref<1x36x256xbf16, #tpu.memory_space<vmem>>, vector<1x24x256xbf16>
    %20 = vector.shape_cast %19 : vector<1x24x256xbf16> to vector<24x256xbf16>
    %c3 = arith.constant 3 : index
    %c0_19 = arith.constant 0 : index
    %c0_20 = arith.constant 0 : index
    %21 = vector.load %arg2[%c3, %c0_19, %c0_20] : memref<4x256x128xbf16, #tpu.memory_space<vmem>>, vector<1x256x128xbf16>
    %22 = vector.shape_cast %21 : vector<1x256x128xbf16> to vector<256x128xbf16>
    %cst_21 = arith.constant dense<0.000000e+00> : vector<24x128xf32>
    %23 = tpu.matmul %20, %22, %cst_21 {dimension_numbers = #tpu.dot_dimension_numbers<[1], [0], [0], [1], [0, 0, 1, 1], [], []>} : vector<24x256xbf16>, vector<256x128xbf16>, vector<24x128xf32> -> vector<24x128xf32>
    %24 = arith.addf %18, %23 : vector<24x128xf32>
    %c0_22 = arith.constant 0 : index
    %c0_23 = arith.constant 0 : index
    %25 = vector.load %arg3[%c0_22, %c0_23] : memref<1x128xf32, #tpu.memory_space<vmem>>, vector<1x128xf32>
    %26 = vector.broadcast %25 : vector<1x128xf32> to vector<24x128xf32>
    %27 = arith.addf %24, %26 : vector<24x128xf32>
    %cst_24 = arith.constant 0.000000e+00 : f32
    %28 = vector.broadcast %cst_24 : f32 to vector<24x128xf32>
    %29 = arith.cmpf ogt, %27, %28 : vector<24x128xf32>
    %cst_25 = arith.constant 2.000000e-01 : f32
    %30 = vector.broadcast %cst_25 : f32 to vector<24x128xf32>
    %31 = arith.mulf %30, %27 : vector<24x128xf32>
    %32 = arith.select %29, %27, %31 : vector<24x128xi1>, vector<24x128xf32>
    %33 = arith.truncf %32 : vector<24x128xf32> to vector<24x128xbf16>
    %c0_26 = arith.constant 0 : index
    %c0_27 = arith.constant 0 : index
    %c0_28 = arith.constant 0 : index
    %34 = vector.load %arg4[%c0_26, %c0_27, %c0_28] : memref<1x24x128xbf16, #tpu.memory_space<vmem>>, vector<1x24x128xbf16>
    %35 = vector.shape_cast %34 : vector<1x24x128xbf16> to vector<24x128xbf16>
    %36 = vector.shape_cast %33 : vector<24x128xbf16> to vector<1x24x128xbf16>
    tpu.vector_store %arg4[%c0_26, %c0_27, %c0_28], %36 {strides = array<i32>} : memref<1x24x128xbf16, #tpu.memory_space<vmem>>, vector<1x24x128xbf16>,
    return
  }
  func.func @transform_0(%arg0: i32) -> (i32, i32, i32) {
    %c0_i32 = arith.constant 0 : i32
    %c0_i32_0 = arith.constant 0 : i32
    %c0_i32_1 = arith.constant 0 : i32
    return %arg0, %c0_i32, %c0_i32_0 : i32, i32, i32
  }
  func.func @transform_1(%arg0: i32) -> (i32, i32, i32) {
    %c0_i32 = arith.constant 0 : i32
    %c0_i32_0 = arith.constant 0 : i32
    %c0_i32_1 = arith.constant 0 : i32
    %c0_i32_2 = arith.constant 0 : i32
    return %c0_i32, %c0_i32_0, %c0_i32_1 : i32, i32, i32
  }
  func.func @transform_2(%arg0: i32) -> (i32, i32) {
    %c0_i32 = arith.constant 0 : i32
    %c0_i32_0 = arith.constant 0 : i32
    %c0_i32_1 = arith.constant 0 : i32
    return %c0_i32, %c0_i32_0 : i32, i32
  }
  func.func @transform_3(%arg0: i32) -> (i32, i32, i32) {
    %c0_i32 = arith.constant 0 : i32
    %c0_i32_0 = arith.constant 0 : i32
    %c0_i32_1 = arith.constant 0 : i32
    return %arg0, %c0_i32, %c0_i32_0 : i32, i32, i32
  }
}

module attributes {stable_mosaic.version = 11 : i64} {
  func.func @_conv_kernel(%arg0: i32, %arg1: memref<1x16x512xbf16, #tpu.memory_space<vmem>>, %arg2: memref<4x512x256xbf16, #tpu.memory_space<vmem>>, %arg3: memref<1x256xf32, #tpu.memory_space<vmem>>, %arg4: memref<1x8x256xbf16, #tpu.memory_space<vmem>>) attributes {dimension_semantics = [#tpu.dimension_semantics<parallel>], iteration_bounds = array<i64: 2>, scalar_prefetch = 0 : i64, scratch_operands = 0 : i64, tpu.core_type = #tpu.core_type<tc>, window_params = [{transform_indices = @transform_0, window_bounds = array<i64: 1, 16, 512>}, {pipeline_mode = #tpu.pipeline_mode<synchronous>, transform_indices = @transform_1, window_bounds = array<i64: 4, 512, 256>}, {pipeline_mode = #tpu.pipeline_mode<synchronous>, transform_indices = @transform_2, window_bounds = array<i64: 1, 256>}, {transform_indices = @transform_3, window_bounds = array<i64: 1, 8, 256>}]} {
    %cst = arith.constant 0.000000e+00 : f32
    %0 = vector.broadcast %cst : f32 to vector<8x256xf32>
    %c0 = arith.constant 0 : index
    %c0_0 = arith.constant 0 : index
    %c0_1 = arith.constant 0 : index
    %1 = vector.load %arg1[%c0, %c0_0, %c0_1] : memref<1x16x512xbf16, #tpu.memory_space<vmem>>, vector<1x8x512xbf16>
    %2 = vector.shape_cast %1 : vector<1x8x512xbf16> to vector<8x512xbf16>
    %c0_2 = arith.constant 0 : index
    %c0_3 = arith.constant 0 : index
    %c0_4 = arith.constant 0 : index
    %3 = vector.load %arg2[%c0_2, %c0_3, %c0_4] : memref<4x512x256xbf16, #tpu.memory_space<vmem>>, vector<1x512x256xbf16>
    %4 = vector.shape_cast %3 : vector<1x512x256xbf16> to vector<512x256xbf16>
    %cst_5 = arith.constant dense<0.000000e+00> : vector<8x256xf32>
    %5 = tpu.matmul %2, %4, %cst_5 {dimension_numbers = #tpu.dot_dimension_numbers<[1], [0], [0], [1], [0, 0, 1, 1], [], []>} : vector<8x512xbf16>, vector<512x256xbf16>, vector<8x256xf32> -> vector<8x256xf32>
    %6 = arith.addf %0, %5 : vector<8x256xf32>
    %c0_6 = arith.constant 0 : index
    %c1 = arith.constant 1 : index
    %c0_7 = arith.constant 0 : index
    %7 = vector.load %arg1[%c0_6, %c1, %c0_7] : memref<1x16x512xbf16, #tpu.memory_space<vmem>>, vector<1x8x512xbf16>
    %8 = vector.shape_cast %7 : vector<1x8x512xbf16> to vector<8x512xbf16>
    %c1_8 = arith.constant 1 : index
    %c0_9 = arith.constant 0 : index
    %c0_10 = arith.constant 0 : index
    %9 = vector.load %arg2[%c1_8, %c0_9, %c0_10] : memref<4x512x256xbf16, #tpu.memory_space<vmem>>, vector<1x512x256xbf16>
    %10 = vector.shape_cast %9 : vector<1x512x256xbf16> to vector<512x256xbf16>
    %cst_11 = arith.constant dense<0.000000e+00> : vector<8x256xf32>
    %11 = tpu.matmul %8, %10, %cst_11 {dimension_numbers = #tpu.dot_dimension_numbers<[1], [0], [0], [1], [0, 0, 1, 1], [], []>} : vector<8x512xbf16>, vector<512x256xbf16>, vector<8x256xf32> -> vector<8x256xf32>
    %12 = arith.addf %6, %11 : vector<8x256xf32>
    %c0_12 = arith.constant 0 : index
    %c4 = arith.constant 4 : index
    %c0_13 = arith.constant 0 : index
    %13 = vector.load %arg1[%c0_12, %c4, %c0_13] : memref<1x16x512xbf16, #tpu.memory_space<vmem>>, vector<1x8x512xbf16>
    %14 = vector.shape_cast %13 : vector<1x8x512xbf16> to vector<8x512xbf16>
    %c2 = arith.constant 2 : index
    %c0_14 = arith.constant 0 : index
    %c0_15 = arith.constant 0 : index
    %15 = vector.load %arg2[%c2, %c0_14, %c0_15] : memref<4x512x256xbf16, #tpu.memory_space<vmem>>, vector<1x512x256xbf16>
    %16 = vector.shape_cast %15 : vector<1x512x256xbf16> to vector<512x256xbf16>
    %cst_16 = arith.constant dense<0.000000e+00> : vector<8x256xf32>
    %17 = tpu.matmul %14, %16, %cst_16 {dimension_numbers = #tpu.dot_dimension_numbers<[1], [0], [0], [1], [0, 0, 1, 1], [], []>} : vector<8x512xbf16>, vector<512x256xbf16>, vector<8x256xf32> -> vector<8x256xf32>
    %18 = arith.addf %12, %17 : vector<8x256xf32>
    %c0_17 = arith.constant 0 : index
    %c5 = arith.constant 5 : index
    %c0_18 = arith.constant 0 : index
    %19 = vector.load %arg1[%c0_17, %c5, %c0_18] : memref<1x16x512xbf16, #tpu.memory_space<vmem>>, vector<1x8x512xbf16>
    %20 = vector.shape_cast %19 : vector<1x8x512xbf16> to vector<8x512xbf16>
    %c3 = arith.constant 3 : index
    %c0_19 = arith.constant 0 : index
    %c0_20 = arith.constant 0 : index
    %21 = vector.load %arg2[%c3, %c0_19, %c0_20] : memref<4x512x256xbf16, #tpu.memory_space<vmem>>, vector<1x512x256xbf16>
    %22 = vector.shape_cast %21 : vector<1x512x256xbf16> to vector<512x256xbf16>
    %cst_21 = arith.constant dense<0.000000e+00> : vector<8x256xf32>
    %23 = tpu.matmul %20, %22, %cst_21 {dimension_numbers = #tpu.dot_dimension_numbers<[1], [0], [0], [1], [0, 0, 1, 1], [], []>} : vector<8x512xbf16>, vector<512x256xbf16>, vector<8x256xf32> -> vector<8x256xf32>
    %24 = arith.addf %18, %23 : vector<8x256xf32>
    %c0_22 = arith.constant 0 : index
    %c0_23 = arith.constant 0 : index
    %25 = vector.load %arg3[%c0_22, %c0_23] : memref<1x256xf32, #tpu.memory_space<vmem>>, vector<1x256xf32>
    %26 = vector.broadcast %25 : vector<1x256xf32> to vector<8x256xf32>
    %27 = arith.addf %24, %26 : vector<8x256xf32>
    %cst_24 = arith.constant 0.000000e+00 : f32
    %28 = vector.broadcast %cst_24 : f32 to vector<8x256xf32>
    %29 = arith.cmpf ogt, %27, %28 : vector<8x256xf32>
    %cst_25 = arith.constant 2.000000e-01 : f32
    %30 = vector.broadcast %cst_25 : f32 to vector<8x256xf32>
    %31 = arith.mulf %30, %27 : vector<8x256xf32>
    %32 = arith.select %29, %27, %31 : vector<8x256xi1>, vector<8x256xf32>
    %33 = arith.truncf %32 : vector<8x256xf32> to vector<8x256xbf16>
    %c0_26 = arith.constant 0 : index
    %c0_27 = arith.constant 0 : index
    %c0_28 = arith.constant 0 : index
    %34 = vector.load %arg4[%c0_26, %c0_27, %c0_28] : memref<1x8x256xbf16, #tpu.memory_space<vmem>>, vector<1x8x256xbf16>
    %35 = vector.shape_cast %34 : vector<1x8x256xbf16> to vector<8x256xbf16>
    %36 = vector.shape_cast %33 : vector<8x256xbf16> to vector<1x8x256xbf16>
    tpu.vector_store %arg4[%c0_26, %c0_27, %c0_28], %36 {strides = array<i32>} : memref<1x8x256xbf16, #tpu.memory_space<vmem>>, vector<1x8x256xbf16>,
    return
  }
  func.func @transform_0(%arg0: i32) -> (i32, i32, i32) {
    %c0_i32 = arith.constant 0 : i32
    %c0_i32_0 = arith.constant 0 : i32
    %c0_i32_1 = arith.constant 0 : i32
    return %arg0, %c0_i32, %c0_i32_0 : i32, i32, i32
  }
  func.func @transform_1(%arg0: i32) -> (i32, i32, i32) {
    %c0_i32 = arith.constant 0 : i32
    %c0_i32_0 = arith.constant 0 : i32
    %c0_i32_1 = arith.constant 0 : i32
    %c0_i32_2 = arith.constant 0 : i32
    return %c0_i32, %c0_i32_0, %c0_i32_1 : i32, i32, i32
  }
  func.func @transform_2(%arg0: i32) -> (i32, i32) {
    %c0_i32 = arith.constant 0 : i32
    %c0_i32_0 = arith.constant 0 : i32
    %c0_i32_1 = arith.constant 0 : i32
    return %c0_i32, %c0_i32_0 : i32, i32
  }
  func.func @transform_3(%arg0: i32) -> (i32, i32, i32) {
    %c0_i32 = arith.constant 0 : i32
    %c0_i32_0 = arith.constant 0 : i32
    %c0_i32_1 = arith.constant 0 : i32
    return %arg0, %c0_i32, %c0_i32_0 : i32, i32, i32
  }
}

module attributes {stable_mosaic.version = 11 : i64} {
  func.func @_conv_fc_kernel(%arg0: i32, %arg1: memref<1x9x1024xbf16, #tpu.memory_space<vmem>>, %arg2: memref<4x1024x512xbf16, #tpu.memory_space<vmem>>, %arg3: memref<1x512xf32, #tpu.memory_space<vmem>>, %arg4: memref<512x128xbf16, #tpu.memory_space<vmem>>, %arg5: memref<1x128xf32, #tpu.memory_space<vmem>>, %arg6: memref<1x1x128xf32, #tpu.memory_space<vmem>>) attributes {dimension_semantics = [#tpu.dimension_semantics<parallel>], iteration_bounds = array<i64: 2>, scalar_prefetch = 0 : i64, scratch_operands = 0 : i64, tpu.core_type = #tpu.core_type<tc>, window_params = [{transform_indices = @transform_0, window_bounds = array<i64: 1, 9, 1024>}, {pipeline_mode = #tpu.pipeline_mode<synchronous>, transform_indices = @transform_1, window_bounds = array<i64: 4, 1024, 512>}, {pipeline_mode = #tpu.pipeline_mode<synchronous>, transform_indices = @transform_2, window_bounds = array<i64: 1, 512>}, {pipeline_mode = #tpu.pipeline_mode<synchronous>, transform_indices = @transform_3, window_bounds = array<i64: 512, 128>}, {pipeline_mode = #tpu.pipeline_mode<synchronous>, transform_indices = @transform_4, window_bounds = array<i64: 1, 128>}, {transform_indices = @transform_5, window_bounds = array<i64: 1, 1, 128>}]} {
    %cst = arith.constant 0.000000e+00 : f32
    %0 = vector.broadcast %cst : f32 to vector<1x512xf32>
    %c0 = arith.constant 0 : index
    %c0_0 = arith.constant 0 : index
    %c0_1 = arith.constant 0 : index
    %1 = vector.load %arg1[%c0, %c0_0, %c0_1] : memref<1x9x1024xbf16, #tpu.memory_space<vmem>>, vector<1x1x1024xbf16>
    %2 = vector.shape_cast %1 : vector<1x1x1024xbf16> to vector<1x1024xbf16>
    %c0_2 = arith.constant 0 : index
    %c0_3 = arith.constant 0 : index
    %c0_4 = arith.constant 0 : index
    %3 = vector.load %arg2[%c0_2, %c0_3, %c0_4] : memref<4x1024x512xbf16, #tpu.memory_space<vmem>>, vector<1x1024x512xbf16>
    %4 = vector.shape_cast %3 : vector<1x1024x512xbf16> to vector<1024x512xbf16>
    %cst_5 = arith.constant dense<0.000000e+00> : vector<1x512xf32>
    %5 = tpu.matmul %2, %4, %cst_5 {dimension_numbers = #tpu.dot_dimension_numbers<[1], [0], [0], [1], [0, 0, 1, 1], [], []>} : vector<1x1024xbf16>, vector<1024x512xbf16>, vector<1x512xf32> -> vector<1x512xf32>
    %6 = arith.addf %0, %5 : vector<1x512xf32>
    %c0_6 = arith.constant 0 : index
    %c1 = arith.constant 1 : index
    %c0_7 = arith.constant 0 : index
    %7 = vector.load %arg1[%c0_6, %c1, %c0_7] : memref<1x9x1024xbf16, #tpu.memory_space<vmem>>, vector<1x1x1024xbf16>
    %8 = vector.shape_cast %7 : vector<1x1x1024xbf16> to vector<1x1024xbf16>
    %c1_8 = arith.constant 1 : index
    %c0_9 = arith.constant 0 : index
    %c0_10 = arith.constant 0 : index
    %9 = vector.load %arg2[%c1_8, %c0_9, %c0_10] : memref<4x1024x512xbf16, #tpu.memory_space<vmem>>, vector<1x1024x512xbf16>
    %10 = vector.shape_cast %9 : vector<1x1024x512xbf16> to vector<1024x512xbf16>
    %cst_11 = arith.constant dense<0.000000e+00> : vector<1x512xf32>
    %11 = tpu.matmul %8, %10, %cst_11 {dimension_numbers = #tpu.dot_dimension_numbers<[1], [0], [0], [1], [0, 0, 1, 1], [], []>} : vector<1x1024xbf16>, vector<1024x512xbf16>, vector<1x512xf32> -> vector<1x512xf32>
    %12 = arith.addf %6, %11 : vector<1x512xf32>
    %c0_12 = arith.constant 0 : index
    %c3 = arith.constant 3 : index
    %c0_13 = arith.constant 0 : index
    %13 = vector.load %arg1[%c0_12, %c3, %c0_13] : memref<1x9x1024xbf16, #tpu.memory_space<vmem>>, vector<1x1x1024xbf16>
    %14 = vector.shape_cast %13 : vector<1x1x1024xbf16> to vector<1x1024xbf16>
    %c2 = arith.constant 2 : index
    %c0_14 = arith.constant 0 : index
    %c0_15 = arith.constant 0 : index
    %15 = vector.load %arg2[%c2, %c0_14, %c0_15] : memref<4x1024x512xbf16, #tpu.memory_space<vmem>>, vector<1x1024x512xbf16>
    %16 = vector.shape_cast %15 : vector<1x1024x512xbf16> to vector<1024x512xbf16>
    %cst_16 = arith.constant dense<0.000000e+00> : vector<1x512xf32>
    %17 = tpu.matmul %14, %16, %cst_16 {dimension_numbers = #tpu.dot_dimension_numbers<[1], [0], [0], [1], [0, 0, 1, 1], [], []>} : vector<1x1024xbf16>, vector<1024x512xbf16>, vector<1x512xf32> -> vector<1x512xf32>
    %18 = arith.addf %12, %17 : vector<1x512xf32>
    %c0_17 = arith.constant 0 : index
    %c4 = arith.constant 4 : index
    %c0_18 = arith.constant 0 : index
    %19 = vector.load %arg1[%c0_17, %c4, %c0_18] : memref<1x9x1024xbf16, #tpu.memory_space<vmem>>, vector<1x1x1024xbf16>
    %20 = vector.shape_cast %19 : vector<1x1x1024xbf16> to vector<1x1024xbf16>
    %c3_19 = arith.constant 3 : index
    %c0_20 = arith.constant 0 : index
    %c0_21 = arith.constant 0 : index
    %21 = vector.load %arg2[%c3_19, %c0_20, %c0_21] : memref<4x1024x512xbf16, #tpu.memory_space<vmem>>, vector<1x1024x512xbf16>
    %22 = vector.shape_cast %21 : vector<1x1024x512xbf16> to vector<1024x512xbf16>
    %cst_22 = arith.constant dense<0.000000e+00> : vector<1x512xf32>
    %23 = tpu.matmul %20, %22, %cst_22 {dimension_numbers = #tpu.dot_dimension_numbers<[1], [0], [0], [1], [0, 0, 1, 1], [], []>} : vector<1x1024xbf16>, vector<1024x512xbf16>, vector<1x512xf32> -> vector<1x512xf32>
    %24 = arith.addf %18, %23 : vector<1x512xf32>
    %c0_23 = arith.constant 0 : index
    %c0_24 = arith.constant 0 : index
    %25 = vector.load %arg3[%c0_23, %c0_24] : memref<1x512xf32, #tpu.memory_space<vmem>>, vector<1x512xf32>
    %26 = arith.addf %24, %25 : vector<1x512xf32>
    %cst_25 = arith.constant 0.000000e+00 : f32
    %27 = vector.broadcast %cst_25 : f32 to vector<1x512xf32>
    %28 = arith.cmpf ogt, %26, %27 : vector<1x512xf32>
    %cst_26 = arith.constant 2.000000e-01 : f32
    %29 = vector.broadcast %cst_26 : f32 to vector<1x512xf32>
    %30 = arith.mulf %29, %26 : vector<1x512xf32>
    %31 = arith.select %28, %26, %30 : vector<1x512xi1>, vector<1x512xf32>
    %32 = arith.truncf %31 : vector<1x512xf32> to vector<1x512xbf16>
    %c0_27 = arith.constant 0 : index
    %c0_28 = arith.constant 0 : index
    %33 = vector.load %arg4[%c0_27, %c0_28] : memref<512x128xbf16, #tpu.memory_space<vmem>>, vector<512x128xbf16>
    %cst_29 = arith.constant dense<0.000000e+00> : vector<1x128xf32>
    %34 = tpu.matmul %32, %33, %cst_29 {dimension_numbers = #tpu.dot_dimension_numbers<[1], [0], [0], [1], [0, 0, 1, 1], [], []>} : vector<1x512xbf16>, vector<512x128xbf16>, vector<1x128xf32> -> vector<1x128xf32>
    %c0_30 = arith.constant 0 : index
    %c0_31 = arith.constant 0 : index
    %35 = vector.load %arg5[%c0_30, %c0_31] : memref<1x128xf32, #tpu.memory_space<vmem>>, vector<1x128xf32>
    %36 = arith.addf %34, %35 : vector<1x128xf32>
    %37 = arith.negf %36 : vector<1x128xf32>
    %38 = math.exp %37 : vector<1x128xf32>
    %cst_32 = arith.constant 1.000000e+00 : f32
    %39 = vector.broadcast %cst_32 : f32 to vector<1x128xf32>
    %40 = arith.addf %39, %38 : vector<1x128xf32>
    %41 = arith.divf %39, %40 : vector<1x128xf32>
    %c0_33 = arith.constant 0 : index
    %c0_34 = arith.constant 0 : index
    %c0_35 = arith.constant 0 : index
    %42 = vector.load %arg6[%c0_33, %c0_34, %c0_35] : memref<1x1x128xf32, #tpu.memory_space<vmem>>, vector<1x1x128xf32>
    %43 = vector.shape_cast %42 : vector<1x1x128xf32> to vector<1x128xf32>
    %44 = vector.shape_cast %41 : vector<1x128xf32> to vector<1x1x128xf32>
    tpu.vector_store %arg6[%c0_33, %c0_34, %c0_35], %44 {strides = array<i32>} : memref<1x1x128xf32, #tpu.memory_space<vmem>>, vector<1x1x128xf32>,
    return
  }
  func.func @transform_0(%arg0: i32) -> (i32, i32, i32) {
    %c0_i32 = arith.constant 0 : i32
    %c0_i32_0 = arith.constant 0 : i32
    %c0_i32_1 = arith.constant 0 : i32
    return %arg0, %c0_i32, %c0_i32_0 : i32, i32, i32
  }
  func.func @transform_1(%arg0: i32) -> (i32, i32, i32) {
    %c0_i32 = arith.constant 0 : i32
    %c0_i32_0 = arith.constant 0 : i32
    %c0_i32_1 = arith.constant 0 : i32
    %c0_i32_2 = arith.constant 0 : i32
    return %c0_i32, %c0_i32_0, %c0_i32_1 : i32, i32, i32
  }
  func.func @transform_2(%arg0: i32) -> (i32, i32) {
    %c0_i32 = arith.constant 0 : i32
    %c0_i32_0 = arith.constant 0 : i32
    %c0_i32_1 = arith.constant 0 : i32
    return %c0_i32, %c0_i32_0 : i32, i32
  }
  func.func @transform_3(%arg0: i32) -> (i32, i32) {
    %c0_i32 = arith.constant 0 : i32
    %c0_i32_0 = arith.constant 0 : i32
    %c0_i32_1 = arith.constant 0 : i32
    return %c0_i32, %c0_i32_0 : i32, i32
  }
  func.func @transform_4(%arg0: i32) -> (i32, i32) {
    %c0_i32 = arith.constant 0 : i32
    %c0_i32_0 = arith.constant 0 : i32
    %c0_i32_1 = arith.constant 0 : i32
    return %c0_i32, %c0_i32_0 : i32, i32
  }
  func.func @transform_5(%arg0: i32) -> (i32, i32, i32) {
    %c0_i32 = arith.constant 0 : i32
    %c0_i32_0 = arith.constant 0 : i32
    %c0_i32_1 = arith.constant 0 : i32
    return %arg0, %c0_i32, %c0_i32_0 : i32, i32, i32
  }
}

</mosaic_0001>

<llo_original>
// kernel: convnet_forward.4
$region0: #{convnet_forward.4}
  #allocation0 [shape = 'u32[]', space=smem, size = 0x4, offset = 0x4, fixed_abs, tag = 'smem constant byte address 0x4 - core index']
  #allocation1 [shape = 'u32[72,128]{1,0:T(1,128)}', space=vmem, size = 0x9000, scoped, tag = 'internal scratch']
  %s0 = inlined_call_operand.vmem [shape: bf16[2,100,16], index: 0, kind: input, shape index: {}]
  %s1 = inlined_call_operand.hbm [shape: bf16[4,16,64], index: 1, kind: input, shape index: {}]
  %s2 = inlined_call_operand.hbm [shape: f32[1,64], index: 2, kind: input, shape index: {}]
  %s3 = inlined_call_operand.vmem [shape: bf16[2,80,64], index: 3, kind: output, shape index: {}]
  %s4 = sld [smem:[#allocation0]]
  $region53: #{convnet_forward.4} parent=0
    _
  %s6 = ssub.s32 1, %s4
  %s7 = scalar_select 0, %s6, %s4
  $region1: #{convnet_forward.4} parent=0
    #allocation2 [shape = 'u8[16384]{0}', space=vmem, size = 0x4000, scoped, tag = 'input window, operand 1, single buffered']
    #allocation3 [shape = 's32[2]{0}', space=sflag, size = 0x8, scoped, tag = 'scoped memory for convnet_forward.4']
    #allocation4 [shape = 'u8[512]{0}', space=vmem, size = 0x400, scoped, tag = 'input window, operand 2, single buffered']
    #allocation5 [shape = 's32[1]{0}', space=sflag, size = 0x4, scoped, tag = 'scoped memory for convnet_forward.4']
    %8 = vsyncpa [#allocation3], 0
    %9 = vsyncpa [#allocation5], 0
    loop: start=0, step=1, limit=4
    $region2: #{convnet_forward.4} parent=1 // loop_pre_header
      _
    $region3: #{convnet_forward.4} parent=1 // loop_header
      %s11 = sphi 0, %s15
      %p12 = scmp.ge.s32.totalorder %s11, 4
      %s21 = sphi 0, %s23
      %s24 = sphi 0, %s21
      %s25 = sphi 0, %s24
      %s41 = sphi 0, %s25
      %s45 = sphi 0, %s45
      %s47 = sphi 0, %s45
      %s48 = sphi 0, %s47
      %s62 = sphi 0, %s48
      %s66 = sphi 0, %s66
      %s68 = sphi 0, %s66
      %s69 = sphi 0, %s68
      %s83 = sphi 0, %s69
      %s89 = sphi 0, %s91
      %s92 = sphi 0, %s89
      %s93 = sphi 0, %s92
      %s109 = sphi 0, %s93
    $region4: #{convnet_forward.4} parent=1 // loop_header_branch
      %14 = sbr.rel (%p12) target = $region8
    $region5: #{convnet_forward.4} parent=1 // loop_body
      %s16 = ssub.s32 %s11, 1
      %s17 = ssub.s32 %s11, 2
      %s18 = sadd.s32 %s11, 1
      %s19 = ssub.s32 %s11, %s18
      %p20 = scmp.eq.s32.totalorder %s19, 0
      %s22 = sadd.s32 %s21, 1
      %s23 = scalar_select %p20, %s21, %s22
      %p26 = pneg %p20
      %p27 = scmp.eq.s32.totalorder %s11, 1
      %p28 = por %p26, %p27
      %p29 = scmp.ne.s32.totalorder %s21, %s24
      %p30 = scmp.eq.s32.totalorder %s11, 0
      %p31 = por %p29, %p30
      %p32 = scmp.ne.s32.totalorder %s21, %s24
      %p33 = scmp.eq.s32.totalorder %s16, 1
      %p34 = por %p32, %p33
      %p35 = scmp.ne.s32.totalorder %s24, %s25
      %p36 = scmp.eq.s32.totalorder %s16, 0
      %p37 = por %p35, %p36
      %p38 = scmp.ne.s32.totalorder %s24, %s25
      %p39 = scmp.eq.s32.totalorder %s17, 1
      %p40 = por %p38, %p39
      %p42 = scmp.ne.s32.totalorder %s25, %s41
      %p43 = scmp.eq.s32.totalorder %s17, 0
      %p44 = por %p42, %p43
      %s46 = sadd.s32 %s45, 1
      %p49 = scmp.eq.s32.totalorder %s11, 1
      %p50 = scmp.ne.s32.totalorder %s45, %s47
      %p51 = scmp.eq.s32.totalorder %s11, 0
      %p52 = por %p50, %p51
      %p53 = scmp.ne.s32.totalorder %s45, %s47
      %p54 = scmp.eq.s32.totalorder %s16, 1
      %p55 = por %p53, %p54
      %p56 = scmp.ne.s32.totalorder %s47, %s48
      %p57 = scmp.eq.s32.totalorder %s16, 0
      %p58 = por %p56, %p57
      %p59 = scmp.ne.s32.totalorder %s47, %s48
      %p60 = scmp.eq.s32.totalorder %s17, 1
      %p61 = por %p59, %p60
      %p63 = scmp.ne.s32.totalorder %s48, %s62
      %p64 = scmp.eq.s32.totalorder %s17, 0
      %p65 = por %p63, %p64
      %s67 = sadd.s32 %s66, 1
      %p70 = scmp.eq.s32.totalorder %s11, 1
      %p71 = scmp.ne.s32.totalorder %s66, %s68
      %p72 = scmp.eq.s32.totalorder %s11, 0
      %p73 = por %p71, %p72
      %p74 = scmp.ne.s32.totalorder %s66, %s68
      %p75 = scmp.eq.s32.totalorder %s16, 1
      %p76 = por %p74, %p75
      %p77 = scmp.ne.s32.totalorder %s68, %s69
      %p78 = scmp.eq.s32.totalorder %s16, 0
      %p79 = por %p77, %p78
      %p80 = scmp.ne.s32.totalorder %s68, %s69
      %p81 = scmp.eq.s32.totalorder %s17, 1
      %p82 = por %p80, %p81
      %p84 = scmp.ne.s32.totalorder %s69, %s83
      %p85 = scmp.eq.s32.totalorder %s17, 0
      %p86 = por %p84, %p85
      %s87 = ssub.s32 %s11, %s18
      %p88 = scmp.eq.s32.totalorder %s87, 0
      %s90 = sadd.s32 %s89, 1
      %s91 = scalar_select %p88, %s89, %s90
      %p94 = pneg %p88
      %p95 = scmp.eq.s32.totalorder %s11, 1
      %p96 = por %p94, %p95
      %p97 = scmp.ne.s32.totalorder %s89, %s92
      %p98 = scmp.eq.s32.totalorder %s11, 0
      %p99 = por %p97, %p98
      %p100 = scmp.ne.s32.totalorder %s89, %s92
      %p101 = scmp.eq.s32.totalorder %s16, 1
      %p102 = por %p100, %p101
      %p103 = scmp.ne.s32.totalorder %s92, %s93
      %p104 = scmp.eq.s32.totalorder %s16, 0
      %p105 = por %p103, %p104
      %p106 = scmp.ne.s32.totalorder %s92, %s93
      %p107 = scmp.eq.s32.totalorder %s17, 1
      %p108 = por %p106, %p107
      %p110 = scmp.ne.s32.totalorder %s93, %s109
      %p111 = scmp.eq.s32.totalorder %s17, 0
      %p112 = por %p110, %p111
      %p113 = scmp.le.s32.totalorder 1, %s11
      %p114 = scmp.lt.s32.totalorder %s11, 3
      %p115 = pnand %p113, %p114
      %p116 = pneg %p115
      // Predicated region
      $region9: #{convnet_forward.4} parent=5 // pred_check
        _
      $region10: #{convnet_forward.4} parent=5 // pred_check_branch
        %118 = sbr.rel (%p115) target = $region12
      $region11: #{convnet_forward.4} parent=5 // pred_region
        %s119 = ssub.s32 %s11, 1
        // Predicated region
        $region13: #{convnet_forward.4} parent=11 // pred_check
          %p120 = pneg %p58
        $region14: #{convnet_forward.4} parent=11 // pred_check_branch
          %122 = sbr.rel (%p120) target = $region16
        $region15: #{convnet_forward.4} parent=11 // pred_region
          %124 = vsyncadd [#allocation3], 0
          %s125 = sshll.u32 %s1, 4
          %s126 = int_to_ptr.hbm [resolvable:$true] %s125
          %s127 = sshll.u32 [#allocation2], 4
          %s128 = int_to_ptr.vmem [resolvable:$true] %s127
          %133 = dma.hbm_to_vmem [thread:$0]  %s126, 512, %s128, [#allocation3], 64, 64, 4
        $region16: #{convnet_forward.4} parent=11 // pred_fallthru
          _
        // Predicated region
        $region17: #{convnet_forward.4} parent=11 // pred_check
          %p134 = pneg %p79
        $region18: #{convnet_forward.4} parent=11 // pred_check_branch
          %136 = sbr.rel (%p134) target = $region20
        $region19: #{convnet_forward.4} parent=11 // pred_region
          %138 = vsyncadd [#allocation5], 0
          %s140 = sshll.u32 %s2, 4
          %s141 = int_to_ptr.hbm [resolvable:$true] %s140
          %s142 = sshll.u32 [#allocation4], 4
          %s143 = int_to_ptr.vmem [resolvable:$true] %s142
          %145 = dma.hbm_to_vmem [thread:$0]  %s141, 16, %s143, [#allocation5]
        $region20: #{convnet_forward.4} parent=11 // pred_fallthru
          _
      $region12: #{convnet_forward.4} parent=5 // pred_fallthru
        _
      %p146 = scmp.lt.s32.totalorder %s11, 2
      // Predicated region
      $region21: #{convnet_forward.4} parent=5 // pred_check
        %p147 = pneg %p146
      $region22: #{convnet_forward.4} parent=5 // pred_check_branch
        %149 = sbr.rel (%p147) target = $region24
      $region23: #{convnet_forward.4} parent=5 // pred_region
        // Predicated region
        $region25: #{convnet_forward.4} parent=23 // pred_check
          %p150 = pneg %p31
        $region26: #{convnet_forward.4} parent=23 // pred_check_branch
          %152 = sbr.rel (%p150) target = $region28
        $region27: #{convnet_forward.4} parent=23 // pred_region
          %p153 = scmp.lt.s32.totalorder %s11, 1
          %s154 = scalar_select %p153, %s11, 1
          %s155 = smul.addr %s154, 13
          %s156 = smul.addr %s155, 4
          %s157 = scalar_lea.vmem %s0, %s156
        $region28: #{convnet_forward.4} parent=23 // pred_fallthru
          _
      $region24: #{convnet_forward.4} parent=5 // pred_fallthru
        _
      %p158 = scmp.le.s32.totalorder 1, %s11
      %p159 = scmp.lt.s32.totalorder %s11, 3
      %p160 = pnand %p158, %p159
      %p161 = pneg %p160
      // Predicated region
      $region29: #{convnet_forward.4} parent=5 // pred_check
        _
      $region30: #{convnet_forward.4} parent=5 // pred_check_branch
        %163 = sbr.rel (%p160) target = $region32
      $region31: #{convnet_forward.4} parent=5 // pred_region
        %s164 = ssub.s32 %s11, 1
        // Predicated region
        $region33: #{convnet_forward.4} parent=31 // pred_check
          %p165 = pneg %p58
        $region34: #{convnet_forward.4} parent=31 // pred_check_branch
          %167 = sbr.rel (%p165) target = $region36
        $region35: #{convnet_forward.4} parent=31 // pred_region
          %169 = dma.done [#allocation3], 512
        $region36: #{convnet_forward.4} parent=31 // pred_fallthru
          _
        // Predicated region
        $region37: #{convnet_forward.4} parent=31 // pred_check
          %p170 = pneg %p79
        $region38: #{convnet_forward.4} parent=31 // pred_check_branch
          %172 = sbr.rel (%p170) target = $region40
        $region39: #{convnet_forward.4} parent=31 // pred_region
          %174 = dma.done [#allocation5], 16
        $region40: #{convnet_forward.4} parent=31 // pred_fallthru
          _
        %p175 = scmp.lt.s32.totalorder %s16, 1
        %s176 = scalar_select %p175, %s16, 1
        %s177 = smul.addr %s176, 13
        %s178 = smul.addr %s177, 4
        %s179 = scalar_lea.vmem %s0, %s178
        %p180 = pneg %p37
        %p181 = pneg %p34
        %p182 = pneg %p58
        %p183 = pneg %p55
        %p184 = pneg %p79
        %p185 = pneg %p76
        %p186 = pneg %p105
        %p187 = pneg %p102
        %p188 = scmp.lt.s32.totalorder %s16, 1
        %s189 = scalar_select %p188, %s16, 1
        %s190 = smul.addr %s189, 10
        %s191 = smul.addr %s190, 4
        %s192 = scalar_lea.vmem %s3, %s191
        %p193 = scmp.lt.s32.totalorder %s16, 1
        %s194 = scalar_select %p193, %s16, 1
        %s195 = smul.addr %s194, 13
        %s196 = smul.addr %s195, 4
        %s197 = scalar_lea.vmem %s0, %s196
        %p198 = scmp.lt.s32.totalorder %s16, 1
        %s199 = scalar_select %p198, %s16, 1
        %s200 = smul.addr %s199, 10
        %s201 = smul.addr %s200, 4
        %s202 = scalar_lea.vmem %s3, %s201
        %v204 = vld [vmem:[%s197] sm:$0xf]
        %v205 = vld [vmem:[%s197 + $0x4] sm:$0xf]
        %v206 = vld [vmem:[%s197 + $0x8] sm:$0xf]
        %v207 = vld [vmem:[%s197 + $0xc] sm:$0xf]
        %v208 = vld [vmem:[%s197 + $0x10] sm:$0xf]
        %v209 = vld [vmem:[%s197 + $0x14] sm:$0xf]
        %v210 = vld [vmem:[%s197 + $0x18] sm:$0xf]
        %v211 = vld [vmem:[%s197 + $0x1c] sm:$0xf]
        %v212 = vld [vmem:[%s197 + $0x20] sm:$0xf]
        %v213 = vld [vmem:[%s197 + $0x24] sm:$0xf]
        %v214 = vld [vmem:[#allocation2] sm:$0xf]
        %v215 = vld [vmem:[#allocation2 + $0x4] sm:$0xf]
        %v216 = vld [vmem:[%s197 + $0x28] sm:$0x1]
        %s217 = scalar_lea.vmem [#allocation2], 8
        %v218 = vld [vmem:[%s217] sm:$0xf]
        %v219 = vld [vmem:[%s217 + $0x4] sm:$0xf]
        %v231 = vunpack.c.l.b16 %v204
        %v232 = vunpack.c.l.b16 %v205
        %v233 = vunpack.c.l.b16 %v206
        %v234 = vunpack.c.l.b16 %v207
        %v235 = vunpack.c.l.b16 %v208
        %v236 = vunpack.c.l.b16 %v209
        %v237 = vunpack.c.l.b16 %v210
        %v238 = vunpack.c.l.b16 %v211
        %v239 = vunpack.c.l.b16 %v212
        %v240 = vunpack.c.l.b16 %v213
        %v241 = vunpack.c.l.b16 %v216
        %v242 = vpack.c.b16 %v232, %v231
        %v243 = vpack.c.b16 %v234, %v233
        %v244 = vpack.c.b16 %v236, %v235
        %v245 = vpack.c.b16 %v238, %v237
        %v246 = vpack.c.b16 %v240, %v239
        %v247 = vpack.c.b16 %v241, %v241
        %vm248 = vsmask.f32 7424
        %v250 = vshrl.u32 %v242, 16
        %v252 = vshll.u32 %v242, 16
        %v254 = vrot.slane %v252, 1
        %v255 = vor.u32 %v250, %v254
        %v257 = vshll.u32 %v243, 16
        %v259 = vrot.slane %v257, 1
        %v260 = vsel %vm248, %v255, %v259
        %v261 = vshrl.u32 %v243, 16
        %v263 = vor.u32 %v261, %v259
        %v265 = vshll.u32 %v244, 16
        %v267 = vrot.slane %v265, 1
        %v268 = vsel %vm248, %v263, %v267
        %v269 = vshrl.u32 %v244, 16
        %v271 = vor.u32 %v269, %v267
        %v273 = vshll.u32 %v245, 16
        %v275 = vrot.slane %v273, 1
        %v276 = vsel %vm248, %v271, %v275
        %v277 = vshrl.u32 %v245, 16
        %v279 = vor.u32 %v277, %v275
        %v281 = vshll.u32 %v246, 16
        %v283 = vrot.slane %v281, 1
        %v284 = vsel %vm248, %v279, %v283
        %v285 = vshrl.u32 %v246, 16
        %v287 = vor.u32 %v285, %v283
        %v289 = vshll.u32 %v247, 16
        %v291 = vrot.slane %v289, 1
        %v292 = vsel %vm248, %v287, %v291
        %v295 = vunpack.c.l.b16 %v218
        %v296 = vunpack.c.l.b16 %v219
        %v297 = vpack.c.b16 %v296, %v295
        %vm299 = vcmask 130048
        %v301 = vsel %vm299, %v260, 0
        %v304 = vsel %vm299, %v268, 0
        %v307 = vsel %vm299, %v276, 0
        %v310 = vsel %vm299, %v284, 0
        %v313 = vsel %vm299, %v292, 0
        %315 = vmatpush.bf16.msra.mxu0 0
        %316 = vmatpush.bf16.msra.mxu0 0
        %317 = vmatpush.bf16.msra.mxu0 0
        %318 = vmatpush.bf16.msra.mxu0 0
        %319 = vmatpush.bf16.msra.mxu0 0
        %320 = vmatpush.bf16.msra.mxu0 0
        %321 = vmatpush.bf16.msra.mxu0 0
        %322 = vmatpush.bf16.msra.mxu0 %v297
        %323 = vmatmul.bf16.gmra.mxu0 %v301
        %v324 = vpop.f32.mrf.mxu0
        %v325 = vadd.f32 0.0, %v324
        %v326 = vpop.f32.mrf.mxu0
        %v327 = vadd.f32 0.0, %v326
        %328 = vmatmul.bf16.gmra.mxu0 %v304
        %v329 = vpop.f32.mrf.mxu0
        %v330 = vadd.f32 0.0, %v329
        %v331 = vpop.f32.mrf.mxu0
        %v332 = vadd.f32 0.0, %v331
        %333 = vmatmul.bf16.gmra.mxu0 %v307
        %v334 = vpop.f32.mrf.mxu0
        %v335 = vadd.f32 0.0, %v334
        %v336 = vpop.f32.mrf.mxu0
        %v337 = vadd.f32 0.0, %v336
        %338 = vmatmul.bf16.gmra.mxu0 %v310
        %v339 = vpop.f32.mrf.mxu0
        %v340 = vadd.f32 0.0, %v339
        %v341 = vpop.f32.mrf.mxu0
        %v342 = vadd.f32 0.0, %v341
        %343 = vmatmul.bf16.gmra.mxu0 %v313
        %v344 = vpop.f32.mrf.mxu0
        %v345 = vadd.f32 0.0, %v344
        %v346 = vpop.f32.mrf.mxu0
        %v347 = vadd.f32 0.0, %v346
        %348 = vdwg.mxu0
        %v351 = vunpack.c.l.b16 %v214
        %v352 = vunpack.c.l.b16 %v215
        %v353 = vpack.c.b16 %v352, %v351
        %v355 = vsel %vm299, %v242, 0
        %v357 = vsel %vm299, %v243, 0
        %v359 = vsel %vm299, %v244, 0
        %v361 = vsel %vm299, %v245, 0
        %v363 = vsel %vm299, %v246, 0
        %365 = vmatpush.bf16.msra.mxu0 0
        %366 = vmatpush.bf16.msra.mxu0 0
        %367 = vmatpush.bf16.msra.mxu0 0
        %368 = vmatpush.bf16.msra.mxu0 0
        %369 = vmatpush.bf16.msra.mxu0 0
        %370 = vmatpush.bf16.msra.mxu0 0
        %371 = vmatpush.bf16.msra.mxu0 0
        %372 = vmatpush.bf16.msra.mxu0 %v353
        %373 = vmatmul.bf16.gmra.mxu0 %v355
        %v374 = vpop.f32.mrf.mxu0
        %v375 = vadd.f32 %v325, %v374
        %v376 = vpop.f32.mrf.mxu0
        %v377 = vadd.f32 %v327, %v376
        %378 = vmatmul.bf16.gmra.mxu0 %v357
        %v379 = vpop.f32.mrf.mxu0
        %v380 = vadd.f32 %v330, %v379
        %v381 = vpop.f32.mrf.mxu0
        %v382 = vadd.f32 %v332, %v381
        %383 = vmatmul.bf16.gmra.mxu0 %v359
        %v384 = vpop.f32.mrf.mxu0
        %v385 = vadd.f32 %v335, %v384
        %v386 = vpop.f32.mrf.mxu0
        %v387 = vadd.f32 %v337, %v386
        %388 = vmatmul.bf16.gmra.mxu0 %v361
        %v389 = vpop.f32.mrf.mxu0
        %v390 = vadd.f32 %v340, %v389
        %v391 = vpop.f32.mrf.mxu0
        %v392 = vadd.f32 %v342, %v391
        %393 = vmatmul.bf16.gmra.mxu0 %v363
        %v394 = vpop.f32.mrf.mxu0
        %v395 = vadd.f32 %v345, %v394
        %v396 = vpop.f32.mrf.mxu0
        %v397 = vadd.f32 %v347, %v396
        %398 = vdwg.mxu0
        %v399 = vld [vmem:[%s197 + $0x4] sm:$0xe]
        %v400 = vld [vmem:[%s197 + $0x8] sm:$0xf]
        %v401 = vld [vmem:[%s197 + $0xc] sm:$0xf]
        %v402 = vld [vmem:[%s197 + $0x10] sm:$0xf]
        %v403 = vld [vmem:[%s197 + $0x14] sm:$0xf]
        %v404 = vld [vmem:[%s197 + $0x18] sm:$0xf]
        %v405 = vld [vmem:[%s197 + $0x1c] sm:$0xf]
        %v406 = vld [vmem:[%s197 + $0x20] sm:$0xf]
        %v407 = vld [vmem:[%s197 + $0x24] sm:$0xf]
        %v408 = vld [vmem:[%s197 + $0x28] sm:$0xf]
        %v409 = vld [vmem:[%s197 + $0x2c] sm:$0x1]
        %s410 = scalar_lea.vmem [#allocation2], 16
        %v411 = vld [vmem:[%s410] sm:$0xf]
        %v412 = vld [vmem:[%s410 + $0x4] sm:$0xf]
        %v424 = vunpack.c.l.b16 %v399
        %v425 = vunpack.c.l.b16 %v400
        %v426 = vunpack.c.l.b16 %v401
        %v427 = vunpack.c.l.b16 %v402
        %v428 = vunpack.c.l.b16 %v403
        %v429 = vunpack.c.l.b16 %v404
        %v430 = vunpack.c.l.b16 %v405
        %v431 = vunpack.c.l.b16 %v406
        %v432 = vunpack.c.l.b16 %v407
        %v433 = vunpack.c.l.b16 %v408
        %v434 = vunpack.c.l.b16 %v409
        %v435 = vpack.c.b16 %v425, %v424
        %v436 = vpack.c.b16 %v427, %v426
        %v437 = vpack.c.b16 %v429, %v428
        %v438 = vpack.c.b16 %v431, %v430
        %v439 = vpack.c.b16 %v433, %v432
        %v440 = vpack.c.b16 %v434, %v434
        %vm441 = vcmask 1046528
        %v442 = vrot.slane %v435, 1
        %v443 = vrot.slane %v436, 1
        %v444 = vsel %vm441, %v442, %v443
        %v445 = vrot.slane %v437, 1
        %v446 = vsel %vm441, %v443, %v445
        %v447 = vrot.slane %v438, 1
        %v448 = vsel %vm441, %v445, %v447
        %v449 = vrot.slane %v439, 1
        %v450 = vsel %vm441, %v447, %v449
        %v451 = vrot.slane %v440, 1
        %v452 = vsel %vm441, %v449, %v451
        %v455 = vunpack.c.l.b16 %v411
        %v456 = vunpack.c.l.b16 %v412
        %v457 = vpack.c.b16 %v456, %v455
        %v460 = vsel %vm299, %v444, 0
        %v463 = vsel %vm299, %v446, 0
        %v466 = vsel %vm299, %v448, 0
        %v469 = vsel %vm299, %v450, 0
        %v472 = vsel %vm299, %v452, 0
        %474 = vmatpush.bf16.msra.mxu0 0
        %475 = vmatpush.bf16.msra.mxu0 0
        %476 = vmatpush.bf16.msra.mxu0 0
        %477 = vmatpush.bf16.msra.mxu0 0
        %478 = vmatpush.bf16.msra.mxu0 0
        %479 = vmatpush.bf16.msra.mxu0 0
        %480 = vmatpush.bf16.msra.mxu0 0
        %481 = vmatpush.bf16.msra.mxu0 %v457
        %482 = vmatmul.bf16.gmra.mxu0 %v460
        %v483 = vpop.f32.mrf.mxu0
        %v484 = vadd.f32 0.0, %v483
        %v485 = vpop.f32.mrf.mxu0
        %v486 = vadd.f32 0.0, %v485
        %487 = vmatmul.bf16.gmra.mxu0 %v463
        %v488 = vpop.f32.mrf.mxu0
        %v489 = vadd.f32 0.0, %v488
        %v490 = vpop.f32.mrf.mxu0
        %v491 = vadd.f32 0.0, %v490
        %492 = vmatmul.bf16.gmra.mxu0 %v466
        %v493 = vpop.f32.mrf.mxu0
        %v494 = vadd.f32 0.0, %v493
        %v495 = vpop.f32.mrf.mxu0
        %v496 = vadd.f32 0.0, %v495
        %497 = vmatmul.bf16.gmra.mxu0 %v469
        %v498 = vpop.f32.mrf.mxu0
        %v499 = vadd.f32 0.0, %v498
        %v500 = vpop.f32.mrf.mxu0
        %v501 = vadd.f32 0.0, %v500
        %502 = vmatmul.bf16.gmra.mxu0 %v472
        %v503 = vpop.f32.mrf.mxu0
        %v504 = vadd.f32 0.0, %v503
        %v505 = vpop.f32.mrf.mxu0
        %v506 = vadd.f32 0.0, %v505
        %507 = vdwg.mxu0
        %v508 = vadd.f32 %v375, %v484
        %v509 = vadd.f32 %v377, %v486
        %v510 = vadd.f32 %v380, %v489
        %v511 = vadd.f32 %v382, %v491
        %v512 = vadd.f32 %v385, %v494
        %v513 = vadd.f32 %v387, %v496
        %v514 = vadd.f32 %v390, %v499
        %v515 = vadd.f32 %v392, %v501
        %v516 = vadd.f32 %v395, %v504
        %v517 = vadd.f32 %v397, %v506
        %v518 = vld [vmem:[%s197 + $0x2c] sm:$0x3]
        %s519 = scalar_lea.vmem [#allocation2], 24
        %v520 = vld [vmem:[%s519] sm:$0xf]
        %v521 = vld [vmem:[%s519 + $0x4] sm:$0xf]
        %v523 = vunpack.c.l.b16 %v518
        %v524 = vpack.c.b16 %v523, %v523
        %vm525 = vsmask.f32 6400
        %v527 = vshrl.u32 %v435, 16
        %v529 = vrot.slane %v527, 1
        %v530 = vshll.u32 %v435, 16
        %v532 = vrot.slane %v530, 2
        %v533 = vor.u32 %v529, %v532
        %v535 = vshrl.u32 %v436, 16
        %v537 = vrot.slane %v535, 1
        %v538 = vshll.u32 %v436, 16
        %v540 = vrot.slane %v538, 2
        %v541 = vor.u32 %v537, %v540
        %v542 = vsel %vm525, %v533, %v541
        %v544 = vshrl.u32 %v437, 16
        %v546 = vrot.slane %v544, 1
        %v547 = vshll.u32 %v437, 16
        %v549 = vrot.slane %v547, 2
        %v550 = vor.u32 %v546, %v549
        %v551 = vsel %vm525, %v541, %v550
        %v553 = vshrl.u32 %v438, 16
        %v555 = vrot.slane %v553, 1
        %v556 = vshll.u32 %v438, 16
        %v558 = vrot.slane %v556, 2
        %v559 = vor.u32 %v555, %v558
        %v560 = vsel %vm525, %v550, %v559
        %v562 = vshrl.u32 %v439, 16
        %v564 = vrot.slane %v562, 1
        %v565 = vshll.u32 %v439, 16
        %v567 = vrot.slane %v565, 2
        %v568 = vor.u32 %v564, %v567
        %v569 = vsel %vm525, %v559, %v568
        %v571 = vshrl.u32 %v524, 16
        %v573 = vrot.slane %v571, 1
        %v574 = vshll.u32 %v524, 16
        %v576 = vrot.slane %v574, 2
        %v577 = vor.u32 %v573, %v576
        %v578 = vsel %vm525, %v568, %v577
        %v581 = vunpack.c.l.b16 %v520
        %v582 = vunpack.c.l.b16 %v521
        %v583 = vpack.c.b16 %v582, %v581
        %v586 = vsel %vm299, %v542, 0
        %v589 = vsel %vm299, %v551, 0
        %v592 = vsel %vm299, %v560, 0
        %v595 = vsel %vm299, %v569, 0
        %v598 = vsel %vm299, %v578, 0
        %600 = vmatpush.bf16.msra.mxu0 0
        %601 = vmatpush.bf16.msra.mxu0 0
        %602 = vmatpush.bf16.msra.mxu0 0
        %603 = vmatpush.bf16.msra.mxu0 0
        %604 = vmatpush.bf16.msra.mxu0 0
        %605 = vmatpush.bf16.msra.mxu0 0
        %606 = vmatpush.bf16.msra.mxu0 0
        %607 = vmatpush.bf16.msra.mxu0 %v583
        %608 = vmatmul.bf16.gmra.mxu0 %v586
        %v609 = vpop.f32.mrf.mxu0
        %v610 = vadd.f32 0.0, %v609
        %v611 = vpop.f32.mrf.mxu0
        %v612 = vadd.f32 0.0, %v611
        %613 = vmatmul.bf16.gmra.mxu0 %v589
        %v614 = vpop.f32.mrf.mxu0
        %v615 = vadd.f32 0.0, %v614
        %v616 = vpop.f32.mrf.mxu0
        %v617 = vadd.f32 0.0, %v616
        %618 = vmatmul.bf16.gmra.mxu0 %v592
        %v619 = vpop.f32.mrf.mxu0
        %v620 = vadd.f32 0.0, %v619
        %v621 = vpop.f32.mrf.mxu0
        %v622 = vadd.f32 0.0, %v621
        %623 = vmatmul.bf16.gmra.mxu0 %v595
        %v624 = vpop.f32.mrf.mxu0
        %v625 = vadd.f32 0.0, %v624
        %v626 = vpop.f32.mrf.mxu0
        %v627 = vadd.f32 0.0, %v626
        %628 = vmatmul.bf16.gmra.mxu0 %v598
        %v629 = vpop.f32.mrf.mxu0
        %v630 = vadd.f32 0.0, %v629
        %v631 = vpop.f32.mrf.mxu0
        %v632 = vadd.f32 0.0, %v631
        %633 = vdwg.mxu0
        %v634 = vadd.f32 %v508, %v610
        %v635 = vadd.f32 %v509, %v612
        %v636 = vadd.f32 %v510, %v615
        %v637 = vadd.f32 %v511, %v617
        %v638 = vadd.f32 %v512, %v620
        %v639 = vadd.f32 %v513, %v622
        %v640 = vadd.f32 %v514, %v625
        %v641 = vadd.f32 %v515, %v627
        %v642 = vadd.f32 %v516, %v630
        %v643 = vadd.f32 %v517, %v632
        %v644 = vld [vmem:[#allocation4] sm:$0x1]
        %v646 = vperm.slane %v644, 0
        %v648 = vadd.f32 %v634, %v646
        %v649 = vadd.f32 %v635, %v646
        %v650 = vadd.f32 %v636, %v646
        %v651 = vadd.f32 %v637, %v646
        %v652 = vadd.f32 %v638, %v646
        %v653 = vadd.f32 %v639, %v646
        %v654 = vadd.f32 %v640, %v646
        %v655 = vadd.f32 %v641, %v646
        %v656 = vadd.f32 %v642, %v646
        %v657 = vadd.f32 %v643, %v646
        %vm658 = vcmp.gt.f32.partialorder %v648, 0.0
        %vm659 = vcmp.gt.f32.partialorder %v649, 0.0
        %vm660 = vcmp.gt.f32.partialorder %v650, 0.0
        %vm661 = vcmp.gt.f32.partialorder %v651, 0.0
        %vm662 = vcmp.gt.f32.partialorder %v652, 0.0
        %vm663 = vcmp.gt.f32.partialorder %v653, 0.0
        %vm664 = vcmp.gt.f32.partialorder %v654, 0.0
        %vm665 = vcmp.gt.f32.partialorder %v655, 0.0
        %vm666 = vcmp.gt.f32.partialorder %v656, 0.0
        %vm667 = vcmp.gt.f32.partialorder %v657, 0.0
        %v668 = vmul.f32 %v648, 0.2
        %v669 = vmul.f32 %v649, 0.2
        %v670 = vmul.f32 %v650, 0.2
        %v671 = vmul.f32 %v651, 0.2
        %v672 = vmul.f32 %v652, 0.2
        %v673 = vmul.f32 %v653, 0.2
        %v674 = vmul.f32 %v654, 0.2
        %v675 = vmul.f32 %v655, 0.2
        %v676 = vmul.f32 %v656, 0.2
        %v677 = vmul.f32 %v657, 0.2
        %v678 = vsel %vm658, %v648, %v668
        %v679 = vsel %vm659, %v649, %v669
        %v680 = vsel %vm660, %v650, %v670
        %v681 = vsel %vm661, %v651, %v671
        %v682 = vsel %vm662, %v652, %v672
        %v683 = vsel %vm663, %v653, %v673
        %v684 = vsel %vm664, %v654, %v674
        %v685 = vsel %vm665, %v655, %v675
        %v686 = vsel %vm666, %v656, %v676
        %v687 = vsel %vm667, %v657, %v677
        %v688 = vpack.c.bf16 %v678, %v678
        %v689 = vpack.c.bf16 %v679, %v679
        %v690 = vpack.c.bf16 %v680, %v680
        %v691 = vpack.c.bf16 %v681, %v681
        %v692 = vpack.c.bf16 %v682, %v682
        %v693 = vpack.c.bf16 %v683, %v683
        %v694 = vpack.c.bf16 %v684, %v684
        %v695 = vpack.c.bf16 %v685, %v685
        %v696 = vpack.c.bf16 %v686, %v686
        %v697 = vpack.c.bf16 %v687, %v687
        %vm698 = vcmask 519168
        %699 = vst.msk [vmem:[%s202] sm:$0xf] %vm698, %v688
        %700 = vst.msk [vmem:[%s202 + $0x4] sm:$0xf] %vm698, %v689
        %701 = vst.msk [vmem:[%s202 + $0x8] sm:$0xf] %vm698, %v690
        %702 = vst.msk [vmem:[%s202 + $0xc] sm:$0xf] %vm698, %v691
        %703 = vst.msk [vmem:[%s202 + $0x10] sm:$0xf] %vm698, %v692
        %704 = vst.msk [vmem:[%s202 + $0x14] sm:$0xf] %vm698, %v693
        %705 = vst.msk [vmem:[%s202 + $0x18] sm:$0xf] %vm698, %v694
        %706 = vst.msk [vmem:[%s202 + $0x1c] sm:$0xf] %vm698, %v695
        %707 = vst.msk [vmem:[%s202 + $0x20] sm:$0xf] %vm698, %v696
        %708 = vst.msk [vmem:[%s202 + $0x24] sm:$0xf] %vm698, %v697
        %p709 = scmp.lt.s32.totalorder %s16, 1
        %s710 = scalar_select %p709, %s16, 1
        %s711 = smul.addr %s710, 10
        %s712 = smul.addr %s711, 4
        %s713 = scalar_lea.vmem %s3, %s712
        // Predicated region
        $region41: #{convnet_forward.4} parent=31 // pred_check
          %p714 = pneg %p102
        $region42: #{convnet_forward.4} parent=31 // pred_check_branch
          %716 = sbr.rel (%p714) target = $region44
        $region43: #{convnet_forward.4} parent=31 // pred_region
          _
        $region44: #{convnet_forward.4} parent=31 // pred_fallthru
          _
      $region32: #{convnet_forward.4} parent=5 // pred_fallthru
        _
      %p717 = scmp.le.s32.totalorder 2, %s11
      // Predicated region
      $region45: #{convnet_forward.4} parent=5 // pred_check
        %p718 = pneg %p717
      $region46: #{convnet_forward.4} parent=5 // pred_check_branch
        %720 = sbr.rel (%p718) target = $region48
      $region47: #{convnet_forward.4} parent=5 // pred_region
        %s721 = ssub.s32 %s11, 2
        // Predicated region
        $region49: #{convnet_forward.4} parent=47 // pred_check
          %p722 = pneg %p108
        $region50: #{convnet_forward.4} parent=47 // pred_check_branch
          %724 = sbr.rel (%p722) target = $region52
        $region51: #{convnet_forward.4} parent=47 // pred_region
          %p725 = scmp.lt.s32.totalorder %s17, 1
          %s726 = scalar_select %p725, %s17, 1
          %s727 = smul.addr %s726, 10
          %s728 = smul.addr %s727, 4
          %s729 = scalar_lea.vmem %s3, %s728
        $region52: #{convnet_forward.4} parent=47 // pred_fallthru
          _
      $region48: #{convnet_forward.4} parent=5 // pred_fallthru
        _
    $region6: #{convnet_forward.4} parent=1 // loop_footer
      %s15 = sadd.s32 1, %s11
    $region7: #{convnet_forward.4} parent=1 // loop_footer_branch
      %10 = sbr.rel target = $region3
    $region8: #{convnet_forward.4} parent=1 // loop_exit
      _
    %730 = vsyncpa [#allocation3], 1
    %s731 = scalar_lea.sflag [#allocation3], 1
    %732 = vsyncpa %s731, 1
    %733 = vsyncpa [#allocation5], 1

// kernel: convnet_forward.5
$region0: #{convnet_forward.5}
  #allocation0 [shape = 'u32[]', space=smem, size = 0x4, offset = 0x4, fixed_abs, tag = 'smem constant byte address 0x4 - core index']
  #allocation1 [shape = 'u32[72,128]{1,0:T(1,128)}', space=vmem, size = 0x9000, scoped, tag = 'internal scratch']
  %s0 = inlined_call_operand.vmem [shape: bf16[2,36,256], index: 0, kind: input, shape index: {}]
  %s1 = inlined_call_operand.hbm [shape: bf16[4,256,128], index: 1, kind: input, shape index: {}]
  %s2 = inlined_call_operand.hbm [shape: f32[1,128], index: 2, kind: input, shape index: {}]
  %s3 = inlined_call_operand.vmem [shape: bf16[2,24,128], index: 3, kind: output, shape index: {}]
  %s4 = sld [smem:[#allocation0]]
  $region53: #{convnet_forward.5} parent=0
    _
  %s6 = ssub.s32 1, %s4
  %s7 = scalar_select 0, %s6, %s4
  $region1: #{convnet_forward.5} parent=0
    #allocation2 [shape = 'u8[262144]{0}', space=vmem, size = 0x40000, scoped, tag = 'input window, operand 1, single buffered']
    #allocation3 [shape = 's32[2]{0}', space=sflag, size = 0x8, scoped, tag = 'scoped memory for convnet_forward.5']
    #allocation4 [shape = 'u8[512]{0}', space=vmem, size = 0x400, scoped, tag = 'input window, operand 2, single buffered']
    #allocation5 [shape = 's32[1]{0}', space=sflag, size = 0x4, scoped, tag = 'scoped memory for convnet_forward.5']
    %8 = vsyncpa [#allocation3], 0
    %9 = vsyncpa [#allocation5], 0
    loop: start=0, step=1, limit=4
    $region2: #{convnet_forward.5} parent=1 // loop_pre_header
      _
    $region3: #{convnet_forward.5} parent=1 // loop_header
      %s11 = sphi 0, %s15
      %p12 = scmp.ge.s32.totalorder %s11, 4
      %s21 = sphi 0, %s23
      %s24 = sphi 0, %s21
      %s25 = sphi 0, %s24
      %s41 = sphi 0, %s25
      %s45 = sphi 0, %s45
      %s47 = sphi 0, %s45
      %s48 = sphi 0, %s47
      %s62 = sphi 0, %s48
      %s66 = sphi 0, %s66
      %s68 = sphi 0, %s66
      %s69 = sphi 0, %s68
      %s83 = sphi 0, %s69
      %s89 = sphi 0, %s91
      %s92 = sphi 0, %s89
      %s93 = sphi 0, %s92
      %s109 = sphi 0, %s93
    $region4: #{convnet_forward.5} parent=1 // loop_header_branch
      %14 = sbr.rel (%p12) target = $region8
    $region5: #{convnet_forward.5} parent=1 // loop_body
      %s16 = ssub.s32 %s11, 1
      %s17 = ssub.s32 %s11, 2
      %s18 = sadd.s32 %s11, 1
      %s19 = ssub.s32 %s11, %s18
      %p20 = scmp.eq.s32.totalorder %s19, 0
      %s22 = sadd.s32 %s21, 1
      %s23 = scalar_select %p20, %s21, %s22
      %p26 = pneg %p20
      %p27 = scmp.eq.s32.totalorder %s11, 1
      %p28 = por %p26, %p27
      %p29 = scmp.ne.s32.totalorder %s21, %s24
      %p30 = scmp.eq.s32.totalorder %s11, 0
      %p31 = por %p29, %p30
      %p32 = scmp.ne.s32.totalorder %s21, %s24
      %p33 = scmp.eq.s32.totalorder %s16, 1
      %p34 = por %p32, %p33
      %p35 = scmp.ne.s32.totalorder %s24, %s25
      %p36 = scmp.eq.s32.totalorder %s16, 0
      %p37 = por %p35, %p36
      %p38 = scmp.ne.s32.totalorder %s24, %s25
      %p39 = scmp.eq.s32.totalorder %s17, 1
      %p40 = por %p38, %p39
      %p42 = scmp.ne.s32.totalorder %s25, %s41
      %p43 = scmp.eq.s32.totalorder %s17, 0
      %p44 = por %p42, %p43
      %s46 = sadd.s32 %s45, 1
      %p49 = scmp.eq.s32.totalorder %s11, 1
      %p50 = scmp.ne.s32.totalorder %s45, %s47
      %p51 = scmp.eq.s32.totalorder %s11, 0
      %p52 = por %p50, %p51
      %p53 = scmp.ne.s32.totalorder %s45, %s47
      %p54 = scmp.eq.s32.totalorder %s16, 1
      %p55 = por %p53, %p54
      %p56 = scmp.ne.s32.totalorder %s47, %s48
      %p57 = scmp.eq.s32.totalorder %s16, 0
      %p58 = por %p56, %p57
      %p59 = scmp.ne.s32.totalorder %s47, %s48
      %p60 = scmp.eq.s32.totalorder %s17, 1
      %p61 = por %p59, %p60
      %p63 = scmp.ne.s32.totalorder %s48, %s62
      %p64 = scmp.eq.s32.totalorder %s17, 0
      %p65 = por %p63, %p64
      %s67 = sadd.s32 %s66, 1
      %p70 = scmp.eq.s32.totalorder %s11, 1
      %p71 = scmp.ne.s32.totalorder %s66, %s68
      %p72 = scmp.eq.s32.totalorder %s11, 0
      %p73 = por %p71, %p72
      %p74 = scmp.ne.s32.totalorder %s66, %s68
      %p75 = scmp.eq.s32.totalorder %s16, 1
      %p76 = por %p74, %p75
      %p77 = scmp.ne.s32.totalorder %s68, %s69
      %p78 = scmp.eq.s32.totalorder %s16, 0
      %p79 = por %p77, %p78
      %p80 = scmp.ne.s32.totalorder %s68, %s69
      %p81 = scmp.eq.s32.totalorder %s17, 1
      %p82 = por %p80, %p81
      %p84 = scmp.ne.s32.totalorder %s69, %s83
      %p85 = scmp.eq.s32.totalorder %s17, 0
      %p86 = por %p84, %p85
      %s87 = ssub.s32 %s11, %s18
      %p88 = scmp.eq.s32.totalorder %s87, 0
      %s90 = sadd.s32 %s89, 1
      %s91 = scalar_select %p88, %s89, %s90
      %p94 = pneg %p88
      %p95 = scmp.eq.s32.totalorder %s11, 1
      %p96 = por %p94, %p95
      %p97 = scmp.ne.s32.totalorder %s89, %s92
      %p98 = scmp.eq.s32.totalorder %s11, 0
      %p99 = por %p97, %p98
      %p100 = scmp.ne.s32.totalorder %s89, %s92
      %p101 = scmp.eq.s32.totalorder %s16, 1
      %p102 = por %p100, %p101
      %p103 = scmp.ne.s32.totalorder %s92, %s93
      %p104 = scmp.eq.s32.totalorder %s16, 0
      %p105 = por %p103, %p104
      %p106 = scmp.ne.s32.totalorder %s92, %s93
      %p107 = scmp.eq.s32.totalorder %s17, 1
      %p108 = por %p106, %p107
      %p110 = scmp.ne.s32.totalorder %s93, %s109
      %p111 = scmp.eq.s32.totalorder %s17, 0
      %p112 = por %p110, %p111
      %p113 = scmp.le.s32.totalorder 1, %s11
      %p114 = scmp.lt.s32.totalorder %s11, 3
      %p115 = pnand %p113, %p114
      %p116 = pneg %p115
      // Predicated region
      $region9: #{convnet_forward.5} parent=5 // pred_check
        _
      $region10: #{convnet_forward.5} parent=5 // pred_check_branch
        %118 = sbr.rel (%p115) target = $region12
      $region11: #{convnet_forward.5} parent=5 // pred_region
        %s119 = ssub.s32 %s11, 1
        // Predicated region
        $region13: #{convnet_forward.5} parent=11 // pred_check
          %p120 = pneg %p58
        $region14: #{convnet_forward.5} parent=11 // pred_check_branch
          %122 = sbr.rel (%p120) target = $region16
        $region15: #{convnet_forward.5} parent=11 // pred_region
          %124 = vsyncadd [#allocation3], 0
          %s125 = sshll.u32 %s1, 4
          %s126 = int_to_ptr.hbm [resolvable:$true] %s125
          %s127 = sshll.u32 [#allocation2], 4
          %s128 = int_to_ptr.vmem [resolvable:$true] %s127
          %133 = dma.hbm_to_vmem [thread:$0]  %s126, 8192, %s128, [#allocation3], 64, 64, 4
        $region16: #{convnet_forward.5} parent=11 // pred_fallthru
          _
        // Predicated region
        $region17: #{convnet_forward.5} parent=11 // pred_check
          %p134 = pneg %p79
        $region18: #{convnet_forward.5} parent=11 // pred_check_branch
          %136 = sbr.rel (%p134) target = $region20
        $region19: #{convnet_forward.5} parent=11 // pred_region
          %138 = vsyncadd [#allocation5], 0
          %s140 = sshll.u32 %s2, 4
          %s141 = int_to_ptr.hbm [resolvable:$true] %s140
          %s142 = sshll.u32 [#allocation4], 4
          %s143 = int_to_ptr.vmem [resolvable:$true] %s142
          %145 = dma.hbm_to_vmem [thread:$0]  %s141, 16, %s143, [#allocation5]
        $region20: #{convnet_forward.5} parent=11 // pred_fallthru
          _
      $region12: #{convnet_forward.5} parent=5 // pred_fallthru
        _
      %p146 = scmp.lt.s32.totalorder %s11, 2
      // Predicated region
      $region21: #{convnet_forward.5} parent=5 // pred_check
        %p147 = pneg %p146
      $region22: #{convnet_forward.5} parent=5 // pred_check_branch
        %149 = sbr.rel (%p147) target = $region24
      $region23: #{convnet_forward.5} parent=5 // pred_region
        // Predicated region
        $region25: #{convnet_forward.5} parent=23 // pred_check
          %p150 = pneg %p31
        $region26: #{convnet_forward.5} parent=23 // pred_check_branch
          %152 = sbr.rel (%p150) target = $region28
        $region27: #{convnet_forward.5} parent=23 // pred_region
          %p153 = scmp.lt.s32.totalorder %s11, 1
          %s154 = scalar_select %p153, %s11, 1
          %s155 = smul.addr %s154, 10
          %s156 = smul.addr %s155, 4
          %s157 = scalar_lea.vmem %s0, %s156
        $region28: #{convnet_forward.5} parent=23 // pred_fallthru
          _
      $region24: #{convnet_forward.5} parent=5 // pred_fallthru
        _
      %p158 = scmp.le.s32.totalorder 1, %s11
      %p159 = scmp.lt.s32.totalorder %s11, 3
      %p160 = pnand %p158, %p159
      %p161 = pneg %p160
      // Predicated region
      $region29: #{convnet_forward.5} parent=5 // pred_check
        _
      $region30: #{convnet_forward.5} parent=5 // pred_check_branch
        %163 = sbr.rel (%p160) target = $region32
      $region31: #{convnet_forward.5} parent=5 // pred_region
        %s164 = ssub.s32 %s11, 1
        // Predicated region
        $region33: #{convnet_forward.5} parent=31 // pred_check
          %p165 = pneg %p58
        $region34: #{convnet_forward.5} parent=31 // pred_check_branch
          %167 = sbr.rel (%p165) target = $region36
        $region35: #{convnet_forward.5} parent=31 // pred_region
          %169 = dma.done [#allocation3], 8192
        $region36: #{convnet_forward.5} parent=31 // pred_fallthru
          _
        // Predicated region
        $region37: #{convnet_forward.5} parent=31 // pred_check
          %p170 = pneg %p79
        $region38: #{convnet_forward.5} parent=31 // pred_check_branch
          %172 = sbr.rel (%p170) target = $region40
        $region39: #{convnet_forward.5} parent=31 // pred_region
          %174 = dma.done [#allocation5], 16
        $region40: #{convnet_forward.5} parent=31 // pred_fallthru
          _
        %p175 = scmp.lt.s32.totalorder %s16, 1
        %s176 = scalar_select %p175, %s16, 1
        %s177 = smul.addr %s176, 10
        %s178 = smul.addr %s177, 4
        %s179 = scalar_lea.vmem %s0, %s178
        %p180 = pneg %p37
        %p181 = pneg %p34
        %p182 = pneg %p58
        %p183 = pneg %p55
        %p184 = pneg %p79
        %p185 = pneg %p76
        %p186 = pneg %p105
        %p187 = pneg %p102
        %p188 = scmp.lt.s32.totalorder %s16, 1
        %s189 = scalar_select %p188, %s16, 1
        %s190 = smul.addr %s189, 3
        %s191 = smul.addr %s190, 4
        %s192 = scalar_lea.vmem %s3, %s191
        %p193 = scmp.lt.s32.totalorder %s16, 1
        %s194 = scalar_select %p193, %s16, 1
        %s195 = smul.addr %s194, 10
        %s196 = smul.addr %s195, 4
        %s197 = scalar_lea.vmem %s0, %s196
        %p198 = scmp.lt.s32.totalorder %s16, 1
        %s199 = scalar_select %p198, %s16, 1
        %s200 = smul.addr %s199, 3
        %s201 = smul.addr %s200, 4
        %s202 = scalar_lea.vmem %s3, %s201
        %v203 = vld [vmem:[%s197] sm:$0xff]
        %v204 = vld [vmem:[%s197 + $0x8] sm:$0xff]
        %v205 = vld [vmem:[%s197 + $0x10] sm:$0xff]
        %v206 = vld [vmem:[#allocation2] sm:$0xf]
        %v207 = vld [vmem:[#allocation2 + $0x4] sm:$0xf]
        %v208 = vld [vmem:[#allocation2 + $0x8] sm:$0xf]
        %v209 = vld [vmem:[#allocation2 + $0xc] sm:$0xf]
        %v210 = vld [vmem:[#allocation2 + $0x10] sm:$0xf]
        %v211 = vld [vmem:[#allocation2 + $0x14] sm:$0xf]
        %v212 = vld [vmem:[#allocation2 + $0x18] sm:$0xf]
        %v213 = vld [vmem:[#allocation2 + $0x1c] sm:$0xf]
        %v214 = vld [vmem:[#allocation2 + $0x20] sm:$0xf]
        %v215 = vld [vmem:[#allocation2 + $0x24] sm:$0xf]
        %v216 = vld [vmem:[#allocation2 + $0x28] sm:$0xf]
        %v217 = vld [vmem:[#allocation2 + $0x2c] sm:$0xf]
        %v218 = vld [vmem:[#allocation2 + $0x30] sm:$0xf]
        %v219 = vld [vmem:[#allocation2 + $0x34] sm:$0xf]
        %v220 = vld [vmem:[#allocation2 + $0x38] sm:$0xf]
        %v221 = vld [vmem:[#allocation2 + $0x3c] sm:$0xf]
        %v222 = vld [vmem:[#allocation2 + $0x40] sm:$0xf]
        %v223 = vld [vmem:[#allocation2 + $0x44] sm:$0xf]
        %v224 = vld [vmem:[#allocation2 + $0x48] sm:$0xf]
        %v225 = vld [vmem:[#allocation2 + $0x4c] sm:$0xf]
        %v226 = vld [vmem:[#allocation2 + $0x50] sm:$0xf]
        %v227 = vld [vmem:[#allocation2 + $0x54] sm:$0xf]
        %v228 = vld [vmem:[#allocation2 + $0x58] sm:$0xf]
        %v229 = vld [vmem:[#allocation2 + $0x5c] sm:$0xf]
        %v230 = vld [vmem:[#allocation2 + $0x60] sm:$0xf]
        %v231 = vld [vmem:[#allocation2 + $0x64] sm:$0xf]
        %v232 = vld [vmem:[#allocation2 + $0x68] sm:$0xf]
        %v233 = vld [vmem:[#allocation2 + $0x6c] sm:$0xf]
        %v234 = vld [vmem:[#allocation2 + $0x70] sm:$0xf]
        %v235 = vld [vmem:[#allocation2 + $0x74] sm:$0xf]
        %v236 = vld [vmem:[#allocation2 + $0x78] sm:$0xf]
        %v237 = vld [vmem:[#allocation2 + $0x7c] sm:$0xf]
        %v238 = vld [vmem:[%s197 + $0x18] sm:$0x11]
        %s239 = scalar_lea.vmem [#allocation2], 128
        %v240 = vld [vmem:[%s239] sm:$0xf]
        %v241 = vld [vmem:[%s239 + $0x4] sm:$0xf]
        %v242 = vld [vmem:[%s239 + $0x8] sm:$0xf]
        %v243 = vld [vmem:[%s239 + $0xc] sm:$0xf]
        %v244 = vld [vmem:[%s239 + $0x10] sm:$0xf]
        %v245 = vld [vmem:[%s239 + $0x14] sm:$0xf]
        %v246 = vld [vmem:[%s239 + $0x18] sm:$0xf]
        %v247 = vld [vmem:[%s239 + $0x1c] sm:$0xf]
        %v248 = vld [vmem:[%s239 + $0x20] sm:$0xf]
        %v249 = vld [vmem:[%s239 + $0x24] sm:$0xf]
        %v250 = vld [vmem:[%s239 + $0x28] sm:$0xf]
        %v251 = vld [vmem:[%s239 + $0x2c] sm:$0xf]
        %v252 = vld [vmem:[%s239 + $0x30] sm:$0xf]
        %v253 = vld [vmem:[%s239 + $0x34] sm:$0xf]
        %v254 = vld [vmem:[%s239 + $0x38] sm:$0xf]
        %v255 = vld [vmem:[%s239 + $0x3c] sm:$0xf]
        %v256 = vld [vmem:[%s239 + $0x40] sm:$0xf]
        %v257 = vld [vmem:[%s239 + $0x44] sm:$0xf]
        %v258 = vld [vmem:[%s239 + $0x48] sm:$0xf]
        %v259 = vld [vmem:[%s239 + $0x4c] sm:$0xf]
        %v260 = vld [vmem:[%s239 + $0x50] sm:$0xf]
        %v261 = vld [vmem:[%s239 + $0x54] sm:$0xf]
        %v262 = vld [vmem:[%s239 + $0x58] sm:$0xf]
        %v263 = vld [vmem:[%s239 + $0x5c] sm:$0xf]
        %v264 = vld [vmem:[%s239 + $0x60] sm:$0xf]
        %v265 = vld [vmem:[%s239 + $0x64] sm:$0xf]
        %v266 = vld [vmem:[%s239 + $0x68] sm:$0xf]
        %v267 = vld [vmem:[%s239 + $0x6c] sm:$0xf]
        %v268 = vld [vmem:[%s239 + $0x70] sm:$0xf]
        %v269 = vld [vmem:[%s239 + $0x74] sm:$0xf]
        %v270 = vld [vmem:[%s239 + $0x78] sm:$0xf]
        %v271 = vld [vmem:[%s239 + $0x7c] sm:$0xf]
        %v276 = vunpack.c.l.b16 %v203
        %v277 = vunpack.c.h.b16 %v203
        %v278 = vunpack.c.l.b16 %v204
        %v279 = vunpack.c.h.b16 %v204
        %v280 = vunpack.c.l.b16 %v205
        %v281 = vunpack.c.h.b16 %v205
        %v282 = vunpack.c.l.b16 %v238
        %v283 = vunpack.c.h.b16 %v238
        %v284 = vpack.c.b16 %v278, %v276
        %v285 = vpack.c.b16 %v279, %v277
        %v286 = vpack.c.b16 %v282, %v280
        %v287 = vpack.c.b16 %v283, %v281
        %vm288 = vsmask.f32 7424
        %v290 = vshrl.u32 %v284, 16
        %v292 = vshll.u32 %v284, 16
        %v294 = vrot.slane %v292, 1
        %v295 = vor.u32 %v290, %v294
        %v297 = vshll.u32 %v286, 16
        %v299 = vrot.slane %v297, 1
        %v300 = vsel %vm288, %v295, %v299
        %v302 = vshrl.u32 %v285, 16
        %v304 = vshll.u32 %v285, 16
        %v306 = vrot.slane %v304, 1
        %v307 = vor.u32 %v302, %v306
        %v309 = vshll.u32 %v287, 16
        %v311 = vrot.slane %v309, 1
        %v312 = vsel %vm288, %v307, %v311
        %v313 = vshrl.u32 %v286, 16
        %v315 = vor.u32 %v313, %v299
        %v316 = vshrl.u32 %v287, 16
        %v318 = vor.u32 %v316, %v311
        %v355 = vunpack.c.l.b16 %v240
        %v356 = vunpack.c.l.b16 %v241
        %v357 = vunpack.c.l.b16 %v242
        %v358 = vunpack.c.l.b16 %v243
        %v359 = vunpack.c.l.b16 %v244
        %v360 = vunpack.c.l.b16 %v245
        %v361 = vunpack.c.l.b16 %v246
        %v362 = vunpack.c.l.b16 %v247
        %v363 = vunpack.c.l.b16 %v248
        %v364 = vunpack.c.l.b16 %v249
        %v365 = vunpack.c.l.b16 %v250
        %v366 = vunpack.c.l.b16 %v251
        %v367 = vunpack.c.l.b16 %v252
        %v368 = vunpack.c.l.b16 %v253
        %v369 = vunpack.c.l.b16 %v254
        %v370 = vunpack.c.l.b16 %v255
        %v371 = vunpack.c.l.b16 %v256
        %v372 = vunpack.c.l.b16 %v257
        %v373 = vunpack.c.l.b16 %v258
        %v374 = vunpack.c.l.b16 %v259
        %v375 = vunpack.c.l.b16 %v260
        %v376 = vunpack.c.l.b16 %v261
        %v377 = vunpack.c.l.b16 %v262
        %v378 = vunpack.c.l.b16 %v263
        %v379 = vunpack.c.l.b16 %v264
        %v380 = vunpack.c.l.b16 %v265
        %v381 = vunpack.c.l.b16 %v266
        %v382 = vunpack.c.l.b16 %v267
        %v383 = vunpack.c.l.b16 %v268
        %v384 = vunpack.c.l.b16 %v269
        %v385 = vunpack.c.l.b16 %v270
        %v386 = vunpack.c.l.b16 %v271
        %v387 = vpack.c.b16 %v356, %v355
        %v388 = vpack.c.b16 %v358, %v357
        %v389 = vpack.c.b16 %v360, %v359
        %v390 = vpack.c.b16 %v362, %v361
        %v391 = vpack.c.b16 %v364, %v363
        %v392 = vpack.c.b16 %v366, %v365
        %v393 = vpack.c.b16 %v368, %v367
        %v394 = vpack.c.b16 %v370, %v369
        %v395 = vpack.c.b16 %v372, %v371
        %v396 = vpack.c.b16 %v374, %v373
        %v397 = vpack.c.b16 %v376, %v375
        %v398 = vpack.c.b16 %v378, %v377
        %v399 = vpack.c.b16 %v380, %v379
        %v400 = vpack.c.b16 %v382, %v381
        %v401 = vpack.c.b16 %v384, %v383
        %v402 = vpack.c.b16 %v386, %v385
        %419 = vmatpush.bf16.msra.mxu0 %v394
        %420 = vmatpush.bf16.msra.mxu0 %v393
        %421 = vmatpush.bf16.msra.mxu0 %v392
        %422 = vmatpush.bf16.msra.mxu0 %v391
        %423 = vmatpush.bf16.msra.mxu0 %v390
        %424 = vmatpush.bf16.msra.mxu0 %v389
        %425 = vmatpush.bf16.msra.mxu0 %v388
        %426 = vmatpush.bf16.msra.mxu0 %v387
        %427 = vmatmul.bf16.gmra.mxu0 %v300
        %v428 = vpop.f32.mrf.mxu0
        %v429 = vadd.f32 0.0, %v428
        %v430 = vpop.f32.mrf.mxu0
        %v431 = vadd.f32 0.0, %v430
        %432 = vmatmul.bf16.gmra.mxu0 %v315
        %v433 = vpop.f32.mrf.mxu0
        %v434 = vadd.f32 0.0, %v433
        %v435 = vpop.f32.mrf.mxu0
        %436 = vdwg.mxu0
        %437 = vmatpush.bf16.msra.mxu0 %v402
        %438 = vmatpush.bf16.msra.mxu0 %v401
        %439 = vmatpush.bf16.msra.mxu0 %v400
        %440 = vmatpush.bf16.msra.mxu0 %v399
        %441 = vmatpush.bf16.msra.mxu0 %v398
        %442 = vmatpush.bf16.msra.mxu0 %v397
        %443 = vmatpush.bf16.msra.mxu0 %v396
        %444 = vmatpush.bf16.msra.mxu0 %v395
        %445 = vmatmul.bf16.gmra.mxu0 %v312
        %v446 = vpop.f32.mrf.mxu0
        %v447 = vadd.f32 %v429, %v446
        %v448 = vpop.f32.mrf.mxu0
        %v449 = vadd.f32 %v431, %v448
        %450 = vmatmul.bf16.gmra.mxu0 %v318
        %v451 = vpop.f32.mrf.mxu0
        %v452 = vadd.f32 %v434, %v451
        %v453 = vpop.f32.mrf.mxu0
        %454 = vdwg.mxu0
        %v455 = vpack.c.b16 %v280, %v280
        %v456 = vpack.c.b16 %v281, %v281
        %v493 = vunpack.c.l.b16 %v206
        %v494 = vunpack.c.l.b16 %v207
        %v495 = vunpack.c.l.b16 %v208
        %v496 = vunpack.c.l.b16 %v209
        %v497 = vunpack.c.l.b16 %v210
        %v498 = vunpack.c.l.b16 %v211
        %v499 = vunpack.c.l.b16 %v212
        %v500 = vunpack.c.l.b16 %v213
        %v501 = vunpack.c.l.b16 %v214
        %v502 = vunpack.c.l.b16 %v215
        %v503 = vunpack.c.l.b16 %v216
        %v504 = vunpack.c.l.b16 %v217
        %v505 = vunpack.c.l.b16 %v218
        %v506 = vunpack.c.l.b16 %v219
        %v507 = vunpack.c.l.b16 %v220
        %v508 = vunpack.c.l.b16 %v221
        %v509 = vunpack.c.l.b16 %v222
        %v510 = vunpack.c.l.b16 %v223
        %v511 = vunpack.c.l.b16 %v224
        %v512 = vunpack.c.l.b16 %v225
        %v513 = vunpack.c.l.b16 %v226
        %v514 = vunpack.c.l.b16 %v227
        %v515 = vunpack.c.l.b16 %v228
        %v516 = vunpack.c.l.b16 %v229
        %v517 = vunpack.c.l.b16 %v230
        %v518 = vunpack.c.l.b16 %v231
        %v519 = vunpack.c.l.b16 %v232
        %v520 = vunpack.c.l.b16 %v233
        %v521 = vunpack.c.l.b16 %v234
        %v522 = vunpack.c.l.b16 %v235
        %v523 = vunpack.c.l.b16 %v236
        %v524 = vunpack.c.l.b16 %v237
        %v525 = vpack.c.b16 %v494, %v493
        %v526 = vpack.c.b16 %v496, %v495
        %v527 = vpack.c.b16 %v498, %v497
        %v528 = vpack.c.b16 %v500, %v499
        %v529 = vpack.c.b16 %v502, %v501
        %v530 = vpack.c.b16 %v504, %v503
        %v531 = vpack.c.b16 %v506, %v505
        %v532 = vpack.c.b16 %v508, %v507
        %v533 = vpack.c.b16 %v510, %v509
        %v534 = vpack.c.b16 %v512, %v511
        %v535 = vpack.c.b16 %v514, %v513
        %v536 = vpack.c.b16 %v516, %v515
        %v537 = vpack.c.b16 %v518, %v517
        %v538 = vpack.c.b16 %v520, %v519
        %v539 = vpack.c.b16 %v522, %v521
        %v540 = vpack.c.b16 %v524, %v523
        %557 = vmatpush.bf16.msra.mxu0 %v532
        %558 = vmatpush.bf16.msra.mxu0 %v531
        %559 = vmatpush.bf16.msra.mxu0 %v530
        %560 = vmatpush.bf16.msra.mxu0 %v529
        %561 = vmatpush.bf16.msra.mxu0 %v528
        %562 = vmatpush.bf16.msra.mxu0 %v527
        %563 = vmatpush.bf16.msra.mxu0 %v526
        %564 = vmatpush.bf16.msra.mxu0 %v525
        %565 = vmatmul.bf16.gmra.mxu0 %v284
        %v566 = vpop.f32.mrf.mxu0
        %v567 = vadd.f32 %v447, %v566
        %v568 = vpop.f32.mrf.mxu0
        %v569 = vadd.f32 %v449, %v568
        %570 = vmatmul.bf16.gmra.mxu0 %v455
        %v571 = vpop.f32.mrf.mxu0
        %v572 = vadd.f32 %v452, %v571
        %v573 = vpop.f32.mrf.mxu0
        %574 = vdwg.mxu0
        %575 = vmatpush.bf16.msra.mxu0 %v540
        %576 = vmatpush.bf16.msra.mxu0 %v539
        %577 = vmatpush.bf16.msra.mxu0 %v538
        %578 = vmatpush.bf16.msra.mxu0 %v537
        %579 = vmatpush.bf16.msra.mxu0 %v536
        %580 = vmatpush.bf16.msra.mxu0 %v535
        %581 = vmatpush.bf16.msra.mxu0 %v534
        %582 = vmatpush.bf16.msra.mxu0 %v533
        %583 = vmatmul.bf16.gmra.mxu0 %v285
        %v584 = vpop.f32.mrf.mxu0
        %v585 = vadd.f32 %v567, %v584
        %v586 = vpop.f32.mrf.mxu0
        %v587 = vadd.f32 %v569, %v586
        %588 = vmatmul.bf16.gmra.mxu0 %v456
        %v589 = vpop.f32.mrf.mxu0
        %v590 = vadd.f32 %v572, %v589
        %v591 = vpop.f32.mrf.mxu0
        %592 = vdwg.mxu0
        %v593 = vld [vmem:[%s197] sm:$0x88]
        %v594 = vld [vmem:[%s197 + $0x18] sm:$0x77]
        %s595 = scalar_lea.vmem [#allocation2], 256
        %v596 = vld [vmem:[%s595] sm:$0xf]
        %v597 = vld [vmem:[%s595 + $0x4] sm:$0xf]
        %v598 = vld [vmem:[%s595 + $0x8] sm:$0xf]
        %v599 = vld [vmem:[%s595 + $0xc] sm:$0xf]
        %v600 = vld [vmem:[%s595 + $0x10] sm:$0xf]
        %v601 = vld [vmem:[%s595 + $0x14] sm:$0xf]
        %v602 = vld [vmem:[%s595 + $0x18] sm:$0xf]
        %v603 = vld [vmem:[%s595 + $0x1c] sm:$0xf]
        %v604 = vld [vmem:[%s595 + $0x20] sm:$0xf]
        %v605 = vld [vmem:[%s595 + $0x24] sm:$0xf]
        %v606 = vld [vmem:[%s595 + $0x28] sm:$0xf]
        %v607 = vld [vmem:[%s595 + $0x2c] sm:$0xf]
        %v608 = vld [vmem:[%s595 + $0x30] sm:$0xf]
        %v609 = vld [vmem:[%s595 + $0x34] sm:$0xf]
        %v610 = vld [vmem:[%s595 + $0x38] sm:$0xf]
        %v611 = vld [vmem:[%s595 + $0x3c] sm:$0xf]
        %v612 = vld [vmem:[%s595 + $0x40] sm:$0xf]
        %v613 = vld [vmem:[%s595 + $0x44] sm:$0xf]
        %v614 = vld [vmem:[%s595 + $0x48] sm:$0xf]
        %v615 = vld [vmem:[%s595 + $0x4c] sm:$0xf]
        %v616 = vld [vmem:[%s595 + $0x50] sm:$0xf]
        %v617 = vld [vmem:[%s595 + $0x54] sm:$0xf]
        %v618 = vld [vmem:[%s595 + $0x58] sm:$0xf]
        %v619 = vld [vmem:[%s595 + $0x5c] sm:$0xf]
        %v620 = vld [vmem:[%s595 + $0x60] sm:$0xf]
        %v621 = vld [vmem:[%s595 + $0x64] sm:$0xf]
        %v622 = vld [vmem:[%s595 + $0x68] sm:$0xf]
        %v623 = vld [vmem:[%s595 + $0x6c] sm:$0xf]
        %v624 = vld [vmem:[%s595 + $0x70] sm:$0xf]
        %v625 = vld [vmem:[%s595 + $0x74] sm:$0xf]
        %v626 = vld [vmem:[%s595 + $0x78] sm:$0xf]
        %v627 = vld [vmem:[%s595 + $0x7c] sm:$0xf]
        %v630 = vunpack.c.l.b16 %v593
        %v631 = vunpack.c.h.b16 %v593
        %v632 = vunpack.c.l.b16 %v594
        %v633 = vunpack.c.h.b16 %v594
        %v634 = vpack.c.b16 %v278, %v630
        %v635 = vpack.c.b16 %v279, %v631
        %v636 = vpack.c.b16 %v632, %v280
        %v637 = vpack.c.b16 %v633, %v281
        %vm638 = vcmask 1044480
        %v639 = vrot.slane %v634, 3
        %v640 = vrot.slane %v636, 3
        %v641 = vsel %vm638, %v639, %v640
        %v642 = vrot.slane %v635, 3
        %v643 = vrot.slane %v637, 3
        %v644 = vsel %vm638, %v642, %v643
        %v681 = vunpack.c.l.b16 %v596
        %v682 = vunpack.c.l.b16 %v597
        %v683 = vunpack.c.l.b16 %v598
        %v684 = vunpack.c.l.b16 %v599
        %v685 = vunpack.c.l.b16 %v600
        %v686 = vunpack.c.l.b16 %v601
        %v687 = vunpack.c.l.b16 %v602
        %v688 = vunpack.c.l.b16 %v603
        %v689 = vunpack.c.l.b16 %v604
        %v690 = vunpack.c.l.b16 %v605
        %v691 = vunpack.c.l.b16 %v606
        %v692 = vunpack.c.l.b16 %v607
        %v693 = vunpack.c.l.b16 %v608
        %v694 = vunpack.c.l.b16 %v609
        %v695 = vunpack.c.l.b16 %v610
        %v696 = vunpack.c.l.b16 %v611
        %v697 = vunpack.c.l.b16 %v612
        %v698 = vunpack.c.l.b16 %v613
        %v699 = vunpack.c.l.b16 %v614
        %v700 = vunpack.c.l.b16 %v615
        %v701 = vunpack.c.l.b16 %v616
        %v702 = vunpack.c.l.b16 %v617
        %v703 = vunpack.c.l.b16 %v618
        %v704 = vunpack.c.l.b16 %v619
        %v705 = vunpack.c.l.b16 %v620
        %v706 = vunpack.c.l.b16 %v621
        %v707 = vunpack.c.l.b16 %v622
        %v708 = vunpack.c.l.b16 %v623
        %v709 = vunpack.c.l.b16 %v624
        %v710 = vunpack.c.l.b16 %v625
        %v711 = vunpack.c.l.b16 %v626
        %v712 = vunpack.c.l.b16 %v627
        %v713 = vpack.c.b16 %v682, %v681
        %v714 = vpack.c.b16 %v684, %v683
        %v715 = vpack.c.b16 %v686, %v685
        %v716 = vpack.c.b16 %v688, %v687
        %v717 = vpack.c.b16 %v690, %v689
        %v718 = vpack.c.b16 %v692, %v691
        %v719 = vpack.c.b16 %v694, %v693
        %v720 = vpack.c.b16 %v696, %v695
        %v721 = vpack.c.b16 %v698, %v697
        %v722 = vpack.c.b16 %v700, %v699
        %v723 = vpack.c.b16 %v702, %v701
        %v724 = vpack.c.b16 %v704, %v703
        %v725 = vpack.c.b16 %v706, %v705
        %v726 = vpack.c.b16 %v708, %v707
        %v727 = vpack.c.b16 %v710, %v709
        %v728 = vpack.c.b16 %v712, %v711
        %745 = vmatpush.bf16.msra.mxu0 %v720
        %746 = vmatpush.bf16.msra.mxu0 %v719
        %747 = vmatpush.bf16.msra.mxu0 %v718
        %748 = vmatpush.bf16.msra.mxu0 %v717
        %749 = vmatpush.bf16.msra.mxu0 %v716
        %750 = vmatpush.bf16.msra.mxu0 %v715
        %751 = vmatpush.bf16.msra.mxu0 %v714
        %752 = vmatpush.bf16.msra.mxu0 %v713
        %753 = vmatmul.bf16.gmra.mxu0 %v641
        %v754 = vpop.f32.mrf.mxu0
        %v755 = vadd.f32 0.0, %v754
        %v756 = vpop.f32.mrf.mxu0
        %v757 = vadd.f32 0.0, %v756
        %758 = vmatmul.bf16.gmra.mxu0 %v640
        %v759 = vpop.f32.mrf.mxu0
        %v760 = vadd.f32 0.0, %v759
        %v761 = vpop.f32.mrf.mxu0
        %762 = vdwg.mxu0
        %763 = vmatpush.bf16.msra.mxu0 %v728
        %764 = vmatpush.bf16.msra.mxu0 %v727
        %765 = vmatpush.bf16.msra.mxu0 %v726
        %766 = vmatpush.bf16.msra.mxu0 %v725
        %767 = vmatpush.bf16.msra.mxu0 %v724
        %768 = vmatpush.bf16.msra.mxu0 %v723
        %769 = vmatpush.bf16.msra.mxu0 %v722
        %770 = vmatpush.bf16.msra.mxu0 %v721
        %771 = vmatmul.bf16.gmra.mxu0 %v644
        %v772 = vpop.f32.mrf.mxu0
        %v773 = vadd.f32 %v755, %v772
        %v774 = vpop.f32.mrf.mxu0
        %v775 = vadd.f32 %v757, %v774
        %776 = vmatmul.bf16.gmra.mxu0 %v643
        %v777 = vpop.f32.mrf.mxu0
        %v778 = vadd.f32 %v760, %v777
        %v779 = vpop.f32.mrf.mxu0
        %780 = vdwg.mxu0
        %v781 = vadd.f32 %v585, %v773
        %v782 = vadd.f32 %v587, %v775
        %v783 = vadd.f32 %v590, %v778
        %v784 = vld [vmem:[%s197 + $0x18] sm:$0xff]
        %s785 = scalar_lea.vmem [#allocation2], 384
        %v786 = vld [vmem:[%s785] sm:$0xf]
        %v787 = vld [vmem:[%s785 + $0x4] sm:$0xf]
        %v788 = vld [vmem:[%s785 + $0x8] sm:$0xf]
        %v789 = vld [vmem:[%s785 + $0xc] sm:$0xf]
        %v790 = vld [vmem:[%s785 + $0x10] sm:$0xf]
        %v791 = vld [vmem:[%s785 + $0x14] sm:$0xf]
        %v792 = vld [vmem:[%s785 + $0x18] sm:$0xf]
        %v793 = vld [vmem:[%s785 + $0x1c] sm:$0xf]
        %v794 = vld [vmem:[%s785 + $0x20] sm:$0xf]
        %v795 = vld [vmem:[%s785 + $0x24] sm:$0xf]
        %v796 = vld [vmem:[%s785 + $0x28] sm:$0xf]
        %v797 = vld [vmem:[%s785 + $0x2c] sm:$0xf]
        %v798 = vld [vmem:[%s785 + $0x30] sm:$0xf]
        %v799 = vld [vmem:[%s785 + $0x34] sm:$0xf]
        %v800 = vld [vmem:[%s785 + $0x38] sm:$0xf]
        %v801 = vld [vmem:[%s785 + $0x3c] sm:$0xf]
        %v802 = vld [vmem:[%s785 + $0x40] sm:$0xf]
        %v803 = vld [vmem:[%s785 + $0x44] sm:$0xf]
        %v804 = vld [vmem:[%s785 + $0x48] sm:$0xf]
        %v805 = vld [vmem:[%s785 + $0x4c] sm:$0xf]
        %v806 = vld [vmem:[%s785 + $0x50] sm:$0xf]
        %v807 = vld [vmem:[%s785 + $0x54] sm:$0xf]
        %v808 = vld [vmem:[%s785 + $0x58] sm:$0xf]
        %v809 = vld [vmem:[%s785 + $0x5c] sm:$0xf]
        %v810 = vld [vmem:[%s785 + $0x60] sm:$0xf]
        %v811 = vld [vmem:[%s785 + $0x64] sm:$0xf]
        %v812 = vld [vmem:[%s785 + $0x68] sm:$0xf]
        %v813 = vld [vmem:[%s785 + $0x6c] sm:$0xf]
        %v814 = vld [vmem:[%s785 + $0x70] sm:$0xf]
        %v815 = vld [vmem:[%s785 + $0x74] sm:$0xf]
        %v816 = vld [vmem:[%s785 + $0x78] sm:$0xf]
        %v817 = vld [vmem:[%s785 + $0x7c] sm:$0xf]
        %v819 = vunpack.c.l.b16 %v784
        %v820 = vunpack.c.h.b16 %v784
        %v821 = vpack.c.b16 %v819, %v280
        %v822 = vpack.c.b16 %v820, %v281
        %vm823 = vsmask.f32 4352
        %v825 = vshrl.u32 %v634, 16
        %v827 = vrot.slane %v825, 3
        %v828 = vshll.u32 %v634, 16
        %v830 = vrot.slane %v828, 4
        %v831 = vor.u32 %v827, %v830
        %v833 = vshrl.u32 %v821, 16
        %v835 = vrot.slane %v833, 3
        %v836 = vshll.u32 %v821, 16
        %v838 = vrot.slane %v836, 4
        %v839 = vor.u32 %v835, %v838
        %v840 = vsel %vm823, %v831, %v839
        %v842 = vshrl.u32 %v635, 16
        %v844 = vrot.slane %v842, 3
        %v845 = vshll.u32 %v635, 16
        %v847 = vrot.slane %v845, 4
        %v848 = vor.u32 %v844, %v847
        %v850 = vshrl.u32 %v822, 16
        %v852 = vrot.slane %v850, 3
        %v853 = vshll.u32 %v822, 16
        %v855 = vrot.slane %v853, 4
        %v856 = vor.u32 %v852, %v855
        %v857 = vsel %vm823, %v848, %v856
        %v894 = vunpack.c.l.b16 %v786
        %v895 = vunpack.c.l.b16 %v787
        %v896 = vunpack.c.l.b16 %v788
        %v897 = vunpack.c.l.b16 %v789
        %v898 = vunpack.c.l.b16 %v790
        %v899 = vunpack.c.l.b16 %v791
        %v900 = vunpack.c.l.b16 %v792
        %v901 = vunpack.c.l.b16 %v793
        %v902 = vunpack.c.l.b16 %v794
        %v903 = vunpack.c.l.b16 %v795
        %v904 = vunpack.c.l.b16 %v796
        %v905 = vunpack.c.l.b16 %v797
        %v906 = vunpack.c.l.b16 %v798
        %v907 = vunpack.c.l.b16 %v799
        %v908 = vunpack.c.l.b16 %v800
        %v909 = vunpack.c.l.b16 %v801
        %v910 = vunpack.c.l.b16 %v802
        %v911 = vunpack.c.l.b16 %v803
        %v912 = vunpack.c.l.b16 %v804
        %v913 = vunpack.c.l.b16 %v805
        %v914 = vunpack.c.l.b16 %v806
        %v915 = vunpack.c.l.b16 %v807
        %v916 = vunpack.c.l.b16 %v808
        %v917 = vunpack.c.l.b16 %v809
        %v918 = vunpack.c.l.b16 %v810
        %v919 = vunpack.c.l.b16 %v811
        %v920 = vunpack.c.l.b16 %v812
        %v921 = vunpack.c.l.b16 %v813
        %v922 = vunpack.c.l.b16 %v814
        %v923 = vunpack.c.l.b16 %v815
        %v924 = vunpack.c.l.b16 %v816
        %v925 = vunpack.c.l.b16 %v817
        %v926 = vpack.c.b16 %v895, %v894
        %v927 = vpack.c.b16 %v897, %v896
        %v928 = vpack.c.b16 %v899, %v898
        %v929 = vpack.c.b16 %v901, %v900
        %v930 = vpack.c.b16 %v903, %v902
        %v931 = vpack.c.b16 %v905, %v904
        %v932 = vpack.c.b16 %v907, %v906
        %v933 = vpack.c.b16 %v909, %v908
        %v934 = vpack.c.b16 %v911, %v910
        %v935 = vpack.c.b16 %v913, %v912
        %v936 = vpack.c.b16 %v915, %v914
        %v937 = vpack.c.b16 %v917, %v916
        %v938 = vpack.c.b16 %v919, %v918
        %v939 = vpack.c.b16 %v921, %v920
        %v940 = vpack.c.b16 %v923, %v922
        %v941 = vpack.c.b16 %v925, %v924
        %958 = vmatpush.bf16.msra.mxu0 %v933
        %959 = vmatpush.bf16.msra.mxu0 %v932
        %960 = vmatpush.bf16.msra.mxu0 %v931
        %961 = vmatpush.bf16.msra.mxu0 %v930
        %962 = vmatpush.bf16.msra.mxu0 %v929
        %963 = vmatpush.bf16.msra.mxu0 %v928
        %964 = vmatpush.bf16.msra.mxu0 %v927
        %965 = vmatpush.bf16.msra.mxu0 %v926
        %966 = vmatmul.bf16.gmra.mxu0 %v840
        %v967 = vpop.f32.mrf.mxu0
        %v968 = vadd.f32 0.0, %v967
        %v969 = vpop.f32.mrf.mxu0
        %v970 = vadd.f32 0.0, %v969
        %971 = vmatmul.bf16.gmra.mxu0 %v839
        %v972 = vpop.f32.mrf.mxu0
        %v973 = vadd.f32 0.0, %v972
        %v974 = vpop.f32.mrf.mxu0
        %975 = vdwg.mxu0
        %976 = vmatpush.bf16.msra.mxu0 %v941
        %977 = vmatpush.bf16.msra.mxu0 %v940
        %978 = vmatpush.bf16.msra.mxu0 %v939
        %979 = vmatpush.bf16.msra.mxu0 %v938
        %980 = vmatpush.bf16.msra.mxu0 %v937
        %981 = vmatpush.bf16.msra.mxu0 %v936
        %982 = vmatpush.bf16.msra.mxu0 %v935
        %983 = vmatpush.bf16.msra.mxu0 %v934
        %984 = vmatmul.bf16.gmra.mxu0 %v857
        %v985 = vpop.f32.mrf.mxu0
        %v986 = vadd.f32 %v968, %v985
        %v987 = vpop.f32.mrf.mxu0
        %v988 = vadd.f32 %v970, %v987
        %989 = vmatmul.bf16.gmra.mxu0 %v856
        %v990 = vpop.f32.mrf.mxu0
        %v991 = vadd.f32 %v973, %v990
        %v992 = vpop.f32.mrf.mxu0
        %993 = vdwg.mxu0
        %v994 = vadd.f32 %v781, %v986
        %v995 = vadd.f32 %v782, %v988
        %v996 = vadd.f32 %v783, %v991
        %v997 = vld [vmem:[#allocation4] sm:$0x1]
        %v999 = vperm.slane %v997, 0
        %v1001 = vadd.f32 %v994, %v999
        %v1002 = vadd.f32 %v995, %v999
        %v1003 = vadd.f32 %v996, %v999
        %vm1004 = vcmp.gt.f32.partialorder %v1001, 0.0
        %vm1005 = vcmp.gt.f32.partialorder %v1002, 0.0
        %vm1006 = vcmp.gt.f32.partialorder %v1003, 0.0
        %v1007 = vmul.f32 %v1001, 0.2
        %v1008 = vmul.f32 %v1002, 0.2
        %v1009 = vmul.f32 %v1003, 0.2
        %v1010 = vsel %vm1004, %v1001, %v1007
        %v1011 = vsel %vm1005, %v1002, %v1008
        %v1012 = vsel %vm1006, %v1003, %v1009
        %v1013 = vpack.c.bf16 %v1010, %v1010
        %v1014 = vpack.c.bf16 %v1011, %v1011
        %v1015 = vpack.c.bf16 %v1012, %v1012
        %1016 = vst [vmem:[%s202] sm:$0xf] %v1013
        %1017 = vst [vmem:[%s202 + $0x4] sm:$0xf] %v1014
        %1018 = vst [vmem:[%s202 + $0x8] sm:$0xf] %v1015
        %p1019 = scmp.lt.s32.totalorder %s16, 1
        %s1020 = scalar_select %p1019, %s16, 1
        %s1021 = smul.addr %s1020, 3
        %s1022 = smul.addr %s1021, 4
        %s1023 = scalar_lea.vmem %s3, %s1022
        // Predicated region
        $region41: #{convnet_forward.5} parent=31 // pred_check
          %p1024 = pneg %p102
        $region42: #{convnet_forward.5} parent=31 // pred_check_branch
          %1026 = sbr.rel (%p1024) target = $region44
        $region43: #{convnet_forward.5} parent=31 // pred_region
          _
        $region44: #{convnet_forward.5} parent=31 // pred_fallthru
          _
      $region32: #{convnet_forward.5} parent=5 // pred_fallthru
        _
      %p1027 = scmp.le.s32.totalorder 2, %s11
      // Predicated region
      $region45: #{convnet_forward.5} parent=5 // pred_check
        %p1028 = pneg %p1027
      $region46: #{convnet_forward.5} parent=5 // pred_check_branch
        %1030 = sbr.rel (%p1028) target = $region48
      $region47: #{convnet_forward.5} parent=5 // pred_region
        %s1031 = ssub.s32 %s11, 2
        // Predicated region
        $region49: #{convnet_forward.5} parent=47 // pred_check
          %p1032 = pneg %p108
        $region50: #{convnet_forward.5} parent=47 // pred_check_branch
          %1034 = sbr.rel (%p1032) target = $region52
        $region51: #{convnet_forward.5} parent=47 // pred_region
          %p1035 = scmp.lt.s32.totalorder %s17, 1
          %s1036 = scalar_select %p1035, %s17, 1
          %s1037 = smul.addr %s1036, 3
          %s1038 = smul.addr %s1037, 4
          %s1039 = scalar_lea.vmem %s3, %s1038
        $region52: #{convnet_forward.5} parent=47 // pred_fallthru
          _
      $region48: #{convnet_forward.5} parent=5 // pred_fallthru
        _
    $region6: #{convnet_forward.5} parent=1 // loop_footer
      %s15 = sadd.s32 1, %s11
    $region7: #{convnet_forward.5} parent=1 // loop_footer_branch
      %10 = sbr.rel target = $region3
    $region8: #{convnet_forward.5} parent=1 // loop_exit
      _
    %1040 = vsyncpa [#allocation3], 1
    %s1041 = scalar_lea.sflag [#allocation3], 1
    %1042 = vsyncpa %s1041, 1
    %1043 = vsyncpa [#allocation5], 1

// kernel: convnet_forward.6
$region0: #{convnet_forward.6}
  #allocation0 [shape = 'u32[]', space=smem, size = 0x4, offset = 0x4, fixed_abs, tag = 'smem constant byte address 0x4 - core index']
  #allocation1 [shape = 'u32[72,128]{1,0:T(1,128)}', space=vmem, size = 0x9000, scoped, tag = 'internal scratch']
  %s0 = inlined_call_operand.vmem [shape: bf16[2,16,512], index: 0, kind: input, shape index: {}]
  %s1 = inlined_call_operand.hbm [shape: bf16[4,512,256], index: 1, kind: input, shape index: {}]
  %s2 = inlined_call_operand.hbm [shape: f32[1,256], index: 2, kind: input, shape index: {}]
  %s3 = inlined_call_operand.vmem [shape: bf16[2,8,256], index: 3, kind: output, shape index: {}]
  %s4 = sld [smem:[#allocation0]]
  $region53: #{convnet_forward.6} parent=0
    _
  %s6 = ssub.s32 1, %s4
  %s7 = scalar_select 0, %s6, %s4
  $region1: #{convnet_forward.6} parent=0
    #allocation2 [shape = 'u8[1048576]{0}', space=vmem, size = 0x100000, scoped, tag = 'input window, operand 1, single buffered']
    #allocation3 [shape = 's32[2]{0}', space=sflag, size = 0x8, scoped, tag = 'scoped memory for convnet_forward.6']
    #allocation4 [shape = 'u8[1024]{0}', space=vmem, size = 0x400, scoped, tag = 'input window, operand 2, single buffered']
    #allocation5 [shape = 's32[1]{0}', space=sflag, size = 0x4, scoped, tag = 'scoped memory for convnet_forward.6']
    %8 = vsyncpa [#allocation3], 0
    %9 = vsyncpa [#allocation5], 0
    loop: start=0, step=1, limit=4
    $region2: #{convnet_forward.6} parent=1 // loop_pre_header
      _
    $region3: #{convnet_forward.6} parent=1 // loop_header
      %s11 = sphi 0, %s15
      %p12 = scmp.ge.s32.totalorder %s11, 4
      %s21 = sphi 0, %s23
      %s24 = sphi 0, %s21
      %s25 = sphi 0, %s24
      %s41 = sphi 0, %s25
      %s45 = sphi 0, %s45
      %s47 = sphi 0, %s45
      %s48 = sphi 0, %s47
      %s62 = sphi 0, %s48
      %s66 = sphi 0, %s66
      %s68 = sphi 0, %s66
      %s69 = sphi 0, %s68
      %s83 = sphi 0, %s69
      %s89 = sphi 0, %s91
      %s92 = sphi 0, %s89
      %s93 = sphi 0, %s92
      %s109 = sphi 0, %s93
    $region4: #{convnet_forward.6} parent=1 // loop_header_branch
      %14 = sbr.rel (%p12) target = $region8
    $region5: #{convnet_forward.6} parent=1 // loop_body
      %s16 = ssub.s32 %s11, 1
      %s17 = ssub.s32 %s11, 2
      %s18 = sadd.s32 %s11, 1
      %s19 = ssub.s32 %s11, %s18
      %p20 = scmp.eq.s32.totalorder %s19, 0
      %s22 = sadd.s32 %s21, 1
      %s23 = scalar_select %p20, %s21, %s22
      %p26 = pneg %p20
      %p27 = scmp.eq.s32.totalorder %s11, 1
      %p28 = por %p26, %p27
      %p29 = scmp.ne.s32.totalorder %s21, %s24
      %p30 = scmp.eq.s32.totalorder %s11, 0
      %p31 = por %p29, %p30
      %p32 = scmp.ne.s32.totalorder %s21, %s24
      %p33 = scmp.eq.s32.totalorder %s16, 1
      %p34 = por %p32, %p33
      %p35 = scmp.ne.s32.totalorder %s24, %s25
      %p36 = scmp.eq.s32.totalorder %s16, 0
      %p37 = por %p35, %p36
      %p38 = scmp.ne.s32.totalorder %s24, %s25
      %p39 = scmp.eq.s32.totalorder %s17, 1
      %p40 = por %p38, %p39
      %p42 = scmp.ne.s32.totalorder %s25, %s41
      %p43 = scmp.eq.s32.totalorder %s17, 0
      %p44 = por %p42, %p43
      %s46 = sadd.s32 %s45, 1
      %p49 = scmp.eq.s32.totalorder %s11, 1
      %p50 = scmp.ne.s32.totalorder %s45, %s47
      %p51 = scmp.eq.s32.totalorder %s11, 0
      %p52 = por %p50, %p51
      %p53 = scmp.ne.s32.totalorder %s45, %s47
      %p54 = scmp.eq.s32.totalorder %s16, 1
      %p55 = por %p53, %p54
      %p56 = scmp.ne.s32.totalorder %s47, %s48
      %p57 = scmp.eq.s32.totalorder %s16, 0
      %p58 = por %p56, %p57
      %p59 = scmp.ne.s32.totalorder %s47, %s48
      %p60 = scmp.eq.s32.totalorder %s17, 1
      %p61 = por %p59, %p60
      %p63 = scmp.ne.s32.totalorder %s48, %s62
      %p64 = scmp.eq.s32.totalorder %s17, 0
      %p65 = por %p63, %p64
      %s67 = sadd.s32 %s66, 1
      %p70 = scmp.eq.s32.totalorder %s11, 1
      %p71 = scmp.ne.s32.totalorder %s66, %s68
      %p72 = scmp.eq.s32.totalorder %s11, 0
      %p73 = por %p71, %p72
      %p74 = scmp.ne.s32.totalorder %s66, %s68
      %p75 = scmp.eq.s32.totalorder %s16, 1
      %p76 = por %p74, %p75
      %p77 = scmp.ne.s32.totalorder %s68, %s69
      %p78 = scmp.eq.s32.totalorder %s16, 0
      %p79 = por %p77, %p78
      %p80 = scmp.ne.s32.totalorder %s68, %s69
      %p81 = scmp.eq.s32.totalorder %s17, 1
      %p82 = por %p80, %p81
      %p84 = scmp.ne.s32.totalorder %s69, %s83
      %p85 = scmp.eq.s32.totalorder %s17, 0
      %p86 = por %p84, %p85
      %s87 = ssub.s32 %s11, %s18
      %p88 = scmp.eq.s32.totalorder %s87, 0
      %s90 = sadd.s32 %s89, 1
      %s91 = scalar_select %p88, %s89, %s90
      %p94 = pneg %p88
      %p95 = scmp.eq.s32.totalorder %s11, 1
      %p96 = por %p94, %p95
      %p97 = scmp.ne.s32.totalorder %s89, %s92
      %p98 = scmp.eq.s32.totalorder %s11, 0
      %p99 = por %p97, %p98
      %p100 = scmp.ne.s32.totalorder %s89, %s92
      %p101 = scmp.eq.s32.totalorder %s16, 1
      %p102 = por %p100, %p101
      %p103 = scmp.ne.s32.totalorder %s92, %s93
      %p104 = scmp.eq.s32.totalorder %s16, 0
      %p105 = por %p103, %p104
      %p106 = scmp.ne.s32.totalorder %s92, %s93
      %p107 = scmp.eq.s32.totalorder %s17, 1
      %p108 = por %p106, %p107
      %p110 = scmp.ne.s32.totalorder %s93, %s109
      %p111 = scmp.eq.s32.totalorder %s17, 0
      %p112 = por %p110, %p111
      %p113 = scmp.le.s32.totalorder 1, %s11
      %p114 = scmp.lt.s32.totalorder %s11, 3
      %p115 = pnand %p113, %p114
      %p116 = pneg %p115
      // Predicated region
      $region9: #{convnet_forward.6} parent=5 // pred_check
        _
      $region10: #{convnet_forward.6} parent=5 // pred_check_branch
        %118 = sbr.rel (%p115) target = $region12
      $region11: #{convnet_forward.6} parent=5 // pred_region
        %s119 = ssub.s32 %s11, 1
        // Predicated region
        $region13: #{convnet_forward.6} parent=11 // pred_check
          %p120 = pneg %p58
        $region14: #{convnet_forward.6} parent=11 // pred_check_branch
          %122 = sbr.rel (%p120) target = $region16
        $region15: #{convnet_forward.6} parent=11 // pred_region
          %124 = vsyncadd [#allocation3], 0
          %s125 = sshll.u32 %s1, 4
          %s126 = int_to_ptr.hbm [resolvable:$true] %s125
          %s127 = sshll.u32 [#allocation2], 4
          %s128 = int_to_ptr.vmem [resolvable:$true] %s127
          %133 = dma.hbm_to_vmem [thread:$0]  %s126, 32768, %s128, [#allocation3], 128, 128, 8
        $region16: #{convnet_forward.6} parent=11 // pred_fallthru
          _
        // Predicated region
        $region17: #{convnet_forward.6} parent=11 // pred_check
          %p134 = pneg %p79
        $region18: #{convnet_forward.6} parent=11 // pred_check_branch
          %136 = sbr.rel (%p134) target = $region20
        $region19: #{convnet_forward.6} parent=11 // pred_region
          %138 = vsyncadd [#allocation5], 0
          %s140 = sshll.u32 %s2, 4
          %s141 = int_to_ptr.hbm [resolvable:$true] %s140
          %s142 = sshll.u32 [#allocation4], 4
          %s143 = int_to_ptr.vmem [resolvable:$true] %s142
          %145 = dma.hbm_to_vmem [thread:$0]  %s141, 32, %s143, [#allocation5]
        $region20: #{convnet_forward.6} parent=11 // pred_fallthru
          _
      $region12: #{convnet_forward.6} parent=5 // pred_fallthru
        _
      %p146 = scmp.lt.s32.totalorder %s11, 2
      // Predicated region
      $region21: #{convnet_forward.6} parent=5 // pred_check
        %p147 = pneg %p146
      $region22: #{convnet_forward.6} parent=5 // pred_check_branch
        %149 = sbr.rel (%p147) target = $region24
      $region23: #{convnet_forward.6} parent=5 // pred_region
        // Predicated region
        $region25: #{convnet_forward.6} parent=23 // pred_check
          %p150 = pneg %p31
        $region26: #{convnet_forward.6} parent=23 // pred_check_branch
          %152 = sbr.rel (%p150) target = $region28
        $region27: #{convnet_forward.6} parent=23 // pred_region
          %p153 = scmp.lt.s32.totalorder %s11, 1
          %s154 = scalar_select %p153, %s11, 1
          %s155 = smul.addr %s154, 8
          %s156 = smul.addr %s155, 4
          %s157 = scalar_lea.vmem %s0, %s156
        $region28: #{convnet_forward.6} parent=23 // pred_fallthru
          _
      $region24: #{convnet_forward.6} parent=5 // pred_fallthru
        _
      %p158 = scmp.le.s32.totalorder 1, %s11
      %p159 = scmp.lt.s32.totalorder %s11, 3
      %p160 = pnand %p158, %p159
      %p161 = pneg %p160
      // Predicated region
      $region29: #{convnet_forward.6} parent=5 // pred_check
        _
      $region30: #{convnet_forward.6} parent=5 // pred_check_branch
        %163 = sbr.rel (%p160) target = $region32
      $region31: #{convnet_forward.6} parent=5 // pred_region
        %s164 = ssub.s32 %s11, 1
        // Predicated region
        $region33: #{convnet_forward.6} parent=31 // pred_check
          %p165 = pneg %p58
        $region34: #{convnet_forward.6} parent=31 // pred_check_branch
          %167 = sbr.rel (%p165) target = $region36
        $region35: #{convnet_forward.6} parent=31 // pred_region
          %169 = dma.done [#allocation3], 32768
        $region36: #{convnet_forward.6} parent=31 // pred_fallthru
          _
        // Predicated region
        $region37: #{convnet_forward.6} parent=31 // pred_check
          %p170 = pneg %p79
        $region38: #{convnet_forward.6} parent=31 // pred_check_branch
          %172 = sbr.rel (%p170) target = $region40
        $region39: #{convnet_forward.6} parent=31 // pred_region
          %174 = dma.done [#allocation5], 32
        $region40: #{convnet_forward.6} parent=31 // pred_fallthru
          _
        %p175 = scmp.lt.s32.totalorder %s16, 1
        %s176 = scalar_select %p175, %s16, 1
        %s177 = smul.addr %s176, 8
        %s178 = smul.addr %s177, 4
        %s179 = scalar_lea.vmem %s0, %s178
        %p180 = pneg %p37
        %p181 = pneg %p34
        %p182 = pneg %p58
        %p183 = pneg %p55
        %p184 = pneg %p79
        %p185 = pneg %p76
        %p186 = pneg %p105
        %p187 = pneg %p102
        %p188 = scmp.lt.s32.totalorder %s16, 1
        %s189 = scalar_select %p188, %s16, 1
        %s190 = smul.addr %s189, 2
        %s191 = smul.addr %s190, 4
        %s192 = scalar_lea.vmem %s3, %s191
        %p193 = scmp.lt.s32.totalorder %s16, 1
        %s194 = scalar_select %p193, %s16, 1
        %s195 = smul.addr %s194, 8
        %s196 = smul.addr %s195, 4
        %s197 = scalar_lea.vmem %s0, %s196
        %p198 = scmp.lt.s32.totalorder %s16, 1
        %s199 = scalar_select %p198, %s16, 1
        %s200 = smul.addr %s199, 2
        %s201 = smul.addr %s200, 4
        %s202 = scalar_lea.vmem %s3, %s201
        %v203 = vld [vmem:[%s197] sm:$0xff]
        %v204 = vld [vmem:[%s197 + $0x8] sm:$0xff]
        %v205 = vld [vmem:[#allocation2] sm:$0xff]
        %v206 = vld [vmem:[#allocation2 + $0x8] sm:$0xff]
        %v207 = vld [vmem:[#allocation2 + $0x10] sm:$0xff]
        %v208 = vld [vmem:[#allocation2 + $0x18] sm:$0xff]
        %v209 = vld [vmem:[#allocation2 + $0x20] sm:$0xff]
        %v210 = vld [vmem:[#allocation2 + $0x28] sm:$0xff]
        %v211 = vld [vmem:[#allocation2 + $0x30] sm:$0xff]
        %v212 = vld [vmem:[#allocation2 + $0x38] sm:$0xff]
        %v213 = vld [vmem:[#allocation2 + $0x40] sm:$0xff]
        %v214 = vld [vmem:[#allocation2 + $0x48] sm:$0xff]
        %v215 = vld [vmem:[#allocation2 + $0x50] sm:$0xff]
        %v216 = vld [vmem:[#allocation2 + $0x58] sm:$0xff]
        %v217 = vld [vmem:[#allocation2 + $0x60] sm:$0xff]
        %v218 = vld [vmem:[#allocation2 + $0x68] sm:$0xff]
        %v219 = vld [vmem:[#allocation2 + $0x70] sm:$0xff]
        %v220 = vld [vmem:[#allocation2 + $0x78] sm:$0xff]
        %v221 = vld [vmem:[#allocation2 + $0x80] sm:$0xff]
        %v222 = vld [vmem:[#allocation2 + $0x88] sm:$0xff]
        %v223 = vld [vmem:[#allocation2 + $0x90] sm:$0xff]
        %v224 = vld [vmem:[#allocation2 + $0x98] sm:$0xff]
        %v225 = vld [vmem:[#allocation2 + $0xa0] sm:$0xff]
        %v226 = vld [vmem:[#allocation2 + $0xa8] sm:$0xff]
        %v227 = vld [vmem:[#allocation2 + $0xb0] sm:$0xff]
        %v228 = vld [vmem:[#allocation2 + $0xb8] sm:$0xff]
        %v229 = vld [vmem:[#allocation2 + $0xc0] sm:$0xff]
        %v230 = vld [vmem:[#allocation2 + $0xc8] sm:$0xff]
        %v231 = vld [vmem:[#allocation2 + $0xd0] sm:$0xff]
        %v232 = vld [vmem:[#allocation2 + $0xd8] sm:$0xff]
        %v233 = vld [vmem:[#allocation2 + $0xe0] sm:$0xff]
        %v234 = vld [vmem:[#allocation2 + $0xe8] sm:$0xff]
        %v235 = vld [vmem:[#allocation2 + $0xf0] sm:$0xff]
        %v236 = vld [vmem:[#allocation2 + $0xf8] sm:$0xff]
        %v237 = vld [vmem:[#allocation2 + $0x100] sm:$0xff]
        %v238 = vld [vmem:[#allocation2 + $0x108] sm:$0xff]
        %v239 = vld [vmem:[#allocation2 + $0x110] sm:$0xff]
        %v240 = vld [vmem:[#allocation2 + $0x118] sm:$0xff]
        %v241 = vld [vmem:[#allocation2 + $0x120] sm:$0xff]
        %v242 = vld [vmem:[#allocation2 + $0x128] sm:$0xff]
        %v243 = vld [vmem:[#allocation2 + $0x130] sm:$0xff]
        %v244 = vld [vmem:[#allocation2 + $0x138] sm:$0xff]
        %v245 = vld [vmem:[#allocation2 + $0x140] sm:$0xff]
        %v246 = vld [vmem:[#allocation2 + $0x148] sm:$0xff]
        %v247 = vld [vmem:[#allocation2 + $0x150] sm:$0xff]
        %v248 = vld [vmem:[#allocation2 + $0x158] sm:$0xff]
        %v249 = vld [vmem:[#allocation2 + $0x160] sm:$0xff]
        %v250 = vld [vmem:[#allocation2 + $0x168] sm:$0xff]
        %v251 = vld [vmem:[#allocation2 + $0x170] sm:$0xff]
        %v252 = vld [vmem:[#allocation2 + $0x178] sm:$0xff]
        %v253 = vld [vmem:[#allocation2 + $0x180] sm:$0xff]
        %v254 = vld [vmem:[#allocation2 + $0x188] sm:$0xff]
        %v255 = vld [vmem:[#allocation2 + $0x190] sm:$0xff]
        %v256 = vld [vmem:[#allocation2 + $0x198] sm:$0xff]
        %v257 = vld [vmem:[#allocation2 + $0x1a0] sm:$0xff]
        %v258 = vld [vmem:[#allocation2 + $0x1a8] sm:$0xff]
        %v259 = vld [vmem:[#allocation2 + $0x1b0] sm:$0xff]
        %v260 = vld [vmem:[#allocation2 + $0x1b8] sm:$0xff]
        %v261 = vld [vmem:[#allocation2 + $0x1c0] sm:$0xff]
        %v262 = vld [vmem:[#allocation2 + $0x1c8] sm:$0xff]
        %v263 = vld [vmem:[#allocation2 + $0x1d0] sm:$0xff]
        %v264 = vld [vmem:[#allocation2 + $0x1d8] sm:$0xff]
        %v265 = vld [vmem:[#allocation2 + $0x1e0] sm:$0xff]
        %v266 = vld [vmem:[#allocation2 + $0x1e8] sm:$0xff]
        %v267 = vld [vmem:[#allocation2 + $0x1f0] sm:$0xff]
        %v268 = vld [vmem:[#allocation2 + $0x1f8] sm:$0xff]
        %v269 = vld [vmem:[%s197] sm:$0xff]
        %v270 = vld [vmem:[%s197 + $0x8] sm:$0xff]
        %v271 = vld [vmem:[%s197 + $0x10] sm:$0x11]
        %v272 = vld [vmem:[%s197 + $0x18] sm:$0x11]
        %s273 = scalar_lea.vmem [#allocation2], 512
        %v274 = vld [vmem:[%s273] sm:$0xff]
        %v275 = vld [vmem:[%s273 + $0x8] sm:$0xff]
        %v276 = vld [vmem:[%s273 + $0x10] sm:$0xff]
        %v277 = vld [vmem:[%s273 + $0x18] sm:$0xff]
        %v278 = vld [vmem:[%s273 + $0x20] sm:$0xff]
        %v279 = vld [vmem:[%s273 + $0x28] sm:$0xff]
        %v280 = vld [vmem:[%s273 + $0x30] sm:$0xff]
        %v281 = vld [vmem:[%s273 + $0x38] sm:$0xff]
        %v282 = vld [vmem:[%s273 + $0x40] sm:$0xff]
        %v283 = vld [vmem:[%s273 + $0x48] sm:$0xff]
        %v284 = vld [vmem:[%s273 + $0x50] sm:$0xff]
        %v285 = vld [vmem:[%s273 + $0x58] sm:$0xff]
        %v286 = vld [vmem:[%s273 + $0x60] sm:$0xff]
        %v287 = vld [vmem:[%s273 + $0x68] sm:$0xff]
        %v288 = vld [vmem:[%s273 + $0x70] sm:$0xff]
        %v289 = vld [vmem:[%s273 + $0x78] sm:$0xff]
        %v290 = vld [vmem:[%s273 + $0x80] sm:$0xff]
        %v291 = vld [vmem:[%s273 + $0x88] sm:$0xff]
        %v292 = vld [vmem:[%s273 + $0x90] sm:$0xff]
        %v293 = vld [vmem:[%s273 + $0x98] sm:$0xff]
        %v294 = vld [vmem:[%s273 + $0xa0] sm:$0xff]
        %v295 = vld [vmem:[%s273 + $0xa8] sm:$0xff]
        %v296 = vld [vmem:[%s273 + $0xb0] sm:$0xff]
        %v297 = vld [vmem:[%s273 + $0xb8] sm:$0xff]
        %v298 = vld [vmem:[%s273 + $0xc0] sm:$0xff]
        %v299 = vld [vmem:[%s273 + $0xc8] sm:$0xff]
        %v300 = vld [vmem:[%s273 + $0xd0] sm:$0xff]
        %v301 = vld [vmem:[%s273 + $0xd8] sm:$0xff]
        %v302 = vld [vmem:[%s273 + $0xe0] sm:$0xff]
        %v303 = vld [vmem:[%s273 + $0xe8] sm:$0xff]
        %v304 = vld [vmem:[%s273 + $0xf0] sm:$0xff]
        %v305 = vld [vmem:[%s273 + $0xf8] sm:$0xff]
        %v306 = vld [vmem:[%s273 + $0x100] sm:$0xff]
        %v307 = vld [vmem:[%s273 + $0x108] sm:$0xff]
        %v308 = vld [vmem:[%s273 + $0x110] sm:$0xff]
        %v309 = vld [vmem:[%s273 + $0x118] sm:$0xff]
        %v310 = vld [vmem:[%s273 + $0x120] sm:$0xff]
        %v311 = vld [vmem:[%s273 + $0x128] sm:$0xff]
        %v312 = vld [vmem:[%s273 + $0x130] sm:$0xff]
        %v313 = vld [vmem:[%s273 + $0x138] sm:$0xff]
        %v314 = vld [vmem:[%s273 + $0x140] sm:$0xff]
        %v315 = vld [vmem:[%s273 + $0x148] sm:$0xff]
        %v316 = vld [vmem:[%s273 + $0x150] sm:$0xff]
        %v317 = vld [vmem:[%s273 + $0x158] sm:$0xff]
        %v318 = vld [vmem:[%s273 + $0x160] sm:$0xff]
        %v319 = vld [vmem:[%s273 + $0x168] sm:$0xff]
        %v320 = vld [vmem:[%s273 + $0x170] sm:$0xff]
        %v321 = vld [vmem:[%s273 + $0x178] sm:$0xff]
        %v322 = vld [vmem:[%s273 + $0x180] sm:$0xff]
        %v323 = vld [vmem:[%s273 + $0x188] sm:$0xff]
        %v324 = vld [vmem:[%s273 + $0x190] sm:$0xff]
        %v325 = vld [vmem:[%s273 + $0x198] sm:$0xff]
        %v326 = vld [vmem:[%s273 + $0x1a0] sm:$0xff]
        %v327 = vld [vmem:[%s273 + $0x1a8] sm:$0xff]
        %v328 = vld [vmem:[%s273 + $0x1b0] sm:$0xff]
        %v329 = vld [vmem:[%s273 + $0x1b8] sm:$0xff]
        %v330 = vld [vmem:[%s273 + $0x1c0] sm:$0xff]
        %v331 = vld [vmem:[%s273 + $0x1c8] sm:$0xff]
        %v332 = vld [vmem:[%s273 + $0x1d0] sm:$0xff]
        %v333 = vld [vmem:[%s273 + $0x1d8] sm:$0xff]
        %v334 = vld [vmem:[%s273 + $0x1e0] sm:$0xff]
        %v335 = vld [vmem:[%s273 + $0x1e8] sm:$0xff]
        %v336 = vld [vmem:[%s273 + $0x1f0] sm:$0xff]
        %v337 = vld [vmem:[%s273 + $0x1f8] sm:$0xff]
        %v342 = vunpack.c.l.b16 %v269
        %v343 = vunpack.c.h.b16 %v269
        %v344 = vunpack.c.l.b16 %v270
        %v345 = vunpack.c.h.b16 %v270
        %v346 = vunpack.c.l.b16 %v271
        %v347 = vunpack.c.h.b16 %v271
        %v348 = vunpack.c.l.b16 %v272
        %v349 = vunpack.c.h.b16 %v272
        %v350 = vpack.c.b16 %v346, %v342
        %v351 = vpack.c.b16 %v347, %v343
        %v352 = vpack.c.b16 %v348, %v344
        %v353 = vpack.c.b16 %v349, %v345
        %v355 = vshrl.u32 %v350, 16
        %v357 = vshll.u32 %v350, 16
        %v359 = vrot.slane %v357, 1
        %v360 = vor.u32 %v355, %v359
        %v362 = vshrl.u32 %v351, 16
        %v364 = vshll.u32 %v351, 16
        %v366 = vrot.slane %v364, 1
        %v367 = vor.u32 %v362, %v366
        %v369 = vshrl.u32 %v352, 16
        %v371 = vshll.u32 %v352, 16
        %v373 = vrot.slane %v371, 1
        %v374 = vor.u32 %v369, %v373
        %v376 = vshrl.u32 %v353, 16
        %v378 = vshll.u32 %v353, 16
        %v380 = vrot.slane %v378, 1
        %v381 = vor.u32 %v376, %v380
        %v450 = vunpack.c.l.b16 %v274
        %v451 = vunpack.c.h.b16 %v274
        %v452 = vunpack.c.l.b16 %v275
        %v453 = vunpack.c.h.b16 %v275
        %v454 = vunpack.c.l.b16 %v276
        %v455 = vunpack.c.h.b16 %v276
        %v456 = vunpack.c.l.b16 %v277
        %v457 = vunpack.c.h.b16 %v277
        %v458 = vunpack.c.l.b16 %v278
        %v459 = vunpack.c.h.b16 %v278
        %v460 = vunpack.c.l.b16 %v279
        %v461 = vunpack.c.h.b16 %v279
        %v462 = vunpack.c.l.b16 %v280
        %v463 = vunpack.c.h.b16 %v280
        %v464 = vunpack.c.l.b16 %v281
        %v465 = vunpack.c.h.b16 %v281
        %v466 = vunpack.c.l.b16 %v282
        %v467 = vunpack.c.h.b16 %v282
        %v468 = vunpack.c.l.b16 %v283
        %v469 = vunpack.c.h.b16 %v283
        %v470 = vunpack.c.l.b16 %v284
        %v471 = vunpack.c.h.b16 %v284
        %v472 = vunpack.c.l.b16 %v285
        %v473 = vunpack.c.h.b16 %v285
        %v474 = vunpack.c.l.b16 %v286
        %v475 = vunpack.c.h.b16 %v286
        %v476 = vunpack.c.l.b16 %v287
        %v477 = vunpack.c.h.b16 %v287
        %v478 = vunpack.c.l.b16 %v288
        %v479 = vunpack.c.h.b16 %v288
        %v480 = vunpack.c.l.b16 %v289
        %v481 = vunpack.c.h.b16 %v289
        %v482 = vunpack.c.l.b16 %v290
        %v483 = vunpack.c.h.b16 %v290
        %v484 = vunpack.c.l.b16 %v291
        %v485 = vunpack.c.h.b16 %v291
        %v486 = vunpack.c.l.b16 %v292
        %v487 = vunpack.c.h.b16 %v292
        %v488 = vunpack.c.l.b16 %v293
        %v489 = vunpack.c.h.b16 %v293
        %v490 = vunpack.c.l.b16 %v294
        %v491 = vunpack.c.h.b16 %v294
        %v492 = vunpack.c.l.b16 %v295
        %v493 = vunpack.c.h.b16 %v295
        %v494 = vunpack.c.l.b16 %v296
        %v495 = vunpack.c.h.b16 %v296
        %v496 = vunpack.c.l.b16 %v297
        %v497 = vunpack.c.h.b16 %v297
        %v498 = vunpack.c.l.b16 %v298
        %v499 = vunpack.c.h.b16 %v298
        %v500 = vunpack.c.l.b16 %v299
        %v501 = vunpack.c.h.b16 %v299
        %v502 = vunpack.c.l.b16 %v300
        %v503 = vunpack.c.h.b16 %v300
        %v504 = vunpack.c.l.b16 %v301
        %v505 = vunpack.c.h.b16 %v301
        %v506 = vunpack.c.l.b16 %v302
        %v507 = vunpack.c.h.b16 %v302
        %v508 = vunpack.c.l.b16 %v303
        %v509 = vunpack.c.h.b16 %v303
        %v510 = vunpack.c.l.b16 %v304
        %v511 = vunpack.c.h.b16 %v304
        %v512 = vunpack.c.l.b16 %v305
        %v513 = vunpack.c.h.b16 %v305
        %v514 = vunpack.c.l.b16 %v306
        %v515 = vunpack.c.h.b16 %v306
        %v516 = vunpack.c.l.b16 %v307
        %v517 = vunpack.c.h.b16 %v307
        %v518 = vunpack.c.l.b16 %v308
        %v519 = vunpack.c.h.b16 %v308
        %v520 = vunpack.c.l.b16 %v309
        %v521 = vunpack.c.h.b16 %v309
        %v522 = vunpack.c.l.b16 %v310
        %v523 = vunpack.c.h.b16 %v310
        %v524 = vunpack.c.l.b16 %v311
        %v525 = vunpack.c.h.b16 %v311
        %v526 = vunpack.c.l.b16 %v312
        %v527 = vunpack.c.h.b16 %v312
        %v528 = vunpack.c.l.b16 %v313
        %v529 = vunpack.c.h.b16 %v313
        %v530 = vunpack.c.l.b16 %v314
        %v531 = vunpack.c.h.b16 %v314
        %v532 = vunpack.c.l.b16 %v315
        %v533 = vunpack.c.h.b16 %v315
        %v534 = vunpack.c.l.b16 %v316
        %v535 = vunpack.c.h.b16 %v316
        %v536 = vunpack.c.l.b16 %v317
        %v537 = vunpack.c.h.b16 %v317
        %v538 = vunpack.c.l.b16 %v318
        %v539 = vunpack.c.h.b16 %v318
        %v540 = vunpack.c.l.b16 %v319
        %v541 = vunpack.c.h.b16 %v319
        %v542 = vunpack.c.l.b16 %v320
        %v543 = vunpack.c.h.b16 %v320
        %v544 = vunpack.c.l.b16 %v321
        %v545 = vunpack.c.h.b16 %v321
        %v546 = vunpack.c.l.b16 %v322
        %v547 = vunpack.c.h.b16 %v322
        %v548 = vunpack.c.l.b16 %v323
        %v549 = vunpack.c.h.b16 %v323
        %v550 = vunpack.c.l.b16 %v324
        %v551 = vunpack.c.h.b16 %v324
        %v552 = vunpack.c.l.b16 %v325
        %v553 = vunpack.c.h.b16 %v325
        %v554 = vunpack.c.l.b16 %v326
        %v555 = vunpack.c.h.b16 %v326
        %v556 = vunpack.c.l.b16 %v327
        %v557 = vunpack.c.h.b16 %v327
        %v558 = vunpack.c.l.b16 %v328
        %v559 = vunpack.c.h.b16 %v328
        %v560 = vunpack.c.l.b16 %v329
        %v561 = vunpack.c.h.b16 %v329
        %v562 = vunpack.c.l.b16 %v330
        %v563 = vunpack.c.h.b16 %v330
        %v564 = vunpack.c.l.b16 %v331
        %v565 = vunpack.c.h.b16 %v331
        %v566 = vunpack.c.l.b16 %v332
        %v567 = vunpack.c.h.b16 %v332
        %v568 = vunpack.c.l.b16 %v333
        %v569 = vunpack.c.h.b16 %v333
        %v570 = vunpack.c.l.b16 %v334
        %v571 = vunpack.c.h.b16 %v334
        %v572 = vunpack.c.l.b16 %v335
        %v573 = vunpack.c.h.b16 %v335
        %v574 = vunpack.c.l.b16 %v336
        %v575 = vunpack.c.h.b16 %v336
        %v576 = vunpack.c.l.b16 %v337
        %v577 = vunpack.c.h.b16 %v337
        %v578 = vpack.c.b16 %v452, %v450
        %v579 = vpack.c.b16 %v453, %v451
        %v580 = vpack.c.b16 %v456, %v454
        %v581 = vpack.c.b16 %v457, %v455
        %v582 = vpack.c.b16 %v460, %v458
        %v583 = vpack.c.b16 %v461, %v459
        %v584 = vpack.c.b16 %v464, %v462
        %v585 = vpack.c.b16 %v465, %v463
        %v586 = vpack.c.b16 %v468, %v466
        %v587 = vpack.c.b16 %v469, %v467
        %v588 = vpack.c.b16 %v472, %v470
        %v589 = vpack.c.b16 %v473, %v471
        %v590 = vpack.c.b16 %v476, %v474
        %v591 = vpack.c.b16 %v477, %v475
        %v592 = vpack.c.b16 %v480, %v478
        %v593 = vpack.c.b16 %v481, %v479
        %v594 = vpack.c.b16 %v484, %v482
        %v595 = vpack.c.b16 %v485, %v483
        %v596 = vpack.c.b16 %v488, %v486
        %v597 = vpack.c.b16 %v489, %v487
        %v598 = vpack.c.b16 %v492, %v490
        %v599 = vpack.c.b16 %v493, %v491
        %v600 = vpack.c.b16 %v496, %v494
        %v601 = vpack.c.b16 %v497, %v495
        %v602 = vpack.c.b16 %v500, %v498
        %v603 = vpack.c.b16 %v501, %v499
        %v604 = vpack.c.b16 %v504, %v502
        %v605 = vpack.c.b16 %v505, %v503
        %v606 = vpack.c.b16 %v508, %v506
        %v607 = vpack.c.b16 %v509, %v507
        %v608 = vpack.c.b16 %v512, %v510
        %v609 = vpack.c.b16 %v513, %v511
        %v610 = vpack.c.b16 %v516, %v514
        %v611 = vpack.c.b16 %v517, %v515
        %v612 = vpack.c.b16 %v520, %v518
        %v613 = vpack.c.b16 %v521, %v519
        %v614 = vpack.c.b16 %v524, %v522
        %v615 = vpack.c.b16 %v525, %v523
        %v616 = vpack.c.b16 %v528, %v526
        %v617 = vpack.c.b16 %v529, %v527
        %v618 = vpack.c.b16 %v532, %v530
        %v619 = vpack.c.b16 %v533, %v531
        %v620 = vpack.c.b16 %v536, %v534
        %v621 = vpack.c.b16 %v537, %v535
        %v622 = vpack.c.b16 %v540, %v538
        %v623 = vpack.c.b16 %v541, %v539
        %v624 = vpack.c.b16 %v544, %v542
        %v625 = vpack.c.b16 %v545, %v543
        %v626 = vpack.c.b16 %v548, %v546
        %v627 = vpack.c.b16 %v549, %v547
        %v628 = vpack.c.b16 %v552, %v550
        %v629 = vpack.c.b16 %v553, %v551
        %v630 = vpack.c.b16 %v556, %v554
        %v631 = vpack.c.b16 %v557, %v555
        %v632 = vpack.c.b16 %v560, %v558
        %v633 = vpack.c.b16 %v561, %v559
        %v634 = vpack.c.b16 %v564, %v562
        %v635 = vpack.c.b16 %v565, %v563
        %v636 = vpack.c.b16 %v568, %v566
        %v637 = vpack.c.b16 %v569, %v567
        %v638 = vpack.c.b16 %v572, %v570
        %v639 = vpack.c.b16 %v573, %v571
        %v640 = vpack.c.b16 %v576, %v574
        %v641 = vpack.c.b16 %v577, %v575
        %706 = vmatpush.bf16.msra.mxu0 %v592
        %707 = vmatpush.bf16.msra.mxu0 %v590
        %708 = vmatpush.bf16.msra.mxu0 %v588
        %709 = vmatpush.bf16.msra.mxu0 %v586
        %710 = vmatpush.bf16.msra.mxu0 %v584
        %711 = vmatpush.bf16.msra.mxu0 %v582
        %712 = vmatpush.bf16.msra.mxu0 %v580
        %713 = vmatpush.bf16.msra.mxu0 %v578
        %714 = vmatmul.bf16.gmra.mxu0 %v360
        %v715 = vpop.f32.mrf.mxu0
        %v716 = vadd.f32 0.0, %v715
        %v717 = vpop.f32.mrf.mxu0
        %718 = vdwg.mxu0
        %719 = vmatpush.bf16.msra.mxu0 %v608
        %720 = vmatpush.bf16.msra.mxu0 %v606
        %721 = vmatpush.bf16.msra.mxu0 %v604
        %722 = vmatpush.bf16.msra.mxu0 %v602
        %723 = vmatpush.bf16.msra.mxu0 %v600
        %724 = vmatpush.bf16.msra.mxu0 %v598
        %725 = vmatpush.bf16.msra.mxu0 %v596
        %726 = vmatpush.bf16.msra.mxu0 %v594
        %727 = vmatmul.bf16.gmra.mxu0 %v367
        %v728 = vpop.f32.mrf.mxu0
        %v729 = vadd.f32 %v716, %v728
        %v730 = vpop.f32.mrf.mxu0
        %731 = vdwg.mxu0
        %732 = vmatpush.bf16.msra.mxu0 %v624
        %733 = vmatpush.bf16.msra.mxu0 %v622
        %734 = vmatpush.bf16.msra.mxu0 %v620
        %735 = vmatpush.bf16.msra.mxu0 %v618
        %736 = vmatpush.bf16.msra.mxu0 %v616
        %737 = vmatpush.bf16.msra.mxu0 %v614
        %738 = vmatpush.bf16.msra.mxu0 %v612
        %739 = vmatpush.bf16.msra.mxu0 %v610
        %740 = vmatmul.bf16.gmra.mxu0 %v374
        %v741 = vpop.f32.mrf.mxu0
        %v742 = vadd.f32 %v729, %v741
        %v743 = vpop.f32.mrf.mxu0
        %744 = vdwg.mxu0
        %745 = vmatpush.bf16.msra.mxu0 %v640
        %746 = vmatpush.bf16.msra.mxu0 %v638
        %747 = vmatpush.bf16.msra.mxu0 %v636
        %748 = vmatpush.bf16.msra.mxu0 %v634
        %749 = vmatpush.bf16.msra.mxu0 %v632
        %750 = vmatpush.bf16.msra.mxu0 %v630
        %751 = vmatpush.bf16.msra.mxu0 %v628
        %752 = vmatpush.bf16.msra.mxu0 %v626
        %753 = vmatmul.bf16.gmra.mxu0 %v381
        %v754 = vpop.f32.mrf.mxu0
        %v755 = vadd.f32 %v742, %v754
        %v756 = vpop.f32.mrf.mxu0
        %757 = vdwg.mxu0
        %758 = vmatpush.bf16.msra.mxu0 %v593
        %759 = vmatpush.bf16.msra.mxu0 %v591
        %760 = vmatpush.bf16.msra.mxu0 %v589
        %761 = vmatpush.bf16.msra.mxu0 %v587
        %762 = vmatpush.bf16.msra.mxu0 %v585
        %763 = vmatpush.bf16.msra.mxu0 %v583
        %764 = vmatpush.bf16.msra.mxu0 %v581
        %765 = vmatpush.bf16.msra.mxu0 %v579
        %766 = vmatmul.bf16.gmra.mxu0 %v360
        %v767 = vpop.f32.mrf.mxu0
        %v768 = vadd.f32 0.0, %v767
        %v769 = vpop.f32.mrf.mxu0
        %770 = vdwg.mxu0
        %771 = vmatpush.bf16.msra.mxu0 %v609
        %772 = vmatpush.bf16.msra.mxu0 %v607
        %773 = vmatpush.bf16.msra.mxu0 %v605
        %774 = vmatpush.bf16.msra.mxu0 %v603
        %775 = vmatpush.bf16.msra.mxu0 %v601
        %776 = vmatpush.bf16.msra.mxu0 %v599
        %777 = vmatpush.bf16.msra.mxu0 %v597
        %778 = vmatpush.bf16.msra.mxu0 %v595
        %779 = vmatmul.bf16.gmra.mxu0 %v367
        %v780 = vpop.f32.mrf.mxu0
        %v781 = vadd.f32 %v768, %v780
        %v782 = vpop.f32.mrf.mxu0
        %783 = vdwg.mxu0
        %784 = vmatpush.bf16.msra.mxu0 %v625
        %785 = vmatpush.bf16.msra.mxu0 %v623
        %786 = vmatpush.bf16.msra.mxu0 %v621
        %787 = vmatpush.bf16.msra.mxu0 %v619
        %788 = vmatpush.bf16.msra.mxu0 %v617
        %789 = vmatpush.bf16.msra.mxu0 %v615
        %790 = vmatpush.bf16.msra.mxu0 %v613
        %791 = vmatpush.bf16.msra.mxu0 %v611
        %792 = vmatmul.bf16.gmra.mxu0 %v374
        %v793 = vpop.f32.mrf.mxu0
        %v794 = vadd.f32 %v781, %v793
        %v795 = vpop.f32.mrf.mxu0
        %796 = vdwg.mxu0
        %797 = vmatpush.bf16.msra.mxu0 %v641
        %798 = vmatpush.bf16.msra.mxu0 %v639
        %799 = vmatpush.bf16.msra.mxu0 %v637
        %800 = vmatpush.bf16.msra.mxu0 %v635
        %801 = vmatpush.bf16.msra.mxu0 %v633
        %802 = vmatpush.bf16.msra.mxu0 %v631
        %803 = vmatpush.bf16.msra.mxu0 %v629
        %804 = vmatpush.bf16.msra.mxu0 %v627
        %805 = vmatmul.bf16.gmra.mxu0 %v381
        %v806 = vpop.f32.mrf.mxu0
        %v807 = vadd.f32 %v794, %v806
        %v808 = vpop.f32.mrf.mxu0
        %809 = vdwg.mxu0
        %v812 = vunpack.c.l.b16 %v203
        %v813 = vunpack.c.h.b16 %v203
        %v814 = vunpack.c.l.b16 %v204
        %v815 = vunpack.c.h.b16 %v204
        %v816 = vpack.c.b16 %v812, %v812
        %v817 = vpack.c.b16 %v813, %v813
        %v818 = vpack.c.b16 %v814, %v814
        %v819 = vpack.c.b16 %v815, %v815
        %v888 = vunpack.c.l.b16 %v205
        %v889 = vunpack.c.h.b16 %v205
        %v890 = vunpack.c.l.b16 %v206
        %v891 = vunpack.c.h.b16 %v206
        %v892 = vunpack.c.l.b16 %v207
        %v893 = vunpack.c.h.b16 %v207
        %v894 = vunpack.c.l.b16 %v208
        %v895 = vunpack.c.h.b16 %v208
        %v896 = vunpack.c.l.b16 %v209
        %v897 = vunpack.c.h.b16 %v209
        %v898 = vunpack.c.l.b16 %v210
        %v899 = vunpack.c.h.b16 %v210
        %v900 = vunpack.c.l.b16 %v211
        %v901 = vunpack.c.h.b16 %v211
        %v902 = vunpack.c.l.b16 %v212
        %v903 = vunpack.c.h.b16 %v212
        %v904 = vunpack.c.l.b16 %v213
        %v905 = vunpack.c.h.b16 %v213
        %v906 = vunpack.c.l.b16 %v214
        %v907 = vunpack.c.h.b16 %v214
        %v908 = vunpack.c.l.b16 %v215
        %v909 = vunpack.c.h.b16 %v215
        %v910 = vunpack.c.l.b16 %v216
        %v911 = vunpack.c.h.b16 %v216
        %v912 = vunpack.c.l.b16 %v217
        %v913 = vunpack.c.h.b16 %v217
        %v914 = vunpack.c.l.b16 %v218
        %v915 = vunpack.c.h.b16 %v218
        %v916 = vunpack.c.l.b16 %v219
        %v917 = vunpack.c.h.b16 %v219
        %v918 = vunpack.c.l.b16 %v220
        %v919 = vunpack.c.h.b16 %v220
        %v920 = vunpack.c.l.b16 %v221
        %v921 = vunpack.c.h.b16 %v221
        %v922 = vunpack.c.l.b16 %v222
        %v923 = vunpack.c.h.b16 %v222
        %v924 = vunpack.c.l.b16 %v223
        %v925 = vunpack.c.h.b16 %v223
        %v926 = vunpack.c.l.b16 %v224
        %v927 = vunpack.c.h.b16 %v224
        %v928 = vunpack.c.l.b16 %v225
        %v929 = vunpack.c.h.b16 %v225
        %v930 = vunpack.c.l.b16 %v226
        %v931 = vunpack.c.h.b16 %v226
        %v932 = vunpack.c.l.b16 %v227
        %v933 = vunpack.c.h.b16 %v227
        %v934 = vunpack.c.l.b16 %v228
        %v935 = vunpack.c.h.b16 %v228
        %v936 = vunpack.c.l.b16 %v229
        %v937 = vunpack.c.h.b16 %v229
        %v938 = vunpack.c.l.b16 %v230
        %v939 = vunpack.c.h.b16 %v230
        %v940 = vunpack.c.l.b16 %v231
        %v941 = vunpack.c.h.b16 %v231
        %v942 = vunpack.c.l.b16 %v232
        %v943 = vunpack.c.h.b16 %v232
        %v944 = vunpack.c.l.b16 %v233
        %v945 = vunpack.c.h.b16 %v233
        %v946 = vunpack.c.l.b16 %v234
        %v947 = vunpack.c.h.b16 %v234
        %v948 = vunpack.c.l.b16 %v235
        %v949 = vunpack.c.h.b16 %v235
        %v950 = vunpack.c.l.b16 %v236
        %v951 = vunpack.c.h.b16 %v236
        %v952 = vunpack.c.l.b16 %v237
        %v953 = vunpack.c.h.b16 %v237
        %v954 = vunpack.c.l.b16 %v238
        %v955 = vunpack.c.h.b16 %v238
        %v956 = vunpack.c.l.b16 %v239
        %v957 = vunpack.c.h.b16 %v239
        %v958 = vunpack.c.l.b16 %v240
        %v959 = vunpack.c.h.b16 %v240
        %v960 = vunpack.c.l.b16 %v241
        %v961 = vunpack.c.h.b16 %v241
        %v962 = vunpack.c.l.b16 %v242
        %v963 = vunpack.c.h.b16 %v242
        %v964 = vunpack.c.l.b16 %v243
        %v965 = vunpack.c.h.b16 %v243
        %v966 = vunpack.c.l.b16 %v244
        %v967 = vunpack.c.h.b16 %v244
        %v968 = vunpack.c.l.b16 %v245
        %v969 = vunpack.c.h.b16 %v245
        %v970 = vunpack.c.l.b16 %v246
        %v971 = vunpack.c.h.b16 %v246
        %v972 = vunpack.c.l.b16 %v247
        %v973 = vunpack.c.h.b16 %v247
        %v974 = vunpack.c.l.b16 %v248
        %v975 = vunpack.c.h.b16 %v248
        %v976 = vunpack.c.l.b16 %v249
        %v977 = vunpack.c.h.b16 %v249
        %v978 = vunpack.c.l.b16 %v250
        %v979 = vunpack.c.h.b16 %v250
        %v980 = vunpack.c.l.b16 %v251
        %v981 = vunpack.c.h.b16 %v251
        %v982 = vunpack.c.l.b16 %v252
        %v983 = vunpack.c.h.b16 %v252
        %v984 = vunpack.c.l.b16 %v253
        %v985 = vunpack.c.h.b16 %v253
        %v986 = vunpack.c.l.b16 %v254
        %v987 = vunpack.c.h.b16 %v254
        %v988 = vunpack.c.l.b16 %v255
        %v989 = vunpack.c.h.b16 %v255
        %v990 = vunpack.c.l.b16 %v256
        %v991 = vunpack.c.h.b16 %v256
        %v992 = vunpack.c.l.b16 %v257
        %v993 = vunpack.c.h.b16 %v257
        %v994 = vunpack.c.l.b16 %v258
        %v995 = vunpack.c.h.b16 %v258
        %v996 = vunpack.c.l.b16 %v259
        %v997 = vunpack.c.h.b16 %v259
        %v998 = vunpack.c.l.b16 %v260
        %v999 = vunpack.c.h.b16 %v260
        %v1000 = vunpack.c.l.b16 %v261
        %v1001 = vunpack.c.h.b16 %v261
        %v1002 = vunpack.c.l.b16 %v262
        %v1003 = vunpack.c.h.b16 %v262
        %v1004 = vunpack.c.l.b16 %v263
        %v1005 = vunpack.c.h.b16 %v263
        %v1006 = vunpack.c.l.b16 %v264
        %v1007 = vunpack.c.h.b16 %v264
        %v1008 = vunpack.c.l.b16 %v265
        %v1009 = vunpack.c.h.b16 %v265
        %v1010 = vunpack.c.l.b16 %v266
        %v1011 = vunpack.c.h.b16 %v266
        %v1012 = vunpack.c.l.b16 %v267
        %v1013 = vunpack.c.h.b16 %v267
        %v1014 = vunpack.c.l.b16 %v268
        %v1015 = vunpack.c.h.b16 %v268
        %v1016 = vpack.c.b16 %v890, %v888
        %v1017 = vpack.c.b16 %v891, %v889
        %v1018 = vpack.c.b16 %v894, %v892
        %v1019 = vpack.c.b16 %v895, %v893
        %v1020 = vpack.c.b16 %v898, %v896
        %v1021 = vpack.c.b16 %v899, %v897
        %v1022 = vpack.c.b16 %v902, %v900
        %v1023 = vpack.c.b16 %v903, %v901
        %v1024 = vpack.c.b16 %v906, %v904
        %v1025 = vpack.c.b16 %v907, %v905
        %v1026 = vpack.c.b16 %v910, %v908
        %v1027 = vpack.c.b16 %v911, %v909
        %v1028 = vpack.c.b16 %v914, %v912
        %v1029 = vpack.c.b16 %v915, %v913
        %v1030 = vpack.c.b16 %v918, %v916
        %v1031 = vpack.c.b16 %v919, %v917
        %v1032 = vpack.c.b16 %v922, %v920
        %v1033 = vpack.c.b16 %v923, %v921
        %v1034 = vpack.c.b16 %v926, %v924
        %v1035 = vpack.c.b16 %v927, %v925
        %v1036 = vpack.c.b16 %v930, %v928
        %v1037 = vpack.c.b16 %v931, %v929
        %v1038 = vpack.c.b16 %v934, %v932
        %v1039 = vpack.c.b16 %v935, %v933
        %v1040 = vpack.c.b16 %v938, %v936
        %v1041 = vpack.c.b16 %v939, %v937
        %v1042 = vpack.c.b16 %v942, %v940
        %v1043 = vpack.c.b16 %v943, %v941
        %v1044 = vpack.c.b16 %v946, %v944
        %v1045 = vpack.c.b16 %v947, %v945
        %v1046 = vpack.c.b16 %v950, %v948
        %v1047 = vpack.c.b16 %v951, %v949
        %v1048 = vpack.c.b16 %v954, %v952
        %v1049 = vpack.c.b16 %v955, %v953
        %v1050 = vpack.c.b16 %v958, %v956
        %v1051 = vpack.c.b16 %v959, %v957
        %v1052 = vpack.c.b16 %v962, %v960
        %v1053 = vpack.c.b16 %v963, %v961
        %v1054 = vpack.c.b16 %v966, %v964
        %v1055 = vpack.c.b16 %v967, %v965
        %v1056 = vpack.c.b16 %v970, %v968
        %v1057 = vpack.c.b16 %v971, %v969
        %v1058 = vpack.c.b16 %v974, %v972
        %v1059 = vpack.c.b16 %v975, %v973
        %v1060 = vpack.c.b16 %v978, %v976
        %v1061 = vpack.c.b16 %v979, %v977
        %v1062 = vpack.c.b16 %v982, %v980
        %v1063 = vpack.c.b16 %v983, %v981
        %v1064 = vpack.c.b16 %v986, %v984
        %v1065 = vpack.c.b16 %v987, %v985
        %v1066 = vpack.c.b16 %v990, %v988
        %v1067 = vpack.c.b16 %v991, %v989
        %v1068 = vpack.c.b16 %v994, %v992
        %v1069 = vpack.c.b16 %v995, %v993
        %v1070 = vpack.c.b16 %v998, %v996
        %v1071 = vpack.c.b16 %v999, %v997
        %v1072 = vpack.c.b16 %v1002, %v1000
        %v1073 = vpack.c.b16 %v1003, %v1001
        %v1074 = vpack.c.b16 %v1006, %v1004
        %v1075 = vpack.c.b16 %v1007, %v1005
        %v1076 = vpack.c.b16 %v1010, %v1008
        %v1077 = vpack.c.b16 %v1011, %v1009
        %v1078 = vpack.c.b16 %v1014, %v1012
        %v1079 = vpack.c.b16 %v1015, %v1013
        %1144 = vmatpush.bf16.msra.mxu0 %v1030
        %1145 = vmatpush.bf16.msra.mxu0 %v1028
        %1146 = vmatpush.bf16.msra.mxu0 %v1026
        %1147 = vmatpush.bf16.msra.mxu0 %v1024
        %1148 = vmatpush.bf16.msra.mxu0 %v1022
        %1149 = vmatpush.bf16.msra.mxu0 %v1020
        %1150 = vmatpush.bf16.msra.mxu0 %v1018
        %1151 = vmatpush.bf16.msra.mxu0 %v1016
        %1152 = vmatmul.bf16.gmra.mxu0 %v816
        %v1153 = vpop.f32.mrf.mxu0
        %v1154 = vadd.f32 %v755, %v1153
        %v1155 = vpop.f32.mrf.mxu0
        %1156 = vdwg.mxu0
        %1157 = vmatpush.bf16.msra.mxu0 %v1046
        %1158 = vmatpush.bf16.msra.mxu0 %v1044
        %1159 = vmatpush.bf16.msra.mxu0 %v1042
        %1160 = vmatpush.bf16.msra.mxu0 %v1040
        %1161 = vmatpush.bf16.msra.mxu0 %v1038
        %1162 = vmatpush.bf16.msra.mxu0 %v1036
        %1163 = vmatpush.bf16.msra.mxu0 %v1034
        %1164 = vmatpush.bf16.msra.mxu0 %v1032
        %1165 = vmatmul.bf16.gmra.mxu0 %v817
        %v1166 = vpop.f32.mrf.mxu0
        %v1167 = vadd.f32 %v1154, %v1166
        %v1168 = vpop.f32.mrf.mxu0
        %1169 = vdwg.mxu0
        %1170 = vmatpush.bf16.msra.mxu0 %v1062
        %1171 = vmatpush.bf16.msra.mxu0 %v1060
        %1172 = vmatpush.bf16.msra.mxu0 %v1058
        %1173 = vmatpush.bf16.msra.mxu0 %v1056
        %1174 = vmatpush.bf16.msra.mxu0 %v1054
        %1175 = vmatpush.bf16.msra.mxu0 %v1052
        %1176 = vmatpush.bf16.msra.mxu0 %v1050
        %1177 = vmatpush.bf16.msra.mxu0 %v1048
        %1178 = vmatmul.bf16.gmra.mxu0 %v818
        %v1179 = vpop.f32.mrf.mxu0
        %v1180 = vadd.f32 %v1167, %v1179
        %v1181 = vpop.f32.mrf.mxu0
        %1182 = vdwg.mxu0
        %1183 = vmatpush.bf16.msra.mxu0 %v1078
        %1184 = vmatpush.bf16.msra.mxu0 %v1076
        %1185 = vmatpush.bf16.msra.mxu0 %v1074
        %1186 = vmatpush.bf16.msra.mxu0 %v1072
        %1187 = vmatpush.bf16.msra.mxu0 %v1070
        %1188 = vmatpush.bf16.msra.mxu0 %v1068
        %1189 = vmatpush.bf16.msra.mxu0 %v1066
        %1190 = vmatpush.bf16.msra.mxu0 %v1064
        %1191 = vmatmul.bf16.gmra.mxu0 %v819
        %v1192 = vpop.f32.mrf.mxu0
        %v1193 = vadd.f32 %v1180, %v1192
        %v1194 = vpop.f32.mrf.mxu0
        %1195 = vdwg.mxu0
        %1196 = vmatpush.bf16.msra.mxu0 %v1031
        %1197 = vmatpush.bf16.msra.mxu0 %v1029
        %1198 = vmatpush.bf16.msra.mxu0 %v1027
        %1199 = vmatpush.bf16.msra.mxu0 %v1025
        %1200 = vmatpush.bf16.msra.mxu0 %v1023
        %1201 = vmatpush.bf16.msra.mxu0 %v1021
        %1202 = vmatpush.bf16.msra.mxu0 %v1019
        %1203 = vmatpush.bf16.msra.mxu0 %v1017
        %1204 = vmatmul.bf16.gmra.mxu0 %v816
        %v1205 = vpop.f32.mrf.mxu0
        %v1206 = vadd.f32 %v807, %v1205
        %v1207 = vpop.f32.mrf.mxu0
        %1208 = vdwg.mxu0
        %1209 = vmatpush.bf16.msra.mxu0 %v1047
        %1210 = vmatpush.bf16.msra.mxu0 %v1045
        %1211 = vmatpush.bf16.msra.mxu0 %v1043
        %1212 = vmatpush.bf16.msra.mxu0 %v1041
        %1213 = vmatpush.bf16.msra.mxu0 %v1039
        %1214 = vmatpush.bf16.msra.mxu0 %v1037
        %1215 = vmatpush.bf16.msra.mxu0 %v1035
        %1216 = vmatpush.bf16.msra.mxu0 %v1033
        %1217 = vmatmul.bf16.gmra.mxu0 %v817
        %v1218 = vpop.f32.mrf.mxu0
        %v1219 = vadd.f32 %v1206, %v1218
        %v1220 = vpop.f32.mrf.mxu0
        %1221 = vdwg.mxu0
        %1222 = vmatpush.bf16.msra.mxu0 %v1063
        %1223 = vmatpush.bf16.msra.mxu0 %v1061
        %1224 = vmatpush.bf16.msra.mxu0 %v1059
        %1225 = vmatpush.bf16.msra.mxu0 %v1057
        %1226 = vmatpush.bf16.msra.mxu0 %v1055
        %1227 = vmatpush.bf16.msra.mxu0 %v1053
        %1228 = vmatpush.bf16.msra.mxu0 %v1051
        %1229 = vmatpush.bf16.msra.mxu0 %v1049
        %1230 = vmatmul.bf16.gmra.mxu0 %v818
        %v1231 = vpop.f32.mrf.mxu0
        %v1232 = vadd.f32 %v1219, %v1231
        %v1233 = vpop.f32.mrf.mxu0
        %1234 = vdwg.mxu0
        %1235 = vmatpush.bf16.msra.mxu0 %v1079
        %1236 = vmatpush.bf16.msra.mxu0 %v1077
        %1237 = vmatpush.bf16.msra.mxu0 %v1075
        %1238 = vmatpush.bf16.msra.mxu0 %v1073
        %1239 = vmatpush.bf16.msra.mxu0 %v1071
        %1240 = vmatpush.bf16.msra.mxu0 %v1069
        %1241 = vmatpush.bf16.msra.mxu0 %v1067
        %1242 = vmatpush.bf16.msra.mxu0 %v1065
        %1243 = vmatmul.bf16.gmra.mxu0 %v819
        %v1244 = vpop.f32.mrf.mxu0
        %v1245 = vadd.f32 %v1232, %v1244
        %v1246 = vpop.f32.mrf.mxu0
        %1247 = vdwg.mxu0
        %v1248 = vld [vmem:[%s197] sm:$0xcc]
        %v1249 = vld [vmem:[%s197 + $0x8] sm:$0xcc]
        %v1250 = vld [vmem:[%s197 + $0x10] sm:$0x33]
        %v1251 = vld [vmem:[%s197 + $0x18] sm:$0x33]
        %s1252 = scalar_lea.vmem [#allocation2], 1024
        %v1253 = vld [vmem:[%s1252] sm:$0xff]
        %v1254 = vld [vmem:[%s1252 + $0x8] sm:$0xff]
        %v1255 = vld [vmem:[%s1252 + $0x10] sm:$0xff]
        %v1256 = vld [vmem:[%s1252 + $0x18] sm:$0xff]
        %v1257 = vld [vmem:[%s1252 + $0x20] sm:$0xff]
        %v1258 = vld [vmem:[%s1252 + $0x28] sm:$0xff]
        %v1259 = vld [vmem:[%s1252 + $0x30] sm:$0xff]
        %v1260 = vld [vmem:[%s1252 + $0x38] sm:$0xff]
        %v1261 = vld [vmem:[%s1252 + $0x40] sm:$0xff]
        %v1262 = vld [vmem:[%s1252 + $0x48] sm:$0xff]
        %v1263 = vld [vmem:[%s1252 + $0x50] sm:$0xff]
        %v1264 = vld [vmem:[%s1252 + $0x58] sm:$0xff]
        %v1265 = vld [vmem:[%s1252 + $0x60] sm:$0xff]
        %v1266 = vld [vmem:[%s1252 + $0x68] sm:$0xff]
        %v1267 = vld [vmem:[%s1252 + $0x70] sm:$0xff]
        %v1268 = vld [vmem:[%s1252 + $0x78] sm:$0xff]
        %v1269 = vld [vmem:[%s1252 + $0x80] sm:$0xff]
        %v1270 = vld [vmem:[%s1252 + $0x88] sm:$0xff]
        %v1271 = vld [vmem:[%s1252 + $0x90] sm:$0xff]
        %v1272 = vld [vmem:[%s1252 + $0x98] sm:$0xff]
        %v1273 = vld [vmem:[%s1252 + $0xa0] sm:$0xff]
        %v1274 = vld [vmem:[%s1252 + $0xa8] sm:$0xff]
        %v1275 = vld [vmem:[%s1252 + $0xb0] sm:$0xff]
        %v1276 = vld [vmem:[%s1252 + $0xb8] sm:$0xff]
        %v1277 = vld [vmem:[%s1252 + $0xc0] sm:$0xff]
        %v1278 = vld [vmem:[%s1252 + $0xc8] sm:$0xff]
        %v1279 = vld [vmem:[%s1252 + $0xd0] sm:$0xff]
        %v1280 = vld [vmem:[%s1252 + $0xd8] sm:$0xff]
        %v1281 = vld [vmem:[%s1252 + $0xe0] sm:$0xff]
        %v1282 = vld [vmem:[%s1252 + $0xe8] sm:$0xff]
        %v1283 = vld [vmem:[%s1252 + $0xf0] sm:$0xff]
        %v1284 = vld [vmem:[%s1252 + $0xf8] sm:$0xff]
        %v1285 = vld [vmem:[%s1252 + $0x100] sm:$0xff]
        %v1286 = vld [vmem:[%s1252 + $0x108] sm:$0xff]
        %v1287 = vld [vmem:[%s1252 + $0x110] sm:$0xff]
        %v1288 = vld [vmem:[%s1252 + $0x118] sm:$0xff]
        %v1289 = vld [vmem:[%s1252 + $0x120] sm:$0xff]
        %v1290 = vld [vmem:[%s1252 + $0x128] sm:$0xff]
        %v1291 = vld [vmem:[%s1252 + $0x130] sm:$0xff]
        %v1292 = vld [vmem:[%s1252 + $0x138] sm:$0xff]
        %v1293 = vld [vmem:[%s1252 + $0x140] sm:$0xff]
        %v1294 = vld [vmem:[%s1252 + $0x148] sm:$0xff]
        %v1295 = vld [vmem:[%s1252 + $0x150] sm:$0xff]
        %v1296 = vld [vmem:[%s1252 + $0x158] sm:$0xff]
        %v1297 = vld [vmem:[%s1252 + $0x160] sm:$0xff]
        %v1298 = vld [vmem:[%s1252 + $0x168] sm:$0xff]
        %v1299 = vld [vmem:[%s1252 + $0x170] sm:$0xff]
        %v1300 = vld [vmem:[%s1252 + $0x178] sm:$0xff]
        %v1301 = vld [vmem:[%s1252 + $0x180] sm:$0xff]
        %v1302 = vld [vmem:[%s1252 + $0x188] sm:$0xff]
        %v1303 = vld [vmem:[%s1252 + $0x190] sm:$0xff]
        %v1304 = vld [vmem:[%s1252 + $0x198] sm:$0xff]
        %v1305 = vld [vmem:[%s1252 + $0x1a0] sm:$0xff]
        %v1306 = vld [vmem:[%s1252 + $0x1a8] sm:$0xff]
        %v1307 = vld [vmem:[%s1252 + $0x1b0] sm:$0xff]
        %v1308 = vld [vmem:[%s1252 + $0x1b8] sm:$0xff]
        %v1309 = vld [vmem:[%s1252 + $0x1c0] sm:$0xff]
        %v1310 = vld [vmem:[%s1252 + $0x1c8] sm:$0xff]
        %v1311 = vld [vmem:[%s1252 + $0x1d0] sm:$0xff]
        %v1312 = vld [vmem:[%s1252 + $0x1d8] sm:$0xff]
        %v1313 = vld [vmem:[%s1252 + $0x1e0] sm:$0xff]
        %v1314 = vld [vmem:[%s1252 + $0x1e8] sm:$0xff]
        %v1315 = vld [vmem:[%s1252 + $0x1f0] sm:$0xff]
        %v1316 = vld [vmem:[%s1252 + $0x1f8] sm:$0xff]
        %v1321 = vunpack.c.l.b16 %v1248
        %v1322 = vunpack.c.h.b16 %v1248
        %v1323 = vunpack.c.l.b16 %v1249
        %v1324 = vunpack.c.h.b16 %v1249
        %v1325 = vunpack.c.l.b16 %v1250
        %v1326 = vunpack.c.h.b16 %v1250
        %v1327 = vunpack.c.l.b16 %v1251
        %v1328 = vunpack.c.h.b16 %v1251
        %v1329 = vpack.c.b16 %v1325, %v1321
        %v1330 = vpack.c.b16 %v1326, %v1322
        %v1331 = vpack.c.b16 %v1327, %v1323
        %v1332 = vpack.c.b16 %v1328, %v1324
        %v1333 = vrot.slane %v1329, 2
        %v1334 = vrot.slane %v1330, 2
        %v1335 = vrot.slane %v1331, 2
        %v1336 = vrot.slane %v1332, 2
        %v1405 = vunpack.c.l.b16 %v1253
        %v1406 = vunpack.c.h.b16 %v1253
        %v1407 = vunpack.c.l.b16 %v1254
        %v1408 = vunpack.c.h.b16 %v1254
        %v1409 = vunpack.c.l.b16 %v1255
        %v1410 = vunpack.c.h.b16 %v1255
        %v1411 = vunpack.c.l.b16 %v1256
        %v1412 = vunpack.c.h.b16 %v1256
        %v1413 = vunpack.c.l.b16 %v1257
        %v1414 = vunpack.c.h.b16 %v1257
        %v1415 = vunpack.c.l.b16 %v1258
        %v1416 = vunpack.c.h.b16 %v1258
        %v1417 = vunpack.c.l.b16 %v1259
        %v1418 = vunpack.c.h.b16 %v1259
        %v1419 = vunpack.c.l.b16 %v1260
        %v1420 = vunpack.c.h.b16 %v1260
        %v1421 = vunpack.c.l.b16 %v1261
        %v1422 = vunpack.c.h.b16 %v1261
        %v1423 = vunpack.c.l.b16 %v1262
        %v1424 = vunpack.c.h.b16 %v1262
        %v1425 = vunpack.c.l.b16 %v1263
        %v1426 = vunpack.c.h.b16 %v1263
        %v1427 = vunpack.c.l.b16 %v1264
        %v1428 = vunpack.c.h.b16 %v1264
        %v1429 = vunpack.c.l.b16 %v1265
        %v1430 = vunpack.c.h.b16 %v1265
        %v1431 = vunpack.c.l.b16 %v1266
        %v1432 = vunpack.c.h.b16 %v1266
        %v1433 = vunpack.c.l.b16 %v1267
        %v1434 = vunpack.c.h.b16 %v1267
        %v1435 = vunpack.c.l.b16 %v1268
        %v1436 = vunpack.c.h.b16 %v1268
        %v1437 = vunpack.c.l.b16 %v1269
        %v1438 = vunpack.c.h.b16 %v1269
        %v1439 = vunpack.c.l.b16 %v1270
        %v1440 = vunpack.c.h.b16 %v1270
        %v1441 = vunpack.c.l.b16 %v1271
        %v1442 = vunpack.c.h.b16 %v1271
        %v1443 = vunpack.c.l.b16 %v1272
        %v1444 = vunpack.c.h.b16 %v1272
        %v1445 = vunpack.c.l.b16 %v1273
        %v1446 = vunpack.c.h.b16 %v1273
        %v1447 = vunpack.c.l.b16 %v1274
        %v1448 = vunpack.c.h.b16 %v1274
        %v1449 = vunpack.c.l.b16 %v1275
        %v1450 = vunpack.c.h.b16 %v1275
        %v1451 = vunpack.c.l.b16 %v1276
        %v1452 = vunpack.c.h.b16 %v1276
        %v1453 = vunpack.c.l.b16 %v1277
        %v1454 = vunpack.c.h.b16 %v1277
        %v1455 = vunpack.c.l.b16 %v1278
        %v1456 = vunpack.c.h.b16 %v1278
        %v1457 = vunpack.c.l.b16 %v1279
        %v1458 = vunpack.c.h.b16 %v1279
        %v1459 = vunpack.c.l.b16 %v1280
        %v1460 = vunpack.c.h.b16 %v1280
        %v1461 = vunpack.c.l.b16 %v1281
        %v1462 = vunpack.c.h.b16 %v1281
        %v1463 = vunpack.c.l.b16 %v1282
        %v1464 = vunpack.c.h.b16 %v1282
        %v1465 = vunpack.c.l.b16 %v1283
        %v1466 = vunpack.c.h.b16 %v1283
        %v1467 = vunpack.c.l.b16 %v1284
        %v1468 = vunpack.c.h.b16 %v1284
        %v1469 = vunpack.c.l.b16 %v1285
        %v1470 = vunpack.c.h.b16 %v1285
        %v1471 = vunpack.c.l.b16 %v1286
        %v1472 = vunpack.c.h.b16 %v1286
        %v1473 = vunpack.c.l.b16 %v1287
        %v1474 = vunpack.c.h.b16 %v1287
        %v1475 = vunpack.c.l.b16 %v1288
        %v1476 = vunpack.c.h.b16 %v1288
        %v1477 = vunpack.c.l.b16 %v1289
        %v1478 = vunpack.c.h.b16 %v1289
        %v1479 = vunpack.c.l.b16 %v1290
        %v1480 = vunpack.c.h.b16 %v1290
        %v1481 = vunpack.c.l.b16 %v1291
        %v1482 = vunpack.c.h.b16 %v1291
        %v1483 = vunpack.c.l.b16 %v1292
        %v1484 = vunpack.c.h.b16 %v1292
        %v1485 = vunpack.c.l.b16 %v1293
        %v1486 = vunpack.c.h.b16 %v1293
        %v1487 = vunpack.c.l.b16 %v1294
        %v1488 = vunpack.c.h.b16 %v1294
        %v1489 = vunpack.c.l.b16 %v1295
        %v1490 = vunpack.c.h.b16 %v1295
        %v1491 = vunpack.c.l.b16 %v1296
        %v1492 = vunpack.c.h.b16 %v1296
        %v1493 = vunpack.c.l.b16 %v1297
        %v1494 = vunpack.c.h.b16 %v1297
        %v1495 = vunpack.c.l.b16 %v1298
        %v1496 = vunpack.c.h.b16 %v1298
        %v1497 = vunpack.c.l.b16 %v1299
        %v1498 = vunpack.c.h.b16 %v1299
        %v1499 = vunpack.c.l.b16 %v1300
        %v1500 = vunpack.c.h.b16 %v1300
        %v1501 = vunpack.c.l.b16 %v1301
        %v1502 = vunpack.c.h.b16 %v1301
        %v1503 = vunpack.c.l.b16 %v1302
        %v1504 = vunpack.c.h.b16 %v1302
        %v1505 = vunpack.c.l.b16 %v1303
        %v1506 = vunpack.c.h.b16 %v1303
        %v1507 = vunpack.c.l.b16 %v1304
        %v1508 = vunpack.c.h.b16 %v1304
        %v1509 = vunpack.c.l.b16 %v1305
        %v1510 = vunpack.c.h.b16 %v1305
        %v1511 = vunpack.c.l.b16 %v1306
        %v1512 = vunpack.c.h.b16 %v1306
        %v1513 = vunpack.c.l.b16 %v1307
        %v1514 = vunpack.c.h.b16 %v1307
        %v1515 = vunpack.c.l.b16 %v1308
        %v1516 = vunpack.c.h.b16 %v1308
        %v1517 = vunpack.c.l.b16 %v1309
        %v1518 = vunpack.c.h.b16 %v1309
        %v1519 = vunpack.c.l.b16 %v1310
        %v1520 = vunpack.c.h.b16 %v1310
        %v1521 = vunpack.c.l.b16 %v1311
        %v1522 = vunpack.c.h.b16 %v1311
        %v1523 = vunpack.c.l.b16 %v1312
        %v1524 = vunpack.c.h.b16 %v1312
        %v1525 = vunpack.c.l.b16 %v1313
        %v1526 = vunpack.c.h.b16 %v1313
        %v1527 = vunpack.c.l.b16 %v1314
        %v1528 = vunpack.c.h.b16 %v1314
        %v1529 = vunpack.c.l.b16 %v1315
        %v1530 = vunpack.c.h.b16 %v1315
        %v1531 = vunpack.c.l.b16 %v1316
        %v1532 = vunpack.c.h.b16 %v1316
        %v1533 = vpack.c.b16 %v1407, %v1405
        %v1534 = vpack.c.b16 %v1408, %v1406
        %v1535 = vpack.c.b16 %v1411, %v1409
        %v1536 = vpack.c.b16 %v1412, %v1410
        %v1537 = vpack.c.b16 %v1415, %v1413
        %v1538 = vpack.c.b16 %v1416, %v1414
        %v1539 = vpack.c.b16 %v1419, %v1417
        %v1540 = vpack.c.b16 %v1420, %v1418
        %v1541 = vpack.c.b16 %v1423, %v1421
        %v1542 = vpack.c.b16 %v1424, %v1422
        %v1543 = vpack.c.b16 %v1427, %v1425
        %v1544 = vpack.c.b16 %v1428, %v1426
        %v1545 = vpack.c.b16 %v1431, %v1429
        %v1546 = vpack.c.b16 %v1432, %v1430
        %v1547 = vpack.c.b16 %v1435, %v1433
        %v1548 = vpack.c.b16 %v1436, %v1434
        %v1549 = vpack.c.b16 %v1439, %v1437
        %v1550 = vpack.c.b16 %v1440, %v1438
        %v1551 = vpack.c.b16 %v1443, %v1441
        %v1552 = vpack.c.b16 %v1444, %v1442
        %v1553 = vpack.c.b16 %v1447, %v1445
        %v1554 = vpack.c.b16 %v1448, %v1446
        %v1555 = vpack.c.b16 %v1451, %v1449
        %v1556 = vpack.c.b16 %v1452, %v1450
        %v1557 = vpack.c.b16 %v1455, %v1453
        %v1558 = vpack.c.b16 %v1456, %v1454
        %v1559 = vpack.c.b16 %v1459, %v1457
        %v1560 = vpack.c.b16 %v1460, %v1458
        %v1561 = vpack.c.b16 %v1463, %v1461
        %v1562 = vpack.c.b16 %v1464, %v1462
        %v1563 = vpack.c.b16 %v1467, %v1465
        %v1564 = vpack.c.b16 %v1468, %v1466
        %v1565 = vpack.c.b16 %v1471, %v1469
        %v1566 = vpack.c.b16 %v1472, %v1470
        %v1567 = vpack.c.b16 %v1475, %v1473
        %v1568 = vpack.c.b16 %v1476, %v1474
        %v1569 = vpack.c.b16 %v1479, %v1477
        %v1570 = vpack.c.b16 %v1480, %v1478
        %v1571 = vpack.c.b16 %v1483, %v1481
        %v1572 = vpack.c.b16 %v1484, %v1482
        %v1573 = vpack.c.b16 %v1487, %v1485
        %v1574 = vpack.c.b16 %v1488, %v1486
        %v1575 = vpack.c.b16 %v1491, %v1489
        %v1576 = vpack.c.b16 %v1492, %v1490
        %v1577 = vpack.c.b16 %v1495, %v1493
        %v1578 = vpack.c.b16 %v1496, %v1494
        %v1579 = vpack.c.b16 %v1499, %v1497
        %v1580 = vpack.c.b16 %v1500, %v1498
        %v1581 = vpack.c.b16 %v1503, %v1501
        %v1582 = vpack.c.b16 %v1504, %v1502
        %v1583 = vpack.c.b16 %v1507, %v1505
        %v1584 = vpack.c.b16 %v1508, %v1506
        %v1585 = vpack.c.b16 %v1511, %v1509
        %v1586 = vpack.c.b16 %v1512, %v1510
        %v1587 = vpack.c.b16 %v1515, %v1513
        %v1588 = vpack.c.b16 %v1516, %v1514
        %v1589 = vpack.c.b16 %v1519, %v1517
        %v1590 = vpack.c.b16 %v1520, %v1518
        %v1591 = vpack.c.b16 %v1523, %v1521
        %v1592 = vpack.c.b16 %v1524, %v1522
        %v1593 = vpack.c.b16 %v1527, %v1525
        %v1594 = vpack.c.b16 %v1528, %v1526
        %v1595 = vpack.c.b16 %v1531, %v1529
        %v1596 = vpack.c.b16 %v1532, %v1530
        %1661 = vmatpush.bf16.msra.mxu0 %v1547
        %1662 = vmatpush.bf16.msra.mxu0 %v1545
        %1663 = vmatpush.bf16.msra.mxu0 %v1543
        %1664 = vmatpush.bf16.msra.mxu0 %v1541
        %1665 = vmatpush.bf16.msra.mxu0 %v1539
        %1666 = vmatpush.bf16.msra.mxu0 %v1537
        %1667 = vmatpush.bf16.msra.mxu0 %v1535
        %1668 = vmatpush.bf16.msra.mxu0 %v1533
        %1669 = vmatmul.bf16.gmra.mxu0 %v1333
        %v1670 = vpop.f32.mrf.mxu0
        %v1671 = vadd.f32 0.0, %v1670
        %v1672 = vpop.f32.mrf.mxu0
        %1673 = vdwg.mxu0
        %1674 = vmatpush.bf16.msra.mxu0 %v1563
        %1675 = vmatpush.bf16.msra.mxu0 %v1561
        %1676 = vmatpush.bf16.msra.mxu0 %v1559
        %1677 = vmatpush.bf16.msra.mxu0 %v1557
        %1678 = vmatpush.bf16.msra.mxu0 %v1555
        %1679 = vmatpush.bf16.msra.mxu0 %v1553
        %1680 = vmatpush.bf16.msra.mxu0 %v1551
        %1681 = vmatpush.bf16.msra.mxu0 %v1549
        %1682 = vmatmul.bf16.gmra.mxu0 %v1334
        %v1683 = vpop.f32.mrf.mxu0
        %v1684 = vadd.f32 %v1671, %v1683
        %v1685 = vpop.f32.mrf.mxu0
        %1686 = vdwg.mxu0
        %1687 = vmatpush.bf16.msra.mxu0 %v1579
        %1688 = vmatpush.bf16.msra.mxu0 %v1577
        %1689 = vmatpush.bf16.msra.mxu0 %v1575
        %1690 = vmatpush.bf16.msra.mxu0 %v1573
        %1691 = vmatpush.bf16.msra.mxu0 %v1571
        %1692 = vmatpush.bf16.msra.mxu0 %v1569
        %1693 = vmatpush.bf16.msra.mxu0 %v1567
        %1694 = vmatpush.bf16.msra.mxu0 %v1565
        %1695 = vmatmul.bf16.gmra.mxu0 %v1335
        %v1696 = vpop.f32.mrf.mxu0
        %v1697 = vadd.f32 %v1684, %v1696
        %v1698 = vpop.f32.mrf.mxu0
        %1699 = vdwg.mxu0
        %1700 = vmatpush.bf16.msra.mxu0 %v1595
        %1701 = vmatpush.bf16.msra.mxu0 %v1593
        %1702 = vmatpush.bf16.msra.mxu0 %v1591
        %1703 = vmatpush.bf16.msra.mxu0 %v1589
        %1704 = vmatpush.bf16.msra.mxu0 %v1587
        %1705 = vmatpush.bf16.msra.mxu0 %v1585
        %1706 = vmatpush.bf16.msra.mxu0 %v1583
        %1707 = vmatpush.bf16.msra.mxu0 %v1581
        %1708 = vmatmul.bf16.gmra.mxu0 %v1336
        %v1709 = vpop.f32.mrf.mxu0
        %v1710 = vadd.f32 %v1697, %v1709
        %v1711 = vpop.f32.mrf.mxu0
        %1712 = vdwg.mxu0
        %1713 = vmatpush.bf16.msra.mxu0 %v1548
        %1714 = vmatpush.bf16.msra.mxu0 %v1546
        %1715 = vmatpush.bf16.msra.mxu0 %v1544
        %1716 = vmatpush.bf16.msra.mxu0 %v1542
        %1717 = vmatpush.bf16.msra.mxu0 %v1540
        %1718 = vmatpush.bf16.msra.mxu0 %v1538
        %1719 = vmatpush.bf16.msra.mxu0 %v1536
        %1720 = vmatpush.bf16.msra.mxu0 %v1534
        %1721 = vmatmul.bf16.gmra.mxu0 %v1333
        %v1722 = vpop.f32.mrf.mxu0
        %v1723 = vadd.f32 0.0, %v1722
        %v1724 = vpop.f32.mrf.mxu0
        %1725 = vdwg.mxu0
        %1726 = vmatpush.bf16.msra.mxu0 %v1564
        %1727 = vmatpush.bf16.msra.mxu0 %v1562
        %1728 = vmatpush.bf16.msra.mxu0 %v1560
        %1729 = vmatpush.bf16.msra.mxu0 %v1558
        %1730 = vmatpush.bf16.msra.mxu0 %v1556
        %1731 = vmatpush.bf16.msra.mxu0 %v1554
        %1732 = vmatpush.bf16.msra.mxu0 %v1552
        %1733 = vmatpush.bf16.msra.mxu0 %v1550
        %1734 = vmatmul.bf16.gmra.mxu0 %v1334
        %v1735 = vpop.f32.mrf.mxu0
        %v1736 = vadd.f32 %v1723, %v1735
        %v1737 = vpop.f32.mrf.mxu0
        %1738 = vdwg.mxu0
        %1739 = vmatpush.bf16.msra.mxu0 %v1580
        %1740 = vmatpush.bf16.msra.mxu0 %v1578
        %1741 = vmatpush.bf16.msra.mxu0 %v1576
        %1742 = vmatpush.bf16.msra.mxu0 %v1574
        %1743 = vmatpush.bf16.msra.mxu0 %v1572
        %1744 = vmatpush.bf16.msra.mxu0 %v1570
        %1745 = vmatpush.bf16.msra.mxu0 %v1568
        %1746 = vmatpush.bf16.msra.mxu0 %v1566
        %1747 = vmatmul.bf16.gmra.mxu0 %v1335
        %v1748 = vpop.f32.mrf.mxu0
        %v1749 = vadd.f32 %v1736, %v1748
        %v1750 = vpop.f32.mrf.mxu0
        %1751 = vdwg.mxu0
        %1752 = vmatpush.bf16.msra.mxu0 %v1596
        %1753 = vmatpush.bf16.msra.mxu0 %v1594
        %1754 = vmatpush.bf16.msra.mxu0 %v1592
        %1755 = vmatpush.bf16.msra.mxu0 %v1590
        %1756 = vmatpush.bf16.msra.mxu0 %v1588
        %1757 = vmatpush.bf16.msra.mxu0 %v1586
        %1758 = vmatpush.bf16.msra.mxu0 %v1584
        %1759 = vmatpush.bf16.msra.mxu0 %v1582
        %1760 = vmatmul.bf16.gmra.mxu0 %v1336
        %v1761 = vpop.f32.mrf.mxu0
        %v1762 = vadd.f32 %v1749, %v1761
        %v1763 = vpop.f32.mrf.mxu0
        %1764 = vdwg.mxu0
        %v1765 = vadd.f32 %v1193, %v1710
        %v1766 = vadd.f32 %v1245, %v1762
        %v1767 = vld [vmem:[%s197 + $0x10] sm:$0x77]
        %v1768 = vld [vmem:[%s197 + $0x18] sm:$0x77]
        %s1769 = scalar_lea.vmem [#allocation2], 1536
        %v1770 = vld [vmem:[%s1769] sm:$0xff]
        %v1771 = vld [vmem:[%s1769 + $0x8] sm:$0xff]
        %v1772 = vld [vmem:[%s1769 + $0x10] sm:$0xff]
        %v1773 = vld [vmem:[%s1769 + $0x18] sm:$0xff]
        %v1774 = vld [vmem:[%s1769 + $0x20] sm:$0xff]
        %v1775 = vld [vmem:[%s1769 + $0x28] sm:$0xff]
        %v1776 = vld [vmem:[%s1769 + $0x30] sm:$0xff]
        %v1777 = vld [vmem:[%s1769 + $0x38] sm:$0xff]
        %v1778 = vld [vmem:[%s1769 + $0x40] sm:$0xff]
        %v1779 = vld [vmem:[%s1769 + $0x48] sm:$0xff]
        %v1780 = vld [vmem:[%s1769 + $0x50] sm:$0xff]
        %v1781 = vld [vmem:[%s1769 + $0x58] sm:$0xff]
        %v1782 = vld [vmem:[%s1769 + $0x60] sm:$0xff]
        %v1783 = vld [vmem:[%s1769 + $0x68] sm:$0xff]
        %v1784 = vld [vmem:[%s1769 + $0x70] sm:$0xff]
        %v1785 = vld [vmem:[%s1769 + $0x78] sm:$0xff]
        %v1786 = vld [vmem:[%s1769 + $0x80] sm:$0xff]
        %v1787 = vld [vmem:[%s1769 + $0x88] sm:$0xff]
        %v1788 = vld [vmem:[%s1769 + $0x90] sm:$0xff]
        %v1789 = vld [vmem:[%s1769 + $0x98] sm:$0xff]
        %v1790 = vld [vmem:[%s1769 + $0xa0] sm:$0xff]
        %v1791 = vld [vmem:[%s1769 + $0xa8] sm:$0xff]
        %v1792 = vld [vmem:[%s1769 + $0xb0] sm:$0xff]
        %v1793 = vld [vmem:[%s1769 + $0xb8] sm:$0xff]
        %v1794 = vld [vmem:[%s1769 + $0xc0] sm:$0xff]
        %v1795 = vld [vmem:[%s1769 + $0xc8] sm:$0xff]
        %v1796 = vld [vmem:[%s1769 + $0xd0] sm:$0xff]
        %v1797 = vld [vmem:[%s1769 + $0xd8] sm:$0xff]
        %v1798 = vld [vmem:[%s1769 + $0xe0] sm:$0xff]
        %v1799 = vld [vmem:[%s1769 + $0xe8] sm:$0xff]
        %v1800 = vld [vmem:[%s1769 + $0xf0] sm:$0xff]
        %v1801 = vld [vmem:[%s1769 + $0xf8] sm:$0xff]
        %v1802 = vld [vmem:[%s1769 + $0x100] sm:$0xff]
        %v1803 = vld [vmem:[%s1769 + $0x108] sm:$0xff]
        %v1804 = vld [vmem:[%s1769 + $0x110] sm:$0xff]
        %v1805 = vld [vmem:[%s1769 + $0x118] sm:$0xff]
        %v1806 = vld [vmem:[%s1769 + $0x120] sm:$0xff]
        %v1807 = vld [vmem:[%s1769 + $0x128] sm:$0xff]
        %v1808 = vld [vmem:[%s1769 + $0x130] sm:$0xff]
        %v1809 = vld [vmem:[%s1769 + $0x138] sm:$0xff]
        %v1810 = vld [vmem:[%s1769 + $0x140] sm:$0xff]
        %v1811 = vld [vmem:[%s1769 + $0x148] sm:$0xff]
        %v1812 = vld [vmem:[%s1769 + $0x150] sm:$0xff]
        %v1813 = vld [vmem:[%s1769 + $0x158] sm:$0xff]
        %v1814 = vld [vmem:[%s1769 + $0x160] sm:$0xff]
        %v1815 = vld [vmem:[%s1769 + $0x168] sm:$0xff]
        %v1816 = vld [vmem:[%s1769 + $0x170] sm:$0xff]
        %v1817 = vld [vmem:[%s1769 + $0x178] sm:$0xff]
        %v1818 = vld [vmem:[%s1769 + $0x180] sm:$0xff]
        %v1819 = vld [vmem:[%s1769 + $0x188] sm:$0xff]
        %v1820 = vld [vmem:[%s1769 + $0x190] sm:$0xff]
        %v1821 = vld [vmem:[%s1769 + $0x198] sm:$0xff]
        %v1822 = vld [vmem:[%s1769 + $0x1a0] sm:$0xff]
        %v1823 = vld [vmem:[%s1769 + $0x1a8] sm:$0xff]
        %v1824 = vld [vmem:[%s1769 + $0x1b0] sm:$0xff]
        %v1825 = vld [vmem:[%s1769 + $0x1b8] sm:$0xff]
        %v1826 = vld [vmem:[%s1769 + $0x1c0] sm:$0xff]
        %v1827 = vld [vmem:[%s1769 + $0x1c8] sm:$0xff]
        %v1828 = vld [vmem:[%s1769 + $0x1d0] sm:$0xff]
        %v1829 = vld [vmem:[%s1769 + $0x1d8] sm:$0xff]
        %v1830 = vld [vmem:[%s1769 + $0x1e0] sm:$0xff]
        %v1831 = vld [vmem:[%s1769 + $0x1e8] sm:$0xff]
        %v1832 = vld [vmem:[%s1769 + $0x1f0] sm:$0xff]
        %v1833 = vld [vmem:[%s1769 + $0x1f8] sm:$0xff]
        %v1836 = vunpack.c.l.b16 %v1767
        %v1837 = vunpack.c.h.b16 %v1767
        %v1838 = vunpack.c.l.b16 %v1768
        %v1839 = vunpack.c.h.b16 %v1768
        %v1840 = vpack.c.b16 %v1836, %v1321
        %v1841 = vpack.c.b16 %v1837, %v1322
        %v1842 = vpack.c.b16 %v1838, %v1323
        %v1843 = vpack.c.b16 %v1839, %v1324
        %v1845 = vshrl.u32 %v1840, 16
        %v1847 = vrot.slane %v1845, 2
        %v1848 = vshll.u32 %v1840, 16
        %v1850 = vrot.slane %v1848, 3
        %v1851 = vor.u32 %v1847, %v1850
        %v1853 = vshrl.u32 %v1841, 16
        %v1855 = vrot.slane %v1853, 2
        %v1856 = vshll.u32 %v1841, 16
        %v1858 = vrot.slane %v1856, 3
        %v1859 = vor.u32 %v1855, %v1858
        %v1861 = vshrl.u32 %v1842, 16
        %v1863 = vrot.slane %v1861, 2
        %v1864 = vshll.u32 %v1842, 16
        %v1866 = vrot.slane %v1864, 3
        %v1867 = vor.u32 %v1863, %v1866
        %v1869 = vshrl.u32 %v1843, 16
        %v1871 = vrot.slane %v1869, 2
        %v1872 = vshll.u32 %v1843, 16
        %v1874 = vrot.slane %v1872, 3
        %v1875 = vor.u32 %v1871, %v1874
        %v1944 = vunpack.c.l.b16 %v1770
        %v1945 = vunpack.c.h.b16 %v1770
        %v1946 = vunpack.c.l.b16 %v1771
        %v1947 = vunpack.c.h.b16 %v1771
        %v1948 = vunpack.c.l.b16 %v1772
        %v1949 = vunpack.c.h.b16 %v1772
        %v1950 = vunpack.c.l.b16 %v1773
        %v1951 = vunpack.c.h.b16 %v1773
        %v1952 = vunpack.c.l.b16 %v1774
        %v1953 = vunpack.c.h.b16 %v1774
        %v1954 = vunpack.c.l.b16 %v1775
        %v1955 = vunpack.c.h.b16 %v1775
        %v1956 = vunpack.c.l.b16 %v1776
        %v1957 = vunpack.c.h.b16 %v1776
        %v1958 = vunpack.c.l.b16 %v1777
        %v1959 = vunpack.c.h.b16 %v1777
        %v1960 = vunpack.c.l.b16 %v1778
        %v1961 = vunpack.c.h.b16 %v1778
        %v1962 = vunpack.c.l.b16 %v1779
        %v1963 = vunpack.c.h.b16 %v1779
        %v1964 = vunpack.c.l.b16 %v1780
        %v1965 = vunpack.c.h.b16 %v1780
        %v1966 = vunpack.c.l.b16 %v1781
        %v1967 = vunpack.c.h.b16 %v1781
        %v1968 = vunpack.c.l.b16 %v1782
        %v1969 = vunpack.c.h.b16 %v1782
        %v1970 = vunpack.c.l.b16 %v1783
        %v1971 = vunpack.c.h.b16 %v1783
        %v1972 = vunpack.c.l.b16 %v1784
        %v1973 = vunpack.c.h.b16 %v1784
        %v1974 = vunpack.c.l.b16 %v1785
        %v1975 = vunpack.c.h.b16 %v1785
        %v1976 = vunpack.c.l.b16 %v1786
        %v1977 = vunpack.c.h.b16 %v1786
        %v1978 = vunpack.c.l.b16 %v1787
        %v1979 = vunpack.c.h.b16 %v1787
        %v1980 = vunpack.c.l.b16 %v1788
        %v1981 = vunpack.c.h.b16 %v1788
        %v1982 = vunpack.c.l.b16 %v1789
        %v1983 = vunpack.c.h.b16 %v1789
        %v1984 = vunpack.c.l.b16 %v1790
        %v1985 = vunpack.c.h.b16 %v1790
        %v1986 = vunpack.c.l.b16 %v1791
        %v1987 = vunpack.c.h.b16 %v1791
        %v1988 = vunpack.c.l.b16 %v1792
        %v1989 = vunpack.c.h.b16 %v1792
        %v1990 = vunpack.c.l.b16 %v1793
        %v1991 = vunpack.c.h.b16 %v1793
        %v1992 = vunpack.c.l.b16 %v1794
        %v1993 = vunpack.c.h.b16 %v1794
        %v1994 = vunpack.c.l.b16 %v1795
        %v1995 = vunpack.c.h.b16 %v1795
        %v1996 = vunpack.c.l.b16 %v1796
        %v1997 = vunpack.c.h.b16 %v1796
        %v1998 = vunpack.c.l.b16 %v1797
        %v1999 = vunpack.c.h.b16 %v1797
        %v2000 = vunpack.c.l.b16 %v1798
        %v2001 = vunpack.c.h.b16 %v1798
        %v2002 = vunpack.c.l.b16 %v1799
        %v2003 = vunpack.c.h.b16 %v1799
        %v2004 = vunpack.c.l.b16 %v1800
        %v2005 = vunpack.c.h.b16 %v1800
        %v2006 = vunpack.c.l.b16 %v1801
        %v2007 = vunpack.c.h.b16 %v1801
        %v2008 = vunpack.c.l.b16 %v1802
        %v2009 = vunpack.c.h.b16 %v1802
        %v2010 = vunpack.c.l.b16 %v1803
        %v2011 = vunpack.c.h.b16 %v1803
        %v2012 = vunpack.c.l.b16 %v1804
        %v2013 = vunpack.c.h.b16 %v1804
        %v2014 = vunpack.c.l.b16 %v1805
        %v2015 = vunpack.c.h.b16 %v1805
        %v2016 = vunpack.c.l.b16 %v1806
        %v2017 = vunpack.c.h.b16 %v1806
        %v2018 = vunpack.c.l.b16 %v1807
        %v2019 = vunpack.c.h.b16 %v1807
        %v2020 = vunpack.c.l.b16 %v1808
        %v2021 = vunpack.c.h.b16 %v1808
        %v2022 = vunpack.c.l.b16 %v1809
        %v2023 = vunpack.c.h.b16 %v1809
        %v2024 = vunpack.c.l.b16 %v1810
        %v2025 = vunpack.c.h.b16 %v1810
        %v2026 = vunpack.c.l.b16 %v1811
        %v2027 = vunpack.c.h.b16 %v1811
        %v2028 = vunpack.c.l.b16 %v1812
        %v2029 = vunpack.c.h.b16 %v1812
        %v2030 = vunpack.c.l.b16 %v1813
        %v2031 = vunpack.c.h.b16 %v1813
        %v2032 = vunpack.c.l.b16 %v1814
        %v2033 = vunpack.c.h.b16 %v1814
        %v2034 = vunpack.c.l.b16 %v1815
        %v2035 = vunpack.c.h.b16 %v1815
        %v2036 = vunpack.c.l.b16 %v1816
        %v2037 = vunpack.c.h.b16 %v1816
        %v2038 = vunpack.c.l.b16 %v1817
        %v2039 = vunpack.c.h.b16 %v1817
        %v2040 = vunpack.c.l.b16 %v1818
        %v2041 = vunpack.c.h.b16 %v1818
        %v2042 = vunpack.c.l.b16 %v1819
        %v2043 = vunpack.c.h.b16 %v1819
        %v2044 = vunpack.c.l.b16 %v1820
        %v2045 = vunpack.c.h.b16 %v1820
        %v2046 = vunpack.c.l.b16 %v1821
        %v2047 = vunpack.c.h.b16 %v1821
        %v2048 = vunpack.c.l.b16 %v1822
        %v2049 = vunpack.c.h.b16 %v1822
        %v2050 = vunpack.c.l.b16 %v1823
        %v2051 = vunpack.c.h.b16 %v1823
        %v2052 = vunpack.c.l.b16 %v1824
        %v2053 = vunpack.c.h.b16 %v1824
        %v2054 = vunpack.c.l.b16 %v1825
        %v2055 = vunpack.c.h.b16 %v1825
        %v2056 = vunpack.c.l.b16 %v1826
        %v2057 = vunpack.c.h.b16 %v1826
        %v2058 = vunpack.c.l.b16 %v1827
        %v2059 = vunpack.c.h.b16 %v1827
        %v2060 = vunpack.c.l.b16 %v1828
        %v2061 = vunpack.c.h.b16 %v1828
        %v2062 = vunpack.c.l.b16 %v1829
        %v2063 = vunpack.c.h.b16 %v1829
        %v2064 = vunpack.c.l.b16 %v1830
        %v2065 = vunpack.c.h.b16 %v1830
        %v2066 = vunpack.c.l.b16 %v1831
        %v2067 = vunpack.c.h.b16 %v1831
        %v2068 = vunpack.c.l.b16 %v1832
        %v2069 = vunpack.c.h.b16 %v1832
        %v2070 = vunpack.c.l.b16 %v1833
        %v2071 = vunpack.c.h.b16 %v1833
        %v2072 = vpack.c.b16 %v1946, %v1944
        %v2073 = vpack.c.b16 %v1947, %v1945
        %v2074 = vpack.c.b16 %v1950, %v1948
        %v2075 = vpack.c.b16 %v1951, %v1949
        %v2076 = vpack.c.b16 %v1954, %v1952
        %v2077 = vpack.c.b16 %v1955, %v1953
        %v2078 = vpack.c.b16 %v1958, %v1956
        %v2079 = vpack.c.b16 %v1959, %v1957
        %v2080 = vpack.c.b16 %v1962, %v1960
        %v2081 = vpack.c.b16 %v1963, %v1961
        %v2082 = vpack.c.b16 %v1966, %v1964
        %v2083 = vpack.c.b16 %v1967, %v1965
        %v2084 = vpack.c.b16 %v1970, %v1968
        %v2085 = vpack.c.b16 %v1971, %v1969
        %v2086 = vpack.c.b16 %v1974, %v1972
        %v2087 = vpack.c.b16 %v1975, %v1973
        %v2088 = vpack.c.b16 %v1978, %v1976
        %v2089 = vpack.c.b16 %v1979, %v1977
        %v2090 = vpack.c.b16 %v1982, %v1980
        %v2091 = vpack.c.b16 %v1983, %v1981
        %v2092 = vpack.c.b16 %v1986, %v1984
        %v2093 = vpack.c.b16 %v1987, %v1985
        %v2094 = vpack.c.b16 %v1990, %v1988
        %v2095 = vpack.c.b16 %v1991, %v1989
        %v2096 = vpack.c.b16 %v1994, %v1992
        %v2097 = vpack.c.b16 %v1995, %v1993
        %v2098 = vpack.c.b16 %v1998, %v1996
        %v2099 = vpack.c.b16 %v1999, %v1997
        %v2100 = vpack.c.b16 %v2002, %v2000
        %v2101 = vpack.c.b16 %v2003, %v2001
        %v2102 = vpack.c.b16 %v2006, %v2004
        %v2103 = vpack.c.b16 %v2007, %v2005
        %v2104 = vpack.c.b16 %v2010, %v2008
        %v2105 = vpack.c.b16 %v2011, %v2009
        %v2106 = vpack.c.b16 %v2014, %v2012
        %v2107 = vpack.c.b16 %v2015, %v2013
        %v2108 = vpack.c.b16 %v2018, %v2016
        %v2109 = vpack.c.b16 %v2019, %v2017
        %v2110 = vpack.c.b16 %v2022, %v2020
        %v2111 = vpack.c.b16 %v2023, %v2021
        %v2112 = vpack.c.b16 %v2026, %v2024
        %v2113 = vpack.c.b16 %v2027, %v2025
        %v2114 = vpack.c.b16 %v2030, %v2028
        %v2115 = vpack.c.b16 %v2031, %v2029
        %v2116 = vpack.c.b16 %v2034, %v2032
        %v2117 = vpack.c.b16 %v2035, %v2033
        %v2118 = vpack.c.b16 %v2038, %v2036
        %v2119 = vpack.c.b16 %v2039, %v2037
        %v2120 = vpack.c.b16 %v2042, %v2040
        %v2121 = vpack.c.b16 %v2043, %v2041
        %v2122 = vpack.c.b16 %v2046, %v2044
        %v2123 = vpack.c.b16 %v2047, %v2045
        %v2124 = vpack.c.b16 %v2050, %v2048
        %v2125 = vpack.c.b16 %v2051, %v2049
        %v2126 = vpack.c.b16 %v2054, %v2052
        %v2127 = vpack.c.b16 %v2055, %v2053
        %v2128 = vpack.c.b16 %v2058, %v2056
        %v2129 = vpack.c.b16 %v2059, %v2057
        %v2130 = vpack.c.b16 %v2062, %v2060
        %v2131 = vpack.c.b16 %v2063, %v2061
        %v2132 = vpack.c.b16 %v2066, %v2064
        %v2133 = vpack.c.b16 %v2067, %v2065
        %v2134 = vpack.c.b16 %v2070, %v2068
        %v2135 = vpack.c.b16 %v2071, %v2069
        %2200 = vmatpush.bf16.msra.mxu0 %v2086
        %2201 = vmatpush.bf16.msra.mxu0 %v2084
        %2202 = vmatpush.bf16.msra.mxu0 %v2082
        %2203 = vmatpush.bf16.msra.mxu0 %v2080
        %2204 = vmatpush.bf16.msra.mxu0 %v2078
        %2205 = vmatpush.bf16.msra.mxu0 %v2076
        %2206 = vmatpush.bf16.msra.mxu0 %v2074
        %2207 = vmatpush.bf16.msra.mxu0 %v2072
        %2208 = vmatmul.bf16.gmra.mxu0 %v1851
        %v2209 = vpop.f32.mrf.mxu0
        %v2210 = vadd.f32 0.0, %v2209
        %v2211 = vpop.f32.mrf.mxu0
        %2212 = vdwg.mxu0
        %2213 = vmatpush.bf16.msra.mxu0 %v2102
        %2214 = vmatpush.bf16.msra.mxu0 %v2100
        %2215 = vmatpush.bf16.msra.mxu0 %v2098
        %2216 = vmatpush.bf16.msra.mxu0 %v2096
        %2217 = vmatpush.bf16.msra.mxu0 %v2094
        %2218 = vmatpush.bf16.msra.mxu0 %v2092
        %2219 = vmatpush.bf16.msra.mxu0 %v2090
        %2220 = vmatpush.bf16.msra.mxu0 %v2088
        %2221 = vmatmul.bf16.gmra.mxu0 %v1859
        %v2222 = vpop.f32.mrf.mxu0
        %v2223 = vadd.f32 %v2210, %v2222
        %v2224 = vpop.f32.mrf.mxu0
        %2225 = vdwg.mxu0
        %2226 = vmatpush.bf16.msra.mxu0 %v2118
        %2227 = vmatpush.bf16.msra.mxu0 %v2116
        %2228 = vmatpush.bf16.msra.mxu0 %v2114
        %2229 = vmatpush.bf16.msra.mxu0 %v2112
        %2230 = vmatpush.bf16.msra.mxu0 %v2110
        %2231 = vmatpush.bf16.msra.mxu0 %v2108
        %2232 = vmatpush.bf16.msra.mxu0 %v2106
        %2233 = vmatpush.bf16.msra.mxu0 %v2104
        %2234 = vmatmul.bf16.gmra.mxu0 %v1867
        %v2235 = vpop.f32.mrf.mxu0
        %v2236 = vadd.f32 %v2223, %v2235
        %v2237 = vpop.f32.mrf.mxu0
        %2238 = vdwg.mxu0
        %2239 = vmatpush.bf16.msra.mxu0 %v2134
        %2240 = vmatpush.bf16.msra.mxu0 %v2132
        %2241 = vmatpush.bf16.msra.mxu0 %v2130
        %2242 = vmatpush.bf16.msra.mxu0 %v2128
        %2243 = vmatpush.bf16.msra.mxu0 %v2126
        %2244 = vmatpush.bf16.msra.mxu0 %v2124
        %2245 = vmatpush.bf16.msra.mxu0 %v2122
        %2246 = vmatpush.bf16.msra.mxu0 %v2120
        %2247 = vmatmul.bf16.gmra.mxu0 %v1875
        %v2248 = vpop.f32.mrf.mxu0
        %v2249 = vadd.f32 %v2236, %v2248
        %v2250 = vpop.f32.mrf.mxu0
        %2251 = vdwg.mxu0
        %2252 = vmatpush.bf16.msra.mxu0 %v2087
        %2253 = vmatpush.bf16.msra.mxu0 %v2085
        %2254 = vmatpush.bf16.msra.mxu0 %v2083
        %2255 = vmatpush.bf16.msra.mxu0 %v2081
        %2256 = vmatpush.bf16.msra.mxu0 %v2079
        %2257 = vmatpush.bf16.msra.mxu0 %v2077
        %2258 = vmatpush.bf16.msra.mxu0 %v2075
        %2259 = vmatpush.bf16.msra.mxu0 %v2073
        %2260 = vmatmul.bf16.gmra.mxu0 %v1851
        %v2261 = vpop.f32.mrf.mxu0
        %v2262 = vadd.f32 0.0, %v2261
        %v2263 = vpop.f32.mrf.mxu0
        %2264 = vdwg.mxu0
        %2265 = vmatpush.bf16.msra.mxu0 %v2103
        %2266 = vmatpush.bf16.msra.mxu0 %v2101
        %2267 = vmatpush.bf16.msra.mxu0 %v2099
        %2268 = vmatpush.bf16.msra.mxu0 %v2097
        %2269 = vmatpush.bf16.msra.mxu0 %v2095
        %2270 = vmatpush.bf16.msra.mxu0 %v2093
        %2271 = vmatpush.bf16.msra.mxu0 %v2091
        %2272 = vmatpush.bf16.msra.mxu0 %v2089
        %2273 = vmatmul.bf16.gmra.mxu0 %v1859
        %v2274 = vpop.f32.mrf.mxu0
        %v2275 = vadd.f32 %v2262, %v2274
        %v2276 = vpop.f32.mrf.mxu0
        %2277 = vdwg.mxu0
        %2278 = vmatpush.bf16.msra.mxu0 %v2119
        %2279 = vmatpush.bf16.msra.mxu0 %v2117
        %2280 = vmatpush.bf16.msra.mxu0 %v2115
        %2281 = vmatpush.bf16.msra.mxu0 %v2113
        %2282 = vmatpush.bf16.msra.mxu0 %v2111
        %2283 = vmatpush.bf16.msra.mxu0 %v2109
        %2284 = vmatpush.bf16.msra.mxu0 %v2107
        %2285 = vmatpush.bf16.msra.mxu0 %v2105
        %2286 = vmatmul.bf16.gmra.mxu0 %v1867
        %v2287 = vpop.f32.mrf.mxu0
        %v2288 = vadd.f32 %v2275, %v2287
        %v2289 = vpop.f32.mrf.mxu0
        %2290 = vdwg.mxu0
        %2291 = vmatpush.bf16.msra.mxu0 %v2135
        %2292 = vmatpush.bf16.msra.mxu0 %v2133
        %2293 = vmatpush.bf16.msra.mxu0 %v2131
        %2294 = vmatpush.bf16.msra.mxu0 %v2129
        %2295 = vmatpush.bf16.msra.mxu0 %v2127
        %2296 = vmatpush.bf16.msra.mxu0 %v2125
        %2297 = vmatpush.bf16.msra.mxu0 %v2123
        %2298 = vmatpush.bf16.msra.mxu0 %v2121
        %2299 = vmatmul.bf16.gmra.mxu0 %v1875
        %v2300 = vpop.f32.mrf.mxu0
        %v2301 = vadd.f32 %v2288, %v2300
        %v2302 = vpop.f32.mrf.mxu0
        %2303 = vdwg.mxu0
        %v2304 = vadd.f32 %v1765, %v2249
        %v2305 = vadd.f32 %v1766, %v2301
        %v2306 = vld [vmem:[#allocation4] sm:$0x3]
        %v2308 = vperm.slane %v2306, 0
        %v2309 = vperm.slane %v2306, 1
        %v2312 = vadd.f32 %v2304, %v2308
        %v2313 = vadd.f32 %v2305, %v2309
        %vm2314 = vcmp.gt.f32.partialorder %v2312, 0.0
        %vm2315 = vcmp.gt.f32.partialorder %v2313, 0.0
        %v2316 = vmul.f32 %v2312, 0.2
        %v2317 = vmul.f32 %v2313, 0.2
        %v2318 = vsel %vm2314, %v2312, %v2316
        %v2319 = vsel %vm2315, %v2313, %v2317
        %v2320 = vpack.c.bf16 %v2319, %v2318
        %2321 = vst [vmem:[%s202] sm:$0xff] %v2320
        %p2322 = scmp.lt.s32.totalorder %s16, 1
        %s2323 = scalar_select %p2322, %s16, 1
        %s2324 = smul.addr %s2323, 2
        %s2325 = smul.addr %s2324, 4
        %s2326 = scalar_lea.vmem %s3, %s2325
        // Predicated region
        $region41: #{convnet_forward.6} parent=31 // pred_check
          %p2327 = pneg %p102
        $region42: #{convnet_forward.6} parent=31 // pred_check_branch
          %2329 = sbr.rel (%p2327) target = $region44
        $region43: #{convnet_forward.6} parent=31 // pred_region
          _
        $region44: #{convnet_forward.6} parent=31 // pred_fallthru
          _
      $region32: #{convnet_forward.6} parent=5 // pred_fallthru
        _
      %p2330 = scmp.le.s32.totalorder 2, %s11
      // Predicated region
      $region45: #{convnet_forward.6} parent=5 // pred_check
        %p2331 = pneg %p2330
      $region46: #{convnet_forward.6} parent=5 // pred_check_branch
        %2333 = sbr.rel (%p2331) target = $region48
      $region47: #{convnet_forward.6} parent=5 // pred_region
        %s2334 = ssub.s32 %s11, 2
        // Predicated region
        $region49: #{convnet_forward.6} parent=47 // pred_check
          %p2335 = pneg %p108
        $region50: #{convnet_forward.6} parent=47 // pred_check_branch
          %2337 = sbr.rel (%p2335) target = $region52
        $region51: #{convnet_forward.6} parent=47 // pred_region
          %p2338 = scmp.lt.s32.totalorder %s17, 1
          %s2339 = scalar_select %p2338, %s17, 1
          %s2340 = smul.addr %s2339, 2
          %s2341 = smul.addr %s2340, 4
          %s2342 = scalar_lea.vmem %s3, %s2341
        $region52: #{convnet_forward.6} parent=47 // pred_fallthru
          _
      $region48: #{convnet_forward.6} parent=5 // pred_fallthru
        _
    $region6: #{convnet_forward.6} parent=1 // loop_footer
      %s15 = sadd.s32 1, %s11
    $region7: #{convnet_forward.6} parent=1 // loop_footer_branch
      %10 = sbr.rel target = $region3
    $region8: #{convnet_forward.6} parent=1 // loop_exit
      _
    %2343 = vsyncpa [#allocation3], 1
    %s2344 = scalar_lea.sflag [#allocation3], 1
    %2345 = vsyncpa %s2344, 1
    %2346 = vsyncpa [#allocation5], 1

// kernel: convnet_forward.7
$region0: #{convnet_forward.7}
  #allocation0 [shape = 'u32[]', space=smem, size = 0x4, offset = 0x4, fixed_abs, tag = 'smem constant byte address 0x4 - core index']
  #allocation1 [shape = 'u32[72,128]{1,0:T(1,128)}', space=vmem, size = 0x9000, scoped, tag = 'internal scratch']
  %s0 = inlined_call_operand.vmem [shape: bf16[2,9,1024], index: 0, kind: input, shape index: {}]
  %s1 = inlined_call_operand.hbm [shape: bf16[4,1024,512], index: 1, kind: input, shape index: {}]
  %s2 = inlined_call_operand.hbm [shape: f32[1,512], index: 2, kind: input, shape index: {}]
  %s3 = inlined_call_operand.hbm [shape: bf16[512,128], index: 3, kind: input, shape index: {}]
  %s4 = inlined_call_operand.hbm [shape: f32[1,128], index: 4, kind: input, shape index: {}]
  %s5 = inlined_call_operand.hbm [shape: f32[2,1,128], index: 5, kind: output, shape index: {}]
  %s6 = sld [smem:[#allocation0]]
  $region69: #{convnet_forward.7} parent=0
    _
  %s8 = ssub.s32 1, %s6
  %s9 = scalar_select 0, %s8, %s6
  $region1: #{convnet_forward.7} parent=0
    #allocation2 [shape = 'u8[4194304]{0}', space=vmem, size = 0x400000, scoped, tag = 'input window, operand 1, single buffered']
    #allocation3 [shape = 's32[2]{0}', space=sflag, size = 0x8, scoped, tag = 'scoped memory for convnet_forward.7']
    #allocation4 [shape = 's32[2]{0}', space=sflag, size = 0x8, scoped, tag = 'scoped memory for convnet_forward.7']
    #allocation5 [shape = 'u8[2048]{0}', space=vmem, size = 0x800, scoped, tag = 'input window, operand 2, single buffered']
    #allocation6 [shape = 's32[1]{0}', space=sflag, size = 0x4, scoped, tag = 'scoped memory for convnet_forward.7']
    #allocation7 [shape = 'u8[131072]{0}', space=vmem, size = 0x20000, scoped, tag = 'input window, operand 3, single buffered']
    #allocation8 [shape = 'u8[512]{0}', space=vmem, size = 0x400, scoped, tag = 'input window, operand 4, single buffered']
    #allocation9 [shape = 's32[1]{0}', space=sflag, size = 0x4, scoped, tag = 'scoped memory for convnet_forward.7']
    #allocation10 [shape = 'u8[1024]{0}', space=vmem, size = 0x400, scoped, tag = 'output window, operand 0']
    %10 = vsyncpa [#allocation3], 0
    %11 = vsyncpa [#allocation6], 0
    %12 = vsyncpa [#allocation9], 0
    %13 = vsyncpa [#allocation4], 0
    %s14 = scalar_lea.sflag [#allocation4], 1
    %15 = vsyncpa %s14, 0
    loop: start=0, step=1, limit=4
    $region2: #{convnet_forward.7} parent=1 // loop_pre_header
      _
    $region3: #{convnet_forward.7} parent=1 // loop_header
      %s17 = sphi 0, %s21
      %p18 = scmp.ge.s32.totalorder %s17, 4
      %s27 = sphi 0, %s29
      %s30 = sphi 0, %s27
      %s31 = sphi 0, %s30
      %s47 = sphi 0, %s31
      %s51 = sphi 0, %s51
      %s53 = sphi 0, %s51
      %s54 = sphi 0, %s53
      %s68 = sphi 0, %s54
      %s72 = sphi 0, %s72
      %s74 = sphi 0, %s72
      %s75 = sphi 0, %s74
      %s89 = sphi 0, %s75
      %s93 = sphi 0, %s93
      %s95 = sphi 0, %s93
      %s96 = sphi 0, %s95
      %s110 = sphi 0, %s96
      %s114 = sphi 0, %s114
      %s116 = sphi 0, %s114
      %s117 = sphi 0, %s116
      %s131 = sphi 0, %s117
      %s137 = sphi 0, %s139
      %s140 = sphi 0, %s137
      %s141 = sphi 0, %s140
      %s157 = sphi 0, %s141
    $region4: #{convnet_forward.7} parent=1 // loop_header_branch
      %20 = sbr.rel (%p18) target = $region8
    $region5: #{convnet_forward.7} parent=1 // loop_body
      %s22 = ssub.s32 %s17, 1
      %s23 = ssub.s32 %s17, 2
      %s24 = sadd.s32 %s17, 1
      %s25 = ssub.s32 %s17, %s24
      %p26 = scmp.eq.s32.totalorder %s25, 0
      %s28 = sadd.s32 %s27, 1
      %s29 = scalar_select %p26, %s27, %s28
      %p32 = pneg %p26
      %p33 = scmp.eq.s32.totalorder %s17, 1
      %p34 = por %p32, %p33
      %p35 = scmp.ne.s32.totalorder %s27, %s30
      %p36 = scmp.eq.s32.totalorder %s17, 0
      %p37 = por %p35, %p36
      %p38 = scmp.ne.s32.totalorder %s27, %s30
      %p39 = scmp.eq.s32.totalorder %s22, 1
      %p40 = por %p38, %p39
      %p41 = scmp.ne.s32.totalorder %s30, %s31
      %p42 = scmp.eq.s32.totalorder %s22, 0
      %p43 = por %p41, %p42
      %p44 = scmp.ne.s32.totalorder %s30, %s31
      %p45 = scmp.eq.s32.totalorder %s23, 1
      %p46 = por %p44, %p45
      %p48 = scmp.ne.s32.totalorder %s31, %s47
      %p49 = scmp.eq.s32.totalorder %s23, 0
      %p50 = por %p48, %p49
      %s52 = sadd.s32 %s51, 1
      %p55 = scmp.eq.s32.totalorder %s17, 1
      %p56 = scmp.ne.s32.totalorder %s51, %s53
      %p57 = scmp.eq.s32.totalorder %s17, 0
      %p58 = por %p56, %p57
      %p59 = scmp.ne.s32.totalorder %s51, %s53
      %p60 = scmp.eq.s32.totalorder %s22, 1
      %p61 = por %p59, %p60
      %p62 = scmp.ne.s32.totalorder %s53, %s54
      %p63 = scmp.eq.s32.totalorder %s22, 0
      %p64 = por %p62, %p63
      %p65 = scmp.ne.s32.totalorder %s53, %s54
      %p66 = scmp.eq.s32.totalorder %s23, 1
      %p67 = por %p65, %p66
      %p69 = scmp.ne.s32.totalorder %s54, %s68
      %p70 = scmp.eq.s32.totalorder %s23, 0
      %p71 = por %p69, %p70
      %s73 = sadd.s32 %s72, 1
      %p76 = scmp.eq.s32.totalorder %s17, 1
      %p77 = scmp.ne.s32.totalorder %s72, %s74
      %p78 = scmp.eq.s32.totalorder %s17, 0
      %p79 = por %p77, %p78
      %p80 = scmp.ne.s32.totalorder %s72, %s74
      %p81 = scmp.eq.s32.totalorder %s22, 1
      %p82 = por %p80, %p81
      %p83 = scmp.ne.s32.totalorder %s74, %s75
      %p84 = scmp.eq.s32.totalorder %s22, 0
      %p85 = por %p83, %p84
      %p86 = scmp.ne.s32.totalorder %s74, %s75
      %p87 = scmp.eq.s32.totalorder %s23, 1
      %p88 = por %p86, %p87
      %p90 = scmp.ne.s32.totalorder %s75, %s89
      %p91 = scmp.eq.s32.totalorder %s23, 0
      %p92 = por %p90, %p91
      %s94 = sadd.s32 %s93, 1
      %p97 = scmp.eq.s32.totalorder %s17, 1
      %p98 = scmp.ne.s32.totalorder %s93, %s95
      %p99 = scmp.eq.s32.totalorder %s17, 0
      %p100 = por %p98, %p99
      %p101 = scmp.ne.s32.totalorder %s93, %s95
      %p102 = scmp.eq.s32.totalorder %s22, 1
      %p103 = por %p101, %p102
      %p104 = scmp.ne.s32.totalorder %s95, %s96
      %p105 = scmp.eq.s32.totalorder %s22, 0
      %p106 = por %p104, %p105
      %p107 = scmp.ne.s32.totalorder %s95, %s96
      %p108 = scmp.eq.s32.totalorder %s23, 1
      %p109 = por %p107, %p108
      %p111 = scmp.ne.s32.totalorder %s96, %s110
      %p112 = scmp.eq.s32.totalorder %s23, 0
      %p113 = por %p111, %p112
      %s115 = sadd.s32 %s114, 1
      %p118 = scmp.eq.s32.totalorder %s17, 1
      %p119 = scmp.ne.s32.totalorder %s114, %s116
      %p120 = scmp.eq.s32.totalorder %s17, 0
      %p121 = por %p119, %p120
      %p122 = scmp.ne.s32.totalorder %s114, %s116
      %p123 = scmp.eq.s32.totalorder %s22, 1
      %p124 = por %p122, %p123
      %p125 = scmp.ne.s32.totalorder %s116, %s117
      %p126 = scmp.eq.s32.totalorder %s22, 0
      %p127 = por %p125, %p126
      %p128 = scmp.ne.s32.totalorder %s116, %s117
      %p129 = scmp.eq.s32.totalorder %s23, 1
      %p130 = por %p128, %p129
      %p132 = scmp.ne.s32.totalorder %s117, %s131
      %p133 = scmp.eq.s32.totalorder %s23, 0
      %p134 = por %p132, %p133
      %s135 = ssub.s32 %s17, %s24
      %p136 = scmp.eq.s32.totalorder %s135, 0
      %s138 = sadd.s32 %s137, 1
      %s139 = scalar_select %p136, %s137, %s138
      %p142 = pneg %p136
      %p143 = scmp.eq.s32.totalorder %s17, 1
      %p144 = por %p142, %p143
      %p145 = scmp.ne.s32.totalorder %s137, %s140
      %p146 = scmp.eq.s32.totalorder %s17, 0
      %p147 = por %p145, %p146
      %p148 = scmp.ne.s32.totalorder %s137, %s140
      %p149 = scmp.eq.s32.totalorder %s22, 1
      %p150 = por %p148, %p149
      %p151 = scmp.ne.s32.totalorder %s140, %s141
      %p152 = scmp.eq.s32.totalorder %s22, 0
      %p153 = por %p151, %p152
      %p154 = scmp.ne.s32.totalorder %s140, %s141
      %p155 = scmp.eq.s32.totalorder %s23, 1
      %p156 = por %p154, %p155
      %p158 = scmp.ne.s32.totalorder %s141, %s157
      %p159 = scmp.eq.s32.totalorder %s23, 0
      %p160 = por %p158, %p159
      %p161 = scmp.le.s32.totalorder 1, %s17
      %p162 = scmp.lt.s32.totalorder %s17, 3
      %p163 = pnand %p161, %p162
      %p164 = pneg %p163
      // Predicated region
      $region9: #{convnet_forward.7} parent=5 // pred_check
        _
      $region10: #{convnet_forward.7} parent=5 // pred_check_branch
        %166 = sbr.rel (%p163) target = $region12
      $region11: #{convnet_forward.7} parent=5 // pred_region
        %s167 = ssub.s32 %s17, 1
        // Predicated region
        $region13: #{convnet_forward.7} parent=11 // pred_check
          %p168 = pneg %p64
        $region14: #{convnet_forward.7} parent=11 // pred_check_branch
          %170 = sbr.rel (%p168) target = $region16
        $region15: #{convnet_forward.7} parent=11 // pred_region
          %172 = vsyncadd [#allocation3], 0
          %s173 = sshll.u32 %s1, 4
          %s174 = int_to_ptr.hbm [resolvable:$true] %s173
          %s175 = sshll.u32 [#allocation2], 4
          %s176 = int_to_ptr.vmem [resolvable:$true] %s175
          %181 = dma.hbm_to_vmem [thread:$0]  %s174, 131072, %s176, [#allocation3], 256, 256, 16
        $region16: #{convnet_forward.7} parent=11 // pred_fallthru
          _
        // Predicated region
        $region17: #{convnet_forward.7} parent=11 // pred_check
          %p182 = pneg %p85
        $region18: #{convnet_forward.7} parent=11 // pred_check_branch
          %184 = sbr.rel (%p182) target = $region20
        $region19: #{convnet_forward.7} parent=11 // pred_region
          %186 = vsyncadd [#allocation6], 0
          %s188 = sshll.u32 %s2, 4
          %s189 = int_to_ptr.hbm [resolvable:$true] %s188
          %s190 = sshll.u32 [#allocation5], 4
          %s191 = int_to_ptr.vmem [resolvable:$true] %s190
          %193 = dma.hbm_to_vmem [thread:$0]  %s189, 64, %s191, [#allocation6]
        $region20: #{convnet_forward.7} parent=11 // pred_fallthru
          _
        // Predicated region
        $region21: #{convnet_forward.7} parent=11 // pred_check
          %p194 = pneg %p106
        $region22: #{convnet_forward.7} parent=11 // pred_check_branch
          %196 = sbr.rel (%p194) target = $region24
        $region23: #{convnet_forward.7} parent=11 // pred_region
          %198 = vsyncadd [#allocation6], 0
          %s199 = sshll.u32 %s3, 4
          %s200 = int_to_ptr.hbm [resolvable:$true] %s199
          %s201 = sshll.u32 [#allocation7], 4
          %s202 = int_to_ptr.vmem [resolvable:$true] %s201
          %207 = dma.hbm_to_vmem [thread:$0]  %s200, 4096, %s202, [#allocation6], 64, 64, 4
        $region24: #{convnet_forward.7} parent=11 // pred_fallthru
          _
        // Predicated region
        $region25: #{convnet_forward.7} parent=11 // pred_check
          %p208 = pneg %p127
        $region26: #{convnet_forward.7} parent=11 // pred_check_branch
          %210 = sbr.rel (%p208) target = $region28
        $region27: #{convnet_forward.7} parent=11 // pred_region
          %212 = vsyncadd [#allocation9], 0
          %s214 = sshll.u32 %s4, 4
          %s215 = int_to_ptr.hbm [resolvable:$true] %s214
          %s216 = sshll.u32 [#allocation8], 4
          %s217 = int_to_ptr.vmem [resolvable:$true] %s216
          %219 = dma.hbm_to_vmem [thread:$0]  %s215, 16, %s217, [#allocation9]
        $region28: #{convnet_forward.7} parent=11 // pred_fallthru
          _
      $region12: #{convnet_forward.7} parent=5 // pred_fallthru
        _
      %p220 = scmp.lt.s32.totalorder %s17, 2
      // Predicated region
      $region29: #{convnet_forward.7} parent=5 // pred_check
        %p221 = pneg %p220
      $region30: #{convnet_forward.7} parent=5 // pred_check_branch
        %223 = sbr.rel (%p221) target = $region32
      $region31: #{convnet_forward.7} parent=5 // pred_region
        // Predicated region
        $region33: #{convnet_forward.7} parent=31 // pred_check
          %p224 = pneg %p37
        $region34: #{convnet_forward.7} parent=31 // pred_check_branch
          %226 = sbr.rel (%p224) target = $region36
        $region35: #{convnet_forward.7} parent=31 // pred_region
          %p227 = scmp.lt.s32.totalorder %s17, 1
          %s228 = scalar_select %p227, %s17, 1
          %s229 = smul.addr %s228, 16
          %s230 = smul.addr %s229, 4
          %s231 = scalar_lea.vmem %s0, %s230
        $region36: #{convnet_forward.7} parent=31 // pred_fallthru
          _
      $region32: #{convnet_forward.7} parent=5 // pred_fallthru
        _
      %p232 = scmp.le.s32.totalorder 1, %s17
      %p233 = scmp.lt.s32.totalorder %s17, 3
      %p234 = pnand %p232, %p233
      %p235 = pneg %p234
      // Predicated region
      $region37: #{convnet_forward.7} parent=5 // pred_check
        _
      $region38: #{convnet_forward.7} parent=5 // pred_check_branch
        %237 = sbr.rel (%p234) target = $region40
      $region39: #{convnet_forward.7} parent=5 // pred_region
        %s238 = ssub.s32 %s17, 1
        // Predicated region
        $region41: #{convnet_forward.7} parent=39 // pred_check
          %p239 = pneg %p64
        $region42: #{convnet_forward.7} parent=39 // pred_check_branch
          %241 = sbr.rel (%p239) target = $region44
        $region43: #{convnet_forward.7} parent=39 // pred_region
          %243 = dma.done [#allocation3], 131072
        $region44: #{convnet_forward.7} parent=39 // pred_fallthru
          _
        // Predicated region
        $region45: #{convnet_forward.7} parent=39 // pred_check
          %p244 = pneg %p85
        $region46: #{convnet_forward.7} parent=39 // pred_check_branch
          %246 = sbr.rel (%p244) target = $region48
        $region47: #{convnet_forward.7} parent=39 // pred_region
          %248 = dma.done [#allocation6], 64
        $region48: #{convnet_forward.7} parent=39 // pred_fallthru
          _
        // Predicated region
        $region49: #{convnet_forward.7} parent=39 // pred_check
          %p249 = pneg %p106
        $region50: #{convnet_forward.7} parent=39 // pred_check_branch
          %251 = sbr.rel (%p249) target = $region52
        $region51: #{convnet_forward.7} parent=39 // pred_region
          %253 = dma.done [#allocation6], 4096
        $region52: #{convnet_forward.7} parent=39 // pred_fallthru
          _
        // Predicated region
        $region53: #{convnet_forward.7} parent=39 // pred_check
          %p254 = pneg %p127
        $region54: #{convnet_forward.7} parent=39 // pred_check_branch
          %256 = sbr.rel (%p254) target = $region56
        $region55: #{convnet_forward.7} parent=39 // pred_region
          %258 = dma.done [#allocation9], 16
        $region56: #{convnet_forward.7} parent=39 // pred_fallthru
          _
        %p259 = scmp.lt.s32.totalorder %s22, 1
        %s260 = scalar_select %p259, %s22, 1
        %s261 = smul.addr %s260, 16
        %s262 = smul.addr %s261, 4
        %s263 = scalar_lea.vmem %s0, %s262
        %p264 = pneg %p43
        %p265 = pneg %p40
        %p266 = pneg %p64
        %p267 = pneg %p61
        %p268 = pneg %p85
        %p269 = pneg %p82
        %p270 = pneg %p106
        %p271 = pneg %p103
        %p272 = pneg %p127
        %p273 = pneg %p124
        %p274 = pneg %p153
        %p275 = pneg %p150
        %s276 = sand.u32 %s140, 1
        %s277 = scalar_lea.sflag [#allocation4], %s276
        %s278 = sand.u32 %s140, 1
        %s279 = scalar_lea.vmem [#allocation10], %s278
        %p280 = scmp.lt.s32.totalorder %s22, 1
        %s281 = scalar_select %p280, %s22, 1
        %s282 = smul.addr %s281, 16
        %s283 = smul.addr %s282, 4
        %s284 = scalar_lea.vmem %s0, %s283
        %v285 = vld [vmem:[%s284] sm:$0x11]
        %v286 = vld [vmem:[%s284 + $0x8] sm:$0x11]
        %v287 = vld [vmem:[%s284 + $0x10] sm:$0x11]
        %v288 = vld [vmem:[%s284 + $0x18] sm:$0x11]
        %v289 = vld [vmem:[#allocation2] sm:$0xff]
        %v290 = vld [vmem:[#allocation2 + $0x8] sm:$0xff]
        %v291 = vld [vmem:[#allocation2 + $0x10] sm:$0xff]
        %v292 = vld [vmem:[#allocation2 + $0x18] sm:$0xff]
        %v293 = vld [vmem:[#allocation2 + $0x20] sm:$0xff]
        %v294 = vld [vmem:[#allocation2 + $0x28] sm:$0xff]
        %v295 = vld [vmem:[#allocation2 + $0x30] sm:$0xff]
        %v296 = vld [vmem:[#allocation2 + $0x38] sm:$0xff]
        %v297 = vld [vmem:[#allocation2 + $0x40] sm:$0xff]
        %v298 = vld [vmem:[#allocation2 + $0x48] sm:$0xff]
        %v299 = vld [vmem:[#allocation2 + $0x50] sm:$0xff]
        %v300 = vld [vmem:[#allocation2 + $0x58] sm:$0xff]
        %v301 = vld [vmem:[#allocation2 + $0x60] sm:$0xff]
        %v302 = vld [vmem:[#allocation2 + $0x68] sm:$0xff]
        %v303 = vld [vmem:[#allocation2 + $0x70] sm:$0xff]
        %v304 = vld [vmem:[#allocation2 + $0x78] sm:$0xff]
        %v305 = vld [vmem:[#allocation2 + $0x80] sm:$0xff]
        %v306 = vld [vmem:[#allocation2 + $0x88] sm:$0xff]
        %v307 = vld [vmem:[#allocation2 + $0x90] sm:$0xff]
        %v308 = vld [vmem:[#allocation2 + $0x98] sm:$0xff]
        %v309 = vld [vmem:[#allocation2 + $0xa0] sm:$0xff]
        %v310 = vld [vmem:[#allocation2 + $0xa8] sm:$0xff]
        %v311 = vld [vmem:[#allocation2 + $0xb0] sm:$0xff]
        %v312 = vld [vmem:[#allocation2 + $0xb8] sm:$0xff]
        %v313 = vld [vmem:[#allocation2 + $0xc0] sm:$0xff]
        %v314 = vld [vmem:[#allocation2 + $0xc8] sm:$0xff]
        %v315 = vld [vmem:[#allocation2 + $0xd0] sm:$0xff]
        %v316 = vld [vmem:[#allocation2 + $0xd8] sm:$0xff]
        %v317 = vld [vmem:[#allocation2 + $0xe0] sm:$0xff]
        %v318 = vld [vmem:[#allocation2 + $0xe8] sm:$0xff]
        %v319 = vld [vmem:[#allocation2 + $0xf0] sm:$0xff]
        %v320 = vld [vmem:[#allocation2 + $0xf8] sm:$0xff]
        %v321 = vld [vmem:[#allocation2 + $0x100] sm:$0xff]
        %v322 = vld [vmem:[#allocation2 + $0x108] sm:$0xff]
        %v323 = vld [vmem:[#allocation2 + $0x110] sm:$0xff]
        %v324 = vld [vmem:[#allocation2 + $0x118] sm:$0xff]
        %v325 = vld [vmem:[#allocation2 + $0x120] sm:$0xff]
        %v326 = vld [vmem:[#allocation2 + $0x128] sm:$0xff]
        %v327 = vld [vmem:[#allocation2 + $0x130] sm:$0xff]
        %v328 = vld [vmem:[#allocation2 + $0x138] sm:$0xff]
        %v329 = vld [vmem:[#allocation2 + $0x140] sm:$0xff]
        %v330 = vld [vmem:[#allocation2 + $0x148] sm:$0xff]
        %v331 = vld [vmem:[#allocation2 + $0x150] sm:$0xff]
        %v332 = vld [vmem:[#allocation2 + $0x158] sm:$0xff]
        %v333 = vld [vmem:[#allocation2 + $0x160] sm:$0xff]
        %v334 = vld [vmem:[#allocation2 + $0x168] sm:$0xff]
        %v335 = vld [vmem:[#allocation2 + $0x170] sm:$0xff]
        %v336 = vld [vmem:[#allocation2 + $0x178] sm:$0xff]
        %v337 = vld [vmem:[#allocation2 + $0x180] sm:$0xff]
        %v338 = vld [vmem:[#allocation2 + $0x188] sm:$0xff]
        %v339 = vld [vmem:[#allocation2 + $0x190] sm:$0xff]
        %v340 = vld [vmem:[#allocation2 + $0x198] sm:$0xff]
        %v341 = vld [vmem:[#allocation2 + $0x1a0] sm:$0xff]
        %v342 = vld [vmem:[#allocation2 + $0x1a8] sm:$0xff]
        %v343 = vld [vmem:[#allocation2 + $0x1b0] sm:$0xff]
        %v344 = vld [vmem:[#allocation2 + $0x1b8] sm:$0xff]
        %v345 = vld [vmem:[#allocation2 + $0x1c0] sm:$0xff]
        %v346 = vld [vmem:[#allocation2 + $0x1c8] sm:$0xff]
        %v347 = vld [vmem:[#allocation2 + $0x1d0] sm:$0xff]
        %v348 = vld [vmem:[#allocation2 + $0x1d8] sm:$0xff]
        %v349 = vld [vmem:[#allocation2 + $0x1e0] sm:$0xff]
        %v350 = vld [vmem:[#allocation2 + $0x1e8] sm:$0xff]
        %v351 = vld [vmem:[#allocation2 + $0x1f0] sm:$0xff]
        %v352 = vld [vmem:[#allocation2 + $0x1f8] sm:$0xff]
        %v353 = vld [vmem:[#allocation2 + $0x200] sm:$0xff]
        %v354 = vld [vmem:[#allocation2 + $0x208] sm:$0xff]
        %v355 = vld [vmem:[#allocation2 + $0x210] sm:$0xff]
        %v356 = vld [vmem:[#allocation2 + $0x218] sm:$0xff]
        %v357 = vld [vmem:[#allocation2 + $0x220] sm:$0xff]
        %v358 = vld [vmem:[#allocation2 + $0x228] sm:$0xff]
        %v359 = vld [vmem:[#allocation2 + $0x230] sm:$0xff]
        %v360 = vld [vmem:[#allocation2 + $0x238] sm:$0xff]
        %v361 = vld [vmem:[#allocation2 + $0x240] sm:$0xff]
        %v362 = vld [vmem:[#allocation2 + $0x248] sm:$0xff]
        %v363 = vld [vmem:[#allocation2 + $0x250] sm:$0xff]
        %v364 = vld [vmem:[#allocation2 + $0x258] sm:$0xff]
        %v365 = vld [vmem:[#allocation2 + $0x260] sm:$0xff]
        %v366 = vld [vmem:[#allocation2 + $0x268] sm:$0xff]
        %v367 = vld [vmem:[#allocation2 + $0x270] sm:$0xff]
        %v368 = vld [vmem:[#allocation2 + $0x278] sm:$0xff]
        %v369 = vld [vmem:[#allocation2 + $0x280] sm:$0xff]
        %v370 = vld [vmem:[#allocation2 + $0x288] sm:$0xff]
        %v371 = vld [vmem:[#allocation2 + $0x290] sm:$0xff]
        %v372 = vld [vmem:[#allocation2 + $0x298] sm:$0xff]
        %v373 = vld [vmem:[#allocation2 + $0x2a0] sm:$0xff]
        %v374 = vld [vmem:[#allocation2 + $0x2a8] sm:$0xff]
        %v375 = vld [vmem:[#allocation2 + $0x2b0] sm:$0xff]
        %v376 = vld [vmem:[#allocation2 + $0x2b8] sm:$0xff]
        %v377 = vld [vmem:[#allocation2 + $0x2c0] sm:$0xff]
        %v378 = vld [vmem:[#allocation2 + $0x2c8] sm:$0xff]
        %v379 = vld [vmem:[#allocation2 + $0x2d0] sm:$0xff]
        %v380 = vld [vmem:[#allocation2 + $0x2d8] sm:$0xff]
        %v381 = vld [vmem:[#allocation2 + $0x2e0] sm:$0xff]
        %v382 = vld [vmem:[#allocation2 + $0x2e8] sm:$0xff]
        %v383 = vld [vmem:[#allocation2 + $0x2f0] sm:$0xff]
        %v384 = vld [vmem:[#allocation2 + $0x2f8] sm:$0xff]
        %v385 = vld [vmem:[#allocation2 + $0x300] sm:$0xff]
        %v386 = vld [vmem:[#allocation2 + $0x308] sm:$0xff]
        %v387 = vld [vmem:[#allocation2 + $0x310] sm:$0xff]
        %v388 = vld [vmem:[#allocation2 + $0x318] sm:$0xff]
        %v389 = vld [vmem:[#allocation2 + $0x320] sm:$0xff]
        %v390 = vld [vmem:[#allocation2 + $0x328] sm:$0xff]
        %v391 = vld [vmem:[#allocation2 + $0x330] sm:$0xff]
        %v392 = vld [vmem:[#allocation2 + $0x338] sm:$0xff]
        %v393 = vld [vmem:[#allocation2 + $0x340] sm:$0xff]
        %v394 = vld [vmem:[#allocation2 + $0x348] sm:$0xff]
        %v395 = vld [vmem:[#allocation2 + $0x350] sm:$0xff]
        %v396 = vld [vmem:[#allocation2 + $0x358] sm:$0xff]
        %v397 = vld [vmem:[#allocation2 + $0x360] sm:$0xff]
        %v398 = vld [vmem:[#allocation2 + $0x368] sm:$0xff]
        %v399 = vld [vmem:[#allocation2 + $0x370] sm:$0xff]
        %v400 = vld [vmem:[#allocation2 + $0x378] sm:$0xff]
        %v401 = vld [vmem:[#allocation2 + $0x380] sm:$0xff]
        %v402 = vld [vmem:[#allocation2 + $0x388] sm:$0xff]
        %v403 = vld [vmem:[#allocation2 + $0x390] sm:$0xff]
        %v404 = vld [vmem:[#allocation2 + $0x398] sm:$0xff]
        %v405 = vld [vmem:[#allocation2 + $0x3a0] sm:$0xff]
        %v406 = vld [vmem:[#allocation2 + $0x3a8] sm:$0xff]
        %v407 = vld [vmem:[#allocation2 + $0x3b0] sm:$0xff]
        %v408 = vld [vmem:[#allocation2 + $0x3b8] sm:$0xff]
        %v409 = vld [vmem:[#allocation2 + $0x3c0] sm:$0xff]
        %v410 = vld [vmem:[#allocation2 + $0x3c8] sm:$0xff]
        %v411 = vld [vmem:[#allocation2 + $0x3d0] sm:$0xff]
        %v412 = vld [vmem:[#allocation2 + $0x3d8] sm:$0xff]
        %v413 = vld [vmem:[#allocation2 + $0x3e0] sm:$0xff]
        %v414 = vld [vmem:[#allocation2 + $0x3e8] sm:$0xff]
        %v415 = vld [vmem:[#allocation2 + $0x3f0] sm:$0xff]
        %v416 = vld [vmem:[#allocation2 + $0x3f8] sm:$0xff]
        %v417 = vld [vmem:[#allocation2 + $0x400] sm:$0xff]
        %v418 = vld [vmem:[#allocation2 + $0x408] sm:$0xff]
        %v419 = vld [vmem:[#allocation2 + $0x410] sm:$0xff]
        %v420 = vld [vmem:[#allocation2 + $0x418] sm:$0xff]
        %v421 = vld [vmem:[#allocation2 + $0x420] sm:$0xff]
        %v422 = vld [vmem:[#allocation2 + $0x428] sm:$0xff]
        %v423 = vld [vmem:[#allocation2 + $0x430] sm:$0xff]
        %v424 = vld [vmem:[#allocation2 + $0x438] sm:$0xff]
        %v425 = vld [vmem:[#allocation2 + $0x440] sm:$0xff]
        %v426 = vld [vmem:[#allocation2 + $0x448] sm:$0xff]
        %v427 = vld [vmem:[#allocation2 + $0x450] sm:$0xff]
        %v428 = vld [vmem:[#allocation2 + $0x458] sm:$0xff]
        %v429 = vld [vmem:[#allocation2 + $0x460] sm:$0xff]
        %v430 = vld [vmem:[#allocation2 + $0x468] sm:$0xff]
        %v431 = vld [vmem:[#allocation2 + $0x470] sm:$0xff]
        %v432 = vld [vmem:[#allocation2 + $0x478] sm:$0xff]
        %v433 = vld [vmem:[#allocation2 + $0x480] sm:$0xff]
        %v434 = vld [vmem:[#allocation2 + $0x488] sm:$0xff]
        %v435 = vld [vmem:[#allocation2 + $0x490] sm:$0xff]
        %v436 = vld [vmem:[#allocation2 + $0x498] sm:$0xff]
        %v437 = vld [vmem:[#allocation2 + $0x4a0] sm:$0xff]
        %v438 = vld [vmem:[#allocation2 + $0x4a8] sm:$0xff]
        %v439 = vld [vmem:[#allocation2 + $0x4b0] sm:$0xff]
        %v440 = vld [vmem:[#allocation2 + $0x4b8] sm:$0xff]
        %v441 = vld [vmem:[#allocation2 + $0x4c0] sm:$0xff]
        %v442 = vld [vmem:[#allocation2 + $0x4c8] sm:$0xff]
        %v443 = vld [vmem:[#allocation2 + $0x4d0] sm:$0xff]
        %v444 = vld [vmem:[#allocation2 + $0x4d8] sm:$0xff]
        %v445 = vld [vmem:[#allocation2 + $0x4e0] sm:$0xff]
        %v446 = vld [vmem:[#allocation2 + $0x4e8] sm:$0xff]
        %v447 = vld [vmem:[#allocation2 + $0x4f0] sm:$0xff]
        %v448 = vld [vmem:[#allocation2 + $0x4f8] sm:$0xff]
        %v449 = vld [vmem:[#allocation2 + $0x500] sm:$0xff]
        %v450 = vld [vmem:[#allocation2 + $0x508] sm:$0xff]
        %v451 = vld [vmem:[#allocation2 + $0x510] sm:$0xff]
        %v452 = vld [vmem:[#allocation2 + $0x518] sm:$0xff]
        %v453 = vld [vmem:[#allocation2 + $0x520] sm:$0xff]
        %v454 = vld [vmem:[#allocation2 + $0x528] sm:$0xff]
        %v455 = vld [vmem:[#allocation2 + $0x530] sm:$0xff]
        %v456 = vld [vmem:[#allocation2 + $0x538] sm:$0xff]
        %v457 = vld [vmem:[#allocation2 + $0x540] sm:$0xff]
        %v458 = vld [vmem:[#allocation2 + $0x548] sm:$0xff]
        %v459 = vld [vmem:[#allocation2 + $0x550] sm:$0xff]
        %v460 = vld [vmem:[#allocation2 + $0x558] sm:$0xff]
        %v461 = vld [vmem:[#allocation2 + $0x560] sm:$0xff]
        %v462 = vld [vmem:[#allocation2 + $0x568] sm:$0xff]
        %v463 = vld [vmem:[#allocation2 + $0x570] sm:$0xff]
        %v464 = vld [vmem:[#allocation2 + $0x578] sm:$0xff]
        %v465 = vld [vmem:[#allocation2 + $0x580] sm:$0xff]
        %v466 = vld [vmem:[#allocation2 + $0x588] sm:$0xff]
        %v467 = vld [vmem:[#allocation2 + $0x590] sm:$0xff]
        %v468 = vld [vmem:[#allocation2 + $0x598] sm:$0xff]
        %v469 = vld [vmem:[#allocation2 + $0x5a0] sm:$0xff]
        %v470 = vld [vmem:[#allocation2 + $0x5a8] sm:$0xff]
        %v471 = vld [vmem:[#allocation2 + $0x5b0] sm:$0xff]
        %v472 = vld [vmem:[#allocation2 + $0x5b8] sm:$0xff]
        %v473 = vld [vmem:[#allocation2 + $0x5c0] sm:$0xff]
        %v474 = vld [vmem:[#allocation2 + $0x5c8] sm:$0xff]
        %v475 = vld [vmem:[#allocation2 + $0x5d0] sm:$0xff]
        %v476 = vld [vmem:[#allocation2 + $0x5d8] sm:$0xff]
        %v477 = vld [vmem:[#allocation2 + $0x5e0] sm:$0xff]
        %v478 = vld [vmem:[#allocation2 + $0x5e8] sm:$0xff]
        %v479 = vld [vmem:[#allocation2 + $0x5f0] sm:$0xff]
        %v480 = vld [vmem:[#allocation2 + $0x5f8] sm:$0xff]
        %v481 = vld [vmem:[#allocation2 + $0x600] sm:$0xff]
        %v482 = vld [vmem:[#allocation2 + $0x608] sm:$0xff]
        %v483 = vld [vmem:[#allocation2 + $0x610] sm:$0xff]
        %v484 = vld [vmem:[#allocation2 + $0x618] sm:$0xff]
        %v485 = vld [vmem:[#allocation2 + $0x620] sm:$0xff]
        %v486 = vld [vmem:[#allocation2 + $0x628] sm:$0xff]
        %v487 = vld [vmem:[#allocation2 + $0x630] sm:$0xff]
        %v488 = vld [vmem:[#allocation2 + $0x638] sm:$0xff]
        %v489 = vld [vmem:[#allocation2 + $0x640] sm:$0xff]
        %v490 = vld [vmem:[#allocation2 + $0x648] sm:$0xff]
        %v491 = vld [vmem:[#allocation2 + $0x650] sm:$0xff]
        %v492 = vld [vmem:[#allocation2 + $0x658] sm:$0xff]
        %v493 = vld [vmem:[#allocation2 + $0x660] sm:$0xff]
        %v494 = vld [vmem:[#allocation2 + $0x668] sm:$0xff]
        %v495 = vld [vmem:[#allocation2 + $0x670] sm:$0xff]
        %v496 = vld [vmem:[#allocation2 + $0x678] sm:$0xff]
        %v497 = vld [vmem:[#allocation2 + $0x680] sm:$0xff]
        %v498 = vld [vmem:[#allocation2 + $0x688] sm:$0xff]
        %v499 = vld [vmem:[#allocation2 + $0x690] sm:$0xff]
        %v500 = vld [vmem:[#allocation2 + $0x698] sm:$0xff]
        %v501 = vld [vmem:[#allocation2 + $0x6a0] sm:$0xff]
        %v502 = vld [vmem:[#allocation2 + $0x6a8] sm:$0xff]
        %v503 = vld [vmem:[#allocation2 + $0x6b0] sm:$0xff]
        %v504 = vld [vmem:[#allocation2 + $0x6b8] sm:$0xff]
        %v505 = vld [vmem:[#allocation2 + $0x6c0] sm:$0xff]
        %v506 = vld [vmem:[#allocation2 + $0x6c8] sm:$0xff]
        %v507 = vld [vmem:[#allocation2 + $0x6d0] sm:$0xff]
        %v508 = vld [vmem:[#allocation2 + $0x6d8] sm:$0xff]
        %v509 = vld [vmem:[#allocation2 + $0x6e0] sm:$0xff]
        %v510 = vld [vmem:[#allocation2 + $0x6e8] sm:$0xff]
        %v511 = vld [vmem:[#allocation2 + $0x6f0] sm:$0xff]
        %v512 = vld [vmem:[#allocation2 + $0x6f8] sm:$0xff]
        %v513 = vld [vmem:[#allocation2 + $0x700] sm:$0xff]
        %v514 = vld [vmem:[#allocation2 + $0x708] sm:$0xff]
        %v515 = vld [vmem:[#allocation2 + $0x710] sm:$0xff]
        %v516 = vld [vmem:[#allocation2 + $0x718] sm:$0xff]
        %v517 = vld [vmem:[#allocation2 + $0x720] sm:$0xff]
        %v518 = vld [vmem:[#allocation2 + $0x728] sm:$0xff]
        %v519 = vld [vmem:[#allocation2 + $0x730] sm:$0xff]
        %v520 = vld [vmem:[#allocation2 + $0x738] sm:$0xff]
        %v521 = vld [vmem:[#allocation2 + $0x740] sm:$0xff]
        %v522 = vld [vmem:[#allocation2 + $0x748] sm:$0xff]
        %v523 = vld [vmem:[#allocation2 + $0x750] sm:$0xff]
        %v524 = vld [vmem:[#allocation2 + $0x758] sm:$0xff]
        %v525 = vld [vmem:[#allocation2 + $0x760] sm:$0xff]
        %v526 = vld [vmem:[#allocation2 + $0x768] sm:$0xff]
        %v527 = vld [vmem:[#allocation2 + $0x770] sm:$0xff]
        %v528 = vld [vmem:[#allocation2 + $0x778] sm:$0xff]
        %v529 = vld [vmem:[#allocation2 + $0x780] sm:$0xff]
        %v530 = vld [vmem:[#allocation2 + $0x788] sm:$0xff]
        %v531 = vld [vmem:[#allocation2 + $0x790] sm:$0xff]
        %v532 = vld [vmem:[#allocation2 + $0x798] sm:$0xff]
        %v533 = vld [vmem:[#allocation2 + $0x7a0] sm:$0xff]
        %v534 = vld [vmem:[#allocation2 + $0x7a8] sm:$0xff]
        %v535 = vld [vmem:[#allocation2 + $0x7b0] sm:$0xff]
        %v536 = vld [vmem:[#allocation2 + $0x7b8] sm:$0xff]
        %v537 = vld [vmem:[#allocation2 + $0x7c0] sm:$0xff]
        %v538 = vld [vmem:[#allocation2 + $0x7c8] sm:$0xff]
        %v539 = vld [vmem:[#allocation2 + $0x7d0] sm:$0xff]
        %v540 = vld [vmem:[#allocation2 + $0x7d8] sm:$0xff]
        %v541 = vld [vmem:[#allocation2 + $0x7e0] sm:$0xff]
        %v542 = vld [vmem:[#allocation2 + $0x7e8] sm:$0xff]
        %v543 = vld [vmem:[#allocation2 + $0x7f0] sm:$0xff]
        %v544 = vld [vmem:[#allocation2 + $0x7f8] sm:$0xff]
        %s545 = scalar_lea.vmem [#allocation2], 2048
        %v546 = vld [vmem:[%s545] sm:$0xff]
        %v547 = vld [vmem:[%s545 + $0x8] sm:$0xff]
        %v548 = vld [vmem:[%s545 + $0x10] sm:$0xff]
        %v549 = vld [vmem:[%s545 + $0x18] sm:$0xff]
        %v550 = vld [vmem:[%s545 + $0x20] sm:$0xff]
        %v551 = vld [vmem:[%s545 + $0x28] sm:$0xff]
        %v552 = vld [vmem:[%s545 + $0x30] sm:$0xff]
        %v553 = vld [vmem:[%s545 + $0x38] sm:$0xff]
        %v554 = vld [vmem:[%s545 + $0x40] sm:$0xff]
        %v555 = vld [vmem:[%s545 + $0x48] sm:$0xff]
        %v556 = vld [vmem:[%s545 + $0x50] sm:$0xff]
        %v557 = vld [vmem:[%s545 + $0x58] sm:$0xff]
        %v558 = vld [vmem:[%s545 + $0x60] sm:$0xff]
        %v559 = vld [vmem:[%s545 + $0x68] sm:$0xff]
        %v560 = vld [vmem:[%s545 + $0x70] sm:$0xff]
        %v561 = vld [vmem:[%s545 + $0x78] sm:$0xff]
        %v562 = vld [vmem:[%s545 + $0x80] sm:$0xff]
        %v563 = vld [vmem:[%s545 + $0x88] sm:$0xff]
        %v564 = vld [vmem:[%s545 + $0x90] sm:$0xff]
        %v565 = vld [vmem:[%s545 + $0x98] sm:$0xff]
        %v566 = vld [vmem:[%s545 + $0xa0] sm:$0xff]
        %v567 = vld [vmem:[%s545 + $0xa8] sm:$0xff]
        %v568 = vld [vmem:[%s545 + $0xb0] sm:$0xff]
        %v569 = vld [vmem:[%s545 + $0xb8] sm:$0xff]
        %v570 = vld [vmem:[%s545 + $0xc0] sm:$0xff]
        %v571 = vld [vmem:[%s545 + $0xc8] sm:$0xff]
        %v572 = vld [vmem:[%s545 + $0xd0] sm:$0xff]
        %v573 = vld [vmem:[%s545 + $0xd8] sm:$0xff]
        %v574 = vld [vmem:[%s545 + $0xe0] sm:$0xff]
        %v575 = vld [vmem:[%s545 + $0xe8] sm:$0xff]
        %v576 = vld [vmem:[%s545 + $0xf0] sm:$0xff]
        %v577 = vld [vmem:[%s545 + $0xf8] sm:$0xff]
        %v578 = vld [vmem:[%s545 + $0x100] sm:$0xff]
        %v579 = vld [vmem:[%s545 + $0x108] sm:$0xff]
        %v580 = vld [vmem:[%s545 + $0x110] sm:$0xff]
        %v581 = vld [vmem:[%s545 + $0x118] sm:$0xff]
        %v582 = vld [vmem:[%s545 + $0x120] sm:$0xff]
        %v583 = vld [vmem:[%s545 + $0x128] sm:$0xff]
        %v584 = vld [vmem:[%s545 + $0x130] sm:$0xff]
        %v585 = vld [vmem:[%s545 + $0x138] sm:$0xff]
        %v586 = vld [vmem:[%s545 + $0x140] sm:$0xff]
        %v587 = vld [vmem:[%s545 + $0x148] sm:$0xff]
        %v588 = vld [vmem:[%s545 + $0x150] sm:$0xff]
        %v589 = vld [vmem:[%s545 + $0x158] sm:$0xff]
        %v590 = vld [vmem:[%s545 + $0x160] sm:$0xff]
        %v591 = vld [vmem:[%s545 + $0x168] sm:$0xff]
        %v592 = vld [vmem:[%s545 + $0x170] sm:$0xff]
        %v593 = vld [vmem:[%s545 + $0x178] sm:$0xff]
        %v594 = vld [vmem:[%s545 + $0x180] sm:$0xff]
        %v595 = vld [vmem:[%s545 + $0x188] sm:$0xff]
        %v596 = vld [vmem:[%s545 + $0x190] sm:$0xff]
        %v597 = vld [vmem:[%s545 + $0x198] sm:$0xff]
        %v598 = vld [vmem:[%s545 + $0x1a0] sm:$0xff]
        %v599 = vld [vmem:[%s545 + $0x1a8] sm:$0xff]
        %v600 = vld [vmem:[%s545 + $0x1b0] sm:$0xff]
        %v601 = vld [vmem:[%s545 + $0x1b8] sm:$0xff]
        %v602 = vld [vmem:[%s545 + $0x1c0] sm:$0xff]
        %v603 = vld [vmem:[%s545 + $0x1c8] sm:$0xff]
        %v604 = vld [vmem:[%s545 + $0x1d0] sm:$0xff]
        %v605 = vld [vmem:[%s545 + $0x1d8] sm:$0xff]
        %v606 = vld [vmem:[%s545 + $0x1e0] sm:$0xff]
        %v607 = vld [vmem:[%s545 + $0x1e8] sm:$0xff]
        %v608 = vld [vmem:[%s545 + $0x1f0] sm:$0xff]
        %v609 = vld [vmem:[%s545 + $0x1f8] sm:$0xff]
        %v610 = vld [vmem:[%s545 + $0x200] sm:$0xff]
        %v611 = vld [vmem:[%s545 + $0x208] sm:$0xff]
        %v612 = vld [vmem:[%s545 + $0x210] sm:$0xff]
        %v613 = vld [vmem:[%s545 + $0x218] sm:$0xff]
        %v614 = vld [vmem:[%s545 + $0x220] sm:$0xff]
        %v615 = vld [vmem:[%s545 + $0x228] sm:$0xff]
        %v616 = vld [vmem:[%s545 + $0x230] sm:$0xff]
        %v617 = vld [vmem:[%s545 + $0x238] sm:$0xff]
        %v618 = vld [vmem:[%s545 + $0x240] sm:$0xff]
        %v619 = vld [vmem:[%s545 + $0x248] sm:$0xff]
        %v620 = vld [vmem:[%s545 + $0x250] sm:$0xff]
        %v621 = vld [vmem:[%s545 + $0x258] sm:$0xff]
        %v622 = vld [vmem:[%s545 + $0x260] sm:$0xff]
        %v623 = vld [vmem:[%s545 + $0x268] sm:$0xff]
        %v624 = vld [vmem:[%s545 + $0x270] sm:$0xff]
        %v625 = vld [vmem:[%s545 + $0x278] sm:$0xff]
        %v626 = vld [vmem:[%s545 + $0x280] sm:$0xff]
        %v627 = vld [vmem:[%s545 + $0x288] sm:$0xff]
        %v628 = vld [vmem:[%s545 + $0x290] sm:$0xff]
        %v629 = vld [vmem:[%s545 + $0x298] sm:$0xff]
        %v630 = vld [vmem:[%s545 + $0x2a0] sm:$0xff]
        %v631 = vld [vmem:[%s545 + $0x2a8] sm:$0xff]
        %v632 = vld [vmem:[%s545 + $0x2b0] sm:$0xff]
        %v633 = vld [vmem:[%s545 + $0x2b8] sm:$0xff]
        %v634 = vld [vmem:[%s545 + $0x2c0] sm:$0xff]
        %v635 = vld [vmem:[%s545 + $0x2c8] sm:$0xff]
        %v636 = vld [vmem:[%s545 + $0x2d0] sm:$0xff]
        %v637 = vld [vmem:[%s545 + $0x2d8] sm:$0xff]
        %v638 = vld [vmem:[%s545 + $0x2e0] sm:$0xff]
        %v639 = vld [vmem:[%s545 + $0x2e8] sm:$0xff]
        %v640 = vld [vmem:[%s545 + $0x2f0] sm:$0xff]
        %v641 = vld [vmem:[%s545 + $0x2f8] sm:$0xff]
        %v642 = vld [vmem:[%s545 + $0x300] sm:$0xff]
        %v643 = vld [vmem:[%s545 + $0x308] sm:$0xff]
        %v644 = vld [vmem:[%s545 + $0x310] sm:$0xff]
        %v645 = vld [vmem:[%s545 + $0x318] sm:$0xff]
        %v646 = vld [vmem:[%s545 + $0x320] sm:$0xff]
        %v647 = vld [vmem:[%s545 + $0x328] sm:$0xff]
        %v648 = vld [vmem:[%s545 + $0x330] sm:$0xff]
        %v649 = vld [vmem:[%s545 + $0x338] sm:$0xff]
        %v650 = vld [vmem:[%s545 + $0x340] sm:$0xff]
        %v651 = vld [vmem:[%s545 + $0x348] sm:$0xff]
        %v652 = vld [vmem:[%s545 + $0x350] sm:$0xff]
        %v653 = vld [vmem:[%s545 + $0x358] sm:$0xff]
        %v654 = vld [vmem:[%s545 + $0x360] sm:$0xff]
        %v655 = vld [vmem:[%s545 + $0x368] sm:$0xff]
        %v656 = vld [vmem:[%s545 + $0x370] sm:$0xff]
        %v657 = vld [vmem:[%s545 + $0x378] sm:$0xff]
        %v658 = vld [vmem:[%s545 + $0x380] sm:$0xff]
        %v659 = vld [vmem:[%s545 + $0x388] sm:$0xff]
        %v660 = vld [vmem:[%s545 + $0x390] sm:$0xff]
        %v661 = vld [vmem:[%s545 + $0x398] sm:$0xff]
        %v662 = vld [vmem:[%s545 + $0x3a0] sm:$0xff]
        %v663 = vld [vmem:[%s545 + $0x3a8] sm:$0xff]
        %v664 = vld [vmem:[%s545 + $0x3b0] sm:$0xff]
        %v665 = vld [vmem:[%s545 + $0x3b8] sm:$0xff]
        %v666 = vld [vmem:[%s545 + $0x3c0] sm:$0xff]
        %v667 = vld [vmem:[%s545 + $0x3c8] sm:$0xff]
        %v668 = vld [vmem:[%s545 + $0x3d0] sm:$0xff]
        %v669 = vld [vmem:[%s545 + $0x3d8] sm:$0xff]
        %v670 = vld [vmem:[%s545 + $0x3e0] sm:$0xff]
        %v671 = vld [vmem:[%s545 + $0x3e8] sm:$0xff]
        %v672 = vld [vmem:[%s545 + $0x3f0] sm:$0xff]
        %v673 = vld [vmem:[%s545 + $0x3f8] sm:$0xff]
        %v674 = vld [vmem:[%s545 + $0x400] sm:$0xff]
        %v675 = vld [vmem:[%s545 + $0x408] sm:$0xff]
        %v676 = vld [vmem:[%s545 + $0x410] sm:$0xff]
        %v677 = vld [vmem:[%s545 + $0x418] sm:$0xff]
        %v678 = vld [vmem:[%s545 + $0x420] sm:$0xff]
        %v679 = vld [vmem:[%s545 + $0x428] sm:$0xff]
        %v680 = vld [vmem:[%s545 + $0x430] sm:$0xff]
        %v681 = vld [vmem:[%s545 + $0x438] sm:$0xff]
        %v682 = vld [vmem:[%s545 + $0x440] sm:$0xff]
        %v683 = vld [vmem:[%s545 + $0x448] sm:$0xff]
        %v684 = vld [vmem:[%s545 + $0x450] sm:$0xff]
        %v685 = vld [vmem:[%s545 + $0x458] sm:$0xff]
        %v686 = vld [vmem:[%s545 + $0x460] sm:$0xff]
        %v687 = vld [vmem:[%s545 + $0x468] sm:$0xff]
        %v688 = vld [vmem:[%s545 + $0x470] sm:$0xff]
        %v689 = vld [vmem:[%s545 + $0x478] sm:$0xff]
        %v690 = vld [vmem:[%s545 + $0x480] sm:$0xff]
        %v691 = vld [vmem:[%s545 + $0x488] sm:$0xff]
        %v692 = vld [vmem:[%s545 + $0x490] sm:$0xff]
        %v693 = vld [vmem:[%s545 + $0x498] sm:$0xff]
        %v694 = vld [vmem:[%s545 + $0x4a0] sm:$0xff]
        %v695 = vld [vmem:[%s545 + $0x4a8] sm:$0xff]
        %v696 = vld [vmem:[%s545 + $0x4b0] sm:$0xff]
        %v697 = vld [vmem:[%s545 + $0x4b8] sm:$0xff]
        %v698 = vld [vmem:[%s545 + $0x4c0] sm:$0xff]
        %v699 = vld [vmem:[%s545 + $0x4c8] sm:$0xff]
        %v700 = vld [vmem:[%s545 + $0x4d0] sm:$0xff]
        %v701 = vld [vmem:[%s545 + $0x4d8] sm:$0xff]
        %v702 = vld [vmem:[%s545 + $0x4e0] sm:$0xff]
        %v703 = vld [vmem:[%s545 + $0x4e8] sm:$0xff]
        %v704 = vld [vmem:[%s545 + $0x4f0] sm:$0xff]
        %v705 = vld [vmem:[%s545 + $0x4f8] sm:$0xff]
        %v706 = vld [vmem:[%s545 + $0x500] sm:$0xff]
        %v707 = vld [vmem:[%s545 + $0x508] sm:$0xff]
        %v708 = vld [vmem:[%s545 + $0x510] sm:$0xff]
        %v709 = vld [vmem:[%s545 + $0x518] sm:$0xff]
        %v710 = vld [vmem:[%s545 + $0x520] sm:$0xff]
        %v711 = vld [vmem:[%s545 + $0x528] sm:$0xff]
        %v712 = vld [vmem:[%s545 + $0x530] sm:$0xff]
        %v713 = vld [vmem:[%s545 + $0x538] sm:$0xff]
        %v714 = vld [vmem:[%s545 + $0x540] sm:$0xff]
        %v715 = vld [vmem:[%s545 + $0x548] sm:$0xff]
        %v716 = vld [vmem:[%s545 + $0x550] sm:$0xff]
        %v717 = vld [vmem:[%s545 + $0x558] sm:$0xff]
        %v718 = vld [vmem:[%s545 + $0x560] sm:$0xff]
        %v719 = vld [vmem:[%s545 + $0x568] sm:$0xff]
        %v720 = vld [vmem:[%s545 + $0x570] sm:$0xff]
        %v721 = vld [vmem:[%s545 + $0x578] sm:$0xff]
        %v722 = vld [vmem:[%s545 + $0x580] sm:$0xff]
        %v723 = vld [vmem:[%s545 + $0x588] sm:$0xff]
        %v724 = vld [vmem:[%s545 + $0x590] sm:$0xff]
        %v725 = vld [vmem:[%s545 + $0x598] sm:$0xff]
        %v726 = vld [vmem:[%s545 + $0x5a0] sm:$0xff]
        %v727 = vld [vmem:[%s545 + $0x5a8] sm:$0xff]
        %v728 = vld [vmem:[%s545 + $0x5b0] sm:$0xff]
        %v729 = vld [vmem:[%s545 + $0x5b8] sm:$0xff]
        %v730 = vld [vmem:[%s545 + $0x5c0] sm:$0xff]
        %v731 = vld [vmem:[%s545 + $0x5c8] sm:$0xff]
        %v732 = vld [vmem:[%s545 + $0x5d0] sm:$0xff]
        %v733 = vld [vmem:[%s545 + $0x5d8] sm:$0xff]
        %v734 = vld [vmem:[%s545 + $0x5e0] sm:$0xff]
        %v735 = vld [vmem:[%s545 + $0x5e8] sm:$0xff]
        %v736 = vld [vmem:[%s545 + $0x5f0] sm:$0xff]
        %v737 = vld [vmem:[%s545 + $0x5f8] sm:$0xff]
        %v738 = vld [vmem:[%s545 + $0x600] sm:$0xff]
        %v739 = vld [vmem:[%s545 + $0x608] sm:$0xff]
        %v740 = vld [vmem:[%s545 + $0x610] sm:$0xff]
        %v741 = vld [vmem:[%s545 + $0x618] sm:$0xff]
        %v742 = vld [vmem:[%s545 + $0x620] sm:$0xff]
        %v743 = vld [vmem:[%s545 + $0x628] sm:$0xff]
        %v744 = vld [vmem:[%s545 + $0x630] sm:$0xff]
        %v745 = vld [vmem:[%s545 + $0x638] sm:$0xff]
        %v746 = vld [vmem:[%s545 + $0x640] sm:$0xff]
        %v747 = vld [vmem:[%s545 + $0x648] sm:$0xff]
        %v748 = vld [vmem:[%s545 + $0x650] sm:$0xff]
        %v749 = vld [vmem:[%s545 + $0x658] sm:$0xff]
        %v750 = vld [vmem:[%s545 + $0x660] sm:$0xff]
        %v751 = vld [vmem:[%s545 + $0x668] sm:$0xff]
        %v752 = vld [vmem:[%s545 + $0x670] sm:$0xff]
        %v753 = vld [vmem:[%s545 + $0x678] sm:$0xff]
        %v754 = vld [vmem:[%s545 + $0x680] sm:$0xff]
        %v755 = vld [vmem:[%s545 + $0x688] sm:$0xff]
        %v756 = vld [vmem:[%s545 + $0x690] sm:$0xff]
        %v757 = vld [vmem:[%s545 + $0x698] sm:$0xff]
        %v758 = vld [vmem:[%s545 + $0x6a0] sm:$0xff]
        %v759 = vld [vmem:[%s545 + $0x6a8] sm:$0xff]
        %v760 = vld [vmem:[%s545 + $0x6b0] sm:$0xff]
        %v761 = vld [vmem:[%s545 + $0x6b8] sm:$0xff]
        %v762 = vld [vmem:[%s545 + $0x6c0] sm:$0xff]
        %v763 = vld [vmem:[%s545 + $0x6c8] sm:$0xff]
        %v764 = vld [vmem:[%s545 + $0x6d0] sm:$0xff]
        %v765 = vld [vmem:[%s545 + $0x6d8] sm:$0xff]
        %v766 = vld [vmem:[%s545 + $0x6e0] sm:$0xff]
        %v767 = vld [vmem:[%s545 + $0x6e8] sm:$0xff]
        %v768 = vld [vmem:[%s545 + $0x6f0] sm:$0xff]
        %v769 = vld [vmem:[%s545 + $0x6f8] sm:$0xff]
        %v770 = vld [vmem:[%s545 + $0x700] sm:$0xff]
        %v771 = vld [vmem:[%s545 + $0x708] sm:$0xff]
        %v772 = vld [vmem:[%s545 + $0x710] sm:$0xff]
        %v773 = vld [vmem:[%s545 + $0x718] sm:$0xff]
        %v774 = vld [vmem:[%s545 + $0x720] sm:$0xff]
        %v775 = vld [vmem:[%s545 + $0x728] sm:$0xff]
        %v776 = vld [vmem:[%s545 + $0x730] sm:$0xff]
        %v777 = vld [vmem:[%s545 + $0x738] sm:$0xff]
        %v778 = vld [vmem:[%s545 + $0x740] sm:$0xff]
        %v779 = vld [vmem:[%s545 + $0x748] sm:$0xff]
        %v780 = vld [vmem:[%s545 + $0x750] sm:$0xff]
        %v781 = vld [vmem:[%s545 + $0x758] sm:$0xff]
        %v782 = vld [vmem:[%s545 + $0x760] sm:$0xff]
        %v783 = vld [vmem:[%s545 + $0x768] sm:$0xff]
        %v784 = vld [vmem:[%s545 + $0x770] sm:$0xff]
        %v785 = vld [vmem:[%s545 + $0x778] sm:$0xff]
        %v786 = vld [vmem:[%s545 + $0x780] sm:$0xff]
        %v787 = vld [vmem:[%s545 + $0x788] sm:$0xff]
        %v788 = vld [vmem:[%s545 + $0x790] sm:$0xff]
        %v789 = vld [vmem:[%s545 + $0x798] sm:$0xff]
        %v790 = vld [vmem:[%s545 + $0x7a0] sm:$0xff]
        %v791 = vld [vmem:[%s545 + $0x7a8] sm:$0xff]
        %v792 = vld [vmem:[%s545 + $0x7b0] sm:$0xff]
        %v793 = vld [vmem:[%s545 + $0x7b8] sm:$0xff]
        %v794 = vld [vmem:[%s545 + $0x7c0] sm:$0xff]
        %v795 = vld [vmem:[%s545 + $0x7c8] sm:$0xff]
        %v796 = vld [vmem:[%s545 + $0x7d0] sm:$0xff]
        %v797 = vld [vmem:[%s545 + $0x7d8] sm:$0xff]
        %v798 = vld [vmem:[%s545 + $0x7e0] sm:$0xff]
        %v799 = vld [vmem:[%s545 + $0x7e8] sm:$0xff]
        %v800 = vld [vmem:[%s545 + $0x7f0] sm:$0xff]
        %v801 = vld [vmem:[%s545 + $0x7f8] sm:$0xff]
        %v806 = vunpack.c.l.b16 %v285
        %v807 = vunpack.c.h.b16 %v285
        %v808 = vunpack.c.l.b16 %v286
        %v809 = vunpack.c.h.b16 %v286
        %v810 = vunpack.c.l.b16 %v287
        %v811 = vunpack.c.h.b16 %v287
        %v812 = vunpack.c.l.b16 %v288
        %v813 = vunpack.c.h.b16 %v288
        %v814 = vpack.c.b16 %v806, %v806
        %v815 = vpack.c.b16 %v807, %v807
        %v816 = vpack.c.b16 %v808, %v808
        %v817 = vpack.c.b16 %v809, %v809
        %v818 = vpack.c.b16 %v810, %v810
        %v819 = vpack.c.b16 %v811, %v811
        %v820 = vpack.c.b16 %v812, %v812
        %v821 = vpack.c.b16 %v813, %v813
        %v823 = vshrl.u32 %v814, 16
        %v826 = vshrl.u32 %v815, 16
        %v829 = vshrl.u32 %v816, 16
        %v832 = vshrl.u32 %v817, 16
        %v835 = vshrl.u32 %v818, 16
        %v838 = vshrl.u32 %v819, 16
        %v841 = vshrl.u32 %v820, 16
        %v844 = vshrl.u32 %v821, 16
        %v1110 = vunpack.c.l.b16 %v546
        %v1111 = vunpack.c.h.b16 %v546
        %v1112 = vunpack.c.l.b16 %v547
        %v1113 = vunpack.c.h.b16 %v547
        %v1114 = vunpack.c.l.b16 %v548
        %v1115 = vunpack.c.h.b16 %v548
        %v1116 = vunpack.c.l.b16 %v549
        %v1117 = vunpack.c.h.b16 %v549
        %v1118 = vunpack.c.l.b16 %v550
        %v1119 = vunpack.c.h.b16 %v550
        %v1120 = vunpack.c.l.b16 %v551
        %v1121 = vunpack.c.h.b16 %v551
        %v1122 = vunpack.c.l.b16 %v552
        %v1123 = vunpack.c.h.b16 %v552
        %v1124 = vunpack.c.l.b16 %v553
        %v1125 = vunpack.c.h.b16 %v553
        %v1126 = vunpack.c.l.b16 %v554
        %v1127 = vunpack.c.h.b16 %v554
        %v1128 = vunpack.c.l.b16 %v555
        %v1129 = vunpack.c.h.b16 %v555
        %v1130 = vunpack.c.l.b16 %v556
        %v1131 = vunpack.c.h.b16 %v556
        %v1132 = vunpack.c.l.b16 %v557
        %v1133 = vunpack.c.h.b16 %v557
        %v1134 = vunpack.c.l.b16 %v558
        %v1135 = vunpack.c.h.b16 %v558
        %v1136 = vunpack.c.l.b16 %v559
        %v1137 = vunpack.c.h.b16 %v559
        %v1138 = vunpack.c.l.b16 %v560
        %v1139 = vunpack.c.h.b16 %v560
        %v1140 = vunpack.c.l.b16 %v561
        %v1141 = vunpack.c.h.b16 %v561
        %v1142 = vunpack.c.l.b16 %v562
        %v1143 = vunpack.c.h.b16 %v562
        %v1144 = vunpack.c.l.b16 %v563
        %v1145 = vunpack.c.h.b16 %v563
        %v1146 = vunpack.c.l.b16 %v564
        %v1147 = vunpack.c.h.b16 %v564
        %v1148 = vunpack.c.l.b16 %v565
        %v1149 = vunpack.c.h.b16 %v565
        %v1150 = vunpack.c.l.b16 %v566
        %v1151 = vunpack.c.h.b16 %v566
        %v1152 = vunpack.c.l.b16 %v567
        %v1153 = vunpack.c.h.b16 %v567
        %v1154 = vunpack.c.l.b16 %v568
        %v1155 = vunpack.c.h.b16 %v568
        %v1156 = vunpack.c.l.b16 %v569
        %v1157 = vunpack.c.h.b16 %v569
        %v1158 = vunpack.c.l.b16 %v570
        %v1159 = vunpack.c.h.b16 %v570
        %v1160 = vunpack.c.l.b16 %v571
        %v1161 = vunpack.c.h.b16 %v571
        %v1162 = vunpack.c.l.b16 %v572
        %v1163 = vunpack.c.h.b16 %v572
        %v1164 = vunpack.c.l.b16 %v573
        %v1165 = vunpack.c.h.b16 %v573
        %v1166 = vunpack.c.l.b16 %v574
        %v1167 = vunpack.c.h.b16 %v574
        %v1168 = vunpack.c.l.b16 %v575
        %v1169 = vunpack.c.h.b16 %v575
        %v1170 = vunpack.c.l.b16 %v576
        %v1171 = vunpack.c.h.b16 %v576
        %v1172 = vunpack.c.l.b16 %v577
        %v1173 = vunpack.c.h.b16 %v577
        %v1174 = vunpack.c.l.b16 %v578
        %v1175 = vunpack.c.h.b16 %v578
        %v1176 = vunpack.c.l.b16 %v579
        %v1177 = vunpack.c.h.b16 %v579
        %v1178 = vunpack.c.l.b16 %v580
        %v1179 = vunpack.c.h.b16 %v580
        %v1180 = vunpack.c.l.b16 %v581
        %v1181 = vunpack.c.h.b16 %v581
        %v1182 = vunpack.c.l.b16 %v582
        %v1183 = vunpack.c.h.b16 %v582
        %v1184 = vunpack.c.l.b16 %v583
        %v1185 = vunpack.c.h.b16 %v583
        %v1186 = vunpack.c.l.b16 %v584
        %v1187 = vunpack.c.h.b16 %v584
        %v1188 = vunpack.c.l.b16 %v585
        %v1189 = vunpack.c.h.b16 %v585
        %v1190 = vunpack.c.l.b16 %v586
        %v1191 = vunpack.c.h.b16 %v586
        %v1192 = vunpack.c.l.b16 %v587
        %v1193 = vunpack.c.h.b16 %v587
        %v1194 = vunpack.c.l.b16 %v588
        %v1195 = vunpack.c.h.b16 %v588
        %v1196 = vunpack.c.l.b16 %v589
        %v1197 = vunpack.c.h.b16 %v589
        %v1198 = vunpack.c.l.b16 %v590
        %v1199 = vunpack.c.h.b16 %v590
        %v1200 = vunpack.c.l.b16 %v591
        %v1201 = vunpack.c.h.b16 %v591
        %v1202 = vunpack.c.l.b16 %v592
        %v1203 = vunpack.c.h.b16 %v592
        %v1204 = vunpack.c.l.b16 %v593
        %v1205 = vunpack.c.h.b16 %v593
        %v1206 = vunpack.c.l.b16 %v594
        %v1207 = vunpack.c.h.b16 %v594
        %v1208 = vunpack.c.l.b16 %v595
        %v1209 = vunpack.c.h.b16 %v595
        %v1210 = vunpack.c.l.b16 %v596
        %v1211 = vunpack.c.h.b16 %v596
        %v1212 = vunpack.c.l.b16 %v597
        %v1213 = vunpack.c.h.b16 %v597
        %v1214 = vunpack.c.l.b16 %v598
        %v1215 = vunpack.c.h.b16 %v598
        %v1216 = vunpack.c.l.b16 %v599
        %v1217 = vunpack.c.h.b16 %v599
        %v1218 = vunpack.c.l.b16 %v600
        %v1219 = vunpack.c.h.b16 %v600
        %v1220 = vunpack.c.l.b16 %v601
        %v1221 = vunpack.c.h.b16 %v601
        %v1222 = vunpack.c.l.b16 %v602
        %v1223 = vunpack.c.h.b16 %v602
        %v1224 = vunpack.c.l.b16 %v603
        %v1225 = vunpack.c.h.b16 %v603
        %v1226 = vunpack.c.l.b16 %v604
        %v1227 = vunpack.c.h.b16 %v604
        %v1228 = vunpack.c.l.b16 %v605
        %v1229 = vunpack.c.h.b16 %v605
        %v1230 = vunpack.c.l.b16 %v606
        %v1231 = vunpack.c.h.b16 %v606
        %v1232 = vunpack.c.l.b16 %v607
        %v1233 = vunpack.c.h.b16 %v607
        %v1234 = vunpack.c.l.b16 %v608
        %v1235 = vunpack.c.h.b16 %v608
        %v1236 = vunpack.c.l.b16 %v609
        %v1237 = vunpack.c.h.b16 %v609
        %v1238 = vunpack.c.l.b16 %v610
        %v1239 = vunpack.c.h.b16 %v610
        %v1240 = vunpack.c.l.b16 %v611
        %v1241 = vunpack.c.h.b16 %v611
        %v1242 = vunpack.c.l.b16 %v612
        %v1243 = vunpack.c.h.b16 %v612
        %v1244 = vunpack.c.l.b16 %v613
        %v1245 = vunpack.c.h.b16 %v613
        %v1246 = vunpack.c.l.b16 %v614
        %v1247 = vunpack.c.h.b16 %v614
        %v1248 = vunpack.c.l.b16 %v615
        %v1249 = vunpack.c.h.b16 %v615
        %v1250 = vunpack.c.l.b16 %v616
        %v1251 = vunpack.c.h.b16 %v616
        %v1252 = vunpack.c.l.b16 %v617
        %v1253 = vunpack.c.h.b16 %v617
        %v1254 = vunpack.c.l.b16 %v618
        %v1255 = vunpack.c.h.b16 %v618
        %v1256 = vunpack.c.l.b16 %v619
        %v1257 = vunpack.c.h.b16 %v619
        %v1258 = vunpack.c.l.b16 %v620
        %v1259 = vunpack.c.h.b16 %v620
        %v1260 = vunpack.c.l.b16 %v621
        %v1261 = vunpack.c.h.b16 %v621
        %v1262 = vunpack.c.l.b16 %v622
        %v1263 = vunpack.c.h.b16 %v622
        %v1264 = vunpack.c.l.b16 %v623
        %v1265 = vunpack.c.h.b16 %v623
        %v1266 = vunpack.c.l.b16 %v624
        %v1267 = vunpack.c.h.b16 %v624
        %v1268 = vunpack.c.l.b16 %v625
        %v1269 = vunpack.c.h.b16 %v625
        %v1270 = vunpack.c.l.b16 %v626
        %v1271 = vunpack.c.h.b16 %v626
        %v1272 = vunpack.c.l.b16 %v627
        %v1273 = vunpack.c.h.b16 %v627
        %v1274 = vunpack.c.l.b16 %v628
        %v1275 = vunpack.c.h.b16 %v628
        %v1276 = vunpack.c.l.b16 %v629
        %v1277 = vunpack.c.h.b16 %v629
        %v1278 = vunpack.c.l.b16 %v630
        %v1279 = vunpack.c.h.b16 %v630
        %v1280 = vunpack.c.l.b16 %v631
        %v1281 = vunpack.c.h.b16 %v631
        %v1282 = vunpack.c.l.b16 %v632
        %v1283 = vunpack.c.h.b16 %v632
        %v1284 = vunpack.c.l.b16 %v633
        %v1285 = vunpack.c.h.b16 %v633
        %v1286 = vunpack.c.l.b16 %v634
        %v1287 = vunpack.c.h.b16 %v634
        %v1288 = vunpack.c.l.b16 %v635
        %v1289 = vunpack.c.h.b16 %v635
        %v1290 = vunpack.c.l.b16 %v636
        %v1291 = vunpack.c.h.b16 %v636
        %v1292 = vunpack.c.l.b16 %v637
        %v1293 = vunpack.c.h.b16 %v637
        %v1294 = vunpack.c.l.b16 %v638
        %v1295 = vunpack.c.h.b16 %v638
        %v1296 = vunpack.c.l.b16 %v639
        %v1297 = vunpack.c.h.b16 %v639
        %v1298 = vunpack.c.l.b16 %v640
        %v1299 = vunpack.c.h.b16 %v640
        %v1300 = vunpack.c.l.b16 %v641
        %v1301 = vunpack.c.h.b16 %v641
        %v1302 = vunpack.c.l.b16 %v642
        %v1303 = vunpack.c.h.b16 %v642
        %v1304 = vunpack.c.l.b16 %v643
        %v1305 = vunpack.c.h.b16 %v643
        %v1306 = vunpack.c.l.b16 %v644
        %v1307 = vunpack.c.h.b16 %v644
        %v1308 = vunpack.c.l.b16 %v645
        %v1309 = vunpack.c.h.b16 %v645
        %v1310 = vunpack.c.l.b16 %v646
        %v1311 = vunpack.c.h.b16 %v646
        %v1312 = vunpack.c.l.b16 %v647
        %v1313 = vunpack.c.h.b16 %v647
        %v1314 = vunpack.c.l.b16 %v648
        %v1315 = vunpack.c.h.b16 %v648
        %v1316 = vunpack.c.l.b16 %v649
        %v1317 = vunpack.c.h.b16 %v649
        %v1318 = vunpack.c.l.b16 %v650
        %v1319 = vunpack.c.h.b16 %v650
        %v1320 = vunpack.c.l.b16 %v651
        %v1321 = vunpack.c.h.b16 %v651
        %v1322 = vunpack.c.l.b16 %v652
        %v1323 = vunpack.c.h.b16 %v652
        %v1324 = vunpack.c.l.b16 %v653
        %v1325 = vunpack.c.h.b16 %v653
        %v1326 = vunpack.c.l.b16 %v654
        %v1327 = vunpack.c.h.b16 %v654
        %v1328 = vunpack.c.l.b16 %v655
        %v1329 = vunpack.c.h.b16 %v655
        %v1330 = vunpack.c.l.b16 %v656
        %v1331 = vunpack.c.h.b16 %v656
        %v1332 = vunpack.c.l.b16 %v657
        %v1333 = vunpack.c.h.b16 %v657
        %v1334 = vunpack.c.l.b16 %v658
        %v1335 = vunpack.c.h.b16 %v658
        %v1336 = vunpack.c.l.b16 %v659
        %v1337 = vunpack.c.h.b16 %v659
        %v1338 = vunpack.c.l.b16 %v660
        %v1339 = vunpack.c.h.b16 %v660
        %v1340 = vunpack.c.l.b16 %v661
        %v1341 = vunpack.c.h.b16 %v661
        %v1342 = vunpack.c.l.b16 %v662
        %v1343 = vunpack.c.h.b16 %v662
        %v1344 = vunpack.c.l.b16 %v663
        %v1345 = vunpack.c.h.b16 %v663
        %v1346 = vunpack.c.l.b16 %v664
        %v1347 = vunpack.c.h.b16 %v664
        %v1348 = vunpack.c.l.b16 %v665
        %v1349 = vunpack.c.h.b16 %v665
        %v1350 = vunpack.c.l.b16 %v666
        %v1351 = vunpack.c.h.b16 %v666
        %v1352 = vunpack.c.l.b16 %v667
        %v1353 = vunpack.c.h.b16 %v667
        %v1354 = vunpack.c.l.b16 %v668
        %v1355 = vunpack.c.h.b16 %v668
        %v1356 = vunpack.c.l.b16 %v669
        %v1357 = vunpack.c.h.b16 %v669
        %v1358 = vunpack.c.l.b16 %v670
        %v1359 = vunpack.c.h.b16 %v670
        %v1360 = vunpack.c.l.b16 %v671
        %v1361 = vunpack.c.h.b16 %v671
        %v1362 = vunpack.c.l.b16 %v672
        %v1363 = vunpack.c.h.b16 %v672
        %v1364 = vunpack.c.l.b16 %v673
        %v1365 = vunpack.c.h.b16 %v673
        %v1366 = vunpack.c.l.b16 %v674
        %v1367 = vunpack.c.h.b16 %v674
        %v1368 = vunpack.c.l.b16 %v675
        %v1369 = vunpack.c.h.b16 %v675
        %v1370 = vunpack.c.l.b16 %v676
        %v1371 = vunpack.c.h.b16 %v676
        %v1372 = vunpack.c.l.b16 %v677
        %v1373 = vunpack.c.h.b16 %v677
        %v1374 = vunpack.c.l.b16 %v678
        %v1375 = vunpack.c.h.b16 %v678
        %v1376 = vunpack.c.l.b16 %v679
        %v1377 = vunpack.c.h.b16 %v679
        %v1378 = vunpack.c.l.b16 %v680
        %v1379 = vunpack.c.h.b16 %v680
        %v1380 = vunpack.c.l.b16 %v681
        %v1381 = vunpack.c.h.b16 %v681
        %v1382 = vunpack.c.l.b16 %v682
        %v1383 = vunpack.c.h.b16 %v682
        %v1384 = vunpack.c.l.b16 %v683
        %v1385 = vunpack.c.h.b16 %v683
        %v1386 = vunpack.c.l.b16 %v684
        %v1387 = vunpack.c.h.b16 %v684
        %v1388 = vunpack.c.l.b16 %v685
        %v1389 = vunpack.c.h.b16 %v685
        %v1390 = vunpack.c.l.b16 %v686
        %v1391 = vunpack.c.h.b16 %v686
        %v1392 = vunpack.c.l.b16 %v687
        %v1393 = vunpack.c.h.b16 %v687
        %v1394 = vunpack.c.l.b16 %v688
        %v1395 = vunpack.c.h.b16 %v688
        %v1396 = vunpack.c.l.b16 %v689
        %v1397 = vunpack.c.h.b16 %v689
        %v1398 = vunpack.c.l.b16 %v690
        %v1399 = vunpack.c.h.b16 %v690
        %v1400 = vunpack.c.l.b16 %v691
        %v1401 = vunpack.c.h.b16 %v691
        %v1402 = vunpack.c.l.b16 %v692
        %v1403 = vunpack.c.h.b16 %v692
        %v1404 = vunpack.c.l.b16 %v693
        %v1405 = vunpack.c.h.b16 %v693
        %v1406 = vunpack.c.l.b16 %v694
        %v1407 = vunpack.c.h.b16 %v694
        %v1408 = vunpack.c.l.b16 %v695
        %v1409 = vunpack.c.h.b16 %v695
        %v1410 = vunpack.c.l.b16 %v696
        %v1411 = vunpack.c.h.b16 %v696
        %v1412 = vunpack.c.l.b16 %v697
        %v1413 = vunpack.c.h.b16 %v697
        %v1414 = vunpack.c.l.b16 %v698
        %v1415 = vunpack.c.h.b16 %v698
        %v1416 = vunpack.c.l.b16 %v699
        %v1417 = vunpack.c.h.b16 %v699
        %v1418 = vunpack.c.l.b16 %v700
        %v1419 = vunpack.c.h.b16 %v700
        %v1420 = vunpack.c.l.b16 %v701
        %v1421 = vunpack.c.h.b16 %v701
        %v1422 = vunpack.c.l.b16 %v702
        %v1423 = vunpack.c.h.b16 %v702
        %v1424 = vunpack.c.l.b16 %v703
        %v1425 = vunpack.c.h.b16 %v703
        %v1426 = vunpack.c.l.b16 %v704
        %v1427 = vunpack.c.h.b16 %v704
        %v1428 = vunpack.c.l.b16 %v705
        %v1429 = vunpack.c.h.b16 %v705
        %v1430 = vunpack.c.l.b16 %v706
        %v1431 = vunpack.c.h.b16 %v706
        %v1432 = vunpack.c.l.b16 %v707
        %v1433 = vunpack.c.h.b16 %v707
        %v1434 = vunpack.c.l.b16 %v708
        %v1435 = vunpack.c.h.b16 %v708
        %v1436 = vunpack.c.l.b16 %v709
        %v1437 = vunpack.c.h.b16 %v709
        %v1438 = vunpack.c.l.b16 %v710
        %v1439 = vunpack.c.h.b16 %v710
        %v1440 = vunpack.c.l.b16 %v711
        %v1441 = vunpack.c.h.b16 %v711
        %v1442 = vunpack.c.l.b16 %v712
        %v1443 = vunpack.c.h.b16 %v712
        %v1444 = vunpack.c.l.b16 %v713
        %v1445 = vunpack.c.h.b16 %v713
        %v1446 = vunpack.c.l.b16 %v714
        %v1447 = vunpack.c.h.b16 %v714
        %v1448 = vunpack.c.l.b16 %v715
        %v1449 = vunpack.c.h.b16 %v715
        %v1450 = vunpack.c.l.b16 %v716
        %v1451 = vunpack.c.h.b16 %v716
        %v1452 = vunpack.c.l.b16 %v717
        %v1453 = vunpack.c.h.b16 %v717
        %v1454 = vunpack.c.l.b16 %v718
        %v1455 = vunpack.c.h.b16 %v718
        %v1456 = vunpack.c.l.b16 %v719
        %v1457 = vunpack.c.h.b16 %v719
        %v1458 = vunpack.c.l.b16 %v720
        %v1459 = vunpack.c.h.b16 %v720
        %v1460 = vunpack.c.l.b16 %v721
        %v1461 = vunpack.c.h.b16 %v721
        %v1462 = vunpack.c.l.b16 %v722
        %v1463 = vunpack.c.h.b16 %v722
        %v1464 = vunpack.c.l.b16 %v723
        %v1465 = vunpack.c.h.b16 %v723
        %v1466 = vunpack.c.l.b16 %v724
        %v1467 = vunpack.c.h.b16 %v724
        %v1468 = vunpack.c.l.b16 %v725
        %v1469 = vunpack.c.h.b16 %v725
        %v1470 = vunpack.c.l.b16 %v726
        %v1471 = vunpack.c.h.b16 %v726
        %v1472 = vunpack.c.l.b16 %v727
        %v1473 = vunpack.c.h.b16 %v727
        %v1474 = vunpack.c.l.b16 %v728
        %v1475 = vunpack.c.h.b16 %v728
        %v1476 = vunpack.c.l.b16 %v729
        %v1477 = vunpack.c.h.b16 %v729
        %v1478 = vunpack.c.l.b16 %v730
        %v1479 = vunpack.c.h.b16 %v730
        %v1480 = vunpack.c.l.b16 %v731
        %v1481 = vunpack.c.h.b16 %v731
        %v1482 = vunpack.c.l.b16 %v732
        %v1483 = vunpack.c.h.b16 %v732
        %v1484 = vunpack.c.l.b16 %v733
        %v1485 = vunpack.c.h.b16 %v733
        %v1486 = vunpack.c.l.b16 %v734
        %v1487 = vunpack.c.h.b16 %v734
        %v1488 = vunpack.c.l.b16 %v735
        %v1489 = vunpack.c.h.b16 %v735
        %v1490 = vunpack.c.l.b16 %v736
        %v1491 = vunpack.c.h.b16 %v736
        %v1492 = vunpack.c.l.b16 %v737
        %v1493 = vunpack.c.h.b16 %v737
        %v1494 = vunpack.c.l.b16 %v738
        %v1495 = vunpack.c.h.b16 %v738
        %v1496 = vunpack.c.l.b16 %v739
        %v1497 = vunpack.c.h.b16 %v739
        %v1498 = vunpack.c.l.b16 %v740
        %v1499 = vunpack.c.h.b16 %v740
        %v1500 = vunpack.c.l.b16 %v741
        %v1501 = vunpack.c.h.b16 %v741
        %v1502 = vunpack.c.l.b16 %v742
        %v1503 = vunpack.c.h.b16 %v742
        %v1504 = vunpack.c.l.b16 %v743
        %v1505 = vunpack.c.h.b16 %v743
        %v1506 = vunpack.c.l.b16 %v744
        %v1507 = vunpack.c.h.b16 %v744
        %v1508 = vunpack.c.l.b16 %v745
        %v1509 = vunpack.c.h.b16 %v745
        %v1510 = vunpack.c.l.b16 %v746
        %v1511 = vunpack.c.h.b16 %v746
        %v1512 = vunpack.c.l.b16 %v747
        %v1513 = vunpack.c.h.b16 %v747
        %v1514 = vunpack.c.l.b16 %v748
        %v1515 = vunpack.c.h.b16 %v748
        %v1516 = vunpack.c.l.b16 %v749
        %v1517 = vunpack.c.h.b16 %v749
        %v1518 = vunpack.c.l.b16 %v750
        %v1519 = vunpack.c.h.b16 %v750
        %v1520 = vunpack.c.l.b16 %v751
        %v1521 = vunpack.c.h.b16 %v751
        %v1522 = vunpack.c.l.b16 %v752
        %v1523 = vunpack.c.h.b16 %v752
        %v1524 = vunpack.c.l.b16 %v753
        %v1525 = vunpack.c.h.b16 %v753
        %v1526 = vunpack.c.l.b16 %v754
        %v1527 = vunpack.c.h.b16 %v754
        %v1528 = vunpack.c.l.b16 %v755
        %v1529 = vunpack.c.h.b16 %v755
        %v1530 = vunpack.c.l.b16 %v756
        %v1531 = vunpack.c.h.b16 %v756
        %v1532 = vunpack.c.l.b16 %v757
        %v1533 = vunpack.c.h.b16 %v757
        %v1534 = vunpack.c.l.b16 %v758
        %v1535 = vunpack.c.h.b16 %v758
        %v1536 = vunpack.c.l.b16 %v759
        %v1537 = vunpack.c.h.b16 %v759
        %v1538 = vunpack.c.l.b16 %v760
        %v1539 = vunpack.c.h.b16 %v760
        %v1540 = vunpack.c.l.b16 %v761
        %v1541 = vunpack.c.h.b16 %v761
        %v1542 = vunpack.c.l.b16 %v762
        %v1543 = vunpack.c.h.b16 %v762
        %v1544 = vunpack.c.l.b16 %v763
        %v1545 = vunpack.c.h.b16 %v763
        %v1546 = vunpack.c.l.b16 %v764
        %v1547 = vunpack.c.h.b16 %v764
        %v1548 = vunpack.c.l.b16 %v765
        %v1549 = vunpack.c.h.b16 %v765
        %v1550 = vunpack.c.l.b16 %v766
        %v1551 = vunpack.c.h.b16 %v766
        %v1552 = vunpack.c.l.b16 %v767
        %v1553 = vunpack.c.h.b16 %v767
        %v1554 = vunpack.c.l.b16 %v768
        %v1555 = vunpack.c.h.b16 %v768
        %v1556 = vunpack.c.l.b16 %v769
        %v1557 = vunpack.c.h.b16 %v769
        %v1558 = vunpack.c.l.b16 %v770
        %v1559 = vunpack.c.h.b16 %v770
        %v1560 = vunpack.c.l.b16 %v771
        %v1561 = vunpack.c.h.b16 %v771
        %v1562 = vunpack.c.l.b16 %v772
        %v1563 = vunpack.c.h.b16 %v772
        %v1564 = vunpack.c.l.b16 %v773
        %v1565 = vunpack.c.h.b16 %v773
        %v1566 = vunpack.c.l.b16 %v774
        %v1567 = vunpack.c.h.b16 %v774
        %v1568 = vunpack.c.l.b16 %v775
        %v1569 = vunpack.c.h.b16 %v775
        %v1570 = vunpack.c.l.b16 %v776
        %v1571 = vunpack.c.h.b16 %v776
        %v1572 = vunpack.c.l.b16 %v777
        %v1573 = vunpack.c.h.b16 %v777
        %v1574 = vunpack.c.l.b16 %v778
        %v1575 = vunpack.c.h.b16 %v778
        %v1576 = vunpack.c.l.b16 %v779
        %v1577 = vunpack.c.h.b16 %v779
        %v1578 = vunpack.c.l.b16 %v780
        %v1579 = vunpack.c.h.b16 %v780
        %v1580 = vunpack.c.l.b16 %v781
        %v1581 = vunpack.c.h.b16 %v781
        %v1582 = vunpack.c.l.b16 %v782
        %v1583 = vunpack.c.h.b16 %v782
        %v1584 = vunpack.c.l.b16 %v783
        %v1585 = vunpack.c.h.b16 %v783
        %v1586 = vunpack.c.l.b16 %v784
        %v1587 = vunpack.c.h.b16 %v784
        %v1588 = vunpack.c.l.b16 %v785
        %v1589 = vunpack.c.h.b16 %v785
        %v1590 = vunpack.c.l.b16 %v786
        %v1591 = vunpack.c.h.b16 %v786
        %v1592 = vunpack.c.l.b16 %v787
        %v1593 = vunpack.c.h.b16 %v787
        %v1594 = vunpack.c.l.b16 %v788
        %v1595 = vunpack.c.h.b16 %v788
        %v1596 = vunpack.c.l.b16 %v789
        %v1597 = vunpack.c.h.b16 %v789
        %v1598 = vunpack.c.l.b16 %v790
        %v1599 = vunpack.c.h.b16 %v790
        %v1600 = vunpack.c.l.b16 %v791
        %v1601 = vunpack.c.h.b16 %v791
        %v1602 = vunpack.c.l.b16 %v792
        %v1603 = vunpack.c.h.b16 %v792
        %v1604 = vunpack.c.l.b16 %v793
        %v1605 = vunpack.c.h.b16 %v793
        %v1606 = vunpack.c.l.b16 %v794
        %v1607 = vunpack.c.h.b16 %v794
        %v1608 = vunpack.c.l.b16 %v795
        %v1609 = vunpack.c.h.b16 %v795
        %v1610 = vunpack.c.l.b16 %v796
        %v1611 = vunpack.c.h.b16 %v796
        %v1612 = vunpack.c.l.b16 %v797
        %v1613 = vunpack.c.h.b16 %v797
        %v1614 = vunpack.c.l.b16 %v798
        %v1615 = vunpack.c.h.b16 %v798
        %v1616 = vunpack.c.l.b16 %v799
        %v1617 = vunpack.c.h.b16 %v799
        %v1618 = vunpack.c.l.b16 %v800
        %v1619 = vunpack.c.h.b16 %v800
        %v1620 = vunpack.c.l.b16 %v801
        %v1621 = vunpack.c.h.b16 %v801
        %v1622 = vpack.c.b16 %v1114, %v1110
        %v1623 = vpack.c.b16 %v1115, %v1111
        %v1624 = vpack.c.b16 %v1116, %v1112
        %v1625 = vpack.c.b16 %v1117, %v1113
        %v1626 = vpack.c.b16 %v1122, %v1118
        %v1627 = vpack.c.b16 %v1123, %v1119
        %v1628 = vpack.c.b16 %v1124, %v1120
        %v1629 = vpack.c.b16 %v1125, %v1121
        %v1630 = vpack.c.b16 %v1130, %v1126
        %v1631 = vpack.c.b16 %v1131, %v1127
        %v1632 = vpack.c.b16 %v1132, %v1128
        %v1633 = vpack.c.b16 %v1133, %v1129
        %v1634 = vpack.c.b16 %v1138, %v1134
        %v1635 = vpack.c.b16 %v1139, %v1135
        %v1636 = vpack.c.b16 %v1140, %v1136
        %v1637 = vpack.c.b16 %v1141, %v1137
        %v1638 = vpack.c.b16 %v1146, %v1142
        %v1639 = vpack.c.b16 %v1147, %v1143
        %v1640 = vpack.c.b16 %v1148, %v1144
        %v1641 = vpack.c.b16 %v1149, %v1145
        %v1642 = vpack.c.b16 %v1154, %v1150
        %v1643 = vpack.c.b16 %v1155, %v1151
        %v1644 = vpack.c.b16 %v1156, %v1152
        %v1645 = vpack.c.b16 %v1157, %v1153
        %v1646 = vpack.c.b16 %v1162, %v1158
        %v1647 = vpack.c.b16 %v1163, %v1159
        %v1648 = vpack.c.b16 %v1164, %v1160
        %v1649 = vpack.c.b16 %v1165, %v1161
        %v1650 = vpack.c.b16 %v1170, %v1166
        %v1651 = vpack.c.b16 %v1171, %v1167
        %v1652 = vpack.c.b16 %v1172, %v1168
        %v1653 = vpack.c.b16 %v1173, %v1169
        %v1654 = vpack.c.b16 %v1178, %v1174
        %v1655 = vpack.c.b16 %v1179, %v1175
        %v1656 = vpack.c.b16 %v1180, %v1176
        %v1657 = vpack.c.b16 %v1181, %v1177
        %v1658 = vpack.c.b16 %v1186, %v1182
        %v1659 = vpack.c.b16 %v1187, %v1183
        %v1660 = vpack.c.b16 %v1188, %v1184
        %v1661 = vpack.c.b16 %v1189, %v1185
        %v1662 = vpack.c.b16 %v1194, %v1190
        %v1663 = vpack.c.b16 %v1195, %v1191
        %v1664 = vpack.c.b16 %v1196, %v1192
        %v1665 = vpack.c.b16 %v1197, %v1193
        %v1666 = vpack.c.b16 %v1202, %v1198
        %v1667 = vpack.c.b16 %v1203, %v1199
        %v1668 = vpack.c.b16 %v1204, %v1200
        %v1669 = vpack.c.b16 %v1205, %v1201
        %v1670 = vpack.c.b16 %v1210, %v1206
        %v1671 = vpack.c.b16 %v1211, %v1207
        %v1672 = vpack.c.b16 %v1212, %v1208
        %v1673 = vpack.c.b16 %v1213, %v1209
        %v1674 = vpack.c.b16 %v1218, %v1214
        %v1675 = vpack.c.b16 %v1219, %v1215
        %v1676 = vpack.c.b16 %v1220, %v1216
        %v1677 = vpack.c.b16 %v1221, %v1217
        %v1678 = vpack.c.b16 %v1226, %v1222
        %v1679 = vpack.c.b16 %v1227, %v1223
        %v1680 = vpack.c.b16 %v1228, %v1224
        %v1681 = vpack.c.b16 %v1229, %v1225
        %v1682 = vpack.c.b16 %v1234, %v1230
        %v1683 = vpack.c.b16 %v1235, %v1231
        %v1684 = vpack.c.b16 %v1236, %v1232
        %v1685 = vpack.c.b16 %v1237, %v1233
        %v1686 = vpack.c.b16 %v1242, %v1238
        %v1687 = vpack.c.b16 %v1243, %v1239
        %v1688 = vpack.c.b16 %v1244, %v1240
        %v1689 = vpack.c.b16 %v1245, %v1241
        %v1690 = vpack.c.b16 %v1250, %v1246
        %v1691 = vpack.c.b16 %v1251, %v1247
        %v1692 = vpack.c.b16 %v1252, %v1248
        %v1693 = vpack.c.b16 %v1253, %v1249
        %v1694 = vpack.c.b16 %v1258, %v1254
        %v1695 = vpack.c.b16 %v1259, %v1255
        %v1696 = vpack.c.b16 %v1260, %v1256
        %v1697 = vpack.c.b16 %v1261, %v1257
        %v1698 = vpack.c.b16 %v1266, %v1262
        %v1699 = vpack.c.b16 %v1267, %v1263
        %v1700 = vpack.c.b16 %v1268, %v1264
        %v1701 = vpack.c.b16 %v1269, %v1265
        %v1702 = vpack.c.b16 %v1274, %v1270
        %v1703 = vpack.c.b16 %v1275, %v1271
        %v1704 = vpack.c.b16 %v1276, %v1272
        %v1705 = vpack.c.b16 %v1277, %v1273
        %v1706 = vpack.c.b16 %v1282, %v1278
        %v1707 = vpack.c.b16 %v1283, %v1279
        %v1708 = vpack.c.b16 %v1284, %v1280
        %v1709 = vpack.c.b16 %v1285, %v1281
        %v1710 = vpack.c.b16 %v1290, %v1286
        %v1711 = vpack.c.b16 %v1291, %v1287
        %v1712 = vpack.c.b16 %v1292, %v1288
        %v1713 = vpack.c.b16 %v1293, %v1289
        %v1714 = vpack.c.b16 %v1298, %v1294
        %v1715 = vpack.c.b16 %v1299, %v1295
        %v1716 = vpack.c.b16 %v1300, %v1296
        %v1717 = vpack.c.b16 %v1301, %v1297
        %v1718 = vpack.c.b16 %v1306, %v1302
        %v1719 = vpack.c.b16 %v1307, %v1303
        %v1720 = vpack.c.b16 %v1308, %v1304
        %v1721 = vpack.c.b16 %v1309, %v1305
        %v1722 = vpack.c.b16 %v1314, %v1310
        %v1723 = vpack.c.b16 %v1315, %v1311
        %v1724 = vpack.c.b16 %v1316, %v1312
        %v1725 = vpack.c.b16 %v1317, %v1313
        %v1726 = vpack.c.b16 %v1322, %v1318
        %v1727 = vpack.c.b16 %v1323, %v1319
        %v1728 = vpack.c.b16 %v1324, %v1320
        %v1729 = vpack.c.b16 %v1325, %v1321
        %v1730 = vpack.c.b16 %v1330, %v1326
        %v1731 = vpack.c.b16 %v1331, %v1327
        %v1732 = vpack.c.b16 %v1332, %v1328
        %v1733 = vpack.c.b16 %v1333, %v1329
        %v1734 = vpack.c.b16 %v1338, %v1334
        %v1735 = vpack.c.b16 %v1339, %v1335
        %v1736 = vpack.c.b16 %v1340, %v1336
        %v1737 = vpack.c.b16 %v1341, %v1337
        %v1738 = vpack.c.b16 %v1346, %v1342
        %v1739 = vpack.c.b16 %v1347, %v1343
        %v1740 = vpack.c.b16 %v1348, %v1344
        %v1741 = vpack.c.b16 %v1349, %v1345
        %v1742 = vpack.c.b16 %v1354, %v1350
        %v1743 = vpack.c.b16 %v1355, %v1351
        %v1744 = vpack.c.b16 %v1356, %v1352
        %v1745 = vpack.c.b16 %v1357, %v1353
        %v1746 = vpack.c.b16 %v1362, %v1358
        %v1747 = vpack.c.b16 %v1363, %v1359
        %v1748 = vpack.c.b16 %v1364, %v1360
        %v1749 = vpack.c.b16 %v1365, %v1361
        %v1750 = vpack.c.b16 %v1370, %v1366
        %v1751 = vpack.c.b16 %v1371, %v1367
        %v1752 = vpack.c.b16 %v1372, %v1368
        %v1753 = vpack.c.b16 %v1373, %v1369
        %v1754 = vpack.c.b16 %v1378, %v1374
        %v1755 = vpack.c.b16 %v1379, %v1375
        %v1756 = vpack.c.b16 %v1380, %v1376
        %v1757 = vpack.c.b16 %v1381, %v1377
        %v1758 = vpack.c.b16 %v1386, %v1382
        %v1759 = vpack.c.b16 %v1387, %v1383
        %v1760 = vpack.c.b16 %v1388, %v1384
        %v1761 = vpack.c.b16 %v1389, %v1385
        %v1762 = vpack.c.b16 %v1394, %v1390
        %v1763 = vpack.c.b16 %v1395, %v1391
        %v1764 = vpack.c.b16 %v1396, %v1392
        %v1765 = vpack.c.b16 %v1397, %v1393
        %v1766 = vpack.c.b16 %v1402, %v1398
        %v1767 = vpack.c.b16 %v1403, %v1399
        %v1768 = vpack.c.b16 %v1404, %v1400
        %v1769 = vpack.c.b16 %v1405, %v1401
        %v1770 = vpack.c.b16 %v1410, %v1406
        %v1771 = vpack.c.b16 %v1411, %v1407
        %v1772 = vpack.c.b16 %v1412, %v1408
        %v1773 = vpack.c.b16 %v1413, %v1409
        %v1774 = vpack.c.b16 %v1418, %v1414
        %v1775 = vpack.c.b16 %v1419, %v1415
        %v1776 = vpack.c.b16 %v1420, %v1416
        %v1777 = vpack.c.b16 %v1421, %v1417
        %v1778 = vpack.c.b16 %v1426, %v1422
        %v1779 = vpack.c.b16 %v1427, %v1423
        %v1780 = vpack.c.b16 %v1428, %v1424
        %v1781 = vpack.c.b16 %v1429, %v1425
        %v1782 = vpack.c.b16 %v1434, %v1430
        %v1783 = vpack.c.b16 %v1435, %v1431
        %v1784 = vpack.c.b16 %v1436, %v1432
        %v1785 = vpack.c.b16 %v1437, %v1433
        %v1786 = vpack.c.b16 %v1442, %v1438
        %v1787 = vpack.c.b16 %v1443, %v1439
        %v1788 = vpack.c.b16 %v1444, %v1440
        %v1789 = vpack.c.b16 %v1445, %v1441
        %v1790 = vpack.c.b16 %v1450, %v1446
        %v1791 = vpack.c.b16 %v1451, %v1447
        %v1792 = vpack.c.b16 %v1452, %v1448
        %v1793 = vpack.c.b16 %v1453, %v1449
        %v1794 = vpack.c.b16 %v1458, %v1454
        %v1795 = vpack.c.b16 %v1459, %v1455
        %v1796 = vpack.c.b16 %v1460, %v1456
        %v1797 = vpack.c.b16 %v1461, %v1457
        %v1798 = vpack.c.b16 %v1466, %v1462
        %v1799 = vpack.c.b16 %v1467, %v1463
        %v1800 = vpack.c.b16 %v1468, %v1464
        %v1801 = vpack.c.b16 %v1469, %v1465
        %v1802 = vpack.c.b16 %v1474, %v1470
        %v1803 = vpack.c.b16 %v1475, %v1471
        %v1804 = vpack.c.b16 %v1476, %v1472
        %v1805 = vpack.c.b16 %v1477, %v1473
        %v1806 = vpack.c.b16 %v1482, %v1478
        %v1807 = vpack.c.b16 %v1483, %v1479
        %v1808 = vpack.c.b16 %v1484, %v1480
        %v1809 = vpack.c.b16 %v1485, %v1481
        %v1810 = vpack.c.b16 %v1490, %v1486
        %v1811 = vpack.c.b16 %v1491, %v1487
        %v1812 = vpack.c.b16 %v1492, %v1488
        %v1813 = vpack.c.b16 %v1493, %v1489
        %v1814 = vpack.c.b16 %v1498, %v1494
        %v1815 = vpack.c.b16 %v1499, %v1495
        %v1816 = vpack.c.b16 %v1500, %v1496
        %v1817 = vpack.c.b16 %v1501, %v1497
        %v1818 = vpack.c.b16 %v1506, %v1502
        %v1819 = vpack.c.b16 %v1507, %v1503
        %v1820 = vpack.c.b16 %v1508, %v1504
        %v1821 = vpack.c.b16 %v1509, %v1505
        %v1822 = vpack.c.b16 %v1514, %v1510
        %v1823 = vpack.c.b16 %v1515, %v1511
        %v1824 = vpack.c.b16 %v1516, %v1512
        %v1825 = vpack.c.b16 %v1517, %v1513
        %v1826 = vpack.c.b16 %v1522, %v1518
        %v1827 = vpack.c.b16 %v1523, %v1519
        %v1828 = vpack.c.b16 %v1524, %v1520
        %v1829 = vpack.c.b16 %v1525, %v1521
        %v1830 = vpack.c.b16 %v1530, %v1526
        %v1831 = vpack.c.b16 %v1531, %v1527
        %v1832 = vpack.c.b16 %v1532, %v1528
        %v1833 = vpack.c.b16 %v1533, %v1529
        %v1834 = vpack.c.b16 %v1538, %v1534
        %v1835 = vpack.c.b16 %v1539, %v1535
        %v1836 = vpack.c.b16 %v1540, %v1536
        %v1837 = vpack.c.b16 %v1541, %v1537
        %v1838 = vpack.c.b16 %v1546, %v1542
        %v1839 = vpack.c.b16 %v1547, %v1543
        %v1840 = vpack.c.b16 %v1548, %v1544
        %v1841 = vpack.c.b16 %v1549, %v1545
        %v1842 = vpack.c.b16 %v1554, %v1550
        %v1843 = vpack.c.b16 %v1555, %v1551
        %v1844 = vpack.c.b16 %v1556, %v1552
        %v1845 = vpack.c.b16 %v1557, %v1553
        %v1846 = vpack.c.b16 %v1562, %v1558
        %v1847 = vpack.c.b16 %v1563, %v1559
        %v1848 = vpack.c.b16 %v1564, %v1560
        %v1849 = vpack.c.b16 %v1565, %v1561
        %v1850 = vpack.c.b16 %v1570, %v1566
        %v1851 = vpack.c.b16 %v1571, %v1567
        %v1852 = vpack.c.b16 %v1572, %v1568
        %v1853 = vpack.c.b16 %v1573, %v1569
        %v1854 = vpack.c.b16 %v1578, %v1574
        %v1855 = vpack.c.b16 %v1579, %v1575
        %v1856 = vpack.c.b16 %v1580, %v1576
        %v1857 = vpack.c.b16 %v1581, %v1577
        %v1858 = vpack.c.b16 %v1586, %v1582
        %v1859 = vpack.c.b16 %v1587, %v1583
        %v1860 = vpack.c.b16 %v1588, %v1584
        %v1861 = vpack.c.b16 %v1589, %v1585
        %v1862 = vpack.c.b16 %v1594, %v1590
        %v1863 = vpack.c.b16 %v1595, %v1591
        %v1864 = vpack.c.b16 %v1596, %v1592
        %v1865 = vpack.c.b16 %v1597, %v1593
        %v1866 = vpack.c.b16 %v1602, %v1598
        %v1867 = vpack.c.b16 %v1603, %v1599
        %v1868 = vpack.c.b16 %v1604, %v1600
        %v1869 = vpack.c.b16 %v1605, %v1601
        %v1870 = vpack.c.b16 %v1610, %v1606
        %v1871 = vpack.c.b16 %v1611, %v1607
        %v1872 = vpack.c.b16 %v1612, %v1608
        %v1873 = vpack.c.b16 %v1613, %v1609
        %v1874 = vpack.c.b16 %v1618, %v1614
        %v1875 = vpack.c.b16 %v1619, %v1615
        %v1876 = vpack.c.b16 %v1620, %v1616
        %v1877 = vpack.c.b16 %v1621, %v1617
        %2134 = vmatpush.bf16.msra.mxu0 %v1650
        %2135 = vmatpush.bf16.msra.mxu0 %v1646
        %2136 = vmatpush.bf16.msra.mxu0 %v1642
        %2137 = vmatpush.bf16.msra.mxu0 %v1638
        %2138 = vmatpush.bf16.msra.mxu0 %v1634
        %2139 = vmatpush.bf16.msra.mxu0 %v1630
        %2140 = vmatpush.bf16.msra.mxu0 %v1626
        %2141 = vmatpush.bf16.msra.mxu0 %v1622
        %2142 = vmatmul.bf16.gmra.mxu0 %v823
        %v2143 = vpop.f32.mrf.mxu0
        %v2144 = vadd.f32 0.0, %v2143
        %v2145 = vpop.f32.mrf.mxu0
        %2146 = vdwg.mxu0
        %2147 = vmatpush.bf16.msra.mxu0 %v1682
        %2148 = vmatpush.bf16.msra.mxu0 %v1678
        %2149 = vmatpush.bf16.msra.mxu0 %v1674
        %2150 = vmatpush.bf16.msra.mxu0 %v1670
        %2151 = vmatpush.bf16.msra.mxu0 %v1666
        %2152 = vmatpush.bf16.msra.mxu0 %v1662
        %2153 = vmatpush.bf16.msra.mxu0 %v1658
        %2154 = vmatpush.bf16.msra.mxu0 %v1654
        %2155 = vmatmul.bf16.gmra.mxu0 %v826
        %v2156 = vpop.f32.mrf.mxu0
        %v2157 = vadd.f32 %v2144, %v2156
        %v2158 = vpop.f32.mrf.mxu0
        %2159 = vdwg.mxu0
        %2160 = vmatpush.bf16.msra.mxu0 %v1714
        %2161 = vmatpush.bf16.msra.mxu0 %v1710
        %2162 = vmatpush.bf16.msra.mxu0 %v1706
        %2163 = vmatpush.bf16.msra.mxu0 %v1702
        %2164 = vmatpush.bf16.msra.mxu0 %v1698
        %2165 = vmatpush.bf16.msra.mxu0 %v1694
        %2166 = vmatpush.bf16.msra.mxu0 %v1690
        %2167 = vmatpush.bf16.msra.mxu0 %v1686
        %2168 = vmatmul.bf16.gmra.mxu0 %v829
        %v2169 = vpop.f32.mrf.mxu0
        %v2170 = vadd.f32 %v2157, %v2169
        %v2171 = vpop.f32.mrf.mxu0
        %2172 = vdwg.mxu0
        %2173 = vmatpush.bf16.msra.mxu0 %v1746
        %2174 = vmatpush.bf16.msra.mxu0 %v1742
        %2175 = vmatpush.bf16.msra.mxu0 %v1738
        %2176 = vmatpush.bf16.msra.mxu0 %v1734
        %2177 = vmatpush.bf16.msra.mxu0 %v1730
        %2178 = vmatpush.bf16.msra.mxu0 %v1726
        %2179 = vmatpush.bf16.msra.mxu0 %v1722
        %2180 = vmatpush.bf16.msra.mxu0 %v1718
        %2181 = vmatmul.bf16.gmra.mxu0 %v832
        %v2182 = vpop.f32.mrf.mxu0
        %v2183 = vadd.f32 %v2170, %v2182
        %v2184 = vpop.f32.mrf.mxu0
        %2185 = vdwg.mxu0
        %2186 = vmatpush.bf16.msra.mxu0 %v1778
        %2187 = vmatpush.bf16.msra.mxu0 %v1774
        %2188 = vmatpush.bf16.msra.mxu0 %v1770
        %2189 = vmatpush.bf16.msra.mxu0 %v1766
        %2190 = vmatpush.bf16.msra.mxu0 %v1762
        %2191 = vmatpush.bf16.msra.mxu0 %v1758
        %2192 = vmatpush.bf16.msra.mxu0 %v1754
        %2193 = vmatpush.bf16.msra.mxu0 %v1750
        %2194 = vmatmul.bf16.gmra.mxu0 %v835
        %v2195 = vpop.f32.mrf.mxu0
        %v2196 = vadd.f32 %v2183, %v2195
        %v2197 = vpop.f32.mrf.mxu0
        %2198 = vdwg.mxu0
        %2199 = vmatpush.bf16.msra.mxu0 %v1810
        %2200 = vmatpush.bf16.msra.mxu0 %v1806
        %2201 = vmatpush.bf16.msra.mxu0 %v1802
        %2202 = vmatpush.bf16.msra.mxu0 %v1798
        %2203 = vmatpush.bf16.msra.mxu0 %v1794
        %2204 = vmatpush.bf16.msra.mxu0 %v1790
        %2205 = vmatpush.bf16.msra.mxu0 %v1786
        %2206 = vmatpush.bf16.msra.mxu0 %v1782
        %2207 = vmatmul.bf16.gmra.mxu0 %v838
        %v2208 = vpop.f32.mrf.mxu0
        %v2209 = vadd.f32 %v2196, %v2208
        %v2210 = vpop.f32.mrf.mxu0
        %2211 = vdwg.mxu0
        %2212 = vmatpush.bf16.msra.mxu0 %v1842
        %2213 = vmatpush.bf16.msra.mxu0 %v1838
        %2214 = vmatpush.bf16.msra.mxu0 %v1834
        %2215 = vmatpush.bf16.msra.mxu0 %v1830
        %2216 = vmatpush.bf16.msra.mxu0 %v1826
        %2217 = vmatpush.bf16.msra.mxu0 %v1822
        %2218 = vmatpush.bf16.msra.mxu0 %v1818
        %2219 = vmatpush.bf16.msra.mxu0 %v1814
        %2220 = vmatmul.bf16.gmra.mxu0 %v841
        %v2221 = vpop.f32.mrf.mxu0
        %v2222 = vadd.f32 %v2209, %v2221
        %v2223 = vpop.f32.mrf.mxu0
        %2224 = vdwg.mxu0
        %2225 = vmatpush.bf16.msra.mxu0 %v1874
        %2226 = vmatpush.bf16.msra.mxu0 %v1870
        %2227 = vmatpush.bf16.msra.mxu0 %v1866
        %2228 = vmatpush.bf16.msra.mxu0 %v1862
        %2229 = vmatpush.bf16.msra.mxu0 %v1858
        %2230 = vmatpush.bf16.msra.mxu0 %v1854
        %2231 = vmatpush.bf16.msra.mxu0 %v1850
        %2232 = vmatpush.bf16.msra.mxu0 %v1846
        %2233 = vmatmul.bf16.gmra.mxu0 %v844
        %v2234 = vpop.f32.mrf.mxu0
        %v2235 = vadd.f32 %v2222, %v2234
        %v2236 = vpop.f32.mrf.mxu0
        %2237 = vdwg.mxu0
        %2238 = vmatpush.bf16.msra.mxu0 %v1651
        %2239 = vmatpush.bf16.msra.mxu0 %v1647
        %2240 = vmatpush.bf16.msra.mxu0 %v1643
        %2241 = vmatpush.bf16.msra.mxu0 %v1639
        %2242 = vmatpush.bf16.msra.mxu0 %v1635
        %2243 = vmatpush.bf16.msra.mxu0 %v1631
        %2244 = vmatpush.bf16.msra.mxu0 %v1627
        %2245 = vmatpush.bf16.msra.mxu0 %v1623
        %2246 = vmatmul.bf16.gmra.mxu0 %v823
        %v2247 = vpop.f32.mrf.mxu0
        %v2248 = vadd.f32 0.0, %v2247
        %v2249 = vpop.f32.mrf.mxu0
        %2250 = vdwg.mxu0
        %2251 = vmatpush.bf16.msra.mxu0 %v1683
        %2252 = vmatpush.bf16.msra.mxu0 %v1679
        %2253 = vmatpush.bf16.msra.mxu0 %v1675
        %2254 = vmatpush.bf16.msra.mxu0 %v1671
        %2255 = vmatpush.bf16.msra.mxu0 %v1667
        %2256 = vmatpush.bf16.msra.mxu0 %v1663
        %2257 = vmatpush.bf16.msra.mxu0 %v1659
        %2258 = vmatpush.bf16.msra.mxu0 %v1655
        %2259 = vmatmul.bf16.gmra.mxu0 %v826
        %v2260 = vpop.f32.mrf.mxu0
        %v2261 = vadd.f32 %v2248, %v2260
        %v2262 = vpop.f32.mrf.mxu0
        %2263 = vdwg.mxu0
        %2264 = vmatpush.bf16.msra.mxu0 %v1715
        %2265 = vmatpush.bf16.msra.mxu0 %v1711
        %2266 = vmatpush.bf16.msra.mxu0 %v1707
        %2267 = vmatpush.bf16.msra.mxu0 %v1703
        %2268 = vmatpush.bf16.msra.mxu0 %v1699
        %2269 = vmatpush.bf16.msra.mxu0 %v1695
        %2270 = vmatpush.bf16.msra.mxu0 %v1691
        %2271 = vmatpush.bf16.msra.mxu0 %v1687
        %2272 = vmatmul.bf16.gmra.mxu0 %v829
        %v2273 = vpop.f32.mrf.mxu0
        %v2274 = vadd.f32 %v2261, %v2273
        %v2275 = vpop.f32.mrf.mxu0
        %2276 = vdwg.mxu0
        %2277 = vmatpush.bf16.msra.mxu0 %v1747
        %2278 = vmatpush.bf16.msra.mxu0 %v1743
        %2279 = vmatpush.bf16.msra.mxu0 %v1739
        %2280 = vmatpush.bf16.msra.mxu0 %v1735
        %2281 = vmatpush.bf16.msra.mxu0 %v1731
        %2282 = vmatpush.bf16.msra.mxu0 %v1727
        %2283 = vmatpush.bf16.msra.mxu0 %v1723
        %2284 = vmatpush.bf16.msra.mxu0 %v1719
        %2285 = vmatmul.bf16.gmra.mxu0 %v832
        %v2286 = vpop.f32.mrf.mxu0
        %v2287 = vadd.f32 %v2274, %v2286
        %v2288 = vpop.f32.mrf.mxu0
        %2289 = vdwg.mxu0
        %2290 = vmatpush.bf16.msra.mxu0 %v1779
        %2291 = vmatpush.bf16.msra.mxu0 %v1775
        %2292 = vmatpush.bf16.msra.mxu0 %v1771
        %2293 = vmatpush.bf16.msra.mxu0 %v1767
        %2294 = vmatpush.bf16.msra.mxu0 %v1763
        %2295 = vmatpush.bf16.msra.mxu0 %v1759
        %2296 = vmatpush.bf16.msra.mxu0 %v1755
        %2297 = vmatpush.bf16.msra.mxu0 %v1751
        %2298 = vmatmul.bf16.gmra.mxu0 %v835
        %v2299 = vpop.f32.mrf.mxu0
        %v2300 = vadd.f32 %v2287, %v2299
        %v2301 = vpop.f32.mrf.mxu0
        %2302 = vdwg.mxu0
        %2303 = vmatpush.bf16.msra.mxu0 %v1811
        %2304 = vmatpush.bf16.msra.mxu0 %v1807
        %2305 = vmatpush.bf16.msra.mxu0 %v1803
        %2306 = vmatpush.bf16.msra.mxu0 %v1799
        %2307 = vmatpush.bf16.msra.mxu0 %v1795
        %2308 = vmatpush.bf16.msra.mxu0 %v1791
        %2309 = vmatpush.bf16.msra.mxu0 %v1787
        %2310 = vmatpush.bf16.msra.mxu0 %v1783
        %2311 = vmatmul.bf16.gmra.mxu0 %v838
        %v2312 = vpop.f32.mrf.mxu0
        %v2313 = vadd.f32 %v2300, %v2312
        %v2314 = vpop.f32.mrf.mxu0
        %2315 = vdwg.mxu0
        %2316 = vmatpush.bf16.msra.mxu0 %v1843
        %2317 = vmatpush.bf16.msra.mxu0 %v1839
        %2318 = vmatpush.bf16.msra.mxu0 %v1835
        %2319 = vmatpush.bf16.msra.mxu0 %v1831
        %2320 = vmatpush.bf16.msra.mxu0 %v1827
        %2321 = vmatpush.bf16.msra.mxu0 %v1823
        %2322 = vmatpush.bf16.msra.mxu0 %v1819
        %2323 = vmatpush.bf16.msra.mxu0 %v1815
        %2324 = vmatmul.bf16.gmra.mxu0 %v841
        %v2325 = vpop.f32.mrf.mxu0
        %v2326 = vadd.f32 %v2313, %v2325
        %v2327 = vpop.f32.mrf.mxu0
        %2328 = vdwg.mxu0
        %2329 = vmatpush.bf16.msra.mxu0 %v1875
        %2330 = vmatpush.bf16.msra.mxu0 %v1871
        %2331 = vmatpush.bf16.msra.mxu0 %v1867
        %2332 = vmatpush.bf16.msra.mxu0 %v1863
        %2333 = vmatpush.bf16.msra.mxu0 %v1859
        %2334 = vmatpush.bf16.msra.mxu0 %v1855
        %2335 = vmatpush.bf16.msra.mxu0 %v1851
        %2336 = vmatpush.bf16.msra.mxu0 %v1847
        %2337 = vmatmul.bf16.gmra.mxu0 %v844
        %v2338 = vpop.f32.mrf.mxu0
        %v2339 = vadd.f32 %v2326, %v2338
        %v2340 = vpop.f32.mrf.mxu0
        %2341 = vdwg.mxu0
        %2342 = vmatpush.bf16.msra.mxu0 %v1652
        %2343 = vmatpush.bf16.msra.mxu0 %v1648
        %2344 = vmatpush.bf16.msra.mxu0 %v1644
        %2345 = vmatpush.bf16.msra.mxu0 %v1640
        %2346 = vmatpush.bf16.msra.mxu0 %v1636
        %2347 = vmatpush.bf16.msra.mxu0 %v1632
        %2348 = vmatpush.bf16.msra.mxu0 %v1628
        %2349 = vmatpush.bf16.msra.mxu0 %v1624
        %2350 = vmatmul.bf16.gmra.mxu0 %v823
        %v2351 = vpop.f32.mrf.mxu0
        %v2352 = vadd.f32 0.0, %v2351
        %v2353 = vpop.f32.mrf.mxu0
        %2354 = vdwg.mxu0
        %2355 = vmatpush.bf16.msra.mxu0 %v1684
        %2356 = vmatpush.bf16.msra.mxu0 %v1680
        %2357 = vmatpush.bf16.msra.mxu0 %v1676
        %2358 = vmatpush.bf16.msra.mxu0 %v1672
        %2359 = vmatpush.bf16.msra.mxu0 %v1668
        %2360 = vmatpush.bf16.msra.mxu0 %v1664
        %2361 = vmatpush.bf16.msra.mxu0 %v1660
        %2362 = vmatpush.bf16.msra.mxu0 %v1656
        %2363 = vmatmul.bf16.gmra.mxu0 %v826
        %v2364 = vpop.f32.mrf.mxu0
        %v2365 = vadd.f32 %v2352, %v2364
        %v2366 = vpop.f32.mrf.mxu0
        %2367 = vdwg.mxu0
        %2368 = vmatpush.bf16.msra.mxu0 %v1716
        %2369 = vmatpush.bf16.msra.mxu0 %v1712
        %2370 = vmatpush.bf16.msra.mxu0 %v1708
        %2371 = vmatpush.bf16.msra.mxu0 %v1704
        %2372 = vmatpush.bf16.msra.mxu0 %v1700
        %2373 = vmatpush.bf16.msra.mxu0 %v1696
        %2374 = vmatpush.bf16.msra.mxu0 %v1692
        %2375 = vmatpush.bf16.msra.mxu0 %v1688
        %2376 = vmatmul.bf16.gmra.mxu0 %v829
        %v2377 = vpop.f32.mrf.mxu0
        %v2378 = vadd.f32 %v2365, %v2377
        %v2379 = vpop.f32.mrf.mxu0
        %2380 = vdwg.mxu0
        %2381 = vmatpush.bf16.msra.mxu0 %v1748
        %2382 = vmatpush.bf16.msra.mxu0 %v1744
        %2383 = vmatpush.bf16.msra.mxu0 %v1740
        %2384 = vmatpush.bf16.msra.mxu0 %v1736
        %2385 = vmatpush.bf16.msra.mxu0 %v1732
        %2386 = vmatpush.bf16.msra.mxu0 %v1728
        %2387 = vmatpush.bf16.msra.mxu0 %v1724
        %2388 = vmatpush.bf16.msra.mxu0 %v1720
        %2389 = vmatmul.bf16.gmra.mxu0 %v832
        %v2390 = vpop.f32.mrf.mxu0
        %v2391 = vadd.f32 %v2378, %v2390
        %v2392 = vpop.f32.mrf.mxu0
        %2393 = vdwg.mxu0
        %2394 = vmatpush.bf16.msra.mxu0 %v1780
        %2395 = vmatpush.bf16.msra.mxu0 %v1776
        %2396 = vmatpush.bf16.msra.mxu0 %v1772
        %2397 = vmatpush.bf16.msra.mxu0 %v1768
        %2398 = vmatpush.bf16.msra.mxu0 %v1764
        %2399 = vmatpush.bf16.msra.mxu0 %v1760
        %2400 = vmatpush.bf16.msra.mxu0 %v1756
        %2401 = vmatpush.bf16.msra.mxu0 %v1752
        %2402 = vmatmul.bf16.gmra.mxu0 %v835
        %v2403 = vpop.f32.mrf.mxu0
        %v2404 = vadd.f32 %v2391, %v2403
        %v2405 = vpop.f32.mrf.mxu0
        %2406 = vdwg.mxu0
        %2407 = vmatpush.bf16.msra.mxu0 %v1812
        %2408 = vmatpush.bf16.msra.mxu0 %v1808
        %2409 = vmatpush.bf16.msra.mxu0 %v1804
        %2410 = vmatpush.bf16.msra.mxu0 %v1800
        %2411 = vmatpush.bf16.msra.mxu0 %v1796
        %2412 = vmatpush.bf16.msra.mxu0 %v1792
        %2413 = vmatpush.bf16.msra.mxu0 %v1788
        %2414 = vmatpush.bf16.msra.mxu0 %v1784
        %2415 = vmatmul.bf16.gmra.mxu0 %v838
        %v2416 = vpop.f32.mrf.mxu0
        %v2417 = vadd.f32 %v2404, %v2416
        %v2418 = vpop.f32.mrf.mxu0
        %2419 = vdwg.mxu0
        %2420 = vmatpush.bf16.msra.mxu0 %v1844
        %2421 = vmatpush.bf16.msra.mxu0 %v1840
        %2422 = vmatpush.bf16.msra.mxu0 %v1836
        %2423 = vmatpush.bf16.msra.mxu0 %v1832
        %2424 = vmatpush.bf16.msra.mxu0 %v1828
        %2425 = vmatpush.bf16.msra.mxu0 %v1824
        %2426 = vmatpush.bf16.msra.mxu0 %v1820
        %2427 = vmatpush.bf16.msra.mxu0 %v1816
        %2428 = vmatmul.bf16.gmra.mxu0 %v841
        %v2429 = vpop.f32.mrf.mxu0
        %v2430 = vadd.f32 %v2417, %v2429
        %v2431 = vpop.f32.mrf.mxu0
        %2432 = vdwg.mxu0
        %2433 = vmatpush.bf16.msra.mxu0 %v1876
        %2434 = vmatpush.bf16.msra.mxu0 %v1872
        %2435 = vmatpush.bf16.msra.mxu0 %v1868
        %2436 = vmatpush.bf16.msra.mxu0 %v1864
        %2437 = vmatpush.bf16.msra.mxu0 %v1860
        %2438 = vmatpush.bf16.msra.mxu0 %v1856
        %2439 = vmatpush.bf16.msra.mxu0 %v1852
        %2440 = vmatpush.bf16.msra.mxu0 %v1848
        %2441 = vmatmul.bf16.gmra.mxu0 %v844
        %v2442 = vpop.f32.mrf.mxu0
        %v2443 = vadd.f32 %v2430, %v2442
        %v2444 = vpop.f32.mrf.mxu0
        %2445 = vdwg.mxu0
        %2446 = vmatpush.bf16.msra.mxu0 %v1653
        %2447 = vmatpush.bf16.msra.mxu0 %v1649
        %2448 = vmatpush.bf16.msra.mxu0 %v1645
        %2449 = vmatpush.bf16.msra.mxu0 %v1641
        %2450 = vmatpush.bf16.msra.mxu0 %v1637
        %2451 = vmatpush.bf16.msra.mxu0 %v1633
        %2452 = vmatpush.bf16.msra.mxu0 %v1629
        %2453 = vmatpush.bf16.msra.mxu0 %v1625
        %2454 = vmatmul.bf16.gmra.mxu0 %v823
        %v2455 = vpop.f32.mrf.mxu0
        %v2456 = vadd.f32 0.0, %v2455
        %v2457 = vpop.f32.mrf.mxu0
        %2458 = vdwg.mxu0
        %2459 = vmatpush.bf16.msra.mxu0 %v1685
        %2460 = vmatpush.bf16.msra.mxu0 %v1681
        %2461 = vmatpush.bf16.msra.mxu0 %v1677
        %2462 = vmatpush.bf16.msra.mxu0 %v1673
        %2463 = vmatpush.bf16.msra.mxu0 %v1669
        %2464 = vmatpush.bf16.msra.mxu0 %v1665
        %2465 = vmatpush.bf16.msra.mxu0 %v1661
        %2466 = vmatpush.bf16.msra.mxu0 %v1657
        %2467 = vmatmul.bf16.gmra.mxu0 %v826
        %v2468 = vpop.f32.mrf.mxu0
        %v2469 = vadd.f32 %v2456, %v2468
        %v2470 = vpop.f32.mrf.mxu0
        %2471 = vdwg.mxu0
        %2472 = vmatpush.bf16.msra.mxu0 %v1717
        %2473 = vmatpush.bf16.msra.mxu0 %v1713
        %2474 = vmatpush.bf16.msra.mxu0 %v1709
        %2475 = vmatpush.bf16.msra.mxu0 %v1705
        %2476 = vmatpush.bf16.msra.mxu0 %v1701
        %2477 = vmatpush.bf16.msra.mxu0 %v1697
        %2478 = vmatpush.bf16.msra.mxu0 %v1693
        %2479 = vmatpush.bf16.msra.mxu0 %v1689
        %2480 = vmatmul.bf16.gmra.mxu0 %v829
        %v2481 = vpop.f32.mrf.mxu0
        %v2482 = vadd.f32 %v2469, %v2481
        %v2483 = vpop.f32.mrf.mxu0
        %2484 = vdwg.mxu0
        %2485 = vmatpush.bf16.msra.mxu0 %v1749
        %2486 = vmatpush.bf16.msra.mxu0 %v1745
        %2487 = vmatpush.bf16.msra.mxu0 %v1741
        %2488 = vmatpush.bf16.msra.mxu0 %v1737
        %2489 = vmatpush.bf16.msra.mxu0 %v1733
        %2490 = vmatpush.bf16.msra.mxu0 %v1729
        %2491 = vmatpush.bf16.msra.mxu0 %v1725
        %2492 = vmatpush.bf16.msra.mxu0 %v1721
        %2493 = vmatmul.bf16.gmra.mxu0 %v832
        %v2494 = vpop.f32.mrf.mxu0
        %v2495 = vadd.f32 %v2482, %v2494
        %v2496 = vpop.f32.mrf.mxu0
        %2497 = vdwg.mxu0
        %2498 = vmatpush.bf16.msra.mxu0 %v1781
        %2499 = vmatpush.bf16.msra.mxu0 %v1777
        %2500 = vmatpush.bf16.msra.mxu0 %v1773
        %2501 = vmatpush.bf16.msra.mxu0 %v1769
        %2502 = vmatpush.bf16.msra.mxu0 %v1765
        %2503 = vmatpush.bf16.msra.mxu0 %v1761
        %2504 = vmatpush.bf16.msra.mxu0 %v1757
        %2505 = vmatpush.bf16.msra.mxu0 %v1753
        %2506 = vmatmul.bf16.gmra.mxu0 %v835
        %v2507 = vpop.f32.mrf.mxu0
        %v2508 = vadd.f32 %v2495, %v2507
        %v2509 = vpop.f32.mrf.mxu0
        %2510 = vdwg.mxu0
        %2511 = vmatpush.bf16.msra.mxu0 %v1813
        %2512 = vmatpush.bf16.msra.mxu0 %v1809
        %2513 = vmatpush.bf16.msra.mxu0 %v1805
        %2514 = vmatpush.bf16.msra.mxu0 %v1801
        %2515 = vmatpush.bf16.msra.mxu0 %v1797
        %2516 = vmatpush.bf16.msra.mxu0 %v1793
        %2517 = vmatpush.bf16.msra.mxu0 %v1789
        %2518 = vmatpush.bf16.msra.mxu0 %v1785
        %2519 = vmatmul.bf16.gmra.mxu0 %v838
        %v2520 = vpop.f32.mrf.mxu0
        %v2521 = vadd.f32 %v2508, %v2520
        %v2522 = vpop.f32.mrf.mxu0
        %2523 = vdwg.mxu0
        %2524 = vmatpush.bf16.msra.mxu0 %v1845
        %2525 = vmatpush.bf16.msra.mxu0 %v1841
        %2526 = vmatpush.bf16.msra.mxu0 %v1837
        %2527 = vmatpush.bf16.msra.mxu0 %v1833
        %2528 = vmatpush.bf16.msra.mxu0 %v1829
        %2529 = vmatpush.bf16.msra.mxu0 %v1825
        %2530 = vmatpush.bf16.msra.mxu0 %v1821
        %2531 = vmatpush.bf16.msra.mxu0 %v1817
        %2532 = vmatmul.bf16.gmra.mxu0 %v841
        %v2533 = vpop.f32.mrf.mxu0
        %v2534 = vadd.f32 %v2521, %v2533
        %v2535 = vpop.f32.mrf.mxu0
        %2536 = vdwg.mxu0
        %2537 = vmatpush.bf16.msra.mxu0 %v1877
        %2538 = vmatpush.bf16.msra.mxu0 %v1873
        %2539 = vmatpush.bf16.msra.mxu0 %v1869
        %2540 = vmatpush.bf16.msra.mxu0 %v1865
        %2541 = vmatpush.bf16.msra.mxu0 %v1861
        %2542 = vmatpush.bf16.msra.mxu0 %v1857
        %2543 = vmatpush.bf16.msra.mxu0 %v1853
        %2544 = vmatpush.bf16.msra.mxu0 %v1849
        %2545 = vmatmul.bf16.gmra.mxu0 %v844
        %v2546 = vpop.f32.mrf.mxu0
        %v2547 = vadd.f32 %v2534, %v2546
        %v2548 = vpop.f32.mrf.mxu0
        %2549 = vdwg.mxu0
        %v2814 = vunpack.c.l.b16 %v289
        %v2815 = vunpack.c.h.b16 %v289
        %v2816 = vunpack.c.l.b16 %v290
        %v2817 = vunpack.c.h.b16 %v290
        %v2818 = vunpack.c.l.b16 %v291
        %v2819 = vunpack.c.h.b16 %v291
        %v2820 = vunpack.c.l.b16 %v292
        %v2821 = vunpack.c.h.b16 %v292
        %v2822 = vunpack.c.l.b16 %v293
        %v2823 = vunpack.c.h.b16 %v293
        %v2824 = vunpack.c.l.b16 %v294
        %v2825 = vunpack.c.h.b16 %v294
        %v2826 = vunpack.c.l.b16 %v295
        %v2827 = vunpack.c.h.b16 %v295
        %v2828 = vunpack.c.l.b16 %v296
        %v2829 = vunpack.c.h.b16 %v296
        %v2830 = vunpack.c.l.b16 %v297
        %v2831 = vunpack.c.h.b16 %v297
        %v2832 = vunpack.c.l.b16 %v298
        %v2833 = vunpack.c.h.b16 %v298
        %v2834 = vunpack.c.l.b16 %v299
        %v2835 = vunpack.c.h.b16 %v299
        %v2836 = vunpack.c.l.b16 %v300
        %v2837 = vunpack.c.h.b16 %v300
        %v2838 = vunpack.c.l.b16 %v301
        %v2839 = vunpack.c.h.b16 %v301
        %v2840 = vunpack.c.l.b16 %v302
        %v2841 = vunpack.c.h.b16 %v302
        %v2842 = vunpack.c.l.b16 %v303
        %v2843 = vunpack.c.h.b16 %v303
        %v2844 = vunpack.c.l.b16 %v304
        %v2845 = vunpack.c.h.b16 %v304
        %v2846 = vunpack.c.l.b16 %v305
        %v2847 = vunpack.c.h.b16 %v305
        %v2848 = vunpack.c.l.b16 %v306
        %v2849 = vunpack.c.h.b16 %v306
        %v2850 = vunpack.c.l.b16 %v307
        %v2851 = vunpack.c.h.b16 %v307
        %v2852 = vunpack.c.l.b16 %v308
        %v2853 = vunpack.c.h.b16 %v308
        %v2854 = vunpack.c.l.b16 %v309
        %v2855 = vunpack.c.h.b16 %v309
        %v2856 = vunpack.c.l.b16 %v310
        %v2857 = vunpack.c.h.b16 %v310
        %v2858 = vunpack.c.l.b16 %v311
        %v2859 = vunpack.c.h.b16 %v311
        %v2860 = vunpack.c.l.b16 %v312
        %v2861 = vunpack.c.h.b16 %v312
        %v2862 = vunpack.c.l.b16 %v313
        %v2863 = vunpack.c.h.b16 %v313
        %v2864 = vunpack.c.l.b16 %v314
        %v2865 = vunpack.c.h.b16 %v314
        %v2866 = vunpack.c.l.b16 %v315
        %v2867 = vunpack.c.h.b16 %v315
        %v2868 = vunpack.c.l.b16 %v316
        %v2869 = vunpack.c.h.b16 %v316
        %v2870 = vunpack.c.l.b16 %v317
        %v2871 = vunpack.c.h.b16 %v317
        %v2872 = vunpack.c.l.b16 %v318
        %v2873 = vunpack.c.h.b16 %v318
        %v2874 = vunpack.c.l.b16 %v319
        %v2875 = vunpack.c.h.b16 %v319
        %v2876 = vunpack.c.l.b16 %v320
        %v2877 = vunpack.c.h.b16 %v320
        %v2878 = vunpack.c.l.b16 %v321
        %v2879 = vunpack.c.h.b16 %v321
        %v2880 = vunpack.c.l.b16 %v322
        %v2881 = vunpack.c.h.b16 %v322
        %v2882 = vunpack.c.l.b16 %v323
        %v2883 = vunpack.c.h.b16 %v323
        %v2884 = vunpack.c.l.b16 %v324
        %v2885 = vunpack.c.h.b16 %v324
        %v2886 = vunpack.c.l.b16 %v325
        %v2887 = vunpack.c.h.b16 %v325
        %v2888 = vunpack.c.l.b16 %v326
        %v2889 = vunpack.c.h.b16 %v326
        %v2890 = vunpack.c.l.b16 %v327
        %v2891 = vunpack.c.h.b16 %v327
        %v2892 = vunpack.c.l.b16 %v328
        %v2893 = vunpack.c.h.b16 %v328
        %v2894 = vunpack.c.l.b16 %v329
        %v2895 = vunpack.c.h.b16 %v329
        %v2896 = vunpack.c.l.b16 %v330
        %v2897 = vunpack.c.h.b16 %v330
        %v2898 = vunpack.c.l.b16 %v331
        %v2899 = vunpack.c.h.b16 %v331
        %v2900 = vunpack.c.l.b16 %v332
        %v2901 = vunpack.c.h.b16 %v332
        %v2902 = vunpack.c.l.b16 %v333
        %v2903 = vunpack.c.h.b16 %v333
        %v2904 = vunpack.c.l.b16 %v334
        %v2905 = vunpack.c.h.b16 %v334
        %v2906 = vunpack.c.l.b16 %v335
        %v2907 = vunpack.c.h.b16 %v335
        %v2908 = vunpack.c.l.b16 %v336
        %v2909 = vunpack.c.h.b16 %v336
        %v2910 = vunpack.c.l.b16 %v337
        %v2911 = vunpack.c.h.b16 %v337
        %v2912 = vunpack.c.l.b16 %v338
        %v2913 = vunpack.c.h.b16 %v338
        %v2914 = vunpack.c.l.b16 %v339
        %v2915 = vunpack.c.h.b16 %v339
        %v2916 = vunpack.c.l.b16 %v340
        %v2917 = vunpack.c.h.b16 %v340
        %v2918 = vunpack.c.l.b16 %v341
        %v2919 = vunpack.c.h.b16 %v341
        %v2920 = vunpack.c.l.b16 %v342
        %v2921 = vunpack.c.h.b16 %v342
        %v2922 = vunpack.c.l.b16 %v343
        %v2923 = vunpack.c.h.b16 %v343
        %v2924 = vunpack.c.l.b16 %v344
        %v2925 = vunpack.c.h.b16 %v344
        %v2926 = vunpack.c.l.b16 %v345
        %v2927 = vunpack.c.h.b16 %v345
        %v2928 = vunpack.c.l.b16 %v346
        %v2929 = vunpack.c.h.b16 %v346
        %v2930 = vunpack.c.l.b16 %v347
        %v2931 = vunpack.c.h.b16 %v347
        %v2932 = vunpack.c.l.b16 %v348
        %v2933 = vunpack.c.h.b16 %v348
        %v2934 = vunpack.c.l.b16 %v349
        %v2935 = vunpack.c.h.b16 %v349
        %v2936 = vunpack.c.l.b16 %v350
        %v2937 = vunpack.c.h.b16 %v350
        %v2938 = vunpack.c.l.b16 %v351
        %v2939 = vunpack.c.h.b16 %v351
        %v2940 = vunpack.c.l.b16 %v352
        %v2941 = vunpack.c.h.b16 %v352
        %v2942 = vunpack.c.l.b16 %v353
        %v2943 = vunpack.c.h.b16 %v353
        %v2944 = vunpack.c.l.b16 %v354
        %v2945 = vunpack.c.h.b16 %v354
        %v2946 = vunpack.c.l.b16 %v355
        %v2947 = vunpack.c.h.b16 %v355
        %v2948 = vunpack.c.l.b16 %v356
        %v2949 = vunpack.c.h.b16 %v356
        %v2950 = vunpack.c.l.b16 %v357
        %v2951 = vunpack.c.h.b16 %v357
        %v2952 = vunpack.c.l.b16 %v358
        %v2953 = vunpack.c.h.b16 %v358
        %v2954 = vunpack.c.l.b16 %v359
        %v2955 = vunpack.c.h.b16 %v359
        %v2956 = vunpack.c.l.b16 %v360
        %v2957 = vunpack.c.h.b16 %v360
        %v2958 = vunpack.c.l.b16 %v361
        %v2959 = vunpack.c.h.b16 %v361
        %v2960 = vunpack.c.l.b16 %v362
        %v2961 = vunpack.c.h.b16 %v362
        %v2962 = vunpack.c.l.b16 %v363
        %v2963 = vunpack.c.h.b16 %v363
        %v2964 = vunpack.c.l.b16 %v364
        %v2965 = vunpack.c.h.b16 %v364
        %v2966 = vunpack.c.l.b16 %v365
        %v2967 = vunpack.c.h.b16 %v365
        %v2968 = vunpack.c.l.b16 %v366
        %v2969 = vunpack.c.h.b16 %v366
        %v2970 = vunpack.c.l.b16 %v367
        %v2971 = vunpack.c.h.b16 %v367
        %v2972 = vunpack.c.l.b16 %v368
        %v2973 = vunpack.c.h.b16 %v368
        %v2974 = vunpack.c.l.b16 %v369
        %v2975 = vunpack.c.h.b16 %v369
        %v2976 = vunpack.c.l.b16 %v370
        %v2977 = vunpack.c.h.b16 %v370
        %v2978 = vunpack.c.l.b16 %v371
        %v2979 = vunpack.c.h.b16 %v371
        %v2980 = vunpack.c.l.b16 %v372
        %v2981 = vunpack.c.h.b16 %v372
        %v2982 = vunpack.c.l.b16 %v373
        %v2983 = vunpack.c.h.b16 %v373
        %v2984 = vunpack.c.l.b16 %v374
        %v2985 = vunpack.c.h.b16 %v374
        %v2986 = vunpack.c.l.b16 %v375
        %v2987 = vunpack.c.h.b16 %v375
        %v2988 = vunpack.c.l.b16 %v376
        %v2989 = vunpack.c.h.b16 %v376
        %v2990 = vunpack.c.l.b16 %v377
        %v2991 = vunpack.c.h.b16 %v377
        %v2992 = vunpack.c.l.b16 %v378
        %v2993 = vunpack.c.h.b16 %v378
        %v2994 = vunpack.c.l.b16 %v379
        %v2995 = vunpack.c.h.b16 %v379
        %v2996 = vunpack.c.l.b16 %v380
        %v2997 = vunpack.c.h.b16 %v380
        %v2998 = vunpack.c.l.b16 %v381
        %v2999 = vunpack.c.h.b16 %v381
        %v3000 = vunpack.c.l.b16 %v382
        %v3001 = vunpack.c.h.b16 %v382
        %v3002 = vunpack.c.l.b16 %v383
        %v3003 = vunpack.c.h.b16 %v383
        %v3004 = vunpack.c.l.b16 %v384
        %v3005 = vunpack.c.h.b16 %v384
        %v3006 = vunpack.c.l.b16 %v385
        %v3007 = vunpack.c.h.b16 %v385
        %v3008 = vunpack.c.l.b16 %v386
        %v3009 = vunpack.c.h.b16 %v386
        %v3010 = vunpack.c.l.b16 %v387
        %v3011 = vunpack.c.h.b16 %v387
        %v3012 = vunpack.c.l.b16 %v388
        %v3013 = vunpack.c.h.b16 %v388
        %v3014 = vunpack.c.l.b16 %v389
        %v3015 = vunpack.c.h.b16 %v389
        %v3016 = vunpack.c.l.b16 %v390
        %v3017 = vunpack.c.h.b16 %v390
        %v3018 = vunpack.c.l.b16 %v391
        %v3019 = vunpack.c.h.b16 %v391
        %v3020 = vunpack.c.l.b16 %v392
        %v3021 = vunpack.c.h.b16 %v392
        %v3022 = vunpack.c.l.b16 %v393
        %v3023 = vunpack.c.h.b16 %v393
        %v3024 = vunpack.c.l.b16 %v394
        %v3025 = vunpack.c.h.b16 %v394
        %v3026 = vunpack.c.l.b16 %v395
        %v3027 = vunpack.c.h.b16 %v395
        %v3028 = vunpack.c.l.b16 %v396
        %v3029 = vunpack.c.h.b16 %v396
        %v3030 = vunpack.c.l.b16 %v397
        %v3031 = vunpack.c.h.b16 %v397
        %v3032 = vunpack.c.l.b16 %v398
        %v3033 = vunpack.c.h.b16 %v398
        %v3034 = vunpack.c.l.b16 %v399
        %v3035 = vunpack.c.h.b16 %v399
        %v3036 = vunpack.c.l.b16 %v400
        %v3037 = vunpack.c.h.b16 %v400
        %v3038 = vunpack.c.l.b16 %v401
        %v3039 = vunpack.c.h.b16 %v401
        %v3040 = vunpack.c.l.b16 %v402
        %v3041 = vunpack.c.h.b16 %v402
        %v3042 = vunpack.c.l.b16 %v403
        %v3043 = vunpack.c.h.b16 %v403
        %v3044 = vunpack.c.l.b16 %v404
        %v3045 = vunpack.c.h.b16 %v404
        %v3046 = vunpack.c.l.b16 %v405
        %v3047 = vunpack.c.h.b16 %v405
        %v3048 = vunpack.c.l.b16 %v406
        %v3049 = vunpack.c.h.b16 %v406
        %v3050 = vunpack.c.l.b16 %v407
        %v3051 = vunpack.c.h.b16 %v407
        %v3052 = vunpack.c.l.b16 %v408
        %v3053 = vunpack.c.h.b16 %v408
        %v3054 = vunpack.c.l.b16 %v409
        %v3055 = vunpack.c.h.b16 %v409
        %v3056 = vunpack.c.l.b16 %v410
        %v3057 = vunpack.c.h.b16 %v410
        %v3058 = vunpack.c.l.b16 %v411
        %v3059 = vunpack.c.h.b16 %v411
        %v3060 = vunpack.c.l.b16 %v412
        %v3061 = vunpack.c.h.b16 %v412
        %v3062 = vunpack.c.l.b16 %v413
        %v3063 = vunpack.c.h.b16 %v413
        %v3064 = vunpack.c.l.b16 %v414
        %v3065 = vunpack.c.h.b16 %v414
        %v3066 = vunpack.c.l.b16 %v415
        %v3067 = vunpack.c.h.b16 %v415
        %v3068 = vunpack.c.l.b16 %v416
        %v3069 = vunpack.c.h.b16 %v416
        %v3070 = vunpack.c.l.b16 %v417
        %v3071 = vunpack.c.h.b16 %v417
        %v3072 = vunpack.c.l.b16 %v418
        %v3073 = vunpack.c.h.b16 %v418
        %v3074 = vunpack.c.l.b16 %v419
        %v3075 = vunpack.c.h.b16 %v419
        %v3076 = vunpack.c.l.b16 %v420
        %v3077 = vunpack.c.h.b16 %v420
        %v3078 = vunpack.c.l.b16 %v421
        %v3079 = vunpack.c.h.b16 %v421
        %v3080 = vunpack.c.l.b16 %v422
        %v3081 = vunpack.c.h.b16 %v422
        %v3082 = vunpack.c.l.b16 %v423
        %v3083 = vunpack.c.h.b16 %v423
        %v3084 = vunpack.c.l.b16 %v424
        %v3085 = vunpack.c.h.b16 %v424
        %v3086 = vunpack.c.l.b16 %v425
        %v3087 = vunpack.c.h.b16 %v425
        %v3088 = vunpack.c.l.b16 %v426
        %v3089 = vunpack.c.h.b16 %v426
        %v3090 = vunpack.c.l.b16 %v427
        %v3091 = vunpack.c.h.b16 %v427
        %v3092 = vunpack.c.l.b16 %v428
        %v3093 = vunpack.c.h.b16 %v428
        %v3094 = vunpack.c.l.b16 %v429
        %v3095 = vunpack.c.h.b16 %v429
        %v3096 = vunpack.c.l.b16 %v430
        %v3097 = vunpack.c.h.b16 %v430
        %v3098 = vunpack.c.l.b16 %v431
        %v3099 = vunpack.c.h.b16 %v431
        %v3100 = vunpack.c.l.b16 %v432
        %v3101 = vunpack.c.h.b16 %v432
        %v3102 = vunpack.c.l.b16 %v433
        %v3103 = vunpack.c.h.b16 %v433
        %v3104 = vunpack.c.l.b16 %v434
        %v3105 = vunpack.c.h.b16 %v434
        %v3106 = vunpack.c.l.b16 %v435
        %v3107 = vunpack.c.h.b16 %v435
        %v3108 = vunpack.c.l.b16 %v436
        %v3109 = vunpack.c.h.b16 %v436
        %v3110 = vunpack.c.l.b16 %v437
        %v3111 = vunpack.c.h.b16 %v437
        %v3112 = vunpack.c.l.b16 %v438
        %v3113 = vunpack.c.h.b16 %v438
        %v3114 = vunpack.c.l.b16 %v439
        %v3115 = vunpack.c.h.b16 %v439
        %v3116 = vunpack.c.l.b16 %v440
        %v3117 = vunpack.c.h.b16 %v440
        %v3118 = vunpack.c.l.b16 %v441
        %v3119 = vunpack.c.h.b16 %v441
        %v3120 = vunpack.c.l.b16 %v442
        %v3121 = vunpack.c.h.b16 %v442
        %v3122 = vunpack.c.l.b16 %v443
        %v3123 = vunpack.c.h.b16 %v443
        %v3124 = vunpack.c.l.b16 %v444
        %v3125 = vunpack.c.h.b16 %v444
        %v3126 = vunpack.c.l.b16 %v445
        %v3127 = vunpack.c.h.b16 %v445
        %v3128 = vunpack.c.l.b16 %v446
        %v3129 = vunpack.c.h.b16 %v446
        %v3130 = vunpack.c.l.b16 %v447
        %v3131 = vunpack.c.h.b16 %v447
        %v3132 = vunpack.c.l.b16 %v448
        %v3133 = vunpack.c.h.b16 %v448
        %v3134 = vunpack.c.l.b16 %v449
        %v3135 = vunpack.c.h.b16 %v449
        %v3136 = vunpack.c.l.b16 %v450
        %v3137 = vunpack.c.h.b16 %v450
        %v3138 = vunpack.c.l.b16 %v451
        %v3139 = vunpack.c.h.b16 %v451
        %v3140 = vunpack.c.l.b16 %v452
        %v3141 = vunpack.c.h.b16 %v452
        %v3142 = vunpack.c.l.b16 %v453
        %v3143 = vunpack.c.h.b16 %v453
        %v3144 = vunpack.c.l.b16 %v454
        %v3145 = vunpack.c.h.b16 %v454
        %v3146 = vunpack.c.l.b16 %v455
        %v3147 = vunpack.c.h.b16 %v455
        %v3148 = vunpack.c.l.b16 %v456
        %v3149 = vunpack.c.h.b16 %v456
        %v3150 = vunpack.c.l.b16 %v457
        %v3151 = vunpack.c.h.b16 %v457
        %v3152 = vunpack.c.l.b16 %v458
        %v3153 = vunpack.c.h.b16 %v458
        %v3154 = vunpack.c.l.b16 %v459
        %v3155 = vunpack.c.h.b16 %v459
        %v3156 = vunpack.c.l.b16 %v460
        %v3157 = vunpack.c.h.b16 %v460
        %v3158 = vunpack.c.l.b16 %v461
        %v3159 = vunpack.c.h.b16 %v461
        %v3160 = vunpack.c.l.b16 %v462
        %v3161 = vunpack.c.h.b16 %v462
        %v3162 = vunpack.c.l.b16 %v463
        %v3163 = vunpack.c.h.b16 %v463
        %v3164 = vunpack.c.l.b16 %v464
        %v3165 = vunpack.c.h.b16 %v464
        %v3166 = vunpack.c.l.b16 %v465
        %v3167 = vunpack.c.h.b16 %v465
        %v3168 = vunpack.c.l.b16 %v466
        %v3169 = vunpack.c.h.b16 %v466
        %v3170 = vunpack.c.l.b16 %v467
        %v3171 = vunpack.c.h.b16 %v467
        %v3172 = vunpack.c.l.b16 %v468
        %v3173 = vunpack.c.h.b16 %v468
        %v3174 = vunpack.c.l.b16 %v469
        %v3175 = vunpack.c.h.b16 %v469
        %v3176 = vunpack.c.l.b16 %v470
        %v3177 = vunpack.c.h.b16 %v470
        %v3178 = vunpack.c.l.b16 %v471
        %v3179 = vunpack.c.h.b16 %v471
        %v3180 = vunpack.c.l.b16 %v472
        %v3181 = vunpack.c.h.b16 %v472
        %v3182 = vunpack.c.l.b16 %v473
        %v3183 = vunpack.c.h.b16 %v473
        %v3184 = vunpack.c.l.b16 %v474
        %v3185 = vunpack.c.h.b16 %v474
        %v3186 = vunpack.c.l.b16 %v475
        %v3187 = vunpack.c.h.b16 %v475
        %v3188 = vunpack.c.l.b16 %v476
        %v3189 = vunpack.c.h.b16 %v476
        %v3190 = vunpack.c.l.b16 %v477
        %v3191 = vunpack.c.h.b16 %v477
        %v3192 = vunpack.c.l.b16 %v478
        %v3193 = vunpack.c.h.b16 %v478
        %v3194 = vunpack.c.l.b16 %v479
        %v3195 = vunpack.c.h.b16 %v479
        %v3196 = vunpack.c.l.b16 %v480
        %v3197 = vunpack.c.h.b16 %v480
        %v3198 = vunpack.c.l.b16 %v481
        %v3199 = vunpack.c.h.b16 %v481
        %v3200 = vunpack.c.l.b16 %v482
        %v3201 = vunpack.c.h.b16 %v482
        %v3202 = vunpack.c.l.b16 %v483
        %v3203 = vunpack.c.h.b16 %v483
        %v3204 = vunpack.c.l.b16 %v484
        %v3205 = vunpack.c.h.b16 %v484
        %v3206 = vunpack.c.l.b16 %v485
        %v3207 = vunpack.c.h.b16 %v485
        %v3208 = vunpack.c.l.b16 %v486
        %v3209 = vunpack.c.h.b16 %v486
        %v3210 = vunpack.c.l.b16 %v487
        %v3211 = vunpack.c.h.b16 %v487
        %v3212 = vunpack.c.l.b16 %v488
        %v3213 = vunpack.c.h.b16 %v488
        %v3214 = vunpack.c.l.b16 %v489
        %v3215 = vunpack.c.h.b16 %v489
        %v3216 = vunpack.c.l.b16 %v490
        %v3217 = vunpack.c.h.b16 %v490
        %v3218 = vunpack.c.l.b16 %v491
        %v3219 = vunpack.c.h.b16 %v491
        %v3220 = vunpack.c.l.b16 %v492
        %v3221 = vunpack.c.h.b16 %v492
        %v3222 = vunpack.c.l.b16 %v493
        %v3223 = vunpack.c.h.b16 %v493
        %v3224 = vunpack.c.l.b16 %v494
        %v3225 = vunpack.c.h.b16 %v494
        %v3226 = vunpack.c.l.b16 %v495
        %v3227 = vunpack.c.h.b16 %v495
        %v3228 = vunpack.c.l.b16 %v496
        %v3229 = vunpack.c.h.b16 %v496
        %v3230 = vunpack.c.l.b16 %v497
        %v3231 = vunpack.c.h.b16 %v497
        %v3232 = vunpack.c.l.b16 %v498
        %v3233 = vunpack.c.h.b16 %v498
        %v3234 = vunpack.c.l.b16 %v499
        %v3235 = vunpack.c.h.b16 %v499
        %v3236 = vunpack.c.l.b16 %v500
        %v3237 = vunpack.c.h.b16 %v500
        %v3238 = vunpack.c.l.b16 %v501
        %v3239 = vunpack.c.h.b16 %v501
        %v3240 = vunpack.c.l.b16 %v502
        %v3241 = vunpack.c.h.b16 %v502
        %v3242 = vunpack.c.l.b16 %v503
        %v3243 = vunpack.c.h.b16 %v503
        %v3244 = vunpack.c.l.b16 %v504
        %v3245 = vunpack.c.h.b16 %v504
        %v3246 = vunpack.c.l.b16 %v505
        %v3247 = vunpack.c.h.b16 %v505
        %v3248 = vunpack.c.l.b16 %v506
        %v3249 = vunpack.c.h.b16 %v506
        %v3250 = vunpack.c.l.b16 %v507
        %v3251 = vunpack.c.h.b16 %v507
        %v3252 = vunpack.c.l.b16 %v508
        %v3253 = vunpack.c.h.b16 %v508
        %v3254 = vunpack.c.l.b16 %v509
        %v3255 = vunpack.c.h.b16 %v509
        %v3256 = vunpack.c.l.b16 %v510
        %v3257 = vunpack.c.h.b16 %v510
        %v3258 = vunpack.c.l.b16 %v511
        %v3259 = vunpack.c.h.b16 %v511
        %v3260 = vunpack.c.l.b16 %v512
        %v3261 = vunpack.c.h.b16 %v512
        %v3262 = vunpack.c.l.b16 %v513
        %v3263 = vunpack.c.h.b16 %v513
        %v3264 = vunpack.c.l.b16 %v514
        %v3265 = vunpack.c.h.b16 %v514
        %v3266 = vunpack.c.l.b16 %v515
        %v3267 = vunpack.c.h.b16 %v515
        %v3268 = vunpack.c.l.b16 %v516
        %v3269 = vunpack.c.h.b16 %v516
        %v3270 = vunpack.c.l.b16 %v517
        %v3271 = vunpack.c.h.b16 %v517
        %v3272 = vunpack.c.l.b16 %v518
        %v3273 = vunpack.c.h.b16 %v518
        %v3274 = vunpack.c.l.b16 %v519
        %v3275 = vunpack.c.h.b16 %v519
        %v3276 = vunpack.c.l.b16 %v520
        %v3277 = vunpack.c.h.b16 %v520
        %v3278 = vunpack.c.l.b16 %v521
        %v3279 = vunpack.c.h.b16 %v521
        %v3280 = vunpack.c.l.b16 %v522
        %v3281 = vunpack.c.h.b16 %v522
        %v3282 = vunpack.c.l.b16 %v523
        %v3283 = vunpack.c.h.b16 %v523
        %v3284 = vunpack.c.l.b16 %v524
        %v3285 = vunpack.c.h.b16 %v524
        %v3286 = vunpack.c.l.b16 %v525
        %v3287 = vunpack.c.h.b16 %v525
        %v3288 = vunpack.c.l.b16 %v526
        %v3289 = vunpack.c.h.b16 %v526
        %v3290 = vunpack.c.l.b16 %v527
        %v3291 = vunpack.c.h.b16 %v527
        %v3292 = vunpack.c.l.b16 %v528
        %v3293 = vunpack.c.h.b16 %v528
        %v3294 = vunpack.c.l.b16 %v529
        %v3295 = vunpack.c.h.b16 %v529
        %v3296 = vunpack.c.l.b16 %v530
        %v3297 = vunpack.c.h.b16 %v530
        %v3298 = vunpack.c.l.b16 %v531
        %v3299 = vunpack.c.h.b16 %v531
        %v3300 = vunpack.c.l.b16 %v532
        %v3301 = vunpack.c.h.b16 %v532
        %v3302 = vunpack.c.l.b16 %v533
        %v3303 = vunpack.c.h.b16 %v533
        %v3304 = vunpack.c.l.b16 %v534
        %v3305 = vunpack.c.h.b16 %v534
        %v3306 = vunpack.c.l.b16 %v535
        %v3307 = vunpack.c.h.b16 %v535
        %v3308 = vunpack.c.l.b16 %v536
        %v3309 = vunpack.c.h.b16 %v536
        %v3310 = vunpack.c.l.b16 %v537
        %v3311 = vunpack.c.h.b16 %v537
        %v3312 = vunpack.c.l.b16 %v538
        %v3313 = vunpack.c.h.b16 %v538
        %v3314 = vunpack.c.l.b16 %v539
        %v3315 = vunpack.c.h.b16 %v539
        %v3316 = vunpack.c.l.b16 %v540
        %v3317 = vunpack.c.h.b16 %v540
        %v3318 = vunpack.c.l.b16 %v541
        %v3319 = vunpack.c.h.b16 %v541
        %v3320 = vunpack.c.l.b16 %v542
        %v3321 = vunpack.c.h.b16 %v542
        %v3322 = vunpack.c.l.b16 %v543
        %v3323 = vunpack.c.h.b16 %v543
        %v3324 = vunpack.c.l.b16 %v544
        %v3325 = vunpack.c.h.b16 %v544
        %v3326 = vpack.c.b16 %v2818, %v2814
        %v3327 = vpack.c.b16 %v2819, %v2815
        %v3328 = vpack.c.b16 %v2820, %v2816
        %v3329 = vpack.c.b16 %v2821, %v2817
        %v3330 = vpack.c.b16 %v2826, %v2822
        %v3331 = vpack.c.b16 %v2827, %v2823
        %v3332 = vpack.c.b16 %v2828, %v2824
        %v3333 = vpack.c.b16 %v2829, %v2825
        %v3334 = vpack.c.b16 %v2834, %v2830
        %v3335 = vpack.c.b16 %v2835, %v2831
        %v3336 = vpack.c.b16 %v2836, %v2832
        %v3337 = vpack.c.b16 %v2837, %v2833
        %v3338 = vpack.c.b16 %v2842, %v2838
        %v3339 = vpack.c.b16 %v2843, %v2839
        %v3340 = vpack.c.b16 %v2844, %v2840
        %v3341 = vpack.c.b16 %v2845, %v2841
        %v3342 = vpack.c.b16 %v2850, %v2846
        %v3343 = vpack.c.b16 %v2851, %v2847
        %v3344 = vpack.c.b16 %v2852, %v2848
        %v3345 = vpack.c.b16 %v2853, %v2849
        %v3346 = vpack.c.b16 %v2858, %v2854
        %v3347 = vpack.c.b16 %v2859, %v2855
        %v3348 = vpack.c.b16 %v2860, %v2856
        %v3349 = vpack.c.b16 %v2861, %v2857
        %v3350 = vpack.c.b16 %v2866, %v2862
        %v3351 = vpack.c.b16 %v2867, %v2863
        %v3352 = vpack.c.b16 %v2868, %v2864
        %v3353 = vpack.c.b16 %v2869, %v2865
        %v3354 = vpack.c.b16 %v2874, %v2870
        %v3355 = vpack.c.b16 %v2875, %v2871
        %v3356 = vpack.c.b16 %v2876, %v2872
        %v3357 = vpack.c.b16 %v2877, %v2873
        %v3358 = vpack.c.b16 %v2882, %v2878
        %v3359 = vpack.c.b16 %v2883, %v2879
        %v3360 = vpack.c.b16 %v2884, %v2880
        %v3361 = vpack.c.b16 %v2885, %v2881
        %v3362 = vpack.c.b16 %v2890, %v2886
        %v3363 = vpack.c.b16 %v2891, %v2887
        %v3364 = vpack.c.b16 %v2892, %v2888
        %v3365 = vpack.c.b16 %v2893, %v2889
        %v3366 = vpack.c.b16 %v2898, %v2894
        %v3367 = vpack.c.b16 %v2899, %v2895
        %v3368 = vpack.c.b16 %v2900, %v2896
        %v3369 = vpack.c.b16 %v2901, %v2897
        %v3370 = vpack.c.b16 %v2906, %v2902
        %v3371 = vpack.c.b16 %v2907, %v2903
        %v3372 = vpack.c.b16 %v2908, %v2904
        %v3373 = vpack.c.b16 %v2909, %v2905
        %v3374 = vpack.c.b16 %v2914, %v2910
        %v3375 = vpack.c.b16 %v2915, %v2911
        %v3376 = vpack.c.b16 %v2916, %v2912
        %v3377 = vpack.c.b16 %v2917, %v2913
        %v3378 = vpack.c.b16 %v2922, %v2918
        %v3379 = vpack.c.b16 %v2923, %v2919
        %v3380 = vpack.c.b16 %v2924, %v2920
        %v3381 = vpack.c.b16 %v2925, %v2921
        %v3382 = vpack.c.b16 %v2930, %v2926
        %v3383 = vpack.c.b16 %v2931, %v2927
        %v3384 = vpack.c.b16 %v2932, %v2928
        %v3385 = vpack.c.b16 %v2933, %v2929
        %v3386 = vpack.c.b16 %v2938, %v2934
        %v3387 = vpack.c.b16 %v2939, %v2935
        %v3388 = vpack.c.b16 %v2940, %v2936
        %v3389 = vpack.c.b16 %v2941, %v2937
        %v3390 = vpack.c.b16 %v2946, %v2942
        %v3391 = vpack.c.b16 %v2947, %v2943
        %v3392 = vpack.c.b16 %v2948, %v2944
        %v3393 = vpack.c.b16 %v2949, %v2945
        %v3394 = vpack.c.b16 %v2954, %v2950
        %v3395 = vpack.c.b16 %v2955, %v2951
        %v3396 = vpack.c.b16 %v2956, %v2952
        %v3397 = vpack.c.b16 %v2957, %v2953
        %v3398 = vpack.c.b16 %v2962, %v2958
        %v3399 = vpack.c.b16 %v2963, %v2959
        %v3400 = vpack.c.b16 %v2964, %v2960
        %v3401 = vpack.c.b16 %v2965, %v2961
        %v3402 = vpack.c.b16 %v2970, %v2966
        %v3403 = vpack.c.b16 %v2971, %v2967
        %v3404 = vpack.c.b16 %v2972, %v2968
        %v3405 = vpack.c.b16 %v2973, %v2969
        %v3406 = vpack.c.b16 %v2978, %v2974
        %v3407 = vpack.c.b16 %v2979, %v2975
        %v3408 = vpack.c.b16 %v2980, %v2976
        %v3409 = vpack.c.b16 %v2981, %v2977
        %v3410 = vpack.c.b16 %v2986, %v2982
        %v3411 = vpack.c.b16 %v2987, %v2983
        %v3412 = vpack.c.b16 %v2988, %v2984
        %v3413 = vpack.c.b16 %v2989, %v2985
        %v3414 = vpack.c.b16 %v2994, %v2990
        %v3415 = vpack.c.b16 %v2995, %v2991
        %v3416 = vpack.c.b16 %v2996, %v2992
        %v3417 = vpack.c.b16 %v2997, %v2993
        %v3418 = vpack.c.b16 %v3002, %v2998
        %v3419 = vpack.c.b16 %v3003, %v2999
        %v3420 = vpack.c.b16 %v3004, %v3000
        %v3421 = vpack.c.b16 %v3005, %v3001
        %v3422 = vpack.c.b16 %v3010, %v3006
        %v3423 = vpack.c.b16 %v3011, %v3007
        %v3424 = vpack.c.b16 %v3012, %v3008
        %v3425 = vpack.c.b16 %v3013, %v3009
        %v3426 = vpack.c.b16 %v3018, %v3014
        %v3427 = vpack.c.b16 %v3019, %v3015
        %v3428 = vpack.c.b16 %v3020, %v3016
        %v3429 = vpack.c.b16 %v3021, %v3017
        %v3430 = vpack.c.b16 %v3026, %v3022
        %v3431 = vpack.c.b16 %v3027, %v3023
        %v3432 = vpack.c.b16 %v3028, %v3024
        %v3433 = vpack.c.b16 %v3029, %v3025
        %v3434 = vpack.c.b16 %v3034, %v3030
        %v3435 = vpack.c.b16 %v3035, %v3031
        %v3436 = vpack.c.b16 %v3036, %v3032
        %v3437 = vpack.c.b16 %v3037, %v3033
        %v3438 = vpack.c.b16 %v3042, %v3038
        %v3439 = vpack.c.b16 %v3043, %v3039
        %v3440 = vpack.c.b16 %v3044, %v3040
        %v3441 = vpack.c.b16 %v3045, %v3041
        %v3442 = vpack.c.b16 %v3050, %v3046
        %v3443 = vpack.c.b16 %v3051, %v3047
        %v3444 = vpack.c.b16 %v3052, %v3048
        %v3445 = vpack.c.b16 %v3053, %v3049
        %v3446 = vpack.c.b16 %v3058, %v3054
        %v3447 = vpack.c.b16 %v3059, %v3055
        %v3448 = vpack.c.b16 %v3060, %v3056
        %v3449 = vpack.c.b16 %v3061, %v3057
        %v3450 = vpack.c.b16 %v3066, %v3062
        %v3451 = vpack.c.b16 %v3067, %v3063
        %v3452 = vpack.c.b16 %v3068, %v3064
        %v3453 = vpack.c.b16 %v3069, %v3065
        %v3454 = vpack.c.b16 %v3074, %v3070
        %v3455 = vpack.c.b16 %v3075, %v3071
        %v3456 = vpack.c.b16 %v3076, %v3072
        %v3457 = vpack.c.b16 %v3077, %v3073
        %v3458 = vpack.c.b16 %v3082, %v3078
        %v3459 = vpack.c.b16 %v3083, %v3079
        %v3460 = vpack.c.b16 %v3084, %v3080
        %v3461 = vpack.c.b16 %v3085, %v3081
        %v3462 = vpack.c.b16 %v3090, %v3086
        %v3463 = vpack.c.b16 %v3091, %v3087
        %v3464 = vpack.c.b16 %v3092, %v3088
        %v3465 = vpack.c.b16 %v3093, %v3089
        %v3466 = vpack.c.b16 %v3098, %v3094
        %v3467 = vpack.c.b16 %v3099, %v3095
        %v3468 = vpack.c.b16 %v3100, %v3096
        %v3469 = vpack.c.b16 %v3101, %v3097
        %v3470 = vpack.c.b16 %v3106, %v3102
        %v3471 = vpack.c.b16 %v3107, %v3103
        %v3472 = vpack.c.b16 %v3108, %v3104
        %v3473 = vpack.c.b16 %v3109, %v3105
        %v3474 = vpack.c.b16 %v3114, %v3110
        %v3475 = vpack.c.b16 %v3115, %v3111
        %v3476 = vpack.c.b16 %v3116, %v3112
        %v3477 = vpack.c.b16 %v3117, %v3113
        %v3478 = vpack.c.b16 %v3122, %v3118
        %v3479 = vpack.c.b16 %v3123, %v3119
        %v3480 = vpack.c.b16 %v3124, %v3120
        %v3481 = vpack.c.b16 %v3125, %v3121
        %v3482 = vpack.c.b16 %v3130, %v3126
        %v3483 = vpack.c.b16 %v3131, %v3127
        %v3484 = vpack.c.b16 %v3132, %v3128
        %v3485 = vpack.c.b16 %v3133, %v3129
        %v3486 = vpack.c.b16 %v3138, %v3134
        %v3487 = vpack.c.b16 %v3139, %v3135
        %v3488 = vpack.c.b16 %v3140, %v3136
        %v3489 = vpack.c.b16 %v3141, %v3137
        %v3490 = vpack.c.b16 %v3146, %v3142
        %v3491 = vpack.c.b16 %v3147, %v3143
        %v3492 = vpack.c.b16 %v3148, %v3144
        %v3493 = vpack.c.b16 %v3149, %v3145
        %v3494 = vpack.c.b16 %v3154, %v3150
        %v3495 = vpack.c.b16 %v3155, %v3151
        %v3496 = vpack.c.b16 %v3156, %v3152
        %v3497 = vpack.c.b16 %v3157, %v3153
        %v3498 = vpack.c.b16 %v3162, %v3158
        %v3499 = vpack.c.b16 %v3163, %v3159
        %v3500 = vpack.c.b16 %v3164, %v3160
        %v3501 = vpack.c.b16 %v3165, %v3161
        %v3502 = vpack.c.b16 %v3170, %v3166
        %v3503 = vpack.c.b16 %v3171, %v3167
        %v3504 = vpack.c.b16 %v3172, %v3168
        %v3505 = vpack.c.b16 %v3173, %v3169
        %v3506 = vpack.c.b16 %v3178, %v3174
        %v3507 = vpack.c.b16 %v3179, %v3175
        %v3508 = vpack.c.b16 %v3180, %v3176
        %v3509 = vpack.c.b16 %v3181, %v3177
        %v3510 = vpack.c.b16 %v3186, %v3182
        %v3511 = vpack.c.b16 %v3187, %v3183
        %v3512 = vpack.c.b16 %v3188, %v3184
        %v3513 = vpack.c.b16 %v3189, %v3185
        %v3514 = vpack.c.b16 %v3194, %v3190
        %v3515 = vpack.c.b16 %v3195, %v3191
        %v3516 = vpack.c.b16 %v3196, %v3192
        %v3517 = vpack.c.b16 %v3197, %v3193
        %v3518 = vpack.c.b16 %v3202, %v3198
        %v3519 = vpack.c.b16 %v3203, %v3199
        %v3520 = vpack.c.b16 %v3204, %v3200
        %v3521 = vpack.c.b16 %v3205, %v3201
        %v3522 = vpack.c.b16 %v3210, %v3206
        %v3523 = vpack.c.b16 %v3211, %v3207
        %v3524 = vpack.c.b16 %v3212, %v3208
        %v3525 = vpack.c.b16 %v3213, %v3209
        %v3526 = vpack.c.b16 %v3218, %v3214
        %v3527 = vpack.c.b16 %v3219, %v3215
        %v3528 = vpack.c.b16 %v3220, %v3216
        %v3529 = vpack.c.b16 %v3221, %v3217
        %v3530 = vpack.c.b16 %v3226, %v3222
        %v3531 = vpack.c.b16 %v3227, %v3223
        %v3532 = vpack.c.b16 %v3228, %v3224
        %v3533 = vpack.c.b16 %v3229, %v3225
        %v3534 = vpack.c.b16 %v3234, %v3230
        %v3535 = vpack.c.b16 %v3235, %v3231
        %v3536 = vpack.c.b16 %v3236, %v3232
        %v3537 = vpack.c.b16 %v3237, %v3233
        %v3538 = vpack.c.b16 %v3242, %v3238
        %v3539 = vpack.c.b16 %v3243, %v3239
        %v3540 = vpack.c.b16 %v3244, %v3240
        %v3541 = vpack.c.b16 %v3245, %v3241
        %v3542 = vpack.c.b16 %v3250, %v3246
        %v3543 = vpack.c.b16 %v3251, %v3247
        %v3544 = vpack.c.b16 %v3252, %v3248
        %v3545 = vpack.c.b16 %v3253, %v3249
        %v3546 = vpack.c.b16 %v3258, %v3254
        %v3547 = vpack.c.b16 %v3259, %v3255
        %v3548 = vpack.c.b16 %v3260, %v3256
        %v3549 = vpack.c.b16 %v3261, %v3257
        %v3550 = vpack.c.b16 %v3266, %v3262
        %v3551 = vpack.c.b16 %v3267, %v3263
        %v3552 = vpack.c.b16 %v3268, %v3264
        %v3553 = vpack.c.b16 %v3269, %v3265
        %v3554 = vpack.c.b16 %v3274, %v3270
        %v3555 = vpack.c.b16 %v3275, %v3271
        %v3556 = vpack.c.b16 %v3276, %v3272
        %v3557 = vpack.c.b16 %v3277, %v3273
        %v3558 = vpack.c.b16 %v3282, %v3278
        %v3559 = vpack.c.b16 %v3283, %v3279
        %v3560 = vpack.c.b16 %v3284, %v3280
        %v3561 = vpack.c.b16 %v3285, %v3281
        %v3562 = vpack.c.b16 %v3290, %v3286
        %v3563 = vpack.c.b16 %v3291, %v3287
        %v3564 = vpack.c.b16 %v3292, %v3288
        %v3565 = vpack.c.b16 %v3293, %v3289
        %v3566 = vpack.c.b16 %v3298, %v3294
        %v3567 = vpack.c.b16 %v3299, %v3295
        %v3568 = vpack.c.b16 %v3300, %v3296
        %v3569 = vpack.c.b16 %v3301, %v3297
        %v3570 = vpack.c.b16 %v3306, %v3302
        %v3571 = vpack.c.b16 %v3307, %v3303
        %v3572 = vpack.c.b16 %v3308, %v3304
        %v3573 = vpack.c.b16 %v3309, %v3305
        %v3574 = vpack.c.b16 %v3314, %v3310
        %v3575 = vpack.c.b16 %v3315, %v3311
        %v3576 = vpack.c.b16 %v3316, %v3312
        %v3577 = vpack.c.b16 %v3317, %v3313
        %v3578 = vpack.c.b16 %v3322, %v3318
        %v3579 = vpack.c.b16 %v3323, %v3319
        %v3580 = vpack.c.b16 %v3324, %v3320
        %v3581 = vpack.c.b16 %v3325, %v3321
        %3838 = vmatpush.bf16.msra.mxu0 %v3354
        %3839 = vmatpush.bf16.msra.mxu0 %v3350
        %3840 = vmatpush.bf16.msra.mxu0 %v3346
        %3841 = vmatpush.bf16.msra.mxu0 %v3342
        %3842 = vmatpush.bf16.msra.mxu0 %v3338
        %3843 = vmatpush.bf16.msra.mxu0 %v3334
        %3844 = vmatpush.bf16.msra.mxu0 %v3330
        %3845 = vmatpush.bf16.msra.mxu0 %v3326
        %3846 = vmatmul.bf16.gmra.mxu0 %v814
        %v3847 = vpop.f32.mrf.mxu0
        %v3848 = vadd.f32 %v2235, %v3847
        %v3849 = vpop.f32.mrf.mxu0
        %3850 = vdwg.mxu0
        %3851 = vmatpush.bf16.msra.mxu0 %v3386
        %3852 = vmatpush.bf16.msra.mxu0 %v3382
        %3853 = vmatpush.bf16.msra.mxu0 %v3378
        %3854 = vmatpush.bf16.msra.mxu0 %v3374
        %3855 = vmatpush.bf16.msra.mxu0 %v3370
        %3856 = vmatpush.bf16.msra.mxu0 %v3366
        %3857 = vmatpush.bf16.msra.mxu0 %v3362
        %3858 = vmatpush.bf16.msra.mxu0 %v3358
        %3859 = vmatmul.bf16.gmra.mxu0 %v815
        %v3860 = vpop.f32.mrf.mxu0
        %v3861 = vadd.f32 %v3848, %v3860
        %v3862 = vpop.f32.mrf.mxu0
        %3863 = vdwg.mxu0
        %3864 = vmatpush.bf16.msra.mxu0 %v3418
        %3865 = vmatpush.bf16.msra.mxu0 %v3414
        %3866 = vmatpush.bf16.msra.mxu0 %v3410
        %3867 = vmatpush.bf16.msra.mxu0 %v3406
        %3868 = vmatpush.bf16.msra.mxu0 %v3402
        %3869 = vmatpush.bf16.msra.mxu0 %v3398
        %3870 = vmatpush.bf16.msra.mxu0 %v3394
        %3871 = vmatpush.bf16.msra.mxu0 %v3390
        %3872 = vmatmul.bf16.gmra.mxu0 %v816
        %v3873 = vpop.f32.mrf.mxu0
        %v3874 = vadd.f32 %v3861, %v3873
        %v3875 = vpop.f32.mrf.mxu0
        %3876 = vdwg.mxu0
        %3877 = vmatpush.bf16.msra.mxu0 %v3450
        %3878 = vmatpush.bf16.msra.mxu0 %v3446
        %3879 = vmatpush.bf16.msra.mxu0 %v3442
        %3880 = vmatpush.bf16.msra.mxu0 %v3438
        %3881 = vmatpush.bf16.msra.mxu0 %v3434
        %3882 = vmatpush.bf16.msra.mxu0 %v3430
        %3883 = vmatpush.bf16.msra.mxu0 %v3426
        %3884 = vmatpush.bf16.msra.mxu0 %v3422
        %3885 = vmatmul.bf16.gmra.mxu0 %v817
        %v3886 = vpop.f32.mrf.mxu0
        %v3887 = vadd.f32 %v3874, %v3886
        %v3888 = vpop.f32.mrf.mxu0
        %3889 = vdwg.mxu0
        %3890 = vmatpush.bf16.msra.mxu0 %v3482
        %3891 = vmatpush.bf16.msra.mxu0 %v3478
        %3892 = vmatpush.bf16.msra.mxu0 %v3474
        %3893 = vmatpush.bf16.msra.mxu0 %v3470
        %3894 = vmatpush.bf16.msra.mxu0 %v3466
        %3895 = vmatpush.bf16.msra.mxu0 %v3462
        %3896 = vmatpush.bf16.msra.mxu0 %v3458
        %3897 = vmatpush.bf16.msra.mxu0 %v3454
        %3898 = vmatmul.bf16.gmra.mxu0 %v818
        %v3899 = vpop.f32.mrf.mxu0
        %v3900 = vadd.f32 %v3887, %v3899
        %v3901 = vpop.f32.mrf.mxu0
        %3902 = vdwg.mxu0
        %3903 = vmatpush.bf16.msra.mxu0 %v3514
        %3904 = vmatpush.bf16.msra.mxu0 %v3510
        %3905 = vmatpush.bf16.msra.mxu0 %v3506
        %3906 = vmatpush.bf16.msra.mxu0 %v3502
        %3907 = vmatpush.bf16.msra.mxu0 %v3498
        %3908 = vmatpush.bf16.msra.mxu0 %v3494
        %3909 = vmatpush.bf16.msra.mxu0 %v3490
        %3910 = vmatpush.bf16.msra.mxu0 %v3486
        %3911 = vmatmul.bf16.gmra.mxu0 %v819
        %v3912 = vpop.f32.mrf.mxu0
        %v3913 = vadd.f32 %v3900, %v3912
        %v3914 = vpop.f32.mrf.mxu0
        %3915 = vdwg.mxu0
        %3916 = vmatpush.bf16.msra.mxu0 %v3546
        %3917 = vmatpush.bf16.msra.mxu0 %v3542
        %3918 = vmatpush.bf16.msra.mxu0 %v3538
        %3919 = vmatpush.bf16.msra.mxu0 %v3534
        %3920 = vmatpush.bf16.msra.mxu0 %v3530
        %3921 = vmatpush.bf16.msra.mxu0 %v3526
        %3922 = vmatpush.bf16.msra.mxu0 %v3522
        %3923 = vmatpush.bf16.msra.mxu0 %v3518
        %3924 = vmatmul.bf16.gmra.mxu0 %v820
        %v3925 = vpop.f32.mrf.mxu0
        %v3926 = vadd.f32 %v3913, %v3925
        %v3927 = vpop.f32.mrf.mxu0
        %3928 = vdwg.mxu0
        %3929 = vmatpush.bf16.msra.mxu0 %v3578
        %3930 = vmatpush.bf16.msra.mxu0 %v3574
        %3931 = vmatpush.bf16.msra.mxu0 %v3570
        %3932 = vmatpush.bf16.msra.mxu0 %v3566
        %3933 = vmatpush.bf16.msra.mxu0 %v3562
        %3934 = vmatpush.bf16.msra.mxu0 %v3558
        %3935 = vmatpush.bf16.msra.mxu0 %v3554
        %3936 = vmatpush.bf16.msra.mxu0 %v3550
        %3937 = vmatmul.bf16.gmra.mxu0 %v821
        %v3938 = vpop.f32.mrf.mxu0
        %v3939 = vadd.f32 %v3926, %v3938
        %v3940 = vpop.f32.mrf.mxu0
        %3941 = vdwg.mxu0
        %3942 = vmatpush.bf16.msra.mxu0 %v3355
        %3943 = vmatpush.bf16.msra.mxu0 %v3351
        %3944 = vmatpush.bf16.msra.mxu0 %v3347
        %3945 = vmatpush.bf16.msra.mxu0 %v3343
        %3946 = vmatpush.bf16.msra.mxu0 %v3339
        %3947 = vmatpush.bf16.msra.mxu0 %v3335
        %3948 = vmatpush.bf16.msra.mxu0 %v3331
        %3949 = vmatpush.bf16.msra.mxu0 %v3327
        %3950 = vmatmul.bf16.gmra.mxu0 %v814
        %v3951 = vpop.f32.mrf.mxu0
        %v3952 = vadd.f32 %v2339, %v3951
        %v3953 = vpop.f32.mrf.mxu0
        %3954 = vdwg.mxu0
        %3955 = vmatpush.bf16.msra.mxu0 %v3387
        %3956 = vmatpush.bf16.msra.mxu0 %v3383
        %3957 = vmatpush.bf16.msra.mxu0 %v3379
        %3958 = vmatpush.bf16.msra.mxu0 %v3375
        %3959 = vmatpush.bf16.msra.mxu0 %v3371
        %3960 = vmatpush.bf16.msra.mxu0 %v3367
        %3961 = vmatpush.bf16.msra.mxu0 %v3363
        %3962 = vmatpush.bf16.msra.mxu0 %v3359
        %3963 = vmatmul.bf16.gmra.mxu0 %v815
        %v3964 = vpop.f32.mrf.mxu0
        %v3965 = vadd.f32 %v3952, %v3964
        %v3966 = vpop.f32.mrf.mxu0
        %3967 = vdwg.mxu0
        %3968 = vmatpush.bf16.msra.mxu0 %v3419
        %3969 = vmatpush.bf16.msra.mxu0 %v3415
        %3970 = vmatpush.bf16.msra.mxu0 %v3411
        %3971 = vmatpush.bf16.msra.mxu0 %v3407
        %3972 = vmatpush.bf16.msra.mxu0 %v3403
        %3973 = vmatpush.bf16.msra.mxu0 %v3399
        %3974 = vmatpush.bf16.msra.mxu0 %v3395
        %3975 = vmatpush.bf16.msra.mxu0 %v3391
        %3976 = vmatmul.bf16.gmra.mxu0 %v816
        %v3977 = vpop.f32.mrf.mxu0
        %v3978 = vadd.f32 %v3965, %v3977
        %v3979 = vpop.f32.mrf.mxu0
        %3980 = vdwg.mxu0
        %3981 = vmatpush.bf16.msra.mxu0 %v3451
        %3982 = vmatpush.bf16.msra.mxu0 %v3447
        %3983 = vmatpush.bf16.msra.mxu0 %v3443
        %3984 = vmatpush.bf16.msra.mxu0 %v3439
        %3985 = vmatpush.bf16.msra.mxu0 %v3435
        %3986 = vmatpush.bf16.msra.mxu0 %v3431
        %3987 = vmatpush.bf16.msra.mxu0 %v3427
        %3988 = vmatpush.bf16.msra.mxu0 %v3423
        %3989 = vmatmul.bf16.gmra.mxu0 %v817
        %v3990 = vpop.f32.mrf.mxu0
        %v3991 = vadd.f32 %v3978, %v3990
        %v3992 = vpop.f32.mrf.mxu0
        %3993 = vdwg.mxu0
        %3994 = vmatpush.bf16.msra.mxu0 %v3483
        %3995 = vmatpush.bf16.msra.mxu0 %v3479
        %3996 = vmatpush.bf16.msra.mxu0 %v3475
        %3997 = vmatpush.bf16.msra.mxu0 %v3471
        %3998 = vmatpush.bf16.msra.mxu0 %v3467
        %3999 = vmatpush.bf16.msra.mxu0 %v3463
        %4000 = vmatpush.bf16.msra.mxu0 %v3459
        %4001 = vmatpush.bf16.msra.mxu0 %v3455
        %4002 = vmatmul.bf16.gmra.mxu0 %v818
        %v4003 = vpop.f32.mrf.mxu0
        %v4004 = vadd.f32 %v3991, %v4003
        %v4005 = vpop.f32.mrf.mxu0
        %4006 = vdwg.mxu0
        %4007 = vmatpush.bf16.msra.mxu0 %v3515
        %4008 = vmatpush.bf16.msra.mxu0 %v3511
        %4009 = vmatpush.bf16.msra.mxu0 %v3507
        %4010 = vmatpush.bf16.msra.mxu0 %v3503
        %4011 = vmatpush.bf16.msra.mxu0 %v3499
        %4012 = vmatpush.bf16.msra.mxu0 %v3495
        %4013 = vmatpush.bf16.msra.mxu0 %v3491
        %4014 = vmatpush.bf16.msra.mxu0 %v3487
        %4015 = vmatmul.bf16.gmra.mxu0 %v819
        %v4016 = vpop.f32.mrf.mxu0
        %v4017 = vadd.f32 %v4004, %v4016
        %v4018 = vpop.f32.mrf.mxu0
        %4019 = vdwg.mxu0
        %4020 = vmatpush.bf16.msra.mxu0 %v3547
        %4021 = vmatpush.bf16.msra.mxu0 %v3543
        %4022 = vmatpush.bf16.msra.mxu0 %v3539
        %4023 = vmatpush.bf16.msra.mxu0 %v3535
        %4024 = vmatpush.bf16.msra.mxu0 %v3531
        %4025 = vmatpush.bf16.msra.mxu0 %v3527
        %4026 = vmatpush.bf16.msra.mxu0 %v3523
        %4027 = vmatpush.bf16.msra.mxu0 %v3519
        %4028 = vmatmul.bf16.gmra.mxu0 %v820
        %v4029 = vpop.f32.mrf.mxu0
        %v4030 = vadd.f32 %v4017, %v4029
        %v4031 = vpop.f32.mrf.mxu0
        %4032 = vdwg.mxu0
        %4033 = vmatpush.bf16.msra.mxu0 %v3579
        %4034 = vmatpush.bf16.msra.mxu0 %v3575
        %4035 = vmatpush.bf16.msra.mxu0 %v3571
        %4036 = vmatpush.bf16.msra.mxu0 %v3567
        %4037 = vmatpush.bf16.msra.mxu0 %v3563
        %4038 = vmatpush.bf16.msra.mxu0 %v3559
        %4039 = vmatpush.bf16.msra.mxu0 %v3555
        %4040 = vmatpush.bf16.msra.mxu0 %v3551
        %4041 = vmatmul.bf16.gmra.mxu0 %v821
        %v4042 = vpop.f32.mrf.mxu0
        %v4043 = vadd.f32 %v4030, %v4042
        %v4044 = vpop.f32.mrf.mxu0
        %4045 = vdwg.mxu0
        %4046 = vmatpush.bf16.msra.mxu0 %v3356
        %4047 = vmatpush.bf16.msra.mxu0 %v3352
        %4048 = vmatpush.bf16.msra.mxu0 %v3348
        %4049 = vmatpush.bf16.msra.mxu0 %v3344
        %4050 = vmatpush.bf16.msra.mxu0 %v3340
        %4051 = vmatpush.bf16.msra.mxu0 %v3336
        %4052 = vmatpush.bf16.msra.mxu0 %v3332
        %4053 = vmatpush.bf16.msra.mxu0 %v3328
        %4054 = vmatmul.bf16.gmra.mxu0 %v814
        %v4055 = vpop.f32.mrf.mxu0
        %v4056 = vadd.f32 %v2443, %v4055
        %v4057 = vpop.f32.mrf.mxu0
        %4058 = vdwg.mxu0
        %4059 = vmatpush.bf16.msra.mxu0 %v3388
        %4060 = vmatpush.bf16.msra.mxu0 %v3384
        %4061 = vmatpush.bf16.msra.mxu0 %v3380
        %4062 = vmatpush.bf16.msra.mxu0 %v3376
        %4063 = vmatpush.bf16.msra.mxu0 %v3372
        %4064 = vmatpush.bf16.msra.mxu0 %v3368
        %4065 = vmatpush.bf16.msra.mxu0 %v3364
        %4066 = vmatpush.bf16.msra.mxu0 %v3360
        %4067 = vmatmul.bf16.gmra.mxu0 %v815
        %v4068 = vpop.f32.mrf.mxu0
        %v4069 = vadd.f32 %v4056, %v4068
        %v4070 = vpop.f32.mrf.mxu0
        %4071 = vdwg.mxu0
        %4072 = vmatpush.bf16.msra.mxu0 %v3420
        %4073 = vmatpush.bf16.msra.mxu0 %v3416
        %4074 = vmatpush.bf16.msra.mxu0 %v3412
        %4075 = vmatpush.bf16.msra.mxu0 %v3408
        %4076 = vmatpush.bf16.msra.mxu0 %v3404
        %4077 = vmatpush.bf16.msra.mxu0 %v3400
        %4078 = vmatpush.bf16.msra.mxu0 %v3396
        %4079 = vmatpush.bf16.msra.mxu0 %v3392
        %4080 = vmatmul.bf16.gmra.mxu0 %v816
        %v4081 = vpop.f32.mrf.mxu0
        %v4082 = vadd.f32 %v4069, %v4081
        %v4083 = vpop.f32.mrf.mxu0
        %4084 = vdwg.mxu0
        %4085 = vmatpush.bf16.msra.mxu0 %v3452
        %4086 = vmatpush.bf16.msra.mxu0 %v3448
        %4087 = vmatpush.bf16.msra.mxu0 %v3444
        %4088 = vmatpush.bf16.msra.mxu0 %v3440
        %4089 = vmatpush.bf16.msra.mxu0 %v3436
        %4090 = vmatpush.bf16.msra.mxu0 %v3432
        %4091 = vmatpush.bf16.msra.mxu0 %v3428
        %4092 = vmatpush.bf16.msra.mxu0 %v3424
        %4093 = vmatmul.bf16.gmra.mxu0 %v817
        %v4094 = vpop.f32.mrf.mxu0
        %v4095 = vadd.f32 %v4082, %v4094
        %v4096 = vpop.f32.mrf.mxu0
        %4097 = vdwg.mxu0
        %4098 = vmatpush.bf16.msra.mxu0 %v3484
        %4099 = vmatpush.bf16.msra.mxu0 %v3480
        %4100 = vmatpush.bf16.msra.mxu0 %v3476
        %4101 = vmatpush.bf16.msra.mxu0 %v3472
        %4102 = vmatpush.bf16.msra.mxu0 %v3468
        %4103 = vmatpush.bf16.msra.mxu0 %v3464
        %4104 = vmatpush.bf16.msra.mxu0 %v3460
        %4105 = vmatpush.bf16.msra.mxu0 %v3456
        %4106 = vmatmul.bf16.gmra.mxu0 %v818
        %v4107 = vpop.f32.mrf.mxu0
        %v4108 = vadd.f32 %v4095, %v4107
        %v4109 = vpop.f32.mrf.mxu0
        %4110 = vdwg.mxu0
        %4111 = vmatpush.bf16.msra.mxu0 %v3516
        %4112 = vmatpush.bf16.msra.mxu0 %v3512
        %4113 = vmatpush.bf16.msra.mxu0 %v3508
        %4114 = vmatpush.bf16.msra.mxu0 %v3504
        %4115 = vmatpush.bf16.msra.mxu0 %v3500
        %4116 = vmatpush.bf16.msra.mxu0 %v3496
        %4117 = vmatpush.bf16.msra.mxu0 %v3492
        %4118 = vmatpush.bf16.msra.mxu0 %v3488
        %4119 = vmatmul.bf16.gmra.mxu0 %v819
        %v4120 = vpop.f32.mrf.mxu0
        %v4121 = vadd.f32 %v4108, %v4120
        %v4122 = vpop.f32.mrf.mxu0
        %4123 = vdwg.mxu0
        %4124 = vmatpush.bf16.msra.mxu0 %v3548
        %4125 = vmatpush.bf16.msra.mxu0 %v3544
        %4126 = vmatpush.bf16.msra.mxu0 %v3540
        %4127 = vmatpush.bf16.msra.mxu0 %v3536
        %4128 = vmatpush.bf16.msra.mxu0 %v3532
        %4129 = vmatpush.bf16.msra.mxu0 %v3528
        %4130 = vmatpush.bf16.msra.mxu0 %v3524
        %4131 = vmatpush.bf16.msra.mxu0 %v3520
        %4132 = vmatmul.bf16.gmra.mxu0 %v820
        %v4133 = vpop.f32.mrf.mxu0
        %v4134 = vadd.f32 %v4121, %v4133
        %v4135 = vpop.f32.mrf.mxu0
        %4136 = vdwg.mxu0
        %4137 = vmatpush.bf16.msra.mxu0 %v3580
        %4138 = vmatpush.bf16.msra.mxu0 %v3576
        %4139 = vmatpush.bf16.msra.mxu0 %v3572
        %4140 = vmatpush.bf16.msra.mxu0 %v3568
        %4141 = vmatpush.bf16.msra.mxu0 %v3564
        %4142 = vmatpush.bf16.msra.mxu0 %v3560
        %4143 = vmatpush.bf16.msra.mxu0 %v3556
        %4144 = vmatpush.bf16.msra.mxu0 %v3552
        %4145 = vmatmul.bf16.gmra.mxu0 %v821
        %v4146 = vpop.f32.mrf.mxu0
        %v4147 = vadd.f32 %v4134, %v4146
        %v4148 = vpop.f32.mrf.mxu0
        %4149 = vdwg.mxu0
        %4150 = vmatpush.bf16.msra.mxu0 %v3357
        %4151 = vmatpush.bf16.msra.mxu0 %v3353
        %4152 = vmatpush.bf16.msra.mxu0 %v3349
        %4153 = vmatpush.bf16.msra.mxu0 %v3345
        %4154 = vmatpush.bf16.msra.mxu0 %v3341
        %4155 = vmatpush.bf16.msra.mxu0 %v3337
        %4156 = vmatpush.bf16.msra.mxu0 %v3333
        %4157 = vmatpush.bf16.msra.mxu0 %v3329
        %4158 = vmatmul.bf16.gmra.mxu0 %v814
        %v4159 = vpop.f32.mrf.mxu0
        %v4160 = vadd.f32 %v2547, %v4159
        %v4161 = vpop.f32.mrf.mxu0
        %4162 = vdwg.mxu0
        %4163 = vmatpush.bf16.msra.mxu0 %v3389
        %4164 = vmatpush.bf16.msra.mxu0 %v3385
        %4165 = vmatpush.bf16.msra.mxu0 %v3381
        %4166 = vmatpush.bf16.msra.mxu0 %v3377
        %4167 = vmatpush.bf16.msra.mxu0 %v3373
        %4168 = vmatpush.bf16.msra.mxu0 %v3369
        %4169 = vmatpush.bf16.msra.mxu0 %v3365
        %4170 = vmatpush.bf16.msra.mxu0 %v3361
        %4171 = vmatmul.bf16.gmra.mxu0 %v815
        %v4172 = vpop.f32.mrf.mxu0
        %v4173 = vadd.f32 %v4160, %v4172
        %v4174 = vpop.f32.mrf.mxu0
        %4175 = vdwg.mxu0
        %4176 = vmatpush.bf16.msra.mxu0 %v3421
        %4177 = vmatpush.bf16.msra.mxu0 %v3417
        %4178 = vmatpush.bf16.msra.mxu0 %v3413
        %4179 = vmatpush.bf16.msra.mxu0 %v3409
        %4180 = vmatpush.bf16.msra.mxu0 %v3405
        %4181 = vmatpush.bf16.msra.mxu0 %v3401
        %4182 = vmatpush.bf16.msra.mxu0 %v3397
        %4183 = vmatpush.bf16.msra.mxu0 %v3393
        %4184 = vmatmul.bf16.gmra.mxu0 %v816
        %v4185 = vpop.f32.mrf.mxu0
        %v4186 = vadd.f32 %v4173, %v4185
        %v4187 = vpop.f32.mrf.mxu0
        %4188 = vdwg.mxu0
        %4189 = vmatpush.bf16.msra.mxu0 %v3453
        %4190 = vmatpush.bf16.msra.mxu0 %v3449
        %4191 = vmatpush.bf16.msra.mxu0 %v3445
        %4192 = vmatpush.bf16.msra.mxu0 %v3441
        %4193 = vmatpush.bf16.msra.mxu0 %v3437
        %4194 = vmatpush.bf16.msra.mxu0 %v3433
        %4195 = vmatpush.bf16.msra.mxu0 %v3429
        %4196 = vmatpush.bf16.msra.mxu0 %v3425
        %4197 = vmatmul.bf16.gmra.mxu0 %v817
        %v4198 = vpop.f32.mrf.mxu0
        %v4199 = vadd.f32 %v4186, %v4198
        %v4200 = vpop.f32.mrf.mxu0
        %4201 = vdwg.mxu0
        %4202 = vmatpush.bf16.msra.mxu0 %v3485
        %4203 = vmatpush.bf16.msra.mxu0 %v3481
        %4204 = vmatpush.bf16.msra.mxu0 %v3477
        %4205 = vmatpush.bf16.msra.mxu0 %v3473
        %4206 = vmatpush.bf16.msra.mxu0 %v3469
        %4207 = vmatpush.bf16.msra.mxu0 %v3465
        %4208 = vmatpush.bf16.msra.mxu0 %v3461
        %4209 = vmatpush.bf16.msra.mxu0 %v3457
        %4210 = vmatmul.bf16.gmra.mxu0 %v818
        %v4211 = vpop.f32.mrf.mxu0
        %v4212 = vadd.f32 %v4199, %v4211
        %v4213 = vpop.f32.mrf.mxu0
        %4214 = vdwg.mxu0
        %4215 = vmatpush.bf16.msra.mxu0 %v3517
        %4216 = vmatpush.bf16.msra.mxu0 %v3513
        %4217 = vmatpush.bf16.msra.mxu0 %v3509
        %4218 = vmatpush.bf16.msra.mxu0 %v3505
        %4219 = vmatpush.bf16.msra.mxu0 %v3501
        %4220 = vmatpush.bf16.msra.mxu0 %v3497
        %4221 = vmatpush.bf16.msra.mxu0 %v3493
        %4222 = vmatpush.bf16.msra.mxu0 %v3489
        %4223 = vmatmul.bf16.gmra.mxu0 %v819
        %v4224 = vpop.f32.mrf.mxu0
        %v4225 = vadd.f32 %v4212, %v4224
        %v4226 = vpop.f32.mrf.mxu0
        %4227 = vdwg.mxu0
        %4228 = vmatpush.bf16.msra.mxu0 %v3549
        %4229 = vmatpush.bf16.msra.mxu0 %v3545
        %4230 = vmatpush.bf16.msra.mxu0 %v3541
        %4231 = vmatpush.bf16.msra.mxu0 %v3537
        %4232 = vmatpush.bf16.msra.mxu0 %v3533
        %4233 = vmatpush.bf16.msra.mxu0 %v3529
        %4234 = vmatpush.bf16.msra.mxu0 %v3525
        %4235 = vmatpush.bf16.msra.mxu0 %v3521
        %4236 = vmatmul.bf16.gmra.mxu0 %v820
        %v4237 = vpop.f32.mrf.mxu0
        %v4238 = vadd.f32 %v4225, %v4237
        %v4239 = vpop.f32.mrf.mxu0
        %4240 = vdwg.mxu0
        %4241 = vmatpush.bf16.msra.mxu0 %v3581
        %4242 = vmatpush.bf16.msra.mxu0 %v3577
        %4243 = vmatpush.bf16.msra.mxu0 %v3573
        %4244 = vmatpush.bf16.msra.mxu0 %v3569
        %4245 = vmatpush.bf16.msra.mxu0 %v3565
        %4246 = vmatpush.bf16.msra.mxu0 %v3561
        %4247 = vmatpush.bf16.msra.mxu0 %v3557
        %4248 = vmatpush.bf16.msra.mxu0 %v3553
        %4249 = vmatmul.bf16.gmra.mxu0 %v821
        %v4250 = vpop.f32.mrf.mxu0
        %v4251 = vadd.f32 %v4238, %v4250
        %v4252 = vpop.f32.mrf.mxu0
        %4253 = vdwg.mxu0
        %v4254 = vld [vmem:[%s284] sm:$0x22]
        %v4255 = vld [vmem:[%s284 + $0x8] sm:$0x22]
        %v4256 = vld [vmem:[%s284 + $0x10] sm:$0x22]
        %v4257 = vld [vmem:[%s284 + $0x18] sm:$0x22]
        %s4258 = scalar_lea.vmem [#allocation2], 4096
        %v4259 = vld [vmem:[%s4258] sm:$0xff]
        %v4260 = vld [vmem:[%s4258 + $0x8] sm:$0xff]
        %v4261 = vld [vmem:[%s4258 + $0x10] sm:$0xff]
        %v4262 = vld [vmem:[%s4258 + $0x18] sm:$0xff]
        %v4263 = vld [vmem:[%s4258 + $0x20] sm:$0xff]
        %v4264 = vld [vmem:[%s4258 + $0x28] sm:$0xff]
        %v4265 = vld [vmem:[%s4258 + $0x30] sm:$0xff]
        %v4266 = vld [vmem:[%s4258 + $0x38] sm:$0xff]
        %v4267 = vld [vmem:[%s4258 + $0x40] sm:$0xff]
        %v4268 = vld [vmem:[%s4258 + $0x48] sm:$0xff]
        %v4269 = vld [vmem:[%s4258 + $0x50] sm:$0xff]
        %v4270 = vld [vmem:[%s4258 + $0x58] sm:$0xff]
        %v4271 = vld [vmem:[%s4258 + $0x60] sm:$0xff]
        %v4272 = vld [vmem:[%s4258 + $0x68] sm:$0xff]
        %v4273 = vld [vmem:[%s4258 + $0x70] sm:$0xff]
        %v4274 = vld [vmem:[%s4258 + $0x78] sm:$0xff]
        %v4275 = vld [vmem:[%s4258 + $0x80] sm:$0xff]
        %v4276 = vld [vmem:[%s4258 + $0x88] sm:$0xff]
        %v4277 = vld [vmem:[%s4258 + $0x90] sm:$0xff]
        %v4278 = vld [vmem:[%s4258 + $0x98] sm:$0xff]
        %v4279 = vld [vmem:[%s4258 + $0xa0] sm:$0xff]
        %v4280 = vld [vmem:[%s4258 + $0xa8] sm:$0xff]
        %v4281 = vld [vmem:[%s4258 + $0xb0] sm:$0xff]
        %v4282 = vld [vmem:[%s4258 + $0xb8] sm:$0xff]
        %v4283 = vld [vmem:[%s4258 + $0xc0] sm:$0xff]
        %v4284 = vld [vmem:[%s4258 + $0xc8] sm:$0xff]
        %v4285 = vld [vmem:[%s4258 + $0xd0] sm:$0xff]
        %v4286 = vld [vmem:[%s4258 + $0xd8] sm:$0xff]
        %v4287 = vld [vmem:[%s4258 + $0xe0] sm:$0xff]
        %v4288 = vld [vmem:[%s4258 + $0xe8] sm:$0xff]
        %v4289 = vld [vmem:[%s4258 + $0xf0] sm:$0xff]
        %v4290 = vld [vmem:[%s4258 + $0xf8] sm:$0xff]
        %v4291 = vld [vmem:[%s4258 + $0x100] sm:$0xff]
        %v4292 = vld [vmem:[%s4258 + $0x108] sm:$0xff]
        %v4293 = vld [vmem:[%s4258 + $0x110] sm:$0xff]
        %v4294 = vld [vmem:[%s4258 + $0x118] sm:$0xff]
        %v4295 = vld [vmem:[%s4258 + $0x120] sm:$0xff]
        %v4296 = vld [vmem:[%s4258 + $0x128] sm:$0xff]
        %v4297 = vld [vmem:[%s4258 + $0x130] sm:$0xff]
        %v4298 = vld [vmem:[%s4258 + $0x138] sm:$0xff]
        %v4299 = vld [vmem:[%s4258 + $0x140] sm:$0xff]
        %v4300 = vld [vmem:[%s4258 + $0x148] sm:$0xff]
        %v4301 = vld [vmem:[%s4258 + $0x150] sm:$0xff]
        %v4302 = vld [vmem:[%s4258 + $0x158] sm:$0xff]
        %v4303 = vld [vmem:[%s4258 + $0x160] sm:$0xff]
        %v4304 = vld [vmem:[%s4258 + $0x168] sm:$0xff]
        %v4305 = vld [vmem:[%s4258 + $0x170] sm:$0xff]
        %v4306 = vld [vmem:[%s4258 + $0x178] sm:$0xff]
        %v4307 = vld [vmem:[%s4258 + $0x180] sm:$0xff]
        %v4308 = vld [vmem:[%s4258 + $0x188] sm:$0xff]
        %v4309 = vld [vmem:[%s4258 + $0x190] sm:$0xff]
        %v4310 = vld [vmem:[%s4258 + $0x198] sm:$0xff]
        %v4311 = vld [vmem:[%s4258 + $0x1a0] sm:$0xff]
        %v4312 = vld [vmem:[%s4258 + $0x1a8] sm:$0xff]
        %v4313 = vld [vmem:[%s4258 + $0x1b0] sm:$0xff]
        %v4314 = vld [vmem:[%s4258 + $0x1b8] sm:$0xff]
        %v4315 = vld [vmem:[%s4258 + $0x1c0] sm:$0xff]
        %v4316 = vld [vmem:[%s4258 + $0x1c8] sm:$0xff]
        %v4317 = vld [vmem:[%s4258 + $0x1d0] sm:$0xff]
        %v4318 = vld [vmem:[%s4258 + $0x1d8] sm:$0xff]
        %v4319 = vld [vmem:[%s4258 + $0x1e0] sm:$0xff]
        %v4320 = vld [vmem:[%s4258 + $0x1e8] sm:$0xff]
        %v4321 = vld [vmem:[%s4258 + $0x1f0] sm:$0xff]
        %v4322 = vld [vmem:[%s4258 + $0x1f8] sm:$0xff]
        %v4323 = vld [vmem:[%s4258 + $0x200] sm:$0xff]
        %v4324 = vld [vmem:[%s4258 + $0x208] sm:$0xff]
        %v4325 = vld [vmem:[%s4258 + $0x210] sm:$0xff]
        %v4326 = vld [vmem:[%s4258 + $0x218] sm:$0xff]
        %v4327 = vld [vmem:[%s4258 + $0x220] sm:$0xff]
        %v4328 = vld [vmem:[%s4258 + $0x228] sm:$0xff]
        %v4329 = vld [vmem:[%s4258 + $0x230] sm:$0xff]
        %v4330 = vld [vmem:[%s4258 + $0x238] sm:$0xff]
        %v4331 = vld [vmem:[%s4258 + $0x240] sm:$0xff]
        %v4332 = vld [vmem:[%s4258 + $0x248] sm:$0xff]
        %v4333 = vld [vmem:[%s4258 + $0x250] sm:$0xff]
        %v4334 = vld [vmem:[%s4258 + $0x258] sm:$0xff]
        %v4335 = vld [vmem:[%s4258 + $0x260] sm:$0xff]
        %v4336 = vld [vmem:[%s4258 + $0x268] sm:$0xff]
        %v4337 = vld [vmem:[%s4258 + $0x270] sm:$0xff]
        %v4338 = vld [vmem:[%s4258 + $0x278] sm:$0xff]
        %v4339 = vld [vmem:[%s4258 + $0x280] sm:$0xff]
        %v4340 = vld [vmem:[%s4258 + $0x288] sm:$0xff]
        %v4341 = vld [vmem:[%s4258 + $0x290] sm:$0xff]
        %v4342 = vld [vmem:[%s4258 + $0x298] sm:$0xff]
        %v4343 = vld [vmem:[%s4258 + $0x2a0] sm:$0xff]
        %v4344 = vld [vmem:[%s4258 + $0x2a8] sm:$0xff]
        %v4345 = vld [vmem:[%s4258 + $0x2b0] sm:$0xff]
        %v4346 = vld [vmem:[%s4258 + $0x2b8] sm:$0xff]
        %v4347 = vld [vmem:[%s4258 + $0x2c0] sm:$0xff]
        %v4348 = vld [vmem:[%s4258 + $0x2c8] sm:$0xff]
        %v4349 = vld [vmem:[%s4258 + $0x2d0] sm:$0xff]
        %v4350 = vld [vmem:[%s4258 + $0x2d8] sm:$0xff]
        %v4351 = vld [vmem:[%s4258 + $0x2e0] sm:$0xff]
        %v4352 = vld [vmem:[%s4258 + $0x2e8] sm:$0xff]
        %v4353 = vld [vmem:[%s4258 + $0x2f0] sm:$0xff]
        %v4354 = vld [vmem:[%s4258 + $0x2f8] sm:$0xff]
        %v4355 = vld [vmem:[%s4258 + $0x300] sm:$0xff]
        %v4356 = vld [vmem:[%s4258 + $0x308] sm:$0xff]
        %v4357 = vld [vmem:[%s4258 + $0x310] sm:$0xff]
        %v4358 = vld [vmem:[%s4258 + $0x318] sm:$0xff]
        %v4359 = vld [vmem:[%s4258 + $0x320] sm:$0xff]
        %v4360 = vld [vmem:[%s4258 + $0x328] sm:$0xff]
        %v4361 = vld [vmem:[%s4258 + $0x330] sm:$0xff]
        %v4362 = vld [vmem:[%s4258 + $0x338] sm:$0xff]
        %v4363 = vld [vmem:[%s4258 + $0x340] sm:$0xff]
        %v4364 = vld [vmem:[%s4258 + $0x348] sm:$0xff]
        %v4365 = vld [vmem:[%s4258 + $0x350] sm:$0xff]
        %v4366 = vld [vmem:[%s4258 + $0x358] sm:$0xff]
        %v4367 = vld [vmem:[%s4258 + $0x360] sm:$0xff]
        %v4368 = vld [vmem:[%s4258 + $0x368] sm:$0xff]
        %v4369 = vld [vmem:[%s4258 + $0x370] sm:$0xff]
        %v4370 = vld [vmem:[%s4258 + $0x378] sm:$0xff]
        %v4371 = vld [vmem:[%s4258 + $0x380] sm:$0xff]
        %v4372 = vld [vmem:[%s4258 + $0x388] sm:$0xff]
        %v4373 = vld [vmem:[%s4258 + $0x390] sm:$0xff]
        %v4374 = vld [vmem:[%s4258 + $0x398] sm:$0xff]
        %v4375 = vld [vmem:[%s4258 + $0x3a0] sm:$0xff]
        %v4376 = vld [vmem:[%s4258 + $0x3a8] sm:$0xff]
        %v4377 = vld [vmem:[%s4258 + $0x3b0] sm:$0xff]
        %v4378 = vld [vmem:[%s4258 + $0x3b8] sm:$0xff]
        %v4379 = vld [vmem:[%s4258 + $0x3c0] sm:$0xff]
        %v4380 = vld [vmem:[%s4258 + $0x3c8] sm:$0xff]
        %v4381 = vld [vmem:[%s4258 + $0x3d0] sm:$0xff]
        %v4382 = vld [vmem:[%s4258 + $0x3d8] sm:$0xff]
        %v4383 = vld [vmem:[%s4258 + $0x3e0] sm:$0xff]
        %v4384 = vld [vmem:[%s4258 + $0x3e8] sm:$0xff]
        %v4385 = vld [vmem:[%s4258 + $0x3f0] sm:$0xff]
        %v4386 = vld [vmem:[%s4258 + $0x3f8] sm:$0xff]
        %v4387 = vld [vmem:[%s4258 + $0x400] sm:$0xff]
        %v4388 = vld [vmem:[%s4258 + $0x408] sm:$0xff]
        %v4389 = vld [vmem:[%s4258 + $0x410] sm:$0xff]
        %v4390 = vld [vmem:[%s4258 + $0x418] sm:$0xff]
        %v4391 = vld [vmem:[%s4258 + $0x420] sm:$0xff]
        %v4392 = vld [vmem:[%s4258 + $0x428] sm:$0xff]
        %v4393 = vld [vmem:[%s4258 + $0x430] sm:$0xff]
        %v4394 = vld [vmem:[%s4258 + $0x438] sm:$0xff]
        %v4395 = vld [vmem:[%s4258 + $0x440] sm:$0xff]
        %v4396 = vld [vmem:[%s4258 + $0x448] sm:$0xff]
        %v4397 = vld [vmem:[%s4258 + $0x450] sm:$0xff]
        %v4398 = vld [vmem:[%s4258 + $0x458] sm:$0xff]
        %v4399 = vld [vmem:[%s4258 + $0x460] sm:$0xff]
        %v4400 = vld [vmem:[%s4258 + $0x468] sm:$0xff]
        %v4401 = vld [vmem:[%s4258 + $0x470] sm:$0xff]
        %v4402 = vld [vmem:[%s4258 + $0x478] sm:$0xff]
        %v4403 = vld [vmem:[%s4258 + $0x480] sm:$0xff]
        %v4404 = vld [vmem:[%s4258 + $0x488] sm:$0xff]
        %v4405 = vld [vmem:[%s4258 + $0x490] sm:$0xff]
        %v4406 = vld [vmem:[%s4258 + $0x498] sm:$0xff]
        %v4407 = vld [vmem:[%s4258 + $0x4a0] sm:$0xff]
        %v4408 = vld [vmem:[%s4258 + $0x4a8] sm:$0xff]
        %v4409 = vld [vmem:[%s4258 + $0x4b0] sm:$0xff]
        %v4410 = vld [vmem:[%s4258 + $0x4b8] sm:$0xff]
        %v4411 = vld [vmem:[%s4258 + $0x4c0] sm:$0xff]
        %v4412 = vld [vmem:[%s4258 + $0x4c8] sm:$0xff]
        %v4413 = vld [vmem:[%s4258 + $0x4d0] sm:$0xff]
        %v4414 = vld [vmem:[%s4258 + $0x4d8] sm:$0xff]
        %v4415 = vld [vmem:[%s4258 + $0x4e0] sm:$0xff]
        %v4416 = vld [vmem:[%s4258 + $0x4e8] sm:$0xff]
        %v4417 = vld [vmem:[%s4258 + $0x4f0] sm:$0xff]
        %v4418 = vld [vmem:[%s4258 + $0x4f8] sm:$0xff]
        %v4419 = vld [vmem:[%s4258 + $0x500] sm:$0xff]
        %v4420 = vld [vmem:[%s4258 + $0x508] sm:$0xff]
        %v4421 = vld [vmem:[%s4258 + $0x510] sm:$0xff]
        %v4422 = vld [vmem:[%s4258 + $0x518] sm:$0xff]
        %v4423 = vld [vmem:[%s4258 + $0x520] sm:$0xff]
        %v4424 = vld [vmem:[%s4258 + $0x528] sm:$0xff]
        %v4425 = vld [vmem:[%s4258 + $0x530] sm:$0xff]
        %v4426 = vld [vmem:[%s4258 + $0x538] sm:$0xff]
        %v4427 = vld [vmem:[%s4258 + $0x540] sm:$0xff]
        %v4428 = vld [vmem:[%s4258 + $0x548] sm:$0xff]
        %v4429 = vld [vmem:[%s4258 + $0x550] sm:$0xff]
        %v4430 = vld [vmem:[%s4258 + $0x558] sm:$0xff]
        %v4431 = vld [vmem:[%s4258 + $0x560] sm:$0xff]
        %v4432 = vld [vmem:[%s4258 + $0x568] sm:$0xff]
        %v4433 = vld [vmem:[%s4258 + $0x570] sm:$0xff]
        %v4434 = vld [vmem:[%s4258 + $0x578] sm:$0xff]
        %v4435 = vld [vmem:[%s4258 + $0x580] sm:$0xff]
        %v4436 = vld [vmem:[%s4258 + $0x588] sm:$0xff]
        %v4437 = vld [vmem:[%s4258 + $0x590] sm:$0xff]
        %v4438 = vld [vmem:[%s4258 + $0x598] sm:$0xff]
        %v4439 = vld [vmem:[%s4258 + $0x5a0] sm:$0xff]
        %v4440 = vld [vmem:[%s4258 + $0x5a8] sm:$0xff]
        %v4441 = vld [vmem:[%s4258 + $0x5b0] sm:$0xff]
        %v4442 = vld [vmem:[%s4258 + $0x5b8] sm:$0xff]
        %v4443 = vld [vmem:[%s4258 + $0x5c0] sm:$0xff]
        %v4444 = vld [vmem:[%s4258 + $0x5c8] sm:$0xff]
        %v4445 = vld [vmem:[%s4258 + $0x5d0] sm:$0xff]
        %v4446 = vld [vmem:[%s4258 + $0x5d8] sm:$0xff]
        %v4447 = vld [vmem:[%s4258 + $0x5e0] sm:$0xff]
        %v4448 = vld [vmem:[%s4258 + $0x5e8] sm:$0xff]
        %v4449 = vld [vmem:[%s4258 + $0x5f0] sm:$0xff]
        %v4450 = vld [vmem:[%s4258 + $0x5f8] sm:$0xff]
        %v4451 = vld [vmem:[%s4258 + $0x600] sm:$0xff]
        %v4452 = vld [vmem:[%s4258 + $0x608] sm:$0xff]
        %v4453 = vld [vmem:[%s4258 + $0x610] sm:$0xff]
        %v4454 = vld [vmem:[%s4258 + $0x618] sm:$0xff]
        %v4455 = vld [vmem:[%s4258 + $0x620] sm:$0xff]
        %v4456 = vld [vmem:[%s4258 + $0x628] sm:$0xff]
        %v4457 = vld [vmem:[%s4258 + $0x630] sm:$0xff]
        %v4458 = vld [vmem:[%s4258 + $0x638] sm:$0xff]
        %v4459 = vld [vmem:[%s4258 + $0x640] sm:$0xff]
        %v4460 = vld [vmem:[%s4258 + $0x648] sm:$0xff]
        %v4461 = vld [vmem:[%s4258 + $0x650] sm:$0xff]
        %v4462 = vld [vmem:[%s4258 + $0x658] sm:$0xff]
        %v4463 = vld [vmem:[%s4258 + $0x660] sm:$0xff]
        %v4464 = vld [vmem:[%s4258 + $0x668] sm:$0xff]
        %v4465 = vld [vmem:[%s4258 + $0x670] sm:$0xff]
        %v4466 = vld [vmem:[%s4258 + $0x678] sm:$0xff]
        %v4467 = vld [vmem:[%s4258 + $0x680] sm:$0xff]
        %v4468 = vld [vmem:[%s4258 + $0x688] sm:$0xff]
        %v4469 = vld [vmem:[%s4258 + $0x690] sm:$0xff]
        %v4470 = vld [vmem:[%s4258 + $0x698] sm:$0xff]
        %v4471 = vld [vmem:[%s4258 + $0x6a0] sm:$0xff]
        %v4472 = vld [vmem:[%s4258 + $0x6a8] sm:$0xff]
        %v4473 = vld [vmem:[%s4258 + $0x6b0] sm:$0xff]
        %v4474 = vld [vmem:[%s4258 + $0x6b8] sm:$0xff]
        %v4475 = vld [vmem:[%s4258 + $0x6c0] sm:$0xff]
        %v4476 = vld [vmem:[%s4258 + $0x6c8] sm:$0xff]
        %v4477 = vld [vmem:[%s4258 + $0x6d0] sm:$0xff]
        %v4478 = vld [vmem:[%s4258 + $0x6d8] sm:$0xff]
        %v4479 = vld [vmem:[%s4258 + $0x6e0] sm:$0xff]
        %v4480 = vld [vmem:[%s4258 + $0x6e8] sm:$0xff]
        %v4481 = vld [vmem:[%s4258 + $0x6f0] sm:$0xff]
        %v4482 = vld [vmem:[%s4258 + $0x6f8] sm:$0xff]
        %v4483 = vld [vmem:[%s4258 + $0x700] sm:$0xff]
        %v4484 = vld [vmem:[%s4258 + $0x708] sm:$0xff]
        %v4485 = vld [vmem:[%s4258 + $0x710] sm:$0xff]
        %v4486 = vld [vmem:[%s4258 + $0x718] sm:$0xff]
        %v4487 = vld [vmem:[%s4258 + $0x720] sm:$0xff]
        %v4488 = vld [vmem:[%s4258 + $0x728] sm:$0xff]
        %v4489 = vld [vmem:[%s4258 + $0x730] sm:$0xff]
        %v4490 = vld [vmem:[%s4258 + $0x738] sm:$0xff]
        %v4491 = vld [vmem:[%s4258 + $0x740] sm:$0xff]
        %v4492 = vld [vmem:[%s4258 + $0x748] sm:$0xff]
        %v4493 = vld [vmem:[%s4258 + $0x750] sm:$0xff]
        %v4494 = vld [vmem:[%s4258 + $0x758] sm:$0xff]
        %v4495 = vld [vmem:[%s4258 + $0x760] sm:$0xff]
        %v4496 = vld [vmem:[%s4258 + $0x768] sm:$0xff]
        %v4497 = vld [vmem:[%s4258 + $0x770] sm:$0xff]
        %v4498 = vld [vmem:[%s4258 + $0x778] sm:$0xff]
        %v4499 = vld [vmem:[%s4258 + $0x780] sm:$0xff]
        %v4500 = vld [vmem:[%s4258 + $0x788] sm:$0xff]
        %v4501 = vld [vmem:[%s4258 + $0x790] sm:$0xff]
        %v4502 = vld [vmem:[%s4258 + $0x798] sm:$0xff]
        %v4503 = vld [vmem:[%s4258 + $0x7a0] sm:$0xff]
        %v4504 = vld [vmem:[%s4258 + $0x7a8] sm:$0xff]
        %v4505 = vld [vmem:[%s4258 + $0x7b0] sm:$0xff]
        %v4506 = vld [vmem:[%s4258 + $0x7b8] sm:$0xff]
        %v4507 = vld [vmem:[%s4258 + $0x7c0] sm:$0xff]
        %v4508 = vld [vmem:[%s4258 + $0x7c8] sm:$0xff]
        %v4509 = vld [vmem:[%s4258 + $0x7d0] sm:$0xff]
        %v4510 = vld [vmem:[%s4258 + $0x7d8] sm:$0xff]
        %v4511 = vld [vmem:[%s4258 + $0x7e0] sm:$0xff]
        %v4512 = vld [vmem:[%s4258 + $0x7e8] sm:$0xff]
        %v4513 = vld [vmem:[%s4258 + $0x7f0] sm:$0xff]
        %v4514 = vld [vmem:[%s4258 + $0x7f8] sm:$0xff]
        %v4519 = vunpack.c.l.b16 %v4254
        %v4520 = vunpack.c.h.b16 %v4254
        %v4521 = vunpack.c.l.b16 %v4255
        %v4522 = vunpack.c.h.b16 %v4255
        %v4523 = vunpack.c.l.b16 %v4256
        %v4524 = vunpack.c.h.b16 %v4256
        %v4525 = vunpack.c.l.b16 %v4257
        %v4526 = vunpack.c.h.b16 %v4257
        %v4527 = vpack.c.b16 %v4519, %v4519
        %v4528 = vpack.c.b16 %v4520, %v4520
        %v4529 = vpack.c.b16 %v4521, %v4521
        %v4530 = vpack.c.b16 %v4522, %v4522
        %v4531 = vpack.c.b16 %v4523, %v4523
        %v4532 = vpack.c.b16 %v4524, %v4524
        %v4533 = vpack.c.b16 %v4525, %v4525
        %v4534 = vpack.c.b16 %v4526, %v4526
        %v4536 = vshrl.u32 %v4527, 16
        %v4538 = vrot.slane %v4536, 1
        %v4540 = vshrl.u32 %v4528, 16
        %v4542 = vrot.slane %v4540, 1
        %v4544 = vshrl.u32 %v4529, 16
        %v4546 = vrot.slane %v4544, 1
        %v4548 = vshrl.u32 %v4530, 16
        %v4550 = vrot.slane %v4548, 1
        %v4552 = vshrl.u32 %v4531, 16
        %v4554 = vrot.slane %v4552, 1
        %v4556 = vshrl.u32 %v4532, 16
        %v4558 = vrot.slane %v4556, 1
        %v4560 = vshrl.u32 %v4533, 16
        %v4562 = vrot.slane %v4560, 1
        %v4564 = vshrl.u32 %v4534, 16
        %v4566 = vrot.slane %v4564, 1
        %v4831 = vunpack.c.l.b16 %v4259
        %v4832 = vunpack.c.h.b16 %v4259
        %v4833 = vunpack.c.l.b16 %v4260
        %v4834 = vunpack.c.h.b16 %v4260
        %v4835 = vunpack.c.l.b16 %v4261
        %v4836 = vunpack.c.h.b16 %v4261
        %v4837 = vunpack.c.l.b16 %v4262
        %v4838 = vunpack.c.h.b16 %v4262
        %v4839 = vunpack.c.l.b16 %v4263
        %v4840 = vunpack.c.h.b16 %v4263
        %v4841 = vunpack.c.l.b16 %v4264
        %v4842 = vunpack.c.h.b16 %v4264
        %v4843 = vunpack.c.l.b16 %v4265
        %v4844 = vunpack.c.h.b16 %v4265
        %v4845 = vunpack.c.l.b16 %v4266
        %v4846 = vunpack.c.h.b16 %v4266
        %v4847 = vunpack.c.l.b16 %v4267
        %v4848 = vunpack.c.h.b16 %v4267
        %v4849 = vunpack.c.l.b16 %v4268
        %v4850 = vunpack.c.h.b16 %v4268
        %v4851 = vunpack.c.l.b16 %v4269
        %v4852 = vunpack.c.h.b16 %v4269
        %v4853 = vunpack.c.l.b16 %v4270
        %v4854 = vunpack.c.h.b16 %v4270
        %v4855 = vunpack.c.l.b16 %v4271
        %v4856 = vunpack.c.h.b16 %v4271
        %v4857 = vunpack.c.l.b16 %v4272
        %v4858 = vunpack.c.h.b16 %v4272
        %v4859 = vunpack.c.l.b16 %v4273
        %v4860 = vunpack.c.h.b16 %v4273
        %v4861 = vunpack.c.l.b16 %v4274
        %v4862 = vunpack.c.h.b16 %v4274
        %v4863 = vunpack.c.l.b16 %v4275
        %v4864 = vunpack.c.h.b16 %v4275
        %v4865 = vunpack.c.l.b16 %v4276
        %v4866 = vunpack.c.h.b16 %v4276
        %v4867 = vunpack.c.l.b16 %v4277
        %v4868 = vunpack.c.h.b16 %v4277
        %v4869 = vunpack.c.l.b16 %v4278
        %v4870 = vunpack.c.h.b16 %v4278
        %v4871 = vunpack.c.l.b16 %v4279
        %v4872 = vunpack.c.h.b16 %v4279
        %v4873 = vunpack.c.l.b16 %v4280
        %v4874 = vunpack.c.h.b16 %v4280
        %v4875 = vunpack.c.l.b16 %v4281
        %v4876 = vunpack.c.h.b16 %v4281
        %v4877 = vunpack.c.l.b16 %v4282
        %v4878 = vunpack.c.h.b16 %v4282
        %v4879 = vunpack.c.l.b16 %v4283
        %v4880 = vunpack.c.h.b16 %v4283
        %v4881 = vunpack.c.l.b16 %v4284
        %v4882 = vunpack.c.h.b16 %v4284
        %v4883 = vunpack.c.l.b16 %v4285
        %v4884 = vunpack.c.h.b16 %v4285
        %v4885 = vunpack.c.l.b16 %v4286
        %v4886 = vunpack.c.h.b16 %v4286
        %v4887 = vunpack.c.l.b16 %v4287
        %v4888 = vunpack.c.h.b16 %v4287
        %v4889 = vunpack.c.l.b16 %v4288
        %v4890 = vunpack.c.h.b16 %v4288
        %v4891 = vunpack.c.l.b16 %v4289
        %v4892 = vunpack.c.h.b16 %v4289
        %v4893 = vunpack.c.l.b16 %v4290
        %v4894 = vunpack.c.h.b16 %v4290
        %v4895 = vunpack.c.l.b16 %v4291
        %v4896 = vunpack.c.h.b16 %v4291
        %v4897 = vunpack.c.l.b16 %v4292
        %v4898 = vunpack.c.h.b16 %v4292
        %v4899 = vunpack.c.l.b16 %v4293
        %v4900 = vunpack.c.h.b16 %v4293
        %v4901 = vunpack.c.l.b16 %v4294
        %v4902 = vunpack.c.h.b16 %v4294
        %v4903 = vunpack.c.l.b16 %v4295
        %v4904 = vunpack.c.h.b16 %v4295
        %v4905 = vunpack.c.l.b16 %v4296
        %v4906 = vunpack.c.h.b16 %v4296
        %v4907 = vunpack.c.l.b16 %v4297
        %v4908 = vunpack.c.h.b16 %v4297
        %v4909 = vunpack.c.l.b16 %v4298
        %v4910 = vunpack.c.h.b16 %v4298
        %v4911 = vunpack.c.l.b16 %v4299
        %v4912 = vunpack.c.h.b16 %v4299
        %v4913 = vunpack.c.l.b16 %v4300
        %v4914 = vunpack.c.h.b16 %v4300
        %v4915 = vunpack.c.l.b16 %v4301
        %v4916 = vunpack.c.h.b16 %v4301
        %v4917 = vunpack.c.l.b16 %v4302
        %v4918 = vunpack.c.h.b16 %v4302
        %v4919 = vunpack.c.l.b16 %v4303
        %v4920 = vunpack.c.h.b16 %v4303
        %v4921 = vunpack.c.l.b16 %v4304
        %v4922 = vunpack.c.h.b16 %v4304
        %v4923 = vunpack.c.l.b16 %v4305
        %v4924 = vunpack.c.h.b16 %v4305
        %v4925 = vunpack.c.l.b16 %v4306
        %v4926 = vunpack.c.h.b16 %v4306
        %v4927 = vunpack.c.l.b16 %v4307
        %v4928 = vunpack.c.h.b16 %v4307
        %v4929 = vunpack.c.l.b16 %v4308
        %v4930 = vunpack.c.h.b16 %v4308
        %v4931 = vunpack.c.l.b16 %v4309
        %v4932 = vunpack.c.h.b16 %v4309
        %v4933 = vunpack.c.l.b16 %v4310
        %v4934 = vunpack.c.h.b16 %v4310
        %v4935 = vunpack.c.l.b16 %v4311
        %v4936 = vunpack.c.h.b16 %v4311
        %v4937 = vunpack.c.l.b16 %v4312
        %v4938 = vunpack.c.h.b16 %v4312
        %v4939 = vunpack.c.l.b16 %v4313
        %v4940 = vunpack.c.h.b16 %v4313
        %v4941 = vunpack.c.l.b16 %v4314
        %v4942 = vunpack.c.h.b16 %v4314
        %v4943 = vunpack.c.l.b16 %v4315
        %v4944 = vunpack.c.h.b16 %v4315
        %v4945 = vunpack.c.l.b16 %v4316
        %v4946 = vunpack.c.h.b16 %v4316
        %v4947 = vunpack.c.l.b16 %v4317
        %v4948 = vunpack.c.h.b16 %v4317
        %v4949 = vunpack.c.l.b16 %v4318
        %v4950 = vunpack.c.h.b16 %v4318
        %v4951 = vunpack.c.l.b16 %v4319
        %v4952 = vunpack.c.h.b16 %v4319
        %v4953 = vunpack.c.l.b16 %v4320
        %v4954 = vunpack.c.h.b16 %v4320
        %v4955 = vunpack.c.l.b16 %v4321
        %v4956 = vunpack.c.h.b16 %v4321
        %v4957 = vunpack.c.l.b16 %v4322
        %v4958 = vunpack.c.h.b16 %v4322
        %v4959 = vunpack.c.l.b16 %v4323
        %v4960 = vunpack.c.h.b16 %v4323
        %v4961 = vunpack.c.l.b16 %v4324
        %v4962 = vunpack.c.h.b16 %v4324
        %v4963 = vunpack.c.l.b16 %v4325
        %v4964 = vunpack.c.h.b16 %v4325
        %v4965 = vunpack.c.l.b16 %v4326
        %v4966 = vunpack.c.h.b16 %v4326
        %v4967 = vunpack.c.l.b16 %v4327
        %v4968 = vunpack.c.h.b16 %v4327
        %v4969 = vunpack.c.l.b16 %v4328
        %v4970 = vunpack.c.h.b16 %v4328
        %v4971 = vunpack.c.l.b16 %v4329
        %v4972 = vunpack.c.h.b16 %v4329
        %v4973 = vunpack.c.l.b16 %v4330
        %v4974 = vunpack.c.h.b16 %v4330
        %v4975 = vunpack.c.l.b16 %v4331
        %v4976 = vunpack.c.h.b16 %v4331
        %v4977 = vunpack.c.l.b16 %v4332
        %v4978 = vunpack.c.h.b16 %v4332
        %v4979 = vunpack.c.l.b16 %v4333
        %v4980 = vunpack.c.h.b16 %v4333
        %v4981 = vunpack.c.l.b16 %v4334
        %v4982 = vunpack.c.h.b16 %v4334
        %v4983 = vunpack.c.l.b16 %v4335
        %v4984 = vunpack.c.h.b16 %v4335
        %v4985 = vunpack.c.l.b16 %v4336
        %v4986 = vunpack.c.h.b16 %v4336
        %v4987 = vunpack.c.l.b16 %v4337
        %v4988 = vunpack.c.h.b16 %v4337
        %v4989 = vunpack.c.l.b16 %v4338
        %v4990 = vunpack.c.h.b16 %v4338
        %v4991 = vunpack.c.l.b16 %v4339
        %v4992 = vunpack.c.h.b16 %v4339
        %v4993 = vunpack.c.l.b16 %v4340
        %v4994 = vunpack.c.h.b16 %v4340
        %v4995 = vunpack.c.l.b16 %v4341
        %v4996 = vunpack.c.h.b16 %v4341
        %v4997 = vunpack.c.l.b16 %v4342
        %v4998 = vunpack.c.h.b16 %v4342
        %v4999 = vunpack.c.l.b16 %v4343
        %v5000 = vunpack.c.h.b16 %v4343
        %v5001 = vunpack.c.l.b16 %v4344
        %v5002 = vunpack.c.h.b16 %v4344
        %v5003 = vunpack.c.l.b16 %v4345
        %v5004 = vunpack.c.h.b16 %v4345
        %v5005 = vunpack.c.l.b16 %v4346
        %v5006 = vunpack.c.h.b16 %v4346
        %v5007 = vunpack.c.l.b16 %v4347
        %v5008 = vunpack.c.h.b16 %v4347
        %v5009 = vunpack.c.l.b16 %v4348
        %v5010 = vunpack.c.h.b16 %v4348
        %v5011 = vunpack.c.l.b16 %v4349
        %v5012 = vunpack.c.h.b16 %v4349
        %v5013 = vunpack.c.l.b16 %v4350
        %v5014 = vunpack.c.h.b16 %v4350
        %v5015 = vunpack.c.l.b16 %v4351
        %v5016 = vunpack.c.h.b16 %v4351
        %v5017 = vunpack.c.l.b16 %v4352
        %v5018 = vunpack.c.h.b16 %v4352
        %v5019 = vunpack.c.l.b16 %v4353
        %v5020 = vunpack.c.h.b16 %v4353
        %v5021 = vunpack.c.l.b16 %v4354
        %v5022 = vunpack.c.h.b16 %v4354
        %v5023 = vunpack.c.l.b16 %v4355
        %v5024 = vunpack.c.h.b16 %v4355
        %v5025 = vunpack.c.l.b16 %v4356
        %v5026 = vunpack.c.h.b16 %v4356
        %v5027 = vunpack.c.l.b16 %v4357
        %v5028 = vunpack.c.h.b16 %v4357
        %v5029 = vunpack.c.l.b16 %v4358
        %v5030 = vunpack.c.h.b16 %v4358
        %v5031 = vunpack.c.l.b16 %v4359
        %v5032 = vunpack.c.h.b16 %v4359
        %v5033 = vunpack.c.l.b16 %v4360
        %v5034 = vunpack.c.h.b16 %v4360
        %v5035 = vunpack.c.l.b16 %v4361
        %v5036 = vunpack.c.h.b16 %v4361
        %v5037 = vunpack.c.l.b16 %v4362
        %v5038 = vunpack.c.h.b16 %v4362
        %v5039 = vunpack.c.l.b16 %v4363
        %v5040 = vunpack.c.h.b16 %v4363
        %v5041 = vunpack.c.l.b16 %v4364
        %v5042 = vunpack.c.h.b16 %v4364
        %v5043 = vunpack.c.l.b16 %v4365
        %v5044 = vunpack.c.h.b16 %v4365
        %v5045 = vunpack.c.l.b16 %v4366
        %v5046 = vunpack.c.h.b16 %v4366
        %v5047 = vunpack.c.l.b16 %v4367
        %v5048 = vunpack.c.h.b16 %v4367
        %v5049 = vunpack.c.l.b16 %v4368
        %v5050 = vunpack.c.h.b16 %v4368
        %v5051 = vunpack.c.l.b16 %v4369
        %v5052 = vunpack.c.h.b16 %v4369
        %v5053 = vunpack.c.l.b16 %v4370
        %v5054 = vunpack.c.h.b16 %v4370
        %v5055 = vunpack.c.l.b16 %v4371
        %v5056 = vunpack.c.h.b16 %v4371
        %v5057 = vunpack.c.l.b16 %v4372
        %v5058 = vunpack.c.h.b16 %v4372
        %v5059 = vunpack.c.l.b16 %v4373
        %v5060 = vunpack.c.h.b16 %v4373
        %v5061 = vunpack.c.l.b16 %v4374
        %v5062 = vunpack.c.h.b16 %v4374
        %v5063 = vunpack.c.l.b16 %v4375
        %v5064 = vunpack.c.h.b16 %v4375
        %v5065 = vunpack.c.l.b16 %v4376
        %v5066 = vunpack.c.h.b16 %v4376
        %v5067 = vunpack.c.l.b16 %v4377
        %v5068 = vunpack.c.h.b16 %v4377
        %v5069 = vunpack.c.l.b16 %v4378
        %v5070 = vunpack.c.h.b16 %v4378
        %v5071 = vunpack.c.l.b16 %v4379
        %v5072 = vunpack.c.h.b16 %v4379
        %v5073 = vunpack.c.l.b16 %v4380
        %v5074 = vunpack.c.h.b16 %v4380
        %v5075 = vunpack.c.l.b16 %v4381
        %v5076 = vunpack.c.h.b16 %v4381
        %v5077 = vunpack.c.l.b16 %v4382
        %v5078 = vunpack.c.h.b16 %v4382
        %v5079 = vunpack.c.l.b16 %v4383
        %v5080 = vunpack.c.h.b16 %v4383
        %v5081 = vunpack.c.l.b16 %v4384
        %v5082 = vunpack.c.h.b16 %v4384
        %v5083 = vunpack.c.l.b16 %v4385
        %v5084 = vunpack.c.h.b16 %v4385
        %v5085 = vunpack.c.l.b16 %v4386
        %v5086 = vunpack.c.h.b16 %v4386
        %v5087 = vunpack.c.l.b16 %v4387
        %v5088 = vunpack.c.h.b16 %v4387
        %v5089 = vunpack.c.l.b16 %v4388
        %v5090 = vunpack.c.h.b16 %v4388
        %v5091 = vunpack.c.l.b16 %v4389
        %v5092 = vunpack.c.h.b16 %v4389
        %v5093 = vunpack.c.l.b16 %v4390
        %v5094 = vunpack.c.h.b16 %v4390
        %v5095 = vunpack.c.l.b16 %v4391
        %v5096 = vunpack.c.h.b16 %v4391
        %v5097 = vunpack.c.l.b16 %v4392
        %v5098 = vunpack.c.h.b16 %v4392
        %v5099 = vunpack.c.l.b16 %v4393
        %v5100 = vunpack.c.h.b16 %v4393
        %v5101 = vunpack.c.l.b16 %v4394
        %v5102 = vunpack.c.h.b16 %v4394
        %v5103 = vunpack.c.l.b16 %v4395
        %v5104 = vunpack.c.h.b16 %v4395
        %v5105 = vunpack.c.l.b16 %v4396
        %v5106 = vunpack.c.h.b16 %v4396
        %v5107 = vunpack.c.l.b16 %v4397
        %v5108 = vunpack.c.h.b16 %v4397
        %v5109 = vunpack.c.l.b16 %v4398
        %v5110 = vunpack.c.h.b16 %v4398
        %v5111 = vunpack.c.l.b16 %v4399
        %v5112 = vunpack.c.h.b16 %v4399
        %v5113 = vunpack.c.l.b16 %v4400
        %v5114 = vunpack.c.h.b16 %v4400
        %v5115 = vunpack.c.l.b16 %v4401
        %v5116 = vunpack.c.h.b16 %v4401
        %v5117 = vunpack.c.l.b16 %v4402
        %v5118 = vunpack.c.h.b16 %v4402
        %v5119 = vunpack.c.l.b16 %v4403
        %v5120 = vunpack.c.h.b16 %v4403
        %v5121 = vunpack.c.l.b16 %v4404
        %v5122 = vunpack.c.h.b16 %v4404
        %v5123 = vunpack.c.l.b16 %v4405
        %v5124 = vunpack.c.h.b16 %v4405
        %v5125 = vunpack.c.l.b16 %v4406
        %v5126 = vunpack.c.h.b16 %v4406
        %v5127 = vunpack.c.l.b16 %v4407
        %v5128 = vunpack.c.h.b16 %v4407
        %v5129 = vunpack.c.l.b16 %v4408
        %v5130 = vunpack.c.h.b16 %v4408
        %v5131 = vunpack.c.l.b16 %v4409
        %v5132 = vunpack.c.h.b16 %v4409
        %v5133 = vunpack.c.l.b16 %v4410
        %v5134 = vunpack.c.h.b16 %v4410
        %v5135 = vunpack.c.l.b16 %v4411
        %v5136 = vunpack.c.h.b16 %v4411
        %v5137 = vunpack.c.l.b16 %v4412
        %v5138 = vunpack.c.h.b16 %v4412
        %v5139 = vunpack.c.l.b16 %v4413
        %v5140 = vunpack.c.h.b16 %v4413
        %v5141 = vunpack.c.l.b16 %v4414
        %v5142 = vunpack.c.h.b16 %v4414
        %v5143 = vunpack.c.l.b16 %v4415
        %v5144 = vunpack.c.h.b16 %v4415
        %v5145 = vunpack.c.l.b16 %v4416
        %v5146 = vunpack.c.h.b16 %v4416
        %v5147 = vunpack.c.l.b16 %v4417
        %v5148 = vunpack.c.h.b16 %v4417
        %v5149 = vunpack.c.l.b16 %v4418
        %v5150 = vunpack.c.h.b16 %v4418
        %v5151 = vunpack.c.l.b16 %v4419
        %v5152 = vunpack.c.h.b16 %v4419
        %v5153 = vunpack.c.l.b16 %v4420
        %v5154 = vunpack.c.h.b16 %v4420
        %v5155 = vunpack.c.l.b16 %v4421
        %v5156 = vunpack.c.h.b16 %v4421
        %v5157 = vunpack.c.l.b16 %v4422
        %v5158 = vunpack.c.h.b16 %v4422
        %v5159 = vunpack.c.l.b16 %v4423
        %v5160 = vunpack.c.h.b16 %v4423
        %v5161 = vunpack.c.l.b16 %v4424
        %v5162 = vunpack.c.h.b16 %v4424
        %v5163 = vunpack.c.l.b16 %v4425
        %v5164 = vunpack.c.h.b16 %v4425
        %v5165 = vunpack.c.l.b16 %v4426
        %v5166 = vunpack.c.h.b16 %v4426
        %v5167 = vunpack.c.l.b16 %v4427
        %v5168 = vunpack.c.h.b16 %v4427
        %v5169 = vunpack.c.l.b16 %v4428
        %v5170 = vunpack.c.h.b16 %v4428
        %v5171 = vunpack.c.l.b16 %v4429
        %v5172 = vunpack.c.h.b16 %v4429
        %v5173 = vunpack.c.l.b16 %v4430
        %v5174 = vunpack.c.h.b16 %v4430
        %v5175 = vunpack.c.l.b16 %v4431
        %v5176 = vunpack.c.h.b16 %v4431
        %v5177 = vunpack.c.l.b16 %v4432
        %v5178 = vunpack.c.h.b16 %v4432
        %v5179 = vunpack.c.l.b16 %v4433
        %v5180 = vunpack.c.h.b16 %v4433
        %v5181 = vunpack.c.l.b16 %v4434
        %v5182 = vunpack.c.h.b16 %v4434
        %v5183 = vunpack.c.l.b16 %v4435
        %v5184 = vunpack.c.h.b16 %v4435
        %v5185 = vunpack.c.l.b16 %v4436
        %v5186 = vunpack.c.h.b16 %v4436
        %v5187 = vunpack.c.l.b16 %v4437
        %v5188 = vunpack.c.h.b16 %v4437
        %v5189 = vunpack.c.l.b16 %v4438
        %v5190 = vunpack.c.h.b16 %v4438
        %v5191 = vunpack.c.l.b16 %v4439
        %v5192 = vunpack.c.h.b16 %v4439
        %v5193 = vunpack.c.l.b16 %v4440
        %v5194 = vunpack.c.h.b16 %v4440
        %v5195 = vunpack.c.l.b16 %v4441
        %v5196 = vunpack.c.h.b16 %v4441
        %v5197 = vunpack.c.l.b16 %v4442
        %v5198 = vunpack.c.h.b16 %v4442
        %v5199 = vunpack.c.l.b16 %v4443
        %v5200 = vunpack.c.h.b16 %v4443
        %v5201 = vunpack.c.l.b16 %v4444
        %v5202 = vunpack.c.h.b16 %v4444
        %v5203 = vunpack.c.l.b16 %v4445
        %v5204 = vunpack.c.h.b16 %v4445
        %v5205 = vunpack.c.l.b16 %v4446
        %v5206 = vunpack.c.h.b16 %v4446
        %v5207 = vunpack.c.l.b16 %v4447
        %v5208 = vunpack.c.h.b16 %v4447
        %v5209 = vunpack.c.l.b16 %v4448
        %v5210 = vunpack.c.h.b16 %v4448
        %v5211 = vunpack.c.l.b16 %v4449
        %v5212 = vunpack.c.h.b16 %v4449
        %v5213 = vunpack.c.l.b16 %v4450
        %v5214 = vunpack.c.h.b16 %v4450
        %v5215 = vunpack.c.l.b16 %v4451
        %v5216 = vunpack.c.h.b16 %v4451
        %v5217 = vunpack.c.l.b16 %v4452
        %v5218 = vunpack.c.h.b16 %v4452
        %v5219 = vunpack.c.l.b16 %v4453
        %v5220 = vunpack.c.h.b16 %v4453
        %v5221 = vunpack.c.l.b16 %v4454
        %v5222 = vunpack.c.h.b16 %v4454
        %v5223 = vunpack.c.l.b16 %v4455
        %v5224 = vunpack.c.h.b16 %v4455
        %v5225 = vunpack.c.l.b16 %v4456
        %v5226 = vunpack.c.h.b16 %v4456
        %v5227 = vunpack.c.l.b16 %v4457
        %v5228 = vunpack.c.h.b16 %v4457
        %v5229 = vunpack.c.l.b16 %v4458
        %v5230 = vunpack.c.h.b16 %v4458
        %v5231 = vunpack.c.l.b16 %v4459
        %v5232 = vunpack.c.h.b16 %v4459
        %v5233 = vunpack.c.l.b16 %v4460
        %v5234 = vunpack.c.h.b16 %v4460
        %v5235 = vunpack.c.l.b16 %v4461
        %v5236 = vunpack.c.h.b16 %v4461
        %v5237 = vunpack.c.l.b16 %v4462
        %v5238 = vunpack.c.h.b16 %v4462
        %v5239 = vunpack.c.l.b16 %v4463
        %v5240 = vunpack.c.h.b16 %v4463
        %v5241 = vunpack.c.l.b16 %v4464
        %v5242 = vunpack.c.h.b16 %v4464
        %v5243 = vunpack.c.l.b16 %v4465
        %v5244 = vunpack.c.h.b16 %v4465
        %v5245 = vunpack.c.l.b16 %v4466
        %v5246 = vunpack.c.h.b16 %v4466
        %v5247 = vunpack.c.l.b16 %v4467
        %v5248 = vunpack.c.h.b16 %v4467
        %v5249 = vunpack.c.l.b16 %v4468
        %v5250 = vunpack.c.h.b16 %v4468
        %v5251 = vunpack.c.l.b16 %v4469
        %v5252 = vunpack.c.h.b16 %v4469
        %v5253 = vunpack.c.l.b16 %v4470
        %v5254 = vunpack.c.h.b16 %v4470
        %v5255 = vunpack.c.l.b16 %v4471
        %v5256 = vunpack.c.h.b16 %v4471
        %v5257 = vunpack.c.l.b16 %v4472
        %v5258 = vunpack.c.h.b16 %v4472
        %v5259 = vunpack.c.l.b16 %v4473
        %v5260 = vunpack.c.h.b16 %v4473
        %v5261 = vunpack.c.l.b16 %v4474
        %v5262 = vunpack.c.h.b16 %v4474
        %v5263 = vunpack.c.l.b16 %v4475
        %v5264 = vunpack.c.h.b16 %v4475
        %v5265 = vunpack.c.l.b16 %v4476
        %v5266 = vunpack.c.h.b16 %v4476
        %v5267 = vunpack.c.l.b16 %v4477
        %v5268 = vunpack.c.h.b16 %v4477
        %v5269 = vunpack.c.l.b16 %v4478
        %v5270 = vunpack.c.h.b16 %v4478
        %v5271 = vunpack.c.l.b16 %v4479
        %v5272 = vunpack.c.h.b16 %v4479
        %v5273 = vunpack.c.l.b16 %v4480
        %v5274 = vunpack.c.h.b16 %v4480
        %v5275 = vunpack.c.l.b16 %v4481
        %v5276 = vunpack.c.h.b16 %v4481
        %v5277 = vunpack.c.l.b16 %v4482
        %v5278 = vunpack.c.h.b16 %v4482
        %v5279 = vunpack.c.l.b16 %v4483
        %v5280 = vunpack.c.h.b16 %v4483
        %v5281 = vunpack.c.l.b16 %v4484
        %v5282 = vunpack.c.h.b16 %v4484
        %v5283 = vunpack.c.l.b16 %v4485
        %v5284 = vunpack.c.h.b16 %v4485
        %v5285 = vunpack.c.l.b16 %v4486
        %v5286 = vunpack.c.h.b16 %v4486
        %v5287 = vunpack.c.l.b16 %v4487
        %v5288 = vunpack.c.h.b16 %v4487
        %v5289 = vunpack.c.l.b16 %v4488
        %v5290 = vunpack.c.h.b16 %v4488
        %v5291 = vunpack.c.l.b16 %v4489
        %v5292 = vunpack.c.h.b16 %v4489
        %v5293 = vunpack.c.l.b16 %v4490
        %v5294 = vunpack.c.h.b16 %v4490
        %v5295 = vunpack.c.l.b16 %v4491
        %v5296 = vunpack.c.h.b16 %v4491
        %v5297 = vunpack.c.l.b16 %v4492
        %v5298 = vunpack.c.h.b16 %v4492
        %v5299 = vunpack.c.l.b16 %v4493
        %v5300 = vunpack.c.h.b16 %v4493
        %v5301 = vunpack.c.l.b16 %v4494
        %v5302 = vunpack.c.h.b16 %v4494
        %v5303 = vunpack.c.l.b16 %v4495
        %v5304 = vunpack.c.h.b16 %v4495
        %v5305 = vunpack.c.l.b16 %v4496
        %v5306 = vunpack.c.h.b16 %v4496
        %v5307 = vunpack.c.l.b16 %v4497
        %v5308 = vunpack.c.h.b16 %v4497
        %v5309 = vunpack.c.l.b16 %v4498
        %v5310 = vunpack.c.h.b16 %v4498
        %v5311 = vunpack.c.l.b16 %v4499
        %v5312 = vunpack.c.h.b16 %v4499
        %v5313 = vunpack.c.l.b16 %v4500
        %v5314 = vunpack.c.h.b16 %v4500
        %v5315 = vunpack.c.l.b16 %v4501
        %v5316 = vunpack.c.h.b16 %v4501
        %v5317 = vunpack.c.l.b16 %v4502
        %v5318 = vunpack.c.h.b16 %v4502
        %v5319 = vunpack.c.l.b16 %v4503
        %v5320 = vunpack.c.h.b16 %v4503
        %v5321 = vunpack.c.l.b16 %v4504
        %v5322 = vunpack.c.h.b16 %v4504
        %v5323 = vunpack.c.l.b16 %v4505
        %v5324 = vunpack.c.h.b16 %v4505
        %v5325 = vunpack.c.l.b16 %v4506
        %v5326 = vunpack.c.h.b16 %v4506
        %v5327 = vunpack.c.l.b16 %v4507
        %v5328 = vunpack.c.h.b16 %v4507
        %v5329 = vunpack.c.l.b16 %v4508
        %v5330 = vunpack.c.h.b16 %v4508
        %v5331 = vunpack.c.l.b16 %v4509
        %v5332 = vunpack.c.h.b16 %v4509
        %v5333 = vunpack.c.l.b16 %v4510
        %v5334 = vunpack.c.h.b16 %v4510
        %v5335 = vunpack.c.l.b16 %v4511
        %v5336 = vunpack.c.h.b16 %v4511
        %v5337 = vunpack.c.l.b16 %v4512
        %v5338 = vunpack.c.h.b16 %v4512
        %v5339 = vunpack.c.l.b16 %v4513
        %v5340 = vunpack.c.h.b16 %v4513
        %v5341 = vunpack.c.l.b16 %v4514
        %v5342 = vunpack.c.h.b16 %v4514
        %v5343 = vpack.c.b16 %v4835, %v4831
        %v5344 = vpack.c.b16 %v4836, %v4832
        %v5345 = vpack.c.b16 %v4837, %v4833
        %v5346 = vpack.c.b16 %v4838, %v4834
        %v5347 = vpack.c.b16 %v4843, %v4839
        %v5348 = vpack.c.b16 %v4844, %v4840
        %v5349 = vpack.c.b16 %v4845, %v4841
        %v5350 = vpack.c.b16 %v4846, %v4842
        %v5351 = vpack.c.b16 %v4851, %v4847
        %v5352 = vpack.c.b16 %v4852, %v4848
        %v5353 = vpack.c.b16 %v4853, %v4849
        %v5354 = vpack.c.b16 %v4854, %v4850
        %v5355 = vpack.c.b16 %v4859, %v4855
        %v5356 = vpack.c.b16 %v4860, %v4856
        %v5357 = vpack.c.b16 %v4861, %v4857
        %v5358 = vpack.c.b16 %v4862, %v4858
        %v5359 = vpack.c.b16 %v4867, %v4863
        %v5360 = vpack.c.b16 %v4868, %v4864
        %v5361 = vpack.c.b16 %v4869, %v4865
        %v5362 = vpack.c.b16 %v4870, %v4866
        %v5363 = vpack.c.b16 %v4875, %v4871
        %v5364 = vpack.c.b16 %v4876, %v4872
        %v5365 = vpack.c.b16 %v4877, %v4873
        %v5366 = vpack.c.b16 %v4878, %v4874
        %v5367 = vpack.c.b16 %v4883, %v4879
        %v5368 = vpack.c.b16 %v4884, %v4880
        %v5369 = vpack.c.b16 %v4885, %v4881
        %v5370 = vpack.c.b16 %v4886, %v4882
        %v5371 = vpack.c.b16 %v4891, %v4887
        %v5372 = vpack.c.b16 %v4892, %v4888
        %v5373 = vpack.c.b16 %v4893, %v4889
        %v5374 = vpack.c.b16 %v4894, %v4890
        %v5375 = vpack.c.b16 %v4899, %v4895
        %v5376 = vpack.c.b16 %v4900, %v4896
        %v5377 = vpack.c.b16 %v4901, %v4897
        %v5378 = vpack.c.b16 %v4902, %v4898
        %v5379 = vpack.c.b16 %v4907, %v4903
        %v5380 = vpack.c.b16 %v4908, %v4904
        %v5381 = vpack.c.b16 %v4909, %v4905
        %v5382 = vpack.c.b16 %v4910, %v4906
        %v5383 = vpack.c.b16 %v4915, %v4911
        %v5384 = vpack.c.b16 %v4916, %v4912
        %v5385 = vpack.c.b16 %v4917, %v4913
        %v5386 = vpack.c.b16 %v4918, %v4914
        %v5387 = vpack.c.b16 %v4923, %v4919
        %v5388 = vpack.c.b16 %v4924, %v4920
        %v5389 = vpack.c.b16 %v4925, %v4921
        %v5390 = vpack.c.b16 %v4926, %v4922
        %v5391 = vpack.c.b16 %v4931, %v4927
        %v5392 = vpack.c.b16 %v4932, %v4928
        %v5393 = vpack.c.b16 %v4933, %v4929
        %v5394 = vpack.c.b16 %v4934, %v4930
        %v5395 = vpack.c.b16 %v4939, %v4935
        %v5396 = vpack.c.b16 %v4940, %v4936
        %v5397 = vpack.c.b16 %v4941, %v4937
        %v5398 = vpack.c.b16 %v4942, %v4938
        %v5399 = vpack.c.b16 %v4947, %v4943
        %v5400 = vpack.c.b16 %v4948, %v4944
        %v5401 = vpack.c.b16 %v4949, %v4945
        %v5402 = vpack.c.b16 %v4950, %v4946
        %v5403 = vpack.c.b16 %v4955, %v4951
        %v5404 = vpack.c.b16 %v4956, %v4952
        %v5405 = vpack.c.b16 %v4957, %v4953
        %v5406 = vpack.c.b16 %v4958, %v4954
        %v5407 = vpack.c.b16 %v4963, %v4959
        %v5408 = vpack.c.b16 %v4964, %v4960
        %v5409 = vpack.c.b16 %v4965, %v4961
        %v5410 = vpack.c.b16 %v4966, %v4962
        %v5411 = vpack.c.b16 %v4971, %v4967
        %v5412 = vpack.c.b16 %v4972, %v4968
        %v5413 = vpack.c.b16 %v4973, %v4969
        %v5414 = vpack.c.b16 %v4974, %v4970
        %v5415 = vpack.c.b16 %v4979, %v4975
        %v5416 = vpack.c.b16 %v4980, %v4976
        %v5417 = vpack.c.b16 %v4981, %v4977
        %v5418 = vpack.c.b16 %v4982, %v4978
        %v5419 = vpack.c.b16 %v4987, %v4983
        %v5420 = vpack.c.b16 %v4988, %v4984
        %v5421 = vpack.c.b16 %v4989, %v4985
        %v5422 = vpack.c.b16 %v4990, %v4986
        %v5423 = vpack.c.b16 %v4995, %v4991
        %v5424 = vpack.c.b16 %v4996, %v4992
        %v5425 = vpack.c.b16 %v4997, %v4993
        %v5426 = vpack.c.b16 %v4998, %v4994
        %v5427 = vpack.c.b16 %v5003, %v4999
        %v5428 = vpack.c.b16 %v5004, %v5000
        %v5429 = vpack.c.b16 %v5005, %v5001
        %v5430 = vpack.c.b16 %v5006, %v5002
        %v5431 = vpack.c.b16 %v5011, %v5007
        %v5432 = vpack.c.b16 %v5012, %v5008
        %v5433 = vpack.c.b16 %v5013, %v5009
        %v5434 = vpack.c.b16 %v5014, %v5010
        %v5435 = vpack.c.b16 %v5019, %v5015
        %v5436 = vpack.c.b16 %v5020, %v5016
        %v5437 = vpack.c.b16 %v5021, %v5017
        %v5438 = vpack.c.b16 %v5022, %v5018
        %v5439 = vpack.c.b16 %v5027, %v5023
        %v5440 = vpack.c.b16 %v5028, %v5024
        %v5441 = vpack.c.b16 %v5029, %v5025
        %v5442 = vpack.c.b16 %v5030, %v5026
        %v5443 = vpack.c.b16 %v5035, %v5031
        %v5444 = vpack.c.b16 %v5036, %v5032
        %v5445 = vpack.c.b16 %v5037, %v5033
        %v5446 = vpack.c.b16 %v5038, %v5034
        %v5447 = vpack.c.b16 %v5043, %v5039
        %v5448 = vpack.c.b16 %v5044, %v5040
        %v5449 = vpack.c.b16 %v5045, %v5041
        %v5450 = vpack.c.b16 %v5046, %v5042
        %v5451 = vpack.c.b16 %v5051, %v5047
        %v5452 = vpack.c.b16 %v5052, %v5048
        %v5453 = vpack.c.b16 %v5053, %v5049
        %v5454 = vpack.c.b16 %v5054, %v5050
        %v5455 = vpack.c.b16 %v5059, %v5055
        %v5456 = vpack.c.b16 %v5060, %v5056
        %v5457 = vpack.c.b16 %v5061, %v5057
        %v5458 = vpack.c.b16 %v5062, %v5058
        %v5459 = vpack.c.b16 %v5067, %v5063
        %v5460 = vpack.c.b16 %v5068, %v5064
        %v5461 = vpack.c.b16 %v5069, %v5065
        %v5462 = vpack.c.b16 %v5070, %v5066
        %v5463 = vpack.c.b16 %v5075, %v5071
        %v5464 = vpack.c.b16 %v5076, %v5072
        %v5465 = vpack.c.b16 %v5077, %v5073
        %v5466 = vpack.c.b16 %v5078, %v5074
        %v5467 = vpack.c.b16 %v5083, %v5079
        %v5468 = vpack.c.b16 %v5084, %v5080
        %v5469 = vpack.c.b16 %v5085, %v5081
        %v5470 = vpack.c.b16 %v5086, %v5082
        %v5471 = vpack.c.b16 %v5091, %v5087
        %v5472 = vpack.c.b16 %v5092, %v5088
        %v5473 = vpack.c.b16 %v5093, %v5089
        %v5474 = vpack.c.b16 %v5094, %v5090
        %v5475 = vpack.c.b16 %v5099, %v5095
        %v5476 = vpack.c.b16 %v5100, %v5096
        %v5477 = vpack.c.b16 %v5101, %v5097
        %v5478 = vpack.c.b16 %v5102, %v5098
        %v5479 = vpack.c.b16 %v5107, %v5103
        %v5480 = vpack.c.b16 %v5108, %v5104
        %v5481 = vpack.c.b16 %v5109, %v5105
        %v5482 = vpack.c.b16 %v5110, %v5106
        %v5483 = vpack.c.b16 %v5115, %v5111
        %v5484 = vpack.c.b16 %v5116, %v5112
        %v5485 = vpack.c.b16 %v5117, %v5113
        %v5486 = vpack.c.b16 %v5118, %v5114
        %v5487 = vpack.c.b16 %v5123, %v5119
        %v5488 = vpack.c.b16 %v5124, %v5120
        %v5489 = vpack.c.b16 %v5125, %v5121
        %v5490 = vpack.c.b16 %v5126, %v5122
        %v5491 = vpack.c.b16 %v5131, %v5127
        %v5492 = vpack.c.b16 %v5132, %v5128
        %v5493 = vpack.c.b16 %v5133, %v5129
        %v5494 = vpack.c.b16 %v5134, %v5130
        %v5495 = vpack.c.b16 %v5139, %v5135
        %v5496 = vpack.c.b16 %v5140, %v5136
        %v5497 = vpack.c.b16 %v5141, %v5137
        %v5498 = vpack.c.b16 %v5142, %v5138
        %v5499 = vpack.c.b16 %v5147, %v5143
        %v5500 = vpack.c.b16 %v5148, %v5144
        %v5501 = vpack.c.b16 %v5149, %v5145
        %v5502 = vpack.c.b16 %v5150, %v5146
        %v5503 = vpack.c.b16 %v5155, %v5151
        %v5504 = vpack.c.b16 %v5156, %v5152
        %v5505 = vpack.c.b16 %v5157, %v5153
        %v5506 = vpack.c.b16 %v5158, %v5154
        %v5507 = vpack.c.b16 %v5163, %v5159
        %v5508 = vpack.c.b16 %v5164, %v5160
        %v5509 = vpack.c.b16 %v5165, %v5161
        %v5510 = vpack.c.b16 %v5166, %v5162
        %v5511 = vpack.c.b16 %v5171, %v5167
        %v5512 = vpack.c.b16 %v5172, %v5168
        %v5513 = vpack.c.b16 %v5173, %v5169
        %v5514 = vpack.c.b16 %v5174, %v5170
        %v5515 = vpack.c.b16 %v5179, %v5175
        %v5516 = vpack.c.b16 %v5180, %v5176
        %v5517 = vpack.c.b16 %v5181, %v5177
        %v5518 = vpack.c.b16 %v5182, %v5178
        %v5519 = vpack.c.b16 %v5187, %v5183
        %v5520 = vpack.c.b16 %v5188, %v5184
        %v5521 = vpack.c.b16 %v5189, %v5185
        %v5522 = vpack.c.b16 %v5190, %v5186
        %v5523 = vpack.c.b16 %v5195, %v5191
        %v5524 = vpack.c.b16 %v5196, %v5192
        %v5525 = vpack.c.b16 %v5197, %v5193
        %v5526 = vpack.c.b16 %v5198, %v5194
        %v5527 = vpack.c.b16 %v5203, %v5199
        %v5528 = vpack.c.b16 %v5204, %v5200
        %v5529 = vpack.c.b16 %v5205, %v5201
        %v5530 = vpack.c.b16 %v5206, %v5202
        %v5531 = vpack.c.b16 %v5211, %v5207
        %v5532 = vpack.c.b16 %v5212, %v5208
        %v5533 = vpack.c.b16 %v5213, %v5209
        %v5534 = vpack.c.b16 %v5214, %v5210
        %v5535 = vpack.c.b16 %v5219, %v5215
        %v5536 = vpack.c.b16 %v5220, %v5216
        %v5537 = vpack.c.b16 %v5221, %v5217
        %v5538 = vpack.c.b16 %v5222, %v5218
        %v5539 = vpack.c.b16 %v5227, %v5223
        %v5540 = vpack.c.b16 %v5228, %v5224
        %v5541 = vpack.c.b16 %v5229, %v5225
        %v5542 = vpack.c.b16 %v5230, %v5226
        %v5543 = vpack.c.b16 %v5235, %v5231
        %v5544 = vpack.c.b16 %v5236, %v5232
        %v5545 = vpack.c.b16 %v5237, %v5233
        %v5546 = vpack.c.b16 %v5238, %v5234
        %v5547 = vpack.c.b16 %v5243, %v5239
        %v5548 = vpack.c.b16 %v5244, %v5240
        %v5549 = vpack.c.b16 %v5245, %v5241
        %v5550 = vpack.c.b16 %v5246, %v5242
        %v5551 = vpack.c.b16 %v5251, %v5247
        %v5552 = vpack.c.b16 %v5252, %v5248
        %v5553 = vpack.c.b16 %v5253, %v5249
        %v5554 = vpack.c.b16 %v5254, %v5250
        %v5555 = vpack.c.b16 %v5259, %v5255
        %v5556 = vpack.c.b16 %v5260, %v5256
        %v5557 = vpack.c.b16 %v5261, %v5257
        %v5558 = vpack.c.b16 %v5262, %v5258
        %v5559 = vpack.c.b16 %v5267, %v5263
        %v5560 = vpack.c.b16 %v5268, %v5264
        %v5561 = vpack.c.b16 %v5269, %v5265
        %v5562 = vpack.c.b16 %v5270, %v5266
        %v5563 = vpack.c.b16 %v5275, %v5271
        %v5564 = vpack.c.b16 %v5276, %v5272
        %v5565 = vpack.c.b16 %v5277, %v5273
        %v5566 = vpack.c.b16 %v5278, %v5274
        %v5567 = vpack.c.b16 %v5283, %v5279
        %v5568 = vpack.c.b16 %v5284, %v5280
        %v5569 = vpack.c.b16 %v5285, %v5281
        %v5570 = vpack.c.b16 %v5286, %v5282
        %v5571 = vpack.c.b16 %v5291, %v5287
        %v5572 = vpack.c.b16 %v5292, %v5288
        %v5573 = vpack.c.b16 %v5293, %v5289
        %v5574 = vpack.c.b16 %v5294, %v5290
        %v5575 = vpack.c.b16 %v5299, %v5295
        %v5576 = vpack.c.b16 %v5300, %v5296
        %v5577 = vpack.c.b16 %v5301, %v5297
        %v5578 = vpack.c.b16 %v5302, %v5298
        %v5579 = vpack.c.b16 %v5307, %v5303
        %v5580 = vpack.c.b16 %v5308, %v5304
        %v5581 = vpack.c.b16 %v5309, %v5305
        %v5582 = vpack.c.b16 %v5310, %v5306
        %v5583 = vpack.c.b16 %v5315, %v5311
        %v5584 = vpack.c.b16 %v5316, %v5312
        %v5585 = vpack.c.b16 %v5317, %v5313
        %v5586 = vpack.c.b16 %v5318, %v5314
        %v5587 = vpack.c.b16 %v5323, %v5319
        %v5588 = vpack.c.b16 %v5324, %v5320
        %v5589 = vpack.c.b16 %v5325, %v5321
        %v5590 = vpack.c.b16 %v5326, %v5322
        %v5591 = vpack.c.b16 %v5331, %v5327
        %v5592 = vpack.c.b16 %v5332, %v5328
        %v5593 = vpack.c.b16 %v5333, %v5329
        %v5594 = vpack.c.b16 %v5334, %v5330
        %v5595 = vpack.c.b16 %v5339, %v5335
        %v5596 = vpack.c.b16 %v5340, %v5336
        %v5597 = vpack.c.b16 %v5341, %v5337
        %v5598 = vpack.c.b16 %v5342, %v5338
        %5855 = vmatpush.bf16.msra.mxu0 %v5371
        %5856 = vmatpush.bf16.msra.mxu0 %v5367
        %5857 = vmatpush.bf16.msra.mxu0 %v5363
        %5858 = vmatpush.bf16.msra.mxu0 %v5359
        %5859 = vmatpush.bf16.msra.mxu0 %v5355
        %5860 = vmatpush.bf16.msra.mxu0 %v5351
        %5861 = vmatpush.bf16.msra.mxu0 %v5347
        %5862 = vmatpush.bf16.msra.mxu0 %v5343
        %5863 = vmatmul.bf16.gmra.mxu0 %v4538
        %v5864 = vpop.f32.mrf.mxu0
        %v5865 = vadd.f32 0.0, %v5864
        %v5866 = vpop.f32.mrf.mxu0
        %5867 = vdwg.mxu0
        %5868 = vmatpush.bf16.msra.mxu0 %v5403
        %5869 = vmatpush.bf16.msra.mxu0 %v5399
        %5870 = vmatpush.bf16.msra.mxu0 %v5395
        %5871 = vmatpush.bf16.msra.mxu0 %v5391
        %5872 = vmatpush.bf16.msra.mxu0 %v5387
        %5873 = vmatpush.bf16.msra.mxu0 %v5383
        %5874 = vmatpush.bf16.msra.mxu0 %v5379
        %5875 = vmatpush.bf16.msra.mxu0 %v5375
        %5876 = vmatmul.bf16.gmra.mxu0 %v4542
        %v5877 = vpop.f32.mrf.mxu0
        %v5878 = vadd.f32 %v5865, %v5877
        %v5879 = vpop.f32.mrf.mxu0
        %5880 = vdwg.mxu0
        %5881 = vmatpush.bf16.msra.mxu0 %v5435
        %5882 = vmatpush.bf16.msra.mxu0 %v5431
        %5883 = vmatpush.bf16.msra.mxu0 %v5427
        %5884 = vmatpush.bf16.msra.mxu0 %v5423
        %5885 = vmatpush.bf16.msra.mxu0 %v5419
        %5886 = vmatpush.bf16.msra.mxu0 %v5415
        %5887 = vmatpush.bf16.msra.mxu0 %v5411
        %5888 = vmatpush.bf16.msra.mxu0 %v5407
        %5889 = vmatmul.bf16.gmra.mxu0 %v4546
        %v5890 = vpop.f32.mrf.mxu0
        %v5891 = vadd.f32 %v5878, %v5890
        %v5892 = vpop.f32.mrf.mxu0
        %5893 = vdwg.mxu0
        %5894 = vmatpush.bf16.msra.mxu0 %v5467
        %5895 = vmatpush.bf16.msra.mxu0 %v5463
        %5896 = vmatpush.bf16.msra.mxu0 %v5459
        %5897 = vmatpush.bf16.msra.mxu0 %v5455
        %5898 = vmatpush.bf16.msra.mxu0 %v5451
        %5899 = vmatpush.bf16.msra.mxu0 %v5447
        %5900 = vmatpush.bf16.msra.mxu0 %v5443
        %5901 = vmatpush.bf16.msra.mxu0 %v5439
        %5902 = vmatmul.bf16.gmra.mxu0 %v4550
        %v5903 = vpop.f32.mrf.mxu0
        %v5904 = vadd.f32 %v5891, %v5903
        %v5905 = vpop.f32.mrf.mxu0
        %5906 = vdwg.mxu0
        %5907 = vmatpush.bf16.msra.mxu0 %v5499
        %5908 = vmatpush.bf16.msra.mxu0 %v5495
        %5909 = vmatpush.bf16.msra.mxu0 %v5491
        %5910 = vmatpush.bf16.msra.mxu0 %v5487
        %5911 = vmatpush.bf16.msra.mxu0 %v5483
        %5912 = vmatpush.bf16.msra.mxu0 %v5479
        %5913 = vmatpush.bf16.msra.mxu0 %v5475
        %5914 = vmatpush.bf16.msra.mxu0 %v5471
        %5915 = vmatmul.bf16.gmra.mxu0 %v4554
        %v5916 = vpop.f32.mrf.mxu0
        %v5917 = vadd.f32 %v5904, %v5916
        %v5918 = vpop.f32.mrf.mxu0
        %5919 = vdwg.mxu0
        %5920 = vmatpush.bf16.msra.mxu0 %v5531
        %5921 = vmatpush.bf16.msra.mxu0 %v5527
        %5922 = vmatpush.bf16.msra.mxu0 %v5523
        %5923 = vmatpush.bf16.msra.mxu0 %v5519
        %5924 = vmatpush.bf16.msra.mxu0 %v5515
        %5925 = vmatpush.bf16.msra.mxu0 %v5511
        %5926 = vmatpush.bf16.msra.mxu0 %v5507
        %5927 = vmatpush.bf16.msra.mxu0 %v5503
        %5928 = vmatmul.bf16.gmra.mxu0 %v4558
        %v5929 = vpop.f32.mrf.mxu0
        %v5930 = vadd.f32 %v5917, %v5929
        %v5931 = vpop.f32.mrf.mxu0
        %5932 = vdwg.mxu0
        %5933 = vmatpush.bf16.msra.mxu0 %v5563
        %5934 = vmatpush.bf16.msra.mxu0 %v5559
        %5935 = vmatpush.bf16.msra.mxu0 %v5555
        %5936 = vmatpush.bf16.msra.mxu0 %v5551
        %5937 = vmatpush.bf16.msra.mxu0 %v5547
        %5938 = vmatpush.bf16.msra.mxu0 %v5543
        %5939 = vmatpush.bf16.msra.mxu0 %v5539
        %5940 = vmatpush.bf16.msra.mxu0 %v5535
        %5941 = vmatmul.bf16.gmra.mxu0 %v4562
        %v5942 = vpop.f32.mrf.mxu0
        %v5943 = vadd.f32 %v5930, %v5942
        %v5944 = vpop.f32.mrf.mxu0
        %5945 = vdwg.mxu0
        %5946 = vmatpush.bf16.msra.mxu0 %v5595
        %5947 = vmatpush.bf16.msra.mxu0 %v5591
        %5948 = vmatpush.bf16.msra.mxu0 %v5587
        %5949 = vmatpush.bf16.msra.mxu0 %v5583
        %5950 = vmatpush.bf16.msra.mxu0 %v5579
        %5951 = vmatpush.bf16.msra.mxu0 %v5575
        %5952 = vmatpush.bf16.msra.mxu0 %v5571
        %5953 = vmatpush.bf16.msra.mxu0 %v5567
        %5954 = vmatmul.bf16.gmra.mxu0 %v4566
        %v5955 = vpop.f32.mrf.mxu0
        %v5956 = vadd.f32 %v5943, %v5955
        %v5957 = vpop.f32.mrf.mxu0
        %5958 = vdwg.mxu0
        %5959 = vmatpush.bf16.msra.mxu0 %v5372
        %5960 = vmatpush.bf16.msra.mxu0 %v5368
        %5961 = vmatpush.bf16.msra.mxu0 %v5364
        %5962 = vmatpush.bf16.msra.mxu0 %v5360
        %5963 = vmatpush.bf16.msra.mxu0 %v5356
        %5964 = vmatpush.bf16.msra.mxu0 %v5352
        %5965 = vmatpush.bf16.msra.mxu0 %v5348
        %5966 = vmatpush.bf16.msra.mxu0 %v5344
        %5967 = vmatmul.bf16.gmra.mxu0 %v4538
        %v5968 = vpop.f32.mrf.mxu0
        %v5969 = vadd.f32 0.0, %v5968
        %v5970 = vpop.f32.mrf.mxu0
        %5971 = vdwg.mxu0
        %5972 = vmatpush.bf16.msra.mxu0 %v5404
        %5973 = vmatpush.bf16.msra.mxu0 %v5400
        %5974 = vmatpush.bf16.msra.mxu0 %v5396
        %5975 = vmatpush.bf16.msra.mxu0 %v5392
        %5976 = vmatpush.bf16.msra.mxu0 %v5388
        %5977 = vmatpush.bf16.msra.mxu0 %v5384
        %5978 = vmatpush.bf16.msra.mxu0 %v5380
        %5979 = vmatpush.bf16.msra.mxu0 %v5376
        %5980 = vmatmul.bf16.gmra.mxu0 %v4542
        %v5981 = vpop.f32.mrf.mxu0
        %v5982 = vadd.f32 %v5969, %v5981
        %v5983 = vpop.f32.mrf.mxu0
        %5984 = vdwg.mxu0
        %5985 = vmatpush.bf16.msra.mxu0 %v5436
        %5986 = vmatpush.bf16.msra.mxu0 %v5432
        %5987 = vmatpush.bf16.msra.mxu0 %v5428
        %5988 = vmatpush.bf16.msra.mxu0 %v5424
        %5989 = vmatpush.bf16.msra.mxu0 %v5420
        %5990 = vmatpush.bf16.msra.mxu0 %v5416
        %5991 = vmatpush.bf16.msra.mxu0 %v5412
        %5992 = vmatpush.bf16.msra.mxu0 %v5408
        %5993 = vmatmul.bf16.gmra.mxu0 %v4546
        %v5994 = vpop.f32.mrf.mxu0
        %v5995 = vadd.f32 %v5982, %v5994
        %v5996 = vpop.f32.mrf.mxu0
        %5997 = vdwg.mxu0
        %5998 = vmatpush.bf16.msra.mxu0 %v5468
        %5999 = vmatpush.bf16.msra.mxu0 %v5464
        %6000 = vmatpush.bf16.msra.mxu0 %v5460
        %6001 = vmatpush.bf16.msra.mxu0 %v5456
        %6002 = vmatpush.bf16.msra.mxu0 %v5452
        %6003 = vmatpush.bf16.msra.mxu0 %v5448
        %6004 = vmatpush.bf16.msra.mxu0 %v5444
        %6005 = vmatpush.bf16.msra.mxu0 %v5440
        %6006 = vmatmul.bf16.gmra.mxu0 %v4550
        %v6007 = vpop.f32.mrf.mxu0
        %v6008 = vadd.f32 %v5995, %v6007
        %v6009 = vpop.f32.mrf.mxu0
        %6010 = vdwg.mxu0
        %6011 = vmatpush.bf16.msra.mxu0 %v5500
        %6012 = vmatpush.bf16.msra.mxu0 %v5496
        %6013 = vmatpush.bf16.msra.mxu0 %v5492
        %6014 = vmatpush.bf16.msra.mxu0 %v5488
        %6015 = vmatpush.bf16.msra.mxu0 %v5484
        %6016 = vmatpush.bf16.msra.mxu0 %v5480
        %6017 = vmatpush.bf16.msra.mxu0 %v5476
        %6018 = vmatpush.bf16.msra.mxu0 %v5472
        %6019 = vmatmul.bf16.gmra.mxu0 %v4554
        %v6020 = vpop.f32.mrf.mxu0
        %v6021 = vadd.f32 %v6008, %v6020
        %v6022 = vpop.f32.mrf.mxu0
        %6023 = vdwg.mxu0
        %6024 = vmatpush.bf16.msra.mxu0 %v5532
        %6025 = vmatpush.bf16.msra.mxu0 %v5528
        %6026 = vmatpush.bf16.msra.mxu0 %v5524
        %6027 = vmatpush.bf16.msra.mxu0 %v5520
        %6028 = vmatpush.bf16.msra.mxu0 %v5516
        %6029 = vmatpush.bf16.msra.mxu0 %v5512
        %6030 = vmatpush.bf16.msra.mxu0 %v5508
        %6031 = vmatpush.bf16.msra.mxu0 %v5504
        %6032 = vmatmul.bf16.gmra.mxu0 %v4558
        %v6033 = vpop.f32.mrf.mxu0
        %v6034 = vadd.f32 %v6021, %v6033
        %v6035 = vpop.f32.mrf.mxu0
        %6036 = vdwg.mxu0
        %6037 = vmatpush.bf16.msra.mxu0 %v5564
        %6038 = vmatpush.bf16.msra.mxu0 %v5560
        %6039 = vmatpush.bf16.msra.mxu0 %v5556
        %6040 = vmatpush.bf16.msra.mxu0 %v5552
        %6041 = vmatpush.bf16.msra.mxu0 %v5548
        %6042 = vmatpush.bf16.msra.mxu0 %v5544
        %6043 = vmatpush.bf16.msra.mxu0 %v5540
        %6044 = vmatpush.bf16.msra.mxu0 %v5536
        %6045 = vmatmul.bf16.gmra.mxu0 %v4562
        %v6046 = vpop.f32.mrf.mxu0
        %v6047 = vadd.f32 %v6034, %v6046
        %v6048 = vpop.f32.mrf.mxu0
        %6049 = vdwg.mxu0
        %6050 = vmatpush.bf16.msra.mxu0 %v5596
        %6051 = vmatpush.bf16.msra.mxu0 %v5592
        %6052 = vmatpush.bf16.msra.mxu0 %v5588
        %6053 = vmatpush.bf16.msra.mxu0 %v5584
        %6054 = vmatpush.bf16.msra.mxu0 %v5580
        %6055 = vmatpush.bf16.msra.mxu0 %v5576
        %6056 = vmatpush.bf16.msra.mxu0 %v5572
        %6057 = vmatpush.bf16.msra.mxu0 %v5568
        %6058 = vmatmul.bf16.gmra.mxu0 %v4566
        %v6059 = vpop.f32.mrf.mxu0
        %v6060 = vadd.f32 %v6047, %v6059
        %v6061 = vpop.f32.mrf.mxu0
        %6062 = vdwg.mxu0
        %6063 = vmatpush.bf16.msra.mxu0 %v5373
        %6064 = vmatpush.bf16.msra.mxu0 %v5369
        %6065 = vmatpush.bf16.msra.mxu0 %v5365
        %6066 = vmatpush.bf16.msra.mxu0 %v5361
        %6067 = vmatpush.bf16.msra.mxu0 %v5357
        %6068 = vmatpush.bf16.msra.mxu0 %v5353
        %6069 = vmatpush.bf16.msra.mxu0 %v5349
        %6070 = vmatpush.bf16.msra.mxu0 %v5345
        %6071 = vmatmul.bf16.gmra.mxu0 %v4538
        %v6072 = vpop.f32.mrf.mxu0
        %v6073 = vadd.f32 0.0, %v6072
        %v6074 = vpop.f32.mrf.mxu0
        %6075 = vdwg.mxu0
        %6076 = vmatpush.bf16.msra.mxu0 %v5405
        %6077 = vmatpush.bf16.msra.mxu0 %v5401
        %6078 = vmatpush.bf16.msra.mxu0 %v5397
        %6079 = vmatpush.bf16.msra.mxu0 %v5393
        %6080 = vmatpush.bf16.msra.mxu0 %v5389
        %6081 = vmatpush.bf16.msra.mxu0 %v5385
        %6082 = vmatpush.bf16.msra.mxu0 %v5381
        %6083 = vmatpush.bf16.msra.mxu0 %v5377
        %6084 = vmatmul.bf16.gmra.mxu0 %v4542
        %v6085 = vpop.f32.mrf.mxu0
        %v6086 = vadd.f32 %v6073, %v6085
        %v6087 = vpop.f32.mrf.mxu0
        %6088 = vdwg.mxu0
        %6089 = vmatpush.bf16.msra.mxu0 %v5437
        %6090 = vmatpush.bf16.msra.mxu0 %v5433
        %6091 = vmatpush.bf16.msra.mxu0 %v5429
        %6092 = vmatpush.bf16.msra.mxu0 %v5425
        %6093 = vmatpush.bf16.msra.mxu0 %v5421
        %6094 = vmatpush.bf16.msra.mxu0 %v5417
        %6095 = vmatpush.bf16.msra.mxu0 %v5413
        %6096 = vmatpush.bf16.msra.mxu0 %v5409
        %6097 = vmatmul.bf16.gmra.mxu0 %v4546
        %v6098 = vpop.f32.mrf.mxu0
        %v6099 = vadd.f32 %v6086, %v6098
        %v6100 = vpop.f32.mrf.mxu0
        %6101 = vdwg.mxu0
        %6102 = vmatpush.bf16.msra.mxu0 %v5469
        %6103 = vmatpush.bf16.msra.mxu0 %v5465
        %6104 = vmatpush.bf16.msra.mxu0 %v5461
        %6105 = vmatpush.bf16.msra.mxu0 %v5457
        %6106 = vmatpush.bf16.msra.mxu0 %v5453
        %6107 = vmatpush.bf16.msra.mxu0 %v5449
        %6108 = vmatpush.bf16.msra.mxu0 %v5445
        %6109 = vmatpush.bf16.msra.mxu0 %v5441
        %6110 = vmatmul.bf16.gmra.mxu0 %v4550
        %v6111 = vpop.f32.mrf.mxu0
        %v6112 = vadd.f32 %v6099, %v6111
        %v6113 = vpop.f32.mrf.mxu0
        %6114 = vdwg.mxu0
        %6115 = vmatpush.bf16.msra.mxu0 %v5501
        %6116 = vmatpush.bf16.msra.mxu0 %v5497
        %6117 = vmatpush.bf16.msra.mxu0 %v5493
        %6118 = vmatpush.bf16.msra.mxu0 %v5489
        %6119 = vmatpush.bf16.msra.mxu0 %v5485
        %6120 = vmatpush.bf16.msra.mxu0 %v5481
        %6121 = vmatpush.bf16.msra.mxu0 %v5477
        %6122 = vmatpush.bf16.msra.mxu0 %v5473
        %6123 = vmatmul.bf16.gmra.mxu0 %v4554
        %v6124 = vpop.f32.mrf.mxu0
        %v6125 = vadd.f32 %v6112, %v6124
        %v6126 = vpop.f32.mrf.mxu0
        %6127 = vdwg.mxu0
        %6128 = vmatpush.bf16.msra.mxu0 %v5533
        %6129 = vmatpush.bf16.msra.mxu0 %v5529
        %6130 = vmatpush.bf16.msra.mxu0 %v5525
        %6131 = vmatpush.bf16.msra.mxu0 %v5521
        %6132 = vmatpush.bf16.msra.mxu0 %v5517
        %6133 = vmatpush.bf16.msra.mxu0 %v5513
        %6134 = vmatpush.bf16.msra.mxu0 %v5509
        %6135 = vmatpush.bf16.msra.mxu0 %v5505
        %6136 = vmatmul.bf16.gmra.mxu0 %v4558
        %v6137 = vpop.f32.mrf.mxu0
        %v6138 = vadd.f32 %v6125, %v6137
        %v6139 = vpop.f32.mrf.mxu0
        %6140 = vdwg.mxu0
        %6141 = vmatpush.bf16.msra.mxu0 %v5565
        %6142 = vmatpush.bf16.msra.mxu0 %v5561
        %6143 = vmatpush.bf16.msra.mxu0 %v5557
        %6144 = vmatpush.bf16.msra.mxu0 %v5553
        %6145 = vmatpush.bf16.msra.mxu0 %v5549
        %6146 = vmatpush.bf16.msra.mxu0 %v5545
        %6147 = vmatpush.bf16.msra.mxu0 %v5541
        %6148 = vmatpush.bf16.msra.mxu0 %v5537
        %6149 = vmatmul.bf16.gmra.mxu0 %v4562
        %v6150 = vpop.f32.mrf.mxu0
        %v6151 = vadd.f32 %v6138, %v6150
        %v6152 = vpop.f32.mrf.mxu0
        %6153 = vdwg.mxu0
        %6154 = vmatpush.bf16.msra.mxu0 %v5597
        %6155 = vmatpush.bf16.msra.mxu0 %v5593
        %6156 = vmatpush.bf16.msra.mxu0 %v5589
        %6157 = vmatpush.bf16.msra.mxu0 %v5585
        %6158 = vmatpush.bf16.msra.mxu0 %v5581
        %6159 = vmatpush.bf16.msra.mxu0 %v5577
        %6160 = vmatpush.bf16.msra.mxu0 %v5573
        %6161 = vmatpush.bf16.msra.mxu0 %v5569
        %6162 = vmatmul.bf16.gmra.mxu0 %v4566
        %v6163 = vpop.f32.mrf.mxu0
        %v6164 = vadd.f32 %v6151, %v6163
        %v6165 = vpop.f32.mrf.mxu0
        %6166 = vdwg.mxu0
        %6167 = vmatpush.bf16.msra.mxu0 %v5374
        %6168 = vmatpush.bf16.msra.mxu0 %v5370
        %6169 = vmatpush.bf16.msra.mxu0 %v5366
        %6170 = vmatpush.bf16.msra.mxu0 %v5362
        %6171 = vmatpush.bf16.msra.mxu0 %v5358
        %6172 = vmatpush.bf16.msra.mxu0 %v5354
        %6173 = vmatpush.bf16.msra.mxu0 %v5350
        %6174 = vmatpush.bf16.msra.mxu0 %v5346
        %6175 = vmatmul.bf16.gmra.mxu0 %v4538
        %v6176 = vpop.f32.mrf.mxu0
        %v6177 = vadd.f32 0.0, %v6176
        %v6178 = vpop.f32.mrf.mxu0
        %6179 = vdwg.mxu0
        %6180 = vmatpush.bf16.msra.mxu0 %v5406
        %6181 = vmatpush.bf16.msra.mxu0 %v5402
        %6182 = vmatpush.bf16.msra.mxu0 %v5398
        %6183 = vmatpush.bf16.msra.mxu0 %v5394
        %6184 = vmatpush.bf16.msra.mxu0 %v5390
        %6185 = vmatpush.bf16.msra.mxu0 %v5386
        %6186 = vmatpush.bf16.msra.mxu0 %v5382
        %6187 = vmatpush.bf16.msra.mxu0 %v5378
        %6188 = vmatmul.bf16.gmra.mxu0 %v4542
        %v6189 = vpop.f32.mrf.mxu0
        %v6190 = vadd.f32 %v6177, %v6189
        %v6191 = vpop.f32.mrf.mxu0
        %6192 = vdwg.mxu0
        %6193 = vmatpush.bf16.msra.mxu0 %v5438
        %6194 = vmatpush.bf16.msra.mxu0 %v5434
        %6195 = vmatpush.bf16.msra.mxu0 %v5430
        %6196 = vmatpush.bf16.msra.mxu0 %v5426
        %6197 = vmatpush.bf16.msra.mxu0 %v5422
        %6198 = vmatpush.bf16.msra.mxu0 %v5418
        %6199 = vmatpush.bf16.msra.mxu0 %v5414
        %6200 = vmatpush.bf16.msra.mxu0 %v5410
        %6201 = vmatmul.bf16.gmra.mxu0 %v4546
        %v6202 = vpop.f32.mrf.mxu0
        %v6203 = vadd.f32 %v6190, %v6202
        %v6204 = vpop.f32.mrf.mxu0
        %6205 = vdwg.mxu0
        %6206 = vmatpush.bf16.msra.mxu0 %v5470
        %6207 = vmatpush.bf16.msra.mxu0 %v5466
        %6208 = vmatpush.bf16.msra.mxu0 %v5462
        %6209 = vmatpush.bf16.msra.mxu0 %v5458
        %6210 = vmatpush.bf16.msra.mxu0 %v5454
        %6211 = vmatpush.bf16.msra.mxu0 %v5450
        %6212 = vmatpush.bf16.msra.mxu0 %v5446
        %6213 = vmatpush.bf16.msra.mxu0 %v5442
        %6214 = vmatmul.bf16.gmra.mxu0 %v4550
        %v6215 = vpop.f32.mrf.mxu0
        %v6216 = vadd.f32 %v6203, %v6215
        %v6217 = vpop.f32.mrf.mxu0
        %6218 = vdwg.mxu0
        %6219 = vmatpush.bf16.msra.mxu0 %v5502
        %6220 = vmatpush.bf16.msra.mxu0 %v5498
        %6221 = vmatpush.bf16.msra.mxu0 %v5494
        %6222 = vmatpush.bf16.msra.mxu0 %v5490
        %6223 = vmatpush.bf16.msra.mxu0 %v5486
        %6224 = vmatpush.bf16.msra.mxu0 %v5482
        %6225 = vmatpush.bf16.msra.mxu0 %v5478
        %6226 = vmatpush.bf16.msra.mxu0 %v5474
        %6227 = vmatmul.bf16.gmra.mxu0 %v4554
        %v6228 = vpop.f32.mrf.mxu0
        %v6229 = vadd.f32 %v6216, %v6228
        %v6230 = vpop.f32.mrf.mxu0
        %6231 = vdwg.mxu0
        %6232 = vmatpush.bf16.msra.mxu0 %v5534
        %6233 = vmatpush.bf16.msra.mxu0 %v5530
        %6234 = vmatpush.bf16.msra.mxu0 %v5526
        %6235 = vmatpush.bf16.msra.mxu0 %v5522
        %6236 = vmatpush.bf16.msra.mxu0 %v5518
        %6237 = vmatpush.bf16.msra.mxu0 %v5514
        %6238 = vmatpush.bf16.msra.mxu0 %v5510
        %6239 = vmatpush.bf16.msra.mxu0 %v5506
        %6240 = vmatmul.bf16.gmra.mxu0 %v4558
        %v6241 = vpop.f32.mrf.mxu0
        %v6242 = vadd.f32 %v6229, %v6241
        %v6243 = vpop.f32.mrf.mxu0
        %6244 = vdwg.mxu0
        %6245 = vmatpush.bf16.msra.mxu0 %v5566
        %6246 = vmatpush.bf16.msra.mxu0 %v5562
        %6247 = vmatpush.bf16.msra.mxu0 %v5558
        %6248 = vmatpush.bf16.msra.mxu0 %v5554
        %6249 = vmatpush.bf16.msra.mxu0 %v5550
        %6250 = vmatpush.bf16.msra.mxu0 %v5546
        %6251 = vmatpush.bf16.msra.mxu0 %v5542
        %6252 = vmatpush.bf16.msra.mxu0 %v5538
        %6253 = vmatmul.bf16.gmra.mxu0 %v4562
        %v6254 = vpop.f32.mrf.mxu0
        %v6255 = vadd.f32 %v6242, %v6254
        %v6256 = vpop.f32.mrf.mxu0
        %6257 = vdwg.mxu0
        %6258 = vmatpush.bf16.msra.mxu0 %v5598
        %6259 = vmatpush.bf16.msra.mxu0 %v5594
        %6260 = vmatpush.bf16.msra.mxu0 %v5590
        %6261 = vmatpush.bf16.msra.mxu0 %v5586
        %6262 = vmatpush.bf16.msra.mxu0 %v5582
        %6263 = vmatpush.bf16.msra.mxu0 %v5578
        %6264 = vmatpush.bf16.msra.mxu0 %v5574
        %6265 = vmatpush.bf16.msra.mxu0 %v5570
        %6266 = vmatmul.bf16.gmra.mxu0 %v4566
        %v6267 = vpop.f32.mrf.mxu0
        %v6268 = vadd.f32 %v6255, %v6267
        %v6269 = vpop.f32.mrf.mxu0
        %6270 = vdwg.mxu0
        %v6271 = vadd.f32 %v3939, %v5956
        %v6272 = vadd.f32 %v4043, %v6060
        %v6273 = vadd.f32 %v4147, %v6164
        %v6274 = vadd.f32 %v4251, %v6268
        %v6275 = vld [vmem:[%s284] sm:$0x44]
        %v6276 = vld [vmem:[%s284 + $0x8] sm:$0x44]
        %v6277 = vld [vmem:[%s284 + $0x10] sm:$0x44]
        %v6278 = vld [vmem:[%s284 + $0x18] sm:$0x44]
        %s6279 = scalar_lea.vmem [#allocation2], 6144
        %v6280 = vld [vmem:[%s6279] sm:$0xff]
        %v6281 = vld [vmem:[%s6279 + $0x8] sm:$0xff]
        %v6282 = vld [vmem:[%s6279 + $0x10] sm:$0xff]
        %v6283 = vld [vmem:[%s6279 + $0x18] sm:$0xff]
        %v6284 = vld [vmem:[%s6279 + $0x20] sm:$0xff]
        %v6285 = vld [vmem:[%s6279 + $0x28] sm:$0xff]
        %v6286 = vld [vmem:[%s6279 + $0x30] sm:$0xff]
        %v6287 = vld [vmem:[%s6279 + $0x38] sm:$0xff]
        %v6288 = vld [vmem:[%s6279 + $0x40] sm:$0xff]
        %v6289 = vld [vmem:[%s6279 + $0x48] sm:$0xff]
        %v6290 = vld [vmem:[%s6279 + $0x50] sm:$0xff]
        %v6291 = vld [vmem:[%s6279 + $0x58] sm:$0xff]
        %v6292 = vld [vmem:[%s6279 + $0x60] sm:$0xff]
        %v6293 = vld [vmem:[%s6279 + $0x68] sm:$0xff]
        %v6294 = vld [vmem:[%s6279 + $0x70] sm:$0xff]
        %v6295 = vld [vmem:[%s6279 + $0x78] sm:$0xff]
        %v6296 = vld [vmem:[%s6279 + $0x80] sm:$0xff]
        %v6297 = vld [vmem:[%s6279 + $0x88] sm:$0xff]
        %v6298 = vld [vmem:[%s6279 + $0x90] sm:$0xff]
        %v6299 = vld [vmem:[%s6279 + $0x98] sm:$0xff]
        %v6300 = vld [vmem:[%s6279 + $0xa0] sm:$0xff]
        %v6301 = vld [vmem:[%s6279 + $0xa8] sm:$0xff]
        %v6302 = vld [vmem:[%s6279 + $0xb0] sm:$0xff]
        %v6303 = vld [vmem:[%s6279 + $0xb8] sm:$0xff]
        %v6304 = vld [vmem:[%s6279 + $0xc0] sm:$0xff]
        %v6305 = vld [vmem:[%s6279 + $0xc8] sm:$0xff]
        %v6306 = vld [vmem:[%s6279 + $0xd0] sm:$0xff]
        %v6307 = vld [vmem:[%s6279 + $0xd8] sm:$0xff]
        %v6308 = vld [vmem:[%s6279 + $0xe0] sm:$0xff]
        %v6309 = vld [vmem:[%s6279 + $0xe8] sm:$0xff]
        %v6310 = vld [vmem:[%s6279 + $0xf0] sm:$0xff]
        %v6311 = vld [vmem:[%s6279 + $0xf8] sm:$0xff]
        %v6312 = vld [vmem:[%s6279 + $0x100] sm:$0xff]
        %v6313 = vld [vmem:[%s6279 + $0x108] sm:$0xff]
        %v6314 = vld [vmem:[%s6279 + $0x110] sm:$0xff]
        %v6315 = vld [vmem:[%s6279 + $0x118] sm:$0xff]
        %v6316 = vld [vmem:[%s6279 + $0x120] sm:$0xff]
        %v6317 = vld [vmem:[%s6279 + $0x128] sm:$0xff]
        %v6318 = vld [vmem:[%s6279 + $0x130] sm:$0xff]
        %v6319 = vld [vmem:[%s6279 + $0x138] sm:$0xff]
        %v6320 = vld [vmem:[%s6279 + $0x140] sm:$0xff]
        %v6321 = vld [vmem:[%s6279 + $0x148] sm:$0xff]
        %v6322 = vld [vmem:[%s6279 + $0x150] sm:$0xff]
        %v6323 = vld [vmem:[%s6279 + $0x158] sm:$0xff]
        %v6324 = vld [vmem:[%s6279 + $0x160] sm:$0xff]
        %v6325 = vld [vmem:[%s6279 + $0x168] sm:$0xff]
        %v6326 = vld [vmem:[%s6279 + $0x170] sm:$0xff]
        %v6327 = vld [vmem:[%s6279 + $0x178] sm:$0xff]
        %v6328 = vld [vmem:[%s6279 + $0x180] sm:$0xff]
        %v6329 = vld [vmem:[%s6279 + $0x188] sm:$0xff]
        %v6330 = vld [vmem:[%s6279 + $0x190] sm:$0xff]
        %v6331 = vld [vmem:[%s6279 + $0x198] sm:$0xff]
        %v6332 = vld [vmem:[%s6279 + $0x1a0] sm:$0xff]
        %v6333 = vld [vmem:[%s6279 + $0x1a8] sm:$0xff]
        %v6334 = vld [vmem:[%s6279 + $0x1b0] sm:$0xff]
        %v6335 = vld [vmem:[%s6279 + $0x1b8] sm:$0xff]
        %v6336 = vld [vmem:[%s6279 + $0x1c0] sm:$0xff]
        %v6337 = vld [vmem:[%s6279 + $0x1c8] sm:$0xff]
        %v6338 = vld [vmem:[%s6279 + $0x1d0] sm:$0xff]
        %v6339 = vld [vmem:[%s6279 + $0x1d8] sm:$0xff]
        %v6340 = vld [vmem:[%s6279 + $0x1e0] sm:$0xff]
        %v6341 = vld [vmem:[%s6279 + $0x1e8] sm:$0xff]
        %v6342 = vld [vmem:[%s6279 + $0x1f0] sm:$0xff]
        %v6343 = vld [vmem:[%s6279 + $0x1f8] sm:$0xff]
        %v6344 = vld [vmem:[%s6279 + $0x200] sm:$0xff]
        %v6345 = vld [vmem:[%s6279 + $0x208] sm:$0xff]
        %v6346 = vld [vmem:[%s6279 + $0x210] sm:$0xff]
        %v6347 = vld [vmem:[%s6279 + $0x218] sm:$0xff]
        %v6348 = vld [vmem:[%s6279 + $0x220] sm:$0xff]
        %v6349 = vld [vmem:[%s6279 + $0x228] sm:$0xff]
        %v6350 = vld [vmem:[%s6279 + $0x230] sm:$0xff]
        %v6351 = vld [vmem:[%s6279 + $0x238] sm:$0xff]
        %v6352 = vld [vmem:[%s6279 + $0x240] sm:$0xff]
        %v6353 = vld [vmem:[%s6279 + $0x248] sm:$0xff]
        %v6354 = vld [vmem:[%s6279 + $0x250] sm:$0xff]
        %v6355 = vld [vmem:[%s6279 + $0x258] sm:$0xff]
        %v6356 = vld [vmem:[%s6279 + $0x260] sm:$0xff]
        %v6357 = vld [vmem:[%s6279 + $0x268] sm:$0xff]
        %v6358 = vld [vmem:[%s6279 + $0x270] sm:$0xff]
        %v6359 = vld [vmem:[%s6279 + $0x278] sm:$0xff]
        %v6360 = vld [vmem:[%s6279 + $0x280] sm:$0xff]
        %v6361 = vld [vmem:[%s6279 + $0x288] sm:$0xff]
        %v6362 = vld [vmem:[%s6279 + $0x290] sm:$0xff]
        %v6363 = vld [vmem:[%s6279 + $0x298] sm:$0xff]
        %v6364 = vld [vmem:[%s6279 + $0x2a0] sm:$0xff]
        %v6365 = vld [vmem:[%s6279 + $0x2a8] sm:$0xff]
        %v6366 = vld [vmem:[%s6279 + $0x2b0] sm:$0xff]
        %v6367 = vld [vmem:[%s6279 + $0x2b8] sm:$0xff]
        %v6368 = vld [vmem:[%s6279 + $0x2c0] sm:$0xff]
        %v6369 = vld [vmem:[%s6279 + $0x2c8] sm:$0xff]
        %v6370 = vld [vmem:[%s6279 + $0x2d0] sm:$0xff]
        %v6371 = vld [vmem:[%s6279 + $0x2d8] sm:$0xff]
        %v6372 = vld [vmem:[%s6279 + $0x2e0] sm:$0xff]
        %v6373 = vld [vmem:[%s6279 + $0x2e8] sm:$0xff]
        %v6374 = vld [vmem:[%s6279 + $0x2f0] sm:$0xff]
        %v6375 = vld [vmem:[%s6279 + $0x2f8] sm:$0xff]
        %v6376 = vld [vmem:[%s6279 + $0x300] sm:$0xff]
        %v6377 = vld [vmem:[%s6279 + $0x308] sm:$0xff]
        %v6378 = vld [vmem:[%s6279 + $0x310] sm:$0xff]
        %v6379 = vld [vmem:[%s6279 + $0x318] sm:$0xff]
        %v6380 = vld [vmem:[%s6279 + $0x320] sm:$0xff]
        %v6381 = vld [vmem:[%s6279 + $0x328] sm:$0xff]
        %v6382 = vld [vmem:[%s6279 + $0x330] sm:$0xff]
        %v6383 = vld [vmem:[%s6279 + $0x338] sm:$0xff]
        %v6384 = vld [vmem:[%s6279 + $0x340] sm:$0xff]
        %v6385 = vld [vmem:[%s6279 + $0x348] sm:$0xff]
        %v6386 = vld [vmem:[%s6279 + $0x350] sm:$0xff]
        %v6387 = vld [vmem:[%s6279 + $0x358] sm:$0xff]
        %v6388 = vld [vmem:[%s6279 + $0x360] sm:$0xff]
        %v6389 = vld [vmem:[%s6279 + $0x368] sm:$0xff]
        %v6390 = vld [vmem:[%s6279 + $0x370] sm:$0xff]
        %v6391 = vld [vmem:[%s6279 + $0x378] sm:$0xff]
        %v6392 = vld [vmem:[%s6279 + $0x380] sm:$0xff]
        %v6393 = vld [vmem:[%s6279 + $0x388] sm:$0xff]
        %v6394 = vld [vmem:[%s6279 + $0x390] sm:$0xff]
        %v6395 = vld [vmem:[%s6279 + $0x398] sm:$0xff]
        %v6396 = vld [vmem:[%s6279 + $0x3a0] sm:$0xff]
        %v6397 = vld [vmem:[%s6279 + $0x3a8] sm:$0xff]
        %v6398 = vld [vmem:[%s6279 + $0x3b0] sm:$0xff]
        %v6399 = vld [vmem:[%s6279 + $0x3b8] sm:$0xff]
        %v6400 = vld [vmem:[%s6279 + $0x3c0] sm:$0xff]
        %v6401 = vld [vmem:[%s6279 + $0x3c8] sm:$0xff]
        %v6402 = vld [vmem:[%s6279 + $0x3d0] sm:$0xff]
        %v6403 = vld [vmem:[%s6279 + $0x3d8] sm:$0xff]
        %v6404 = vld [vmem:[%s6279 + $0x3e0] sm:$0xff]
        %v6405 = vld [vmem:[%s6279 + $0x3e8] sm:$0xff]
        %v6406 = vld [vmem:[%s6279 + $0x3f0] sm:$0xff]
        %v6407 = vld [vmem:[%s6279 + $0x3f8] sm:$0xff]
        %v6408 = vld [vmem:[%s6279 + $0x400] sm:$0xff]
        %v6409 = vld [vmem:[%s6279 + $0x408] sm:$0xff]
        %v6410 = vld [vmem:[%s6279 + $0x410] sm:$0xff]
        %v6411 = vld [vmem:[%s6279 + $0x418] sm:$0xff]
        %v6412 = vld [vmem:[%s6279 + $0x420] sm:$0xff]
        %v6413 = vld [vmem:[%s6279 + $0x428] sm:$0xff]
        %v6414 = vld [vmem:[%s6279 + $0x430] sm:$0xff]
        %v6415 = vld [vmem:[%s6279 + $0x438] sm:$0xff]
        %v6416 = vld [vmem:[%s6279 + $0x440] sm:$0xff]
        %v6417 = vld [vmem:[%s6279 + $0x448] sm:$0xff]
        %v6418 = vld [vmem:[%s6279 + $0x450] sm:$0xff]
        %v6419 = vld [vmem:[%s6279 + $0x458] sm:$0xff]
        %v6420 = vld [vmem:[%s6279 + $0x460] sm:$0xff]
        %v6421 = vld [vmem:[%s6279 + $0x468] sm:$0xff]
        %v6422 = vld [vmem:[%s6279 + $0x470] sm:$0xff]
        %v6423 = vld [vmem:[%s6279 + $0x478] sm:$0xff]
        %v6424 = vld [vmem:[%s6279 + $0x480] sm:$0xff]
        %v6425 = vld [vmem:[%s6279 + $0x488] sm:$0xff]
        %v6426 = vld [vmem:[%s6279 + $0x490] sm:$0xff]
        %v6427 = vld [vmem:[%s6279 + $0x498] sm:$0xff]
        %v6428 = vld [vmem:[%s6279 + $0x4a0] sm:$0xff]
        %v6429 = vld [vmem:[%s6279 + $0x4a8] sm:$0xff]
        %v6430 = vld [vmem:[%s6279 + $0x4b0] sm:$0xff]
        %v6431 = vld [vmem:[%s6279 + $0x4b8] sm:$0xff]
        %v6432 = vld [vmem:[%s6279 + $0x4c0] sm:$0xff]
        %v6433 = vld [vmem:[%s6279 + $0x4c8] sm:$0xff]
        %v6434 = vld [vmem:[%s6279 + $0x4d0] sm:$0xff]
        %v6435 = vld [vmem:[%s6279 + $0x4d8] sm:$0xff]
        %v6436 = vld [vmem:[%s6279 + $0x4e0] sm:$0xff]
        %v6437 = vld [vmem:[%s6279 + $0x4e8] sm:$0xff]
        %v6438 = vld [vmem:[%s6279 + $0x4f0] sm:$0xff]
        %v6439 = vld [vmem:[%s6279 + $0x4f8] sm:$0xff]
        %v6440 = vld [vmem:[%s6279 + $0x500] sm:$0xff]
        %v6441 = vld [vmem:[%s6279 + $0x508] sm:$0xff]
        %v6442 = vld [vmem:[%s6279 + $0x510] sm:$0xff]
        %v6443 = vld [vmem:[%s6279 + $0x518] sm:$0xff]
        %v6444 = vld [vmem:[%s6279 + $0x520] sm:$0xff]
        %v6445 = vld [vmem:[%s6279 + $0x528] sm:$0xff]
        %v6446 = vld [vmem:[%s6279 + $0x530] sm:$0xff]
        %v6447 = vld [vmem:[%s6279 + $0x538] sm:$0xff]
        %v6448 = vld [vmem:[%s6279 + $0x540] sm:$0xff]
        %v6449 = vld [vmem:[%s6279 + $0x548] sm:$0xff]
        %v6450 = vld [vmem:[%s6279 + $0x550] sm:$0xff]
        %v6451 = vld [vmem:[%s6279 + $0x558] sm:$0xff]
        %v6452 = vld [vmem:[%s6279 + $0x560] sm:$0xff]
        %v6453 = vld [vmem:[%s6279 + $0x568] sm:$0xff]
        %v6454 = vld [vmem:[%s6279 + $0x570] sm:$0xff]
        %v6455 = vld [vmem:[%s6279 + $0x578] sm:$0xff]
        %v6456 = vld [vmem:[%s6279 + $0x580] sm:$0xff]
        %v6457 = vld [vmem:[%s6279 + $0x588] sm:$0xff]
        %v6458 = vld [vmem:[%s6279 + $0x590] sm:$0xff]
        %v6459 = vld [vmem:[%s6279 + $0x598] sm:$0xff]
        %v6460 = vld [vmem:[%s6279 + $0x5a0] sm:$0xff]
        %v6461 = vld [vmem:[%s6279 + $0x5a8] sm:$0xff]
        %v6462 = vld [vmem:[%s6279 + $0x5b0] sm:$0xff]
        %v6463 = vld [vmem:[%s6279 + $0x5b8] sm:$0xff]
        %v6464 = vld [vmem:[%s6279 + $0x5c0] sm:$0xff]
        %v6465 = vld [vmem:[%s6279 + $0x5c8] sm:$0xff]
        %v6466 = vld [vmem:[%s6279 + $0x5d0] sm:$0xff]
        %v6467 = vld [vmem:[%s6279 + $0x5d8] sm:$0xff]
        %v6468 = vld [vmem:[%s6279 + $0x5e0] sm:$0xff]
        %v6469 = vld [vmem:[%s6279 + $0x5e8] sm:$0xff]
        %v6470 = vld [vmem:[%s6279 + $0x5f0] sm:$0xff]
        %v6471 = vld [vmem:[%s6279 + $0x5f8] sm:$0xff]
        %v6472 = vld [vmem:[%s6279 + $0x600] sm:$0xff]
        %v6473 = vld [vmem:[%s6279 + $0x608] sm:$0xff]
        %v6474 = vld [vmem:[%s6279 + $0x610] sm:$0xff]
        %v6475 = vld [vmem:[%s6279 + $0x618] sm:$0xff]
        %v6476 = vld [vmem:[%s6279 + $0x620] sm:$0xff]
        %v6477 = vld [vmem:[%s6279 + $0x628] sm:$0xff]
        %v6478 = vld [vmem:[%s6279 + $0x630] sm:$0xff]
        %v6479 = vld [vmem:[%s6279 + $0x638] sm:$0xff]
        %v6480 = vld [vmem:[%s6279 + $0x640] sm:$0xff]
        %v6481 = vld [vmem:[%s6279 + $0x648] sm:$0xff]
        %v6482 = vld [vmem:[%s6279 + $0x650] sm:$0xff]
        %v6483 = vld [vmem:[%s6279 + $0x658] sm:$0xff]
        %v6484 = vld [vmem:[%s6279 + $0x660] sm:$0xff]
        %v6485 = vld [vmem:[%s6279 + $0x668] sm:$0xff]
        %v6486 = vld [vmem:[%s6279 + $0x670] sm:$0xff]
        %v6487 = vld [vmem:[%s6279 + $0x678] sm:$0xff]
        %v6488 = vld [vmem:[%s6279 + $0x680] sm:$0xff]
        %v6489 = vld [vmem:[%s6279 + $0x688] sm:$0xff]
        %v6490 = vld [vmem:[%s6279 + $0x690] sm:$0xff]
        %v6491 = vld [vmem:[%s6279 + $0x698] sm:$0xff]
        %v6492 = vld [vmem:[%s6279 + $0x6a0] sm:$0xff]
        %v6493 = vld [vmem:[%s6279 + $0x6a8] sm:$0xff]
        %v6494 = vld [vmem:[%s6279 + $0x6b0] sm:$0xff]
        %v6495 = vld [vmem:[%s6279 + $0x6b8] sm:$0xff]
        %v6496 = vld [vmem:[%s6279 + $0x6c0] sm:$0xff]
        %v6497 = vld [vmem:[%s6279 + $0x6c8] sm:$0xff]
        %v6498 = vld [vmem:[%s6279 + $0x6d0] sm:$0xff]
        %v6499 = vld [vmem:[%s6279 + $0x6d8] sm:$0xff]
        %v6500 = vld [vmem:[%s6279 + $0x6e0] sm:$0xff]
        %v6501 = vld [vmem:[%s6279 + $0x6e8] sm:$0xff]
        %v6502 = vld [vmem:[%s6279 + $0x6f0] sm:$0xff]
        %v6503 = vld [vmem:[%s6279 + $0x6f8] sm:$0xff]
        %v6504 = vld [vmem:[%s6279 + $0x700] sm:$0xff]
        %v6505 = vld [vmem:[%s6279 + $0x708] sm:$0xff]
        %v6506 = vld [vmem:[%s6279 + $0x710] sm:$0xff]
        %v6507 = vld [vmem:[%s6279 + $0x718] sm:$0xff]
        %v6508 = vld [vmem:[%s6279 + $0x720] sm:$0xff]
        %v6509 = vld [vmem:[%s6279 + $0x728] sm:$0xff]
        %v6510 = vld [vmem:[%s6279 + $0x730] sm:$0xff]
        %v6511 = vld [vmem:[%s6279 + $0x738] sm:$0xff]
        %v6512 = vld [vmem:[%s6279 + $0x740] sm:$0xff]
        %v6513 = vld [vmem:[%s6279 + $0x748] sm:$0xff]
        %v6514 = vld [vmem:[%s6279 + $0x750] sm:$0xff]
        %v6515 = vld [vmem:[%s6279 + $0x758] sm:$0xff]
        %v6516 = vld [vmem:[%s6279 + $0x760] sm:$0xff]
        %v6517 = vld [vmem:[%s6279 + $0x768] sm:$0xff]
        %v6518 = vld [vmem:[%s6279 + $0x770] sm:$0xff]
        %v6519 = vld [vmem:[%s6279 + $0x778] sm:$0xff]
        %v6520 = vld [vmem:[%s6279 + $0x780] sm:$0xff]
        %v6521 = vld [vmem:[%s6279 + $0x788] sm:$0xff]
        %v6522 = vld [vmem:[%s6279 + $0x790] sm:$0xff]
        %v6523 = vld [vmem:[%s6279 + $0x798] sm:$0xff]
        %v6524 = vld [vmem:[%s6279 + $0x7a0] sm:$0xff]
        %v6525 = vld [vmem:[%s6279 + $0x7a8] sm:$0xff]
        %v6526 = vld [vmem:[%s6279 + $0x7b0] sm:$0xff]
        %v6527 = vld [vmem:[%s6279 + $0x7b8] sm:$0xff]
        %v6528 = vld [vmem:[%s6279 + $0x7c0] sm:$0xff]
        %v6529 = vld [vmem:[%s6279 + $0x7c8] sm:$0xff]
        %v6530 = vld [vmem:[%s6279 + $0x7d0] sm:$0xff]
        %v6531 = vld [vmem:[%s6279 + $0x7d8] sm:$0xff]
        %v6532 = vld [vmem:[%s6279 + $0x7e0] sm:$0xff]
        %v6533 = vld [vmem:[%s6279 + $0x7e8] sm:$0xff]
        %v6534 = vld [vmem:[%s6279 + $0x7f0] sm:$0xff]
        %v6535 = vld [vmem:[%s6279 + $0x7f8] sm:$0xff]
        %v6540 = vunpack.c.l.b16 %v6275
        %v6541 = vunpack.c.h.b16 %v6275
        %v6542 = vunpack.c.l.b16 %v6276
        %v6543 = vunpack.c.h.b16 %v6276
        %v6544 = vunpack.c.l.b16 %v6277
        %v6545 = vunpack.c.h.b16 %v6277
        %v6546 = vunpack.c.l.b16 %v6278
        %v6547 = vunpack.c.h.b16 %v6278
        %v6548 = vpack.c.b16 %v6540, %v6540
        %v6549 = vpack.c.b16 %v6541, %v6541
        %v6550 = vpack.c.b16 %v6542, %v6542
        %v6551 = vpack.c.b16 %v6543, %v6543
        %v6552 = vpack.c.b16 %v6544, %v6544
        %v6553 = vpack.c.b16 %v6545, %v6545
        %v6554 = vpack.c.b16 %v6546, %v6546
        %v6555 = vpack.c.b16 %v6547, %v6547
        %v6556 = vrot.slane %v6548, 2
        %v6557 = vrot.slane %v6549, 2
        %v6558 = vrot.slane %v6550, 2
        %v6559 = vrot.slane %v6551, 2
        %v6560 = vrot.slane %v6552, 2
        %v6561 = vrot.slane %v6553, 2
        %v6562 = vrot.slane %v6554, 2
        %v6563 = vrot.slane %v6555, 2
        %v6828 = vunpack.c.l.b16 %v6280
        %v6829 = vunpack.c.h.b16 %v6280
        %v6830 = vunpack.c.l.b16 %v6281
        %v6831 = vunpack.c.h.b16 %v6281
        %v6832 = vunpack.c.l.b16 %v6282
        %v6833 = vunpack.c.h.b16 %v6282
        %v6834 = vunpack.c.l.b16 %v6283
        %v6835 = vunpack.c.h.b16 %v6283
        %v6836 = vunpack.c.l.b16 %v6284
        %v6837 = vunpack.c.h.b16 %v6284
        %v6838 = vunpack.c.l.b16 %v6285
        %v6839 = vunpack.c.h.b16 %v6285
        %v6840 = vunpack.c.l.b16 %v6286
        %v6841 = vunpack.c.h.b16 %v6286
        %v6842 = vunpack.c.l.b16 %v6287
        %v6843 = vunpack.c.h.b16 %v6287
        %v6844 = vunpack.c.l.b16 %v6288
        %v6845 = vunpack.c.h.b16 %v6288
        %v6846 = vunpack.c.l.b16 %v6289
        %v6847 = vunpack.c.h.b16 %v6289
        %v6848 = vunpack.c.l.b16 %v6290
        %v6849 = vunpack.c.h.b16 %v6290
        %v6850 = vunpack.c.l.b16 %v6291
        %v6851 = vunpack.c.h.b16 %v6291
        %v6852 = vunpack.c.l.b16 %v6292
        %v6853 = vunpack.c.h.b16 %v6292
        %v6854 = vunpack.c.l.b16 %v6293
        %v6855 = vunpack.c.h.b16 %v6293
        %v6856 = vunpack.c.l.b16 %v6294
        %v6857 = vunpack.c.h.b16 %v6294
        %v6858 = vunpack.c.l.b16 %v6295
        %v6859 = vunpack.c.h.b16 %v6295
        %v6860 = vunpack.c.l.b16 %v6296
        %v6861 = vunpack.c.h.b16 %v6296
        %v6862 = vunpack.c.l.b16 %v6297
        %v6863 = vunpack.c.h.b16 %v6297
        %v6864 = vunpack.c.l.b16 %v6298
        %v6865 = vunpack.c.h.b16 %v6298
        %v6866 = vunpack.c.l.b16 %v6299
        %v6867 = vunpack.c.h.b16 %v6299
        %v6868 = vunpack.c.l.b16 %v6300
        %v6869 = vunpack.c.h.b16 %v6300
        %v6870 = vunpack.c.l.b16 %v6301
        %v6871 = vunpack.c.h.b16 %v6301
        %v6872 = vunpack.c.l.b16 %v6302
        %v6873 = vunpack.c.h.b16 %v6302
        %v6874 = vunpack.c.l.b16 %v6303
        %v6875 = vunpack.c.h.b16 %v6303
        %v6876 = vunpack.c.l.b16 %v6304
        %v6877 = vunpack.c.h.b16 %v6304
        %v6878 = vunpack.c.l.b16 %v6305
        %v6879 = vunpack.c.h.b16 %v6305
        %v6880 = vunpack.c.l.b16 %v6306
        %v6881 = vunpack.c.h.b16 %v6306
        %v6882 = vunpack.c.l.b16 %v6307
        %v6883 = vunpack.c.h.b16 %v6307
        %v6884 = vunpack.c.l.b16 %v6308
        %v6885 = vunpack.c.h.b16 %v6308
        %v6886 = vunpack.c.l.b16 %v6309
        %v6887 = vunpack.c.h.b16 %v6309
        %v6888 = vunpack.c.l.b16 %v6310
        %v6889 = vunpack.c.h.b16 %v6310
        %v6890 = vunpack.c.l.b16 %v6311
        %v6891 = vunpack.c.h.b16 %v6311
        %v6892 = vunpack.c.l.b16 %v6312
        %v6893 = vunpack.c.h.b16 %v6312
        %v6894 = vunpack.c.l.b16 %v6313
        %v6895 = vunpack.c.h.b16 %v6313
        %v6896 = vunpack.c.l.b16 %v6314
        %v6897 = vunpack.c.h.b16 %v6314
        %v6898 = vunpack.c.l.b16 %v6315
        %v6899 = vunpack.c.h.b16 %v6315
        %v6900 = vunpack.c.l.b16 %v6316
        %v6901 = vunpack.c.h.b16 %v6316
        %v6902 = vunpack.c.l.b16 %v6317
        %v6903 = vunpack.c.h.b16 %v6317
        %v6904 = vunpack.c.l.b16 %v6318
        %v6905 = vunpack.c.h.b16 %v6318
        %v6906 = vunpack.c.l.b16 %v6319
        %v6907 = vunpack.c.h.b16 %v6319
        %v6908 = vunpack.c.l.b16 %v6320
        %v6909 = vunpack.c.h.b16 %v6320
        %v6910 = vunpack.c.l.b16 %v6321
        %v6911 = vunpack.c.h.b16 %v6321
        %v6912 = vunpack.c.l.b16 %v6322
        %v6913 = vunpack.c.h.b16 %v6322
        %v6914 = vunpack.c.l.b16 %v6323
        %v6915 = vunpack.c.h.b16 %v6323
        %v6916 = vunpack.c.l.b16 %v6324
        %v6917 = vunpack.c.h.b16 %v6324
        %v6918 = vunpack.c.l.b16 %v6325
        %v6919 = vunpack.c.h.b16 %v6325
        %v6920 = vunpack.c.l.b16 %v6326
        %v6921 = vunpack.c.h.b16 %v6326
        %v6922 = vunpack.c.l.b16 %v6327
        %v6923 = vunpack.c.h.b16 %v6327
        %v6924 = vunpack.c.l.b16 %v6328
        %v6925 = vunpack.c.h.b16 %v6328
        %v6926 = vunpack.c.l.b16 %v6329
        %v6927 = vunpack.c.h.b16 %v6329
        %v6928 = vunpack.c.l.b16 %v6330
        %v6929 = vunpack.c.h.b16 %v6330
        %v6930 = vunpack.c.l.b16 %v6331
        %v6931 = vunpack.c.h.b16 %v6331
        %v6932 = vunpack.c.l.b16 %v6332
        %v6933 = vunpack.c.h.b16 %v6332
        %v6934 = vunpack.c.l.b16 %v6333
        %v6935 = vunpack.c.h.b16 %v6333
        %v6936 = vunpack.c.l.b16 %v6334
        %v6937 = vunpack.c.h.b16 %v6334
        %v6938 = vunpack.c.l.b16 %v6335
        %v6939 = vunpack.c.h.b16 %v6335
        %v6940 = vunpack.c.l.b16 %v6336
        %v6941 = vunpack.c.h.b16 %v6336
        %v6942 = vunpack.c.l.b16 %v6337
        %v6943 = vunpack.c.h.b16 %v6337
        %v6944 = vunpack.c.l.b16 %v6338
        %v6945 = vunpack.c.h.b16 %v6338
        %v6946 = vunpack.c.l.b16 %v6339
        %v6947 = vunpack.c.h.b16 %v6339
        %v6948 = vunpack.c.l.b16 %v6340
        %v6949 = vunpack.c.h.b16 %v6340
        %v6950 = vunpack.c.l.b16 %v6341
        %v6951 = vunpack.c.h.b16 %v6341
        %v6952 = vunpack.c.l.b16 %v6342
        %v6953 = vunpack.c.h.b16 %v6342
        %v6954 = vunpack.c.l.b16 %v6343
        %v6955 = vunpack.c.h.b16 %v6343
        %v6956 = vunpack.c.l.b16 %v6344
        %v6957 = vunpack.c.h.b16 %v6344
        %v6958 = vunpack.c.l.b16 %v6345
        %v6959 = vunpack.c.h.b16 %v6345
        %v6960 = vunpack.c.l.b16 %v6346
        %v6961 = vunpack.c.h.b16 %v6346
        %v6962 = vunpack.c.l.b16 %v6347
        %v6963 = vunpack.c.h.b16 %v6347
        %v6964 = vunpack.c.l.b16 %v6348
        %v6965 = vunpack.c.h.b16 %v6348
        %v6966 = vunpack.c.l.b16 %v6349
        %v6967 = vunpack.c.h.b16 %v6349
        %v6968 = vunpack.c.l.b16 %v6350
        %v6969 = vunpack.c.h.b16 %v6350
        %v6970 = vunpack.c.l.b16 %v6351
        %v6971 = vunpack.c.h.b16 %v6351
        %v6972 = vunpack.c.l.b16 %v6352
        %v6973 = vunpack.c.h.b16 %v6352
        %v6974 = vunpack.c.l.b16 %v6353
        %v6975 = vunpack.c.h.b16 %v6353
        %v6976 = vunpack.c.l.b16 %v6354
        %v6977 = vunpack.c.h.b16 %v6354
        %v6978 = vunpack.c.l.b16 %v6355
        %v6979 = vunpack.c.h.b16 %v6355
        %v6980 = vunpack.c.l.b16 %v6356
        %v6981 = vunpack.c.h.b16 %v6356
        %v6982 = vunpack.c.l.b16 %v6357
        %v6983 = vunpack.c.h.b16 %v6357
        %v6984 = vunpack.c.l.b16 %v6358
        %v6985 = vunpack.c.h.b16 %v6358
        %v6986 = vunpack.c.l.b16 %v6359
        %v6987 = vunpack.c.h.b16 %v6359
        %v6988 = vunpack.c.l.b16 %v6360
        %v6989 = vunpack.c.h.b16 %v6360
        %v6990 = vunpack.c.l.b16 %v6361
        %v6991 = vunpack.c.h.b16 %v6361
        %v6992 = vunpack.c.l.b16 %v6362
        %v6993 = vunpack.c.h.b16 %v6362
        %v6994 = vunpack.c.l.b16 %v6363
        %v6995 = vunpack.c.h.b16 %v6363
        %v6996 = vunpack.c.l.b16 %v6364
        %v6997 = vunpack.c.h.b16 %v6364
        %v6998 = vunpack.c.l.b16 %v6365
        %v6999 = vunpack.c.h.b16 %v6365
        %v7000 = vunpack.c.l.b16 %v6366
        %v7001 = vunpack.c.h.b16 %v6366
        %v7002 = vunpack.c.l.b16 %v6367
        %v7003 = vunpack.c.h.b16 %v6367
        %v7004 = vunpack.c.l.b16 %v6368
        %v7005 = vunpack.c.h.b16 %v6368
        %v7006 = vunpack.c.l.b16 %v6369
        %v7007 = vunpack.c.h.b16 %v6369
        %v7008 = vunpack.c.l.b16 %v6370
        %v7009 = vunpack.c.h.b16 %v6370
        %v7010 = vunpack.c.l.b16 %v6371
        %v7011 = vunpack.c.h.b16 %v6371
        %v7012 = vunpack.c.l.b16 %v6372
        %v7013 = vunpack.c.h.b16 %v6372
        %v7014 = vunpack.c.l.b16 %v6373
        %v7015 = vunpack.c.h.b16 %v6373
        %v7016 = vunpack.c.l.b16 %v6374
        %v7017 = vunpack.c.h.b16 %v6374
        %v7018 = vunpack.c.l.b16 %v6375
        %v7019 = vunpack.c.h.b16 %v6375
        %v7020 = vunpack.c.l.b16 %v6376
        %v7021 = vunpack.c.h.b16 %v6376
        %v7022 = vunpack.c.l.b16 %v6377
        %v7023 = vunpack.c.h.b16 %v6377
        %v7024 = vunpack.c.l.b16 %v6378
        %v7025 = vunpack.c.h.b16 %v6378
        %v7026 = vunpack.c.l.b16 %v6379
        %v7027 = vunpack.c.h.b16 %v6379
        %v7028 = vunpack.c.l.b16 %v6380
        %v7029 = vunpack.c.h.b16 %v6380
        %v7030 = vunpack.c.l.b16 %v6381
        %v7031 = vunpack.c.h.b16 %v6381
        %v7032 = vunpack.c.l.b16 %v6382
        %v7033 = vunpack.c.h.b16 %v6382
        %v7034 = vunpack.c.l.b16 %v6383
        %v7035 = vunpack.c.h.b16 %v6383
        %v7036 = vunpack.c.l.b16 %v6384
        %v7037 = vunpack.c.h.b16 %v6384
        %v7038 = vunpack.c.l.b16 %v6385
        %v7039 = vunpack.c.h.b16 %v6385
        %v7040 = vunpack.c.l.b16 %v6386
        %v7041 = vunpack.c.h.b16 %v6386
        %v7042 = vunpack.c.l.b16 %v6387
        %v7043 = vunpack.c.h.b16 %v6387
        %v7044 = vunpack.c.l.b16 %v6388
        %v7045 = vunpack.c.h.b16 %v6388
        %v7046 = vunpack.c.l.b16 %v6389
        %v7047 = vunpack.c.h.b16 %v6389
        %v7048 = vunpack.c.l.b16 %v6390
        %v7049 = vunpack.c.h.b16 %v6390
        %v7050 = vunpack.c.l.b16 %v6391
        %v7051 = vunpack.c.h.b16 %v6391
        %v7052 = vunpack.c.l.b16 %v6392
        %v7053 = vunpack.c.h.b16 %v6392
        %v7054 = vunpack.c.l.b16 %v6393
        %v7055 = vunpack.c.h.b16 %v6393
        %v7056 = vunpack.c.l.b16 %v6394
        %v7057 = vunpack.c.h.b16 %v6394
        %v7058 = vunpack.c.l.b16 %v6395
        %v7059 = vunpack.c.h.b16 %v6395
        %v7060 = vunpack.c.l.b16 %v6396
        %v7061 = vunpack.c.h.b16 %v6396
        %v7062 = vunpack.c.l.b16 %v6397
        %v7063 = vunpack.c.h.b16 %v6397
        %v7064 = vunpack.c.l.b16 %v6398
        %v7065 = vunpack.c.h.b16 %v6398
        %v7066 = vunpack.c.l.b16 %v6399
        %v7067 = vunpack.c.h.b16 %v6399
        %v7068 = vunpack.c.l.b16 %v6400
        %v7069 = vunpack.c.h.b16 %v6400
        %v7070 = vunpack.c.l.b16 %v6401
        %v7071 = vunpack.c.h.b16 %v6401
        %v7072 = vunpack.c.l.b16 %v6402
        %v7073 = vunpack.c.h.b16 %v6402
        %v7074 = vunpack.c.l.b16 %v6403
        %v7075 = vunpack.c.h.b16 %v6403
        %v7076 = vunpack.c.l.b16 %v6404
        %v7077 = vunpack.c.h.b16 %v6404
        %v7078 = vunpack.c.l.b16 %v6405
        %v7079 = vunpack.c.h.b16 %v6405
        %v7080 = vunpack.c.l.b16 %v6406
        %v7081 = vunpack.c.h.b16 %v6406
        %v7082 = vunpack.c.l.b16 %v6407
        %v7083 = vunpack.c.h.b16 %v6407
        %v7084 = vunpack.c.l.b16 %v6408
        %v7085 = vunpack.c.h.b16 %v6408
        %v7086 = vunpack.c.l.b16 %v6409
        %v7087 = vunpack.c.h.b16 %v6409
        %v7088 = vunpack.c.l.b16 %v6410
        %v7089 = vunpack.c.h.b16 %v6410
        %v7090 = vunpack.c.l.b16 %v6411
        %v7091 = vunpack.c.h.b16 %v6411
        %v7092 = vunpack.c.l.b16 %v6412
        %v7093 = vunpack.c.h.b16 %v6412
        %v7094 = vunpack.c.l.b16 %v6413
        %v7095 = vunpack.c.h.b16 %v6413
        %v7096 = vunpack.c.l.b16 %v6414
        %v7097 = vunpack.c.h.b16 %v6414
        %v7098 = vunpack.c.l.b16 %v6415
        %v7099 = vunpack.c.h.b16 %v6415
        %v7100 = vunpack.c.l.b16 %v6416
        %v7101 = vunpack.c.h.b16 %v6416
        %v7102 = vunpack.c.l.b16 %v6417
        %v7103 = vunpack.c.h.b16 %v6417
        %v7104 = vunpack.c.l.b16 %v6418
        %v7105 = vunpack.c.h.b16 %v6418
        %v7106 = vunpack.c.l.b16 %v6419
        %v7107 = vunpack.c.h.b16 %v6419
        %v7108 = vunpack.c.l.b16 %v6420
        %v7109 = vunpack.c.h.b16 %v6420
        %v7110 = vunpack.c.l.b16 %v6421
        %v7111 = vunpack.c.h.b16 %v6421
        %v7112 = vunpack.c.l.b16 %v6422
        %v7113 = vunpack.c.h.b16 %v6422
        %v7114 = vunpack.c.l.b16 %v6423
        %v7115 = vunpack.c.h.b16 %v6423
        %v7116 = vunpack.c.l.b16 %v6424
        %v7117 = vunpack.c.h.b16 %v6424
        %v7118 = vunpack.c.l.b16 %v6425
        %v7119 = vunpack.c.h.b16 %v6425
        %v7120 = vunpack.c.l.b16 %v6426
        %v7121 = vunpack.c.h.b16 %v6426
        %v7122 = vunpack.c.l.b16 %v6427
        %v7123 = vunpack.c.h.b16 %v6427
        %v7124 = vunpack.c.l.b16 %v6428
        %v7125 = vunpack.c.h.b16 %v6428
        %v7126 = vunpack.c.l.b16 %v6429
        %v7127 = vunpack.c.h.b16 %v6429
        %v7128 = vunpack.c.l.b16 %v6430
        %v7129 = vunpack.c.h.b16 %v6430
        %v7130 = vunpack.c.l.b16 %v6431
        %v7131 = vunpack.c.h.b16 %v6431
        %v7132 = vunpack.c.l.b16 %v6432
        %v7133 = vunpack.c.h.b16 %v6432
        %v7134 = vunpack.c.l.b16 %v6433
        %v7135 = vunpack.c.h.b16 %v6433
        %v7136 = vunpack.c.l.b16 %v6434
        %v7137 = vunpack.c.h.b16 %v6434
        %v7138 = vunpack.c.l.b16 %v6435
        %v7139 = vunpack.c.h.b16 %v6435
        %v7140 = vunpack.c.l.b16 %v6436
        %v7141 = vunpack.c.h.b16 %v6436
        %v7142 = vunpack.c.l.b16 %v6437
        %v7143 = vunpack.c.h.b16 %v6437
        %v7144 = vunpack.c.l.b16 %v6438
        %v7145 = vunpack.c.h.b16 %v6438
        %v7146 = vunpack.c.l.b16 %v6439
        %v7147 = vunpack.c.h.b16 %v6439
        %v7148 = vunpack.c.l.b16 %v6440
        %v7149 = vunpack.c.h.b16 %v6440
        %v7150 = vunpack.c.l.b16 %v6441
        %v7151 = vunpack.c.h.b16 %v6441
        %v7152 = vunpack.c.l.b16 %v6442
        %v7153 = vunpack.c.h.b16 %v6442
        %v7154 = vunpack.c.l.b16 %v6443
        %v7155 = vunpack.c.h.b16 %v6443
        %v7156 = vunpack.c.l.b16 %v6444
        %v7157 = vunpack.c.h.b16 %v6444
        %v7158 = vunpack.c.l.b16 %v6445
        %v7159 = vunpack.c.h.b16 %v6445
        %v7160 = vunpack.c.l.b16 %v6446
        %v7161 = vunpack.c.h.b16 %v6446
        %v7162 = vunpack.c.l.b16 %v6447
        %v7163 = vunpack.c.h.b16 %v6447
        %v7164 = vunpack.c.l.b16 %v6448
        %v7165 = vunpack.c.h.b16 %v6448
        %v7166 = vunpack.c.l.b16 %v6449
        %v7167 = vunpack.c.h.b16 %v6449
        %v7168 = vunpack.c.l.b16 %v6450
        %v7169 = vunpack.c.h.b16 %v6450
        %v7170 = vunpack.c.l.b16 %v6451
        %v7171 = vunpack.c.h.b16 %v6451
        %v7172 = vunpack.c.l.b16 %v6452
        %v7173 = vunpack.c.h.b16 %v6452
        %v7174 = vunpack.c.l.b16 %v6453
        %v7175 = vunpack.c.h.b16 %v6453
        %v7176 = vunpack.c.l.b16 %v6454
        %v7177 = vunpack.c.h.b16 %v6454
        %v7178 = vunpack.c.l.b16 %v6455
        %v7179 = vunpack.c.h.b16 %v6455
        %v7180 = vunpack.c.l.b16 %v6456
        %v7181 = vunpack.c.h.b16 %v6456
        %v7182 = vunpack.c.l.b16 %v6457
        %v7183 = vunpack.c.h.b16 %v6457
        %v7184 = vunpack.c.l.b16 %v6458
        %v7185 = vunpack.c.h.b16 %v6458
        %v7186 = vunpack.c.l.b16 %v6459
        %v7187 = vunpack.c.h.b16 %v6459
        %v7188 = vunpack.c.l.b16 %v6460
        %v7189 = vunpack.c.h.b16 %v6460
        %v7190 = vunpack.c.l.b16 %v6461
        %v7191 = vunpack.c.h.b16 %v6461
        %v7192 = vunpack.c.l.b16 %v6462
        %v7193 = vunpack.c.h.b16 %v6462
        %v7194 = vunpack.c.l.b16 %v6463
        %v7195 = vunpack.c.h.b16 %v6463
        %v7196 = vunpack.c.l.b16 %v6464
        %v7197 = vunpack.c.h.b16 %v6464
        %v7198 = vunpack.c.l.b16 %v6465
        %v7199 = vunpack.c.h.b16 %v6465
        %v7200 = vunpack.c.l.b16 %v6466
        %v7201 = vunpack.c.h.b16 %v6466
        %v7202 = vunpack.c.l.b16 %v6467
        %v7203 = vunpack.c.h.b16 %v6467
        %v7204 = vunpack.c.l.b16 %v6468
        %v7205 = vunpack.c.h.b16 %v6468
        %v7206 = vunpack.c.l.b16 %v6469
        %v7207 = vunpack.c.h.b16 %v6469
        %v7208 = vunpack.c.l.b16 %v6470
        %v7209 = vunpack.c.h.b16 %v6470
        %v7210 = vunpack.c.l.b16 %v6471
        %v7211 = vunpack.c.h.b16 %v6471
        %v7212 = vunpack.c.l.b16 %v6472
        %v7213 = vunpack.c.h.b16 %v6472
        %v7214 = vunpack.c.l.b16 %v6473
        %v7215 = vunpack.c.h.b16 %v6473
        %v7216 = vunpack.c.l.b16 %v6474
        %v7217 = vunpack.c.h.b16 %v6474
        %v7218 = vunpack.c.l.b16 %v6475
        %v7219 = vunpack.c.h.b16 %v6475
        %v7220 = vunpack.c.l.b16 %v6476
        %v7221 = vunpack.c.h.b16 %v6476
        %v7222 = vunpack.c.l.b16 %v6477
        %v7223 = vunpack.c.h.b16 %v6477
        %v7224 = vunpack.c.l.b16 %v6478
        %v7225 = vunpack.c.h.b16 %v6478
        %v7226 = vunpack.c.l.b16 %v6479
        %v7227 = vunpack.c.h.b16 %v6479
        %v7228 = vunpack.c.l.b16 %v6480
        %v7229 = vunpack.c.h.b16 %v6480
        %v7230 = vunpack.c.l.b16 %v6481
        %v7231 = vunpack.c.h.b16 %v6481
        %v7232 = vunpack.c.l.b16 %v6482
        %v7233 = vunpack.c.h.b16 %v6482
        %v7234 = vunpack.c.l.b16 %v6483
        %v7235 = vunpack.c.h.b16 %v6483
        %v7236 = vunpack.c.l.b16 %v6484
        %v7237 = vunpack.c.h.b16 %v6484
        %v7238 = vunpack.c.l.b16 %v6485
        %v7239 = vunpack.c.h.b16 %v6485
        %v7240 = vunpack.c.l.b16 %v6486
        %v7241 = vunpack.c.h.b16 %v6486
        %v7242 = vunpack.c.l.b16 %v6487
        %v7243 = vunpack.c.h.b16 %v6487
        %v7244 = vunpack.c.l.b16 %v6488
        %v7245 = vunpack.c.h.b16 %v6488
        %v7246 = vunpack.c.l.b16 %v6489
        %v7247 = vunpack.c.h.b16 %v6489
        %v7248 = vunpack.c.l.b16 %v6490
        %v7249 = vunpack.c.h.b16 %v6490
        %v7250 = vunpack.c.l.b16 %v6491
        %v7251 = vunpack.c.h.b16 %v6491
        %v7252 = vunpack.c.l.b16 %v6492
        %v7253 = vunpack.c.h.b16 %v6492
        %v7254 = vunpack.c.l.b16 %v6493
        %v7255 = vunpack.c.h.b16 %v6493
        %v7256 = vunpack.c.l.b16 %v6494
        %v7257 = vunpack.c.h.b16 %v6494
        %v7258 = vunpack.c.l.b16 %v6495
        %v7259 = vunpack.c.h.b16 %v6495
        %v7260 = vunpack.c.l.b16 %v6496
        %v7261 = vunpack.c.h.b16 %v6496
        %v7262 = vunpack.c.l.b16 %v6497
        %v7263 = vunpack.c.h.b16 %v6497
        %v7264 = vunpack.c.l.b16 %v6498
        %v7265 = vunpack.c.h.b16 %v6498
        %v7266 = vunpack.c.l.b16 %v6499
        %v7267 = vunpack.c.h.b16 %v6499
        %v7268 = vunpack.c.l.b16 %v6500
        %v7269 = vunpack.c.h.b16 %v6500
        %v7270 = vunpack.c.l.b16 %v6501
        %v7271 = vunpack.c.h.b16 %v6501
        %v7272 = vunpack.c.l.b16 %v6502
        %v7273 = vunpack.c.h.b16 %v6502
        %v7274 = vunpack.c.l.b16 %v6503
        %v7275 = vunpack.c.h.b16 %v6503
        %v7276 = vunpack.c.l.b16 %v6504
        %v7277 = vunpack.c.h.b16 %v6504
        %v7278 = vunpack.c.l.b16 %v6505
        %v7279 = vunpack.c.h.b16 %v6505
        %v7280 = vunpack.c.l.b16 %v6506
        %v7281 = vunpack.c.h.b16 %v6506
        %v7282 = vunpack.c.l.b16 %v6507
        %v7283 = vunpack.c.h.b16 %v6507
        %v7284 = vunpack.c.l.b16 %v6508
        %v7285 = vunpack.c.h.b16 %v6508
        %v7286 = vunpack.c.l.b16 %v6509
        %v7287 = vunpack.c.h.b16 %v6509
        %v7288 = vunpack.c.l.b16 %v6510
        %v7289 = vunpack.c.h.b16 %v6510
        %v7290 = vunpack.c.l.b16 %v6511
        %v7291 = vunpack.c.h.b16 %v6511
        %v7292 = vunpack.c.l.b16 %v6512
        %v7293 = vunpack.c.h.b16 %v6512
        %v7294 = vunpack.c.l.b16 %v6513
        %v7295 = vunpack.c.h.b16 %v6513
        %v7296 = vunpack.c.l.b16 %v6514
        %v7297 = vunpack.c.h.b16 %v6514
        %v7298 = vunpack.c.l.b16 %v6515
        %v7299 = vunpack.c.h.b16 %v6515
        %v7300 = vunpack.c.l.b16 %v6516
        %v7301 = vunpack.c.h.b16 %v6516
        %v7302 = vunpack.c.l.b16 %v6517
        %v7303 = vunpack.c.h.b16 %v6517
        %v7304 = vunpack.c.l.b16 %v6518
        %v7305 = vunpack.c.h.b16 %v6518
        %v7306 = vunpack.c.l.b16 %v6519
        %v7307 = vunpack.c.h.b16 %v6519
        %v7308 = vunpack.c.l.b16 %v6520
        %v7309 = vunpack.c.h.b16 %v6520
        %v7310 = vunpack.c.l.b16 %v6521
        %v7311 = vunpack.c.h.b16 %v6521
        %v7312 = vunpack.c.l.b16 %v6522
        %v7313 = vunpack.c.h.b16 %v6522
        %v7314 = vunpack.c.l.b16 %v6523
        %v7315 = vunpack.c.h.b16 %v6523
        %v7316 = vunpack.c.l.b16 %v6524
        %v7317 = vunpack.c.h.b16 %v6524
        %v7318 = vunpack.c.l.b16 %v6525
        %v7319 = vunpack.c.h.b16 %v6525
        %v7320 = vunpack.c.l.b16 %v6526
        %v7321 = vunpack.c.h.b16 %v6526
        %v7322 = vunpack.c.l.b16 %v6527
        %v7323 = vunpack.c.h.b16 %v6527
        %v7324 = vunpack.c.l.b16 %v6528
        %v7325 = vunpack.c.h.b16 %v6528
        %v7326 = vunpack.c.l.b16 %v6529
        %v7327 = vunpack.c.h.b16 %v6529
        %v7328 = vunpack.c.l.b16 %v6530
        %v7329 = vunpack.c.h.b16 %v6530
        %v7330 = vunpack.c.l.b16 %v6531
        %v7331 = vunpack.c.h.b16 %v6531
        %v7332 = vunpack.c.l.b16 %v6532
        %v7333 = vunpack.c.h.b16 %v6532
        %v7334 = vunpack.c.l.b16 %v6533
        %v7335 = vunpack.c.h.b16 %v6533
        %v7336 = vunpack.c.l.b16 %v6534
        %v7337 = vunpack.c.h.b16 %v6534
        %v7338 = vunpack.c.l.b16 %v6535
        %v7339 = vunpack.c.h.b16 %v6535
        %v7340 = vpack.c.b16 %v6832, %v6828
        %v7341 = vpack.c.b16 %v6833, %v6829
        %v7342 = vpack.c.b16 %v6834, %v6830
        %v7343 = vpack.c.b16 %v6835, %v6831
        %v7344 = vpack.c.b16 %v6840, %v6836
        %v7345 = vpack.c.b16 %v6841, %v6837
        %v7346 = vpack.c.b16 %v6842, %v6838
        %v7347 = vpack.c.b16 %v6843, %v6839
        %v7348 = vpack.c.b16 %v6848, %v6844
        %v7349 = vpack.c.b16 %v6849, %v6845
        %v7350 = vpack.c.b16 %v6850, %v6846
        %v7351 = vpack.c.b16 %v6851, %v6847
        %v7352 = vpack.c.b16 %v6856, %v6852
        %v7353 = vpack.c.b16 %v6857, %v6853
        %v7354 = vpack.c.b16 %v6858, %v6854
        %v7355 = vpack.c.b16 %v6859, %v6855
        %v7356 = vpack.c.b16 %v6864, %v6860
        %v7357 = vpack.c.b16 %v6865, %v6861
        %v7358 = vpack.c.b16 %v6866, %v6862
        %v7359 = vpack.c.b16 %v6867, %v6863
        %v7360 = vpack.c.b16 %v6872, %v6868
        %v7361 = vpack.c.b16 %v6873, %v6869
        %v7362 = vpack.c.b16 %v6874, %v6870
        %v7363 = vpack.c.b16 %v6875, %v6871
        %v7364 = vpack.c.b16 %v6880, %v6876
        %v7365 = vpack.c.b16 %v6881, %v6877
        %v7366 = vpack.c.b16 %v6882, %v6878
        %v7367 = vpack.c.b16 %v6883, %v6879
        %v7368 = vpack.c.b16 %v6888, %v6884
        %v7369 = vpack.c.b16 %v6889, %v6885
        %v7370 = vpack.c.b16 %v6890, %v6886
        %v7371 = vpack.c.b16 %v6891, %v6887
        %v7372 = vpack.c.b16 %v6896, %v6892
        %v7373 = vpack.c.b16 %v6897, %v6893
        %v7374 = vpack.c.b16 %v6898, %v6894
        %v7375 = vpack.c.b16 %v6899, %v6895
        %v7376 = vpack.c.b16 %v6904, %v6900
        %v7377 = vpack.c.b16 %v6905, %v6901
        %v7378 = vpack.c.b16 %v6906, %v6902
        %v7379 = vpack.c.b16 %v6907, %v6903
        %v7380 = vpack.c.b16 %v6912, %v6908
        %v7381 = vpack.c.b16 %v6913, %v6909
        %v7382 = vpack.c.b16 %v6914, %v6910
        %v7383 = vpack.c.b16 %v6915, %v6911
        %v7384 = vpack.c.b16 %v6920, %v6916
        %v7385 = vpack.c.b16 %v6921, %v6917
        %v7386 = vpack.c.b16 %v6922, %v6918
        %v7387 = vpack.c.b16 %v6923, %v6919
        %v7388 = vpack.c.b16 %v6928, %v6924
        %v7389 = vpack.c.b16 %v6929, %v6925
        %v7390 = vpack.c.b16 %v6930, %v6926
        %v7391 = vpack.c.b16 %v6931, %v6927
        %v7392 = vpack.c.b16 %v6936, %v6932
        %v7393 = vpack.c.b16 %v6937, %v6933
        %v7394 = vpack.c.b16 %v6938, %v6934
        %v7395 = vpack.c.b16 %v6939, %v6935
        %v7396 = vpack.c.b16 %v6944, %v6940
        %v7397 = vpack.c.b16 %v6945, %v6941
        %v7398 = vpack.c.b16 %v6946, %v6942
        %v7399 = vpack.c.b16 %v6947, %v6943
        %v7400 = vpack.c.b16 %v6952, %v6948
        %v7401 = vpack.c.b16 %v6953, %v6949
        %v7402 = vpack.c.b16 %v6954, %v6950
        %v7403 = vpack.c.b16 %v6955, %v6951
        %v7404 = vpack.c.b16 %v6960, %v6956
        %v7405 = vpack.c.b16 %v6961, %v6957
        %v7406 = vpack.c.b16 %v6962, %v6958
        %v7407 = vpack.c.b16 %v6963, %v6959
        %v7408 = vpack.c.b16 %v6968, %v6964
        %v7409 = vpack.c.b16 %v6969, %v6965
        %v7410 = vpack.c.b16 %v6970, %v6966
        %v7411 = vpack.c.b16 %v6971, %v6967
        %v7412 = vpack.c.b16 %v6976, %v6972
        %v7413 = vpack.c.b16 %v6977, %v6973
        %v7414 = vpack.c.b16 %v6978, %v6974
        %v7415 = vpack.c.b16 %v6979, %v6975
        %v7416 = vpack.c.b16 %v6984, %v6980
        %v7417 = vpack.c.b16 %v6985, %v6981
        %v7418 = vpack.c.b16 %v6986, %v6982
        %v7419 = vpack.c.b16 %v6987, %v6983
        %v7420 = vpack.c.b16 %v6992, %v6988
        %v7421 = vpack.c.b16 %v6993, %v6989
        %v7422 = vpack.c.b16 %v6994, %v6990
        %v7423 = vpack.c.b16 %v6995, %v6991
        %v7424 = vpack.c.b16 %v7000, %v6996
        %v7425 = vpack.c.b16 %v7001, %v6997
        %v7426 = vpack.c.b16 %v7002, %v6998
        %v7427 = vpack.c.b16 %v7003, %v6999
        %v7428 = vpack.c.b16 %v7008, %v7004
        %v7429 = vpack.c.b16 %v7009, %v7005
        %v7430 = vpack.c.b16 %v7010, %v7006
        %v7431 = vpack.c.b16 %v7011, %v7007
        %v7432 = vpack.c.b16 %v7016, %v7012
        %v7433 = vpack.c.b16 %v7017, %v7013
        %v7434 = vpack.c.b16 %v7018, %v7014
        %v7435 = vpack.c.b16 %v7019, %v7015
        %v7436 = vpack.c.b16 %v7024, %v7020
        %v7437 = vpack.c.b16 %v7025, %v7021
        %v7438 = vpack.c.b16 %v7026, %v7022
        %v7439 = vpack.c.b16 %v7027, %v7023
        %v7440 = vpack.c.b16 %v7032, %v7028
        %v7441 = vpack.c.b16 %v7033, %v7029
        %v7442 = vpack.c.b16 %v7034, %v7030
        %v7443 = vpack.c.b16 %v7035, %v7031
        %v7444 = vpack.c.b16 %v7040, %v7036
        %v7445 = vpack.c.b16 %v7041, %v7037
        %v7446 = vpack.c.b16 %v7042, %v7038
        %v7447 = vpack.c.b16 %v7043, %v7039
        %v7448 = vpack.c.b16 %v7048, %v7044
        %v7449 = vpack.c.b16 %v7049, %v7045
        %v7450 = vpack.c.b16 %v7050, %v7046
        %v7451 = vpack.c.b16 %v7051, %v7047
        %v7452 = vpack.c.b16 %v7056, %v7052
        %v7453 = vpack.c.b16 %v7057, %v7053
        %v7454 = vpack.c.b16 %v7058, %v7054
        %v7455 = vpack.c.b16 %v7059, %v7055
        %v7456 = vpack.c.b16 %v7064, %v7060
        %v7457 = vpack.c.b16 %v7065, %v7061
        %v7458 = vpack.c.b16 %v7066, %v7062
        %v7459 = vpack.c.b16 %v7067, %v7063
        %v7460 = vpack.c.b16 %v7072, %v7068
        %v7461 = vpack.c.b16 %v7073, %v7069
        %v7462 = vpack.c.b16 %v7074, %v7070
        %v7463 = vpack.c.b16 %v7075, %v7071
        %v7464 = vpack.c.b16 %v7080, %v7076
        %v7465 = vpack.c.b16 %v7081, %v7077
        %v7466 = vpack.c.b16 %v7082, %v7078
        %v7467 = vpack.c.b16 %v7083, %v7079
        %v7468 = vpack.c.b16 %v7088, %v7084
        %v7469 = vpack.c.b16 %v7089, %v7085
        %v7470 = vpack.c.b16 %v7090, %v7086
        %v7471 = vpack.c.b16 %v7091, %v7087
        %v7472 = vpack.c.b16 %v7096, %v7092
        %v7473 = vpack.c.b16 %v7097, %v7093
        %v7474 = vpack.c.b16 %v7098, %v7094
        %v7475 = vpack.c.b16 %v7099, %v7095
        %v7476 = vpack.c.b16 %v7104, %v7100
        %v7477 = vpack.c.b16 %v7105, %v7101
        %v7478 = vpack.c.b16 %v7106, %v7102
        %v7479 = vpack.c.b16 %v7107, %v7103
        %v7480 = vpack.c.b16 %v7112, %v7108
        %v7481 = vpack.c.b16 %v7113, %v7109
        %v7482 = vpack.c.b16 %v7114, %v7110
        %v7483 = vpack.c.b16 %v7115, %v7111
        %v7484 = vpack.c.b16 %v7120, %v7116
        %v7485 = vpack.c.b16 %v7121, %v7117
        %v7486 = vpack.c.b16 %v7122, %v7118
        %v7487 = vpack.c.b16 %v7123, %v7119
        %v7488 = vpack.c.b16 %v7128, %v7124
        %v7489 = vpack.c.b16 %v7129, %v7125
        %v7490 = vpack.c.b16 %v7130, %v7126
        %v7491 = vpack.c.b16 %v7131, %v7127
        %v7492 = vpack.c.b16 %v7136, %v7132
        %v7493 = vpack.c.b16 %v7137, %v7133
        %v7494 = vpack.c.b16 %v7138, %v7134
        %v7495 = vpack.c.b16 %v7139, %v7135
        %v7496 = vpack.c.b16 %v7144, %v7140
        %v7497 = vpack.c.b16 %v7145, %v7141
        %v7498 = vpack.c.b16 %v7146, %v7142
        %v7499 = vpack.c.b16 %v7147, %v7143
        %v7500 = vpack.c.b16 %v7152, %v7148
        %v7501 = vpack.c.b16 %v7153, %v7149
        %v7502 = vpack.c.b16 %v7154, %v7150
        %v7503 = vpack.c.b16 %v7155, %v7151
        %v7504 = vpack.c.b16 %v7160, %v7156
        %v7505 = vpack.c.b16 %v7161, %v7157
        %v7506 = vpack.c.b16 %v7162, %v7158
        %v7507 = vpack.c.b16 %v7163, %v7159
        %v7508 = vpack.c.b16 %v7168, %v7164
        %v7509 = vpack.c.b16 %v7169, %v7165
        %v7510 = vpack.c.b16 %v7170, %v7166
        %v7511 = vpack.c.b16 %v7171, %v7167
        %v7512 = vpack.c.b16 %v7176, %v7172
        %v7513 = vpack.c.b16 %v7177, %v7173
        %v7514 = vpack.c.b16 %v7178, %v7174
        %v7515 = vpack.c.b16 %v7179, %v7175
        %v7516 = vpack.c.b16 %v7184, %v7180
        %v7517 = vpack.c.b16 %v7185, %v7181
        %v7518 = vpack.c.b16 %v7186, %v7182
        %v7519 = vpack.c.b16 %v7187, %v7183
        %v7520 = vpack.c.b16 %v7192, %v7188
        %v7521 = vpack.c.b16 %v7193, %v7189
        %v7522 = vpack.c.b16 %v7194, %v7190
        %v7523 = vpack.c.b16 %v7195, %v7191
        %v7524 = vpack.c.b16 %v7200, %v7196
        %v7525 = vpack.c.b16 %v7201, %v7197
        %v7526 = vpack.c.b16 %v7202, %v7198
        %v7527 = vpack.c.b16 %v7203, %v7199
        %v7528 = vpack.c.b16 %v7208, %v7204
        %v7529 = vpack.c.b16 %v7209, %v7205
        %v7530 = vpack.c.b16 %v7210, %v7206
        %v7531 = vpack.c.b16 %v7211, %v7207
        %v7532 = vpack.c.b16 %v7216, %v7212
        %v7533 = vpack.c.b16 %v7217, %v7213
        %v7534 = vpack.c.b16 %v7218, %v7214
        %v7535 = vpack.c.b16 %v7219, %v7215
        %v7536 = vpack.c.b16 %v7224, %v7220
        %v7537 = vpack.c.b16 %v7225, %v7221
        %v7538 = vpack.c.b16 %v7226, %v7222
        %v7539 = vpack.c.b16 %v7227, %v7223
        %v7540 = vpack.c.b16 %v7232, %v7228
        %v7541 = vpack.c.b16 %v7233, %v7229
        %v7542 = vpack.c.b16 %v7234, %v7230
        %v7543 = vpack.c.b16 %v7235, %v7231
        %v7544 = vpack.c.b16 %v7240, %v7236
        %v7545 = vpack.c.b16 %v7241, %v7237
        %v7546 = vpack.c.b16 %v7242, %v7238
        %v7547 = vpack.c.b16 %v7243, %v7239
        %v7548 = vpack.c.b16 %v7248, %v7244
        %v7549 = vpack.c.b16 %v7249, %v7245
        %v7550 = vpack.c.b16 %v7250, %v7246
        %v7551 = vpack.c.b16 %v7251, %v7247
        %v7552 = vpack.c.b16 %v7256, %v7252
        %v7553 = vpack.c.b16 %v7257, %v7253
        %v7554 = vpack.c.b16 %v7258, %v7254
        %v7555 = vpack.c.b16 %v7259, %v7255
        %v7556 = vpack.c.b16 %v7264, %v7260
        %v7557 = vpack.c.b16 %v7265, %v7261
        %v7558 = vpack.c.b16 %v7266, %v7262
        %v7559 = vpack.c.b16 %v7267, %v7263
        %v7560 = vpack.c.b16 %v7272, %v7268
        %v7561 = vpack.c.b16 %v7273, %v7269
        %v7562 = vpack.c.b16 %v7274, %v7270
        %v7563 = vpack.c.b16 %v7275, %v7271
        %v7564 = vpack.c.b16 %v7280, %v7276
        %v7565 = vpack.c.b16 %v7281, %v7277
        %v7566 = vpack.c.b16 %v7282, %v7278
        %v7567 = vpack.c.b16 %v7283, %v7279
        %v7568 = vpack.c.b16 %v7288, %v7284
        %v7569 = vpack.c.b16 %v7289, %v7285
        %v7570 = vpack.c.b16 %v7290, %v7286
        %v7571 = vpack.c.b16 %v7291, %v7287
        %v7572 = vpack.c.b16 %v7296, %v7292
        %v7573 = vpack.c.b16 %v7297, %v7293
        %v7574 = vpack.c.b16 %v7298, %v7294
        %v7575 = vpack.c.b16 %v7299, %v7295
        %v7576 = vpack.c.b16 %v7304, %v7300
        %v7577 = vpack.c.b16 %v7305, %v7301
        %v7578 = vpack.c.b16 %v7306, %v7302
        %v7579 = vpack.c.b16 %v7307, %v7303
        %v7580 = vpack.c.b16 %v7312, %v7308
        %v7581 = vpack.c.b16 %v7313, %v7309
        %v7582 = vpack.c.b16 %v7314, %v7310
        %v7583 = vpack.c.b16 %v7315, %v7311
        %v7584 = vpack.c.b16 %v7320, %v7316
        %v7585 = vpack.c.b16 %v7321, %v7317
        %v7586 = vpack.c.b16 %v7322, %v7318
        %v7587 = vpack.c.b16 %v7323, %v7319
        %v7588 = vpack.c.b16 %v7328, %v7324
        %v7589 = vpack.c.b16 %v7329, %v7325
        %v7590 = vpack.c.b16 %v7330, %v7326
        %v7591 = vpack.c.b16 %v7331, %v7327
        %v7592 = vpack.c.b16 %v7336, %v7332
        %v7593 = vpack.c.b16 %v7337, %v7333
        %v7594 = vpack.c.b16 %v7338, %v7334
        %v7595 = vpack.c.b16 %v7339, %v7335
        %7852 = vmatpush.bf16.msra.mxu0 %v7368
        %7853 = vmatpush.bf16.msra.mxu0 %v7364
        %7854 = vmatpush.bf16.msra.mxu0 %v7360
        %7855 = vmatpush.bf16.msra.mxu0 %v7356
        %7856 = vmatpush.bf16.msra.mxu0 %v7352
        %7857 = vmatpush.bf16.msra.mxu0 %v7348
        %7858 = vmatpush.bf16.msra.mxu0 %v7344
        %7859 = vmatpush.bf16.msra.mxu0 %v7340
        %7860 = vmatmul.bf16.gmra.mxu0 %v6556
        %v7861 = vpop.f32.mrf.mxu0
        %v7862 = vadd.f32 0.0, %v7861
        %v7863 = vpop.f32.mrf.mxu0
        %7864 = vdwg.mxu0
        %7865 = vmatpush.bf16.msra.mxu0 %v7400
        %7866 = vmatpush.bf16.msra.mxu0 %v7396
        %7867 = vmatpush.bf16.msra.mxu0 %v7392
        %7868 = vmatpush.bf16.msra.mxu0 %v7388
        %7869 = vmatpush.bf16.msra.mxu0 %v7384
        %7870 = vmatpush.bf16.msra.mxu0 %v7380
        %7871 = vmatpush.bf16.msra.mxu0 %v7376
        %7872 = vmatpush.bf16.msra.mxu0 %v7372
        %7873 = vmatmul.bf16.gmra.mxu0 %v6557
        %v7874 = vpop.f32.mrf.mxu0
        %v7875 = vadd.f32 %v7862, %v7874
        %v7876 = vpop.f32.mrf.mxu0
        %7877 = vdwg.mxu0
        %7878 = vmatpush.bf16.msra.mxu0 %v7432
        %7879 = vmatpush.bf16.msra.mxu0 %v7428
        %7880 = vmatpush.bf16.msra.mxu0 %v7424
        %7881 = vmatpush.bf16.msra.mxu0 %v7420
        %7882 = vmatpush.bf16.msra.mxu0 %v7416
        %7883 = vmatpush.bf16.msra.mxu0 %v7412
        %7884 = vmatpush.bf16.msra.mxu0 %v7408
        %7885 = vmatpush.bf16.msra.mxu0 %v7404
        %7886 = vmatmul.bf16.gmra.mxu0 %v6558
        %v7887 = vpop.f32.mrf.mxu0
        %v7888 = vadd.f32 %v7875, %v7887
        %v7889 = vpop.f32.mrf.mxu0
        %7890 = vdwg.mxu0
        %7891 = vmatpush.bf16.msra.mxu0 %v7464
        %7892 = vmatpush.bf16.msra.mxu0 %v7460
        %7893 = vmatpush.bf16.msra.mxu0 %v7456
        %7894 = vmatpush.bf16.msra.mxu0 %v7452
        %7895 = vmatpush.bf16.msra.mxu0 %v7448
        %7896 = vmatpush.bf16.msra.mxu0 %v7444
        %7897 = vmatpush.bf16.msra.mxu0 %v7440
        %7898 = vmatpush.bf16.msra.mxu0 %v7436
        %7899 = vmatmul.bf16.gmra.mxu0 %v6559
        %v7900 = vpop.f32.mrf.mxu0
        %v7901 = vadd.f32 %v7888, %v7900
        %v7902 = vpop.f32.mrf.mxu0
        %7903 = vdwg.mxu0
        %7904 = vmatpush.bf16.msra.mxu0 %v7496
        %7905 = vmatpush.bf16.msra.mxu0 %v7492
        %7906 = vmatpush.bf16.msra.mxu0 %v7488
        %7907 = vmatpush.bf16.msra.mxu0 %v7484
        %7908 = vmatpush.bf16.msra.mxu0 %v7480
        %7909 = vmatpush.bf16.msra.mxu0 %v7476
        %7910 = vmatpush.bf16.msra.mxu0 %v7472
        %7911 = vmatpush.bf16.msra.mxu0 %v7468
        %7912 = vmatmul.bf16.gmra.mxu0 %v6560
        %v7913 = vpop.f32.mrf.mxu0
        %v7914 = vadd.f32 %v7901, %v7913
        %v7915 = vpop.f32.mrf.mxu0
        %7916 = vdwg.mxu0
        %7917 = vmatpush.bf16.msra.mxu0 %v7528
        %7918 = vmatpush.bf16.msra.mxu0 %v7524
        %7919 = vmatpush.bf16.msra.mxu0 %v7520
        %7920 = vmatpush.bf16.msra.mxu0 %v7516
        %7921 = vmatpush.bf16.msra.mxu0 %v7512
        %7922 = vmatpush.bf16.msra.mxu0 %v7508
        %7923 = vmatpush.bf16.msra.mxu0 %v7504
        %7924 = vmatpush.bf16.msra.mxu0 %v7500
        %7925 = vmatmul.bf16.gmra.mxu0 %v6561
        %v7926 = vpop.f32.mrf.mxu0
        %v7927 = vadd.f32 %v7914, %v7926
        %v7928 = vpop.f32.mrf.mxu0
        %7929 = vdwg.mxu0
        %7930 = vmatpush.bf16.msra.mxu0 %v7560
        %7931 = vmatpush.bf16.msra.mxu0 %v7556
        %7932 = vmatpush.bf16.msra.mxu0 %v7552
        %7933 = vmatpush.bf16.msra.mxu0 %v7548
        %7934 = vmatpush.bf16.msra.mxu0 %v7544
        %7935 = vmatpush.bf16.msra.mxu0 %v7540
        %7936 = vmatpush.bf16.msra.mxu0 %v7536
        %7937 = vmatpush.bf16.msra.mxu0 %v7532
        %7938 = vmatmul.bf16.gmra.mxu0 %v6562
        %v7939 = vpop.f32.mrf.mxu0
        %v7940 = vadd.f32 %v7927, %v7939
        %v7941 = vpop.f32.mrf.mxu0
        %7942 = vdwg.mxu0
        %7943 = vmatpush.bf16.msra.mxu0 %v7592
        %7944 = vmatpush.bf16.msra.mxu0 %v7588
        %7945 = vmatpush.bf16.msra.mxu0 %v7584
        %7946 = vmatpush.bf16.msra.mxu0 %v7580
        %7947 = vmatpush.bf16.msra.mxu0 %v7576
        %7948 = vmatpush.bf16.msra.mxu0 %v7572
        %7949 = vmatpush.bf16.msra.mxu0 %v7568
        %7950 = vmatpush.bf16.msra.mxu0 %v7564
        %7951 = vmatmul.bf16.gmra.mxu0 %v6563
        %v7952 = vpop.f32.mrf.mxu0
        %v7953 = vadd.f32 %v7940, %v7952
        %v7954 = vpop.f32.mrf.mxu0
        %7955 = vdwg.mxu0
        %7956 = vmatpush.bf16.msra.mxu0 %v7369
        %7957 = vmatpush.bf16.msra.mxu0 %v7365
        %7958 = vmatpush.bf16.msra.mxu0 %v7361
        %7959 = vmatpush.bf16.msra.mxu0 %v7357
        %7960 = vmatpush.bf16.msra.mxu0 %v7353
        %7961 = vmatpush.bf16.msra.mxu0 %v7349
        %7962 = vmatpush.bf16.msra.mxu0 %v7345
        %7963 = vmatpush.bf16.msra.mxu0 %v7341
        %7964 = vmatmul.bf16.gmra.mxu0 %v6556
        %v7965 = vpop.f32.mrf.mxu0
        %v7966 = vadd.f32 0.0, %v7965
        %v7967 = vpop.f32.mrf.mxu0
        %7968 = vdwg.mxu0
        %7969 = vmatpush.bf16.msra.mxu0 %v7401
        %7970 = vmatpush.bf16.msra.mxu0 %v7397
        %7971 = vmatpush.bf16.msra.mxu0 %v7393
        %7972 = vmatpush.bf16.msra.mxu0 %v7389
        %7973 = vmatpush.bf16.msra.mxu0 %v7385
        %7974 = vmatpush.bf16.msra.mxu0 %v7381
        %7975 = vmatpush.bf16.msra.mxu0 %v7377
        %7976 = vmatpush.bf16.msra.mxu0 %v7373
        %7977 = vmatmul.bf16.gmra.mxu0 %v6557
        %v7978 = vpop.f32.mrf.mxu0
        %v7979 = vadd.f32 %v7966, %v7978
        %v7980 = vpop.f32.mrf.mxu0
        %7981 = vdwg.mxu0
        %7982 = vmatpush.bf16.msra.mxu0 %v7433
        %7983 = vmatpush.bf16.msra.mxu0 %v7429
        %7984 = vmatpush.bf16.msra.mxu0 %v7425
        %7985 = vmatpush.bf16.msra.mxu0 %v7421
        %7986 = vmatpush.bf16.msra.mxu0 %v7417
        %7987 = vmatpush.bf16.msra.mxu0 %v7413
        %7988 = vmatpush.bf16.msra.mxu0 %v7409
        %7989 = vmatpush.bf16.msra.mxu0 %v7405
        %7990 = vmatmul.bf16.gmra.mxu0 %v6558
        %v7991 = vpop.f32.mrf.mxu0
        %v7992 = vadd.f32 %v7979, %v7991
        %v7993 = vpop.f32.mrf.mxu0
        %7994 = vdwg.mxu0
        %7995 = vmatpush.bf16.msra.mxu0 %v7465
        %7996 = vmatpush.bf16.msra.mxu0 %v7461
        %7997 = vmatpush.bf16.msra.mxu0 %v7457
        %7998 = vmatpush.bf16.msra.mxu0 %v7453
        %7999 = vmatpush.bf16.msra.mxu0 %v7449
        %8000 = vmatpush.bf16.msra.mxu0 %v7445
        %8001 = vmatpush.bf16.msra.mxu0 %v7441
        %8002 = vmatpush.bf16.msra.mxu0 %v7437
        %8003 = vmatmul.bf16.gmra.mxu0 %v6559
        %v8004 = vpop.f32.mrf.mxu0
        %v8005 = vadd.f32 %v7992, %v8004
        %v8006 = vpop.f32.mrf.mxu0
        %8007 = vdwg.mxu0
        %8008 = vmatpush.bf16.msra.mxu0 %v7497
        %8009 = vmatpush.bf16.msra.mxu0 %v7493
        %8010 = vmatpush.bf16.msra.mxu0 %v7489
        %8011 = vmatpush.bf16.msra.mxu0 %v7485
        %8012 = vmatpush.bf16.msra.mxu0 %v7481
        %8013 = vmatpush.bf16.msra.mxu0 %v7477
        %8014 = vmatpush.bf16.msra.mxu0 %v7473
        %8015 = vmatpush.bf16.msra.mxu0 %v7469
        %8016 = vmatmul.bf16.gmra.mxu0 %v6560
        %v8017 = vpop.f32.mrf.mxu0
        %v8018 = vadd.f32 %v8005, %v8017
        %v8019 = vpop.f32.mrf.mxu0
        %8020 = vdwg.mxu0
        %8021 = vmatpush.bf16.msra.mxu0 %v7529
        %8022 = vmatpush.bf16.msra.mxu0 %v7525
        %8023 = vmatpush.bf16.msra.mxu0 %v7521
        %8024 = vmatpush.bf16.msra.mxu0 %v7517
        %8025 = vmatpush.bf16.msra.mxu0 %v7513
        %8026 = vmatpush.bf16.msra.mxu0 %v7509
        %8027 = vmatpush.bf16.msra.mxu0 %v7505
        %8028 = vmatpush.bf16.msra.mxu0 %v7501
        %8029 = vmatmul.bf16.gmra.mxu0 %v6561
        %v8030 = vpop.f32.mrf.mxu0
        %v8031 = vadd.f32 %v8018, %v8030
        %v8032 = vpop.f32.mrf.mxu0
        %8033 = vdwg.mxu0
        %8034 = vmatpush.bf16.msra.mxu0 %v7561
        %8035 = vmatpush.bf16.msra.mxu0 %v7557
        %8036 = vmatpush.bf16.msra.mxu0 %v7553
        %8037 = vmatpush.bf16.msra.mxu0 %v7549
        %8038 = vmatpush.bf16.msra.mxu0 %v7545
        %8039 = vmatpush.bf16.msra.mxu0 %v7541
        %8040 = vmatpush.bf16.msra.mxu0 %v7537
        %8041 = vmatpush.bf16.msra.mxu0 %v7533
        %8042 = vmatmul.bf16.gmra.mxu0 %v6562
        %v8043 = vpop.f32.mrf.mxu0
        %v8044 = vadd.f32 %v8031, %v8043
        %v8045 = vpop.f32.mrf.mxu0
        %8046 = vdwg.mxu0
        %8047 = vmatpush.bf16.msra.mxu0 %v7593
        %8048 = vmatpush.bf16.msra.mxu0 %v7589
        %8049 = vmatpush.bf16.msra.mxu0 %v7585
        %8050 = vmatpush.bf16.msra.mxu0 %v7581
        %8051 = vmatpush.bf16.msra.mxu0 %v7577
        %8052 = vmatpush.bf16.msra.mxu0 %v7573
        %8053 = vmatpush.bf16.msra.mxu0 %v7569
        %8054 = vmatpush.bf16.msra.mxu0 %v7565
        %8055 = vmatmul.bf16.gmra.mxu0 %v6563
        %v8056 = vpop.f32.mrf.mxu0
        %v8057 = vadd.f32 %v8044, %v8056
        %v8058 = vpop.f32.mrf.mxu0
        %8059 = vdwg.mxu0
        %8060 = vmatpush.bf16.msra.mxu0 %v7370
        %8061 = vmatpush.bf16.msra.mxu0 %v7366
        %8062 = vmatpush.bf16.msra.mxu0 %v7362
        %8063 = vmatpush.bf16.msra.mxu0 %v7358
        %8064 = vmatpush.bf16.msra.mxu0 %v7354
        %8065 = vmatpush.bf16.msra.mxu0 %v7350
        %8066 = vmatpush.bf16.msra.mxu0 %v7346
        %8067 = vmatpush.bf16.msra.mxu0 %v7342
        %8068 = vmatmul.bf16.gmra.mxu0 %v6556
        %v8069 = vpop.f32.mrf.mxu0
        %v8070 = vadd.f32 0.0, %v8069
        %v8071 = vpop.f32.mrf.mxu0
        %8072 = vdwg.mxu0
        %8073 = vmatpush.bf16.msra.mxu0 %v7402
        %8074 = vmatpush.bf16.msra.mxu0 %v7398
        %8075 = vmatpush.bf16.msra.mxu0 %v7394
        %8076 = vmatpush.bf16.msra.mxu0 %v7390
        %8077 = vmatpush.bf16.msra.mxu0 %v7386
        %8078 = vmatpush.bf16.msra.mxu0 %v7382
        %8079 = vmatpush.bf16.msra.mxu0 %v7378
        %8080 = vmatpush.bf16.msra.mxu0 %v7374
        %8081 = vmatmul.bf16.gmra.mxu0 %v6557
        %v8082 = vpop.f32.mrf.mxu0
        %v8083 = vadd.f32 %v8070, %v8082
        %v8084 = vpop.f32.mrf.mxu0
        %8085 = vdwg.mxu0
        %8086 = vmatpush.bf16.msra.mxu0 %v7434
        %8087 = vmatpush.bf16.msra.mxu0 %v7430
        %8088 = vmatpush.bf16.msra.mxu0 %v7426
        %8089 = vmatpush.bf16.msra.mxu0 %v7422
        %8090 = vmatpush.bf16.msra.mxu0 %v7418
        %8091 = vmatpush.bf16.msra.mxu0 %v7414
        %8092 = vmatpush.bf16.msra.mxu0 %v7410
        %8093 = vmatpush.bf16.msra.mxu0 %v7406
        %8094 = vmatmul.bf16.gmra.mxu0 %v6558
        %v8095 = vpop.f32.mrf.mxu0
        %v8096 = vadd.f32 %v8083, %v8095
        %v8097 = vpop.f32.mrf.mxu0
        %8098 = vdwg.mxu0
        %8099 = vmatpush.bf16.msra.mxu0 %v7466
        %8100 = vmatpush.bf16.msra.mxu0 %v7462
        %8101 = vmatpush.bf16.msra.mxu0 %v7458
        %8102 = vmatpush.bf16.msra.mxu0 %v7454
        %8103 = vmatpush.bf16.msra.mxu0 %v7450
        %8104 = vmatpush.bf16.msra.mxu0 %v7446
        %8105 = vmatpush.bf16.msra.mxu0 %v7442
        %8106 = vmatpush.bf16.msra.mxu0 %v7438
        %8107 = vmatmul.bf16.gmra.mxu0 %v6559
        %v8108 = vpop.f32.mrf.mxu0
        %v8109 = vadd.f32 %v8096, %v8108
        %v8110 = vpop.f32.mrf.mxu0
        %8111 = vdwg.mxu0
        %8112 = vmatpush.bf16.msra.mxu0 %v7498
        %8113 = vmatpush.bf16.msra.mxu0 %v7494
        %8114 = vmatpush.bf16.msra.mxu0 %v7490
        %8115 = vmatpush.bf16.msra.mxu0 %v7486
        %8116 = vmatpush.bf16.msra.mxu0 %v7482
        %8117 = vmatpush.bf16.msra.mxu0 %v7478
        %8118 = vmatpush.bf16.msra.mxu0 %v7474
        %8119 = vmatpush.bf16.msra.mxu0 %v7470
        %8120 = vmatmul.bf16.gmra.mxu0 %v6560
        %v8121 = vpop.f32.mrf.mxu0
        %v8122 = vadd.f32 %v8109, %v8121
        %v8123 = vpop.f32.mrf.mxu0
        %8124 = vdwg.mxu0
        %8125 = vmatpush.bf16.msra.mxu0 %v7530
        %8126 = vmatpush.bf16.msra.mxu0 %v7526
        %8127 = vmatpush.bf16.msra.mxu0 %v7522
        %8128 = vmatpush.bf16.msra.mxu0 %v7518
        %8129 = vmatpush.bf16.msra.mxu0 %v7514
        %8130 = vmatpush.bf16.msra.mxu0 %v7510
        %8131 = vmatpush.bf16.msra.mxu0 %v7506
        %8132 = vmatpush.bf16.msra.mxu0 %v7502
        %8133 = vmatmul.bf16.gmra.mxu0 %v6561
        %v8134 = vpop.f32.mrf.mxu0
        %v8135 = vadd.f32 %v8122, %v8134
        %v8136 = vpop.f32.mrf.mxu0
        %8137 = vdwg.mxu0
        %8138 = vmatpush.bf16.msra.mxu0 %v7562
        %8139 = vmatpush.bf16.msra.mxu0 %v7558
        %8140 = vmatpush.bf16.msra.mxu0 %v7554
        %8141 = vmatpush.bf16.msra.mxu0 %v7550
        %8142 = vmatpush.bf16.msra.mxu0 %v7546
        %8143 = vmatpush.bf16.msra.mxu0 %v7542
        %8144 = vmatpush.bf16.msra.mxu0 %v7538
        %8145 = vmatpush.bf16.msra.mxu0 %v7534
        %8146 = vmatmul.bf16.gmra.mxu0 %v6562
        %v8147 = vpop.f32.mrf.mxu0
        %v8148 = vadd.f32 %v8135, %v8147
        %v8149 = vpop.f32.mrf.mxu0
        %8150 = vdwg.mxu0
        %8151 = vmatpush.bf16.msra.mxu0 %v7594
        %8152 = vmatpush.bf16.msra.mxu0 %v7590
        %8153 = vmatpush.bf16.msra.mxu0 %v7586
        %8154 = vmatpush.bf16.msra.mxu0 %v7582
        %8155 = vmatpush.bf16.msra.mxu0 %v7578
        %8156 = vmatpush.bf16.msra.mxu0 %v7574
        %8157 = vmatpush.bf16.msra.mxu0 %v7570
        %8158 = vmatpush.bf16.msra.mxu0 %v7566
        %8159 = vmatmul.bf16.gmra.mxu0 %v6563
        %v8160 = vpop.f32.mrf.mxu0
        %v8161 = vadd.f32 %v8148, %v8160
        %v8162 = vpop.f32.mrf.mxu0
        %8163 = vdwg.mxu0
        %8164 = vmatpush.bf16.msra.mxu0 %v7371
        %8165 = vmatpush.bf16.msra.mxu0 %v7367
        %8166 = vmatpush.bf16.msra.mxu0 %v7363
        %8167 = vmatpush.bf16.msra.mxu0 %v7359
        %8168 = vmatpush.bf16.msra.mxu0 %v7355
        %8169 = vmatpush.bf16.msra.mxu0 %v7351
        %8170 = vmatpush.bf16.msra.mxu0 %v7347
        %8171 = vmatpush.bf16.msra.mxu0 %v7343
        %8172 = vmatmul.bf16.gmra.mxu0 %v6556
        %v8173 = vpop.f32.mrf.mxu0
        %v8174 = vadd.f32 0.0, %v8173
        %v8175 = vpop.f32.mrf.mxu0
        %8176 = vdwg.mxu0
        %8177 = vmatpush.bf16.msra.mxu0 %v7403
        %8178 = vmatpush.bf16.msra.mxu0 %v7399
        %8179 = vmatpush.bf16.msra.mxu0 %v7395
        %8180 = vmatpush.bf16.msra.mxu0 %v7391
        %8181 = vmatpush.bf16.msra.mxu0 %v7387
        %8182 = vmatpush.bf16.msra.mxu0 %v7383
        %8183 = vmatpush.bf16.msra.mxu0 %v7379
        %8184 = vmatpush.bf16.msra.mxu0 %v7375
        %8185 = vmatmul.bf16.gmra.mxu0 %v6557
        %v8186 = vpop.f32.mrf.mxu0
        %v8187 = vadd.f32 %v8174, %v8186
        %v8188 = vpop.f32.mrf.mxu0
        %8189 = vdwg.mxu0
        %8190 = vmatpush.bf16.msra.mxu0 %v7435
        %8191 = vmatpush.bf16.msra.mxu0 %v7431
        %8192 = vmatpush.bf16.msra.mxu0 %v7427
        %8193 = vmatpush.bf16.msra.mxu0 %v7423
        %8194 = vmatpush.bf16.msra.mxu0 %v7419
        %8195 = vmatpush.bf16.msra.mxu0 %v7415
        %8196 = vmatpush.bf16.msra.mxu0 %v7411
        %8197 = vmatpush.bf16.msra.mxu0 %v7407
        %8198 = vmatmul.bf16.gmra.mxu0 %v6558
        %v8199 = vpop.f32.mrf.mxu0
        %v8200 = vadd.f32 %v8187, %v8199
        %v8201 = vpop.f32.mrf.mxu0
        %8202 = vdwg.mxu0
        %8203 = vmatpush.bf16.msra.mxu0 %v7467
        %8204 = vmatpush.bf16.msra.mxu0 %v7463
        %8205 = vmatpush.bf16.msra.mxu0 %v7459
        %8206 = vmatpush.bf16.msra.mxu0 %v7455
        %8207 = vmatpush.bf16.msra.mxu0 %v7451
        %8208 = vmatpush.bf16.msra.mxu0 %v7447
        %8209 = vmatpush.bf16.msra.mxu0 %v7443
        %8210 = vmatpush.bf16.msra.mxu0 %v7439
        %8211 = vmatmul.bf16.gmra.mxu0 %v6559
        %v8212 = vpop.f32.mrf.mxu0
        %v8213 = vadd.f32 %v8200, %v8212
        %v8214 = vpop.f32.mrf.mxu0
        %8215 = vdwg.mxu0
        %8216 = vmatpush.bf16.msra.mxu0 %v7499
        %8217 = vmatpush.bf16.msra.mxu0 %v7495
        %8218 = vmatpush.bf16.msra.mxu0 %v7491
        %8219 = vmatpush.bf16.msra.mxu0 %v7487
        %8220 = vmatpush.bf16.msra.mxu0 %v7483
        %8221 = vmatpush.bf16.msra.mxu0 %v7479
        %8222 = vmatpush.bf16.msra.mxu0 %v7475
        %8223 = vmatpush.bf16.msra.mxu0 %v7471
        %8224 = vmatmul.bf16.gmra.mxu0 %v6560
        %v8225 = vpop.f32.mrf.mxu0
        %v8226 = vadd.f32 %v8213, %v8225
        %v8227 = vpop.f32.mrf.mxu0
        %8228 = vdwg.mxu0
        %8229 = vmatpush.bf16.msra.mxu0 %v7531
        %8230 = vmatpush.bf16.msra.mxu0 %v7527
        %8231 = vmatpush.bf16.msra.mxu0 %v7523
        %8232 = vmatpush.bf16.msra.mxu0 %v7519
        %8233 = vmatpush.bf16.msra.mxu0 %v7515
        %8234 = vmatpush.bf16.msra.mxu0 %v7511
        %8235 = vmatpush.bf16.msra.mxu0 %v7507
        %8236 = vmatpush.bf16.msra.mxu0 %v7503
        %8237 = vmatmul.bf16.gmra.mxu0 %v6561
        %v8238 = vpop.f32.mrf.mxu0
        %v8239 = vadd.f32 %v8226, %v8238
        %v8240 = vpop.f32.mrf.mxu0
        %8241 = vdwg.mxu0
        %8242 = vmatpush.bf16.msra.mxu0 %v7563
        %8243 = vmatpush.bf16.msra.mxu0 %v7559
        %8244 = vmatpush.bf16.msra.mxu0 %v7555
        %8245 = vmatpush.bf16.msra.mxu0 %v7551
        %8246 = vmatpush.bf16.msra.mxu0 %v7547
        %8247 = vmatpush.bf16.msra.mxu0 %v7543
        %8248 = vmatpush.bf16.msra.mxu0 %v7539
        %8249 = vmatpush.bf16.msra.mxu0 %v7535
        %8250 = vmatmul.bf16.gmra.mxu0 %v6562
        %v8251 = vpop.f32.mrf.mxu0
        %v8252 = vadd.f32 %v8239, %v8251
        %v8253 = vpop.f32.mrf.mxu0
        %8254 = vdwg.mxu0
        %8255 = vmatpush.bf16.msra.mxu0 %v7595
        %8256 = vmatpush.bf16.msra.mxu0 %v7591
        %8257 = vmatpush.bf16.msra.mxu0 %v7587
        %8258 = vmatpush.bf16.msra.mxu0 %v7583
        %8259 = vmatpush.bf16.msra.mxu0 %v7579
        %8260 = vmatpush.bf16.msra.mxu0 %v7575
        %8261 = vmatpush.bf16.msra.mxu0 %v7571
        %8262 = vmatpush.bf16.msra.mxu0 %v7567
        %8263 = vmatmul.bf16.gmra.mxu0 %v6563
        %v8264 = vpop.f32.mrf.mxu0
        %v8265 = vadd.f32 %v8252, %v8264
        %v8266 = vpop.f32.mrf.mxu0
        %8267 = vdwg.mxu0
        %v8268 = vadd.f32 %v6271, %v7953
        %v8269 = vadd.f32 %v6272, %v8057
        %v8270 = vadd.f32 %v6273, %v8161
        %v8271 = vadd.f32 %v6274, %v8265
        %v8272 = vld [vmem:[#allocation5] sm:$0xf]
        %v8274 = vperm.slane %v8272, 0
        %v8275 = vperm.slane %v8272, 1
        %v8276 = vperm.slane %v8272, 2
        %v8277 = vperm.slane %v8272, 3
        %v8282 = vadd.f32 %v8268, %v8274
        %v8283 = vadd.f32 %v8269, %v8275
        %v8284 = vadd.f32 %v8270, %v8276
        %v8285 = vadd.f32 %v8271, %v8277
        %vm8286 = vcmp.gt.f32.partialorder %v8282, 0.0
        %vm8287 = vcmp.gt.f32.partialorder %v8283, 0.0
        %vm8288 = vcmp.gt.f32.partialorder %v8284, 0.0
        %vm8289 = vcmp.gt.f32.partialorder %v8285, 0.0
        %v8290 = vmul.f32 %v8282, 0.2
        %v8291 = vmul.f32 %v8283, 0.2
        %v8292 = vmul.f32 %v8284, 0.2
        %v8293 = vmul.f32 %v8285, 0.2
        %v8294 = vsel %vm8286, %v8282, %v8290
        %v8295 = vsel %vm8287, %v8283, %v8291
        %v8296 = vsel %vm8288, %v8284, %v8292
        %v8297 = vsel %vm8289, %v8285, %v8293
        %v8298 = vpack.c.bf16 %v8294, %v8294
        %v8299 = vpack.c.bf16 %v8295, %v8295
        %v8300 = vpack.c.bf16 %v8296, %v8296
        %v8301 = vpack.c.bf16 %v8297, %v8297
        %v8302 = vld [vmem:[#allocation7] sm:$0xf]
        %v8303 = vld [vmem:[#allocation7 + $0x4] sm:$0xf]
        %v8304 = vld [vmem:[#allocation7 + $0x8] sm:$0xf]
        %v8305 = vld [vmem:[#allocation7 + $0xc] sm:$0xf]
        %v8306 = vld [vmem:[#allocation7 + $0x10] sm:$0xf]
        %v8307 = vld [vmem:[#allocation7 + $0x14] sm:$0xf]
        %v8308 = vld [vmem:[#allocation7 + $0x18] sm:$0xf]
        %v8309 = vld [vmem:[#allocation7 + $0x1c] sm:$0xf]
        %v8310 = vld [vmem:[#allocation7 + $0x20] sm:$0xf]
        %v8311 = vld [vmem:[#allocation7 + $0x24] sm:$0xf]
        %v8312 = vld [vmem:[#allocation7 + $0x28] sm:$0xf]
        %v8313 = vld [vmem:[#allocation7 + $0x2c] sm:$0xf]
        %v8314 = vld [vmem:[#allocation7 + $0x30] sm:$0xf]
        %v8315 = vld [vmem:[#allocation7 + $0x34] sm:$0xf]
        %v8316 = vld [vmem:[#allocation7 + $0x38] sm:$0xf]
        %v8317 = vld [vmem:[#allocation7 + $0x3c] sm:$0xf]
        %v8318 = vld [vmem:[#allocation7 + $0x40] sm:$0xf]
        %v8319 = vld [vmem:[#allocation7 + $0x44] sm:$0xf]
        %v8320 = vld [vmem:[#allocation7 + $0x48] sm:$0xf]
        %v8321 = vld [vmem:[#allocation7 + $0x4c] sm:$0xf]
        %v8322 = vld [vmem:[#allocation7 + $0x50] sm:$0xf]
        %v8323 = vld [vmem:[#allocation7 + $0x54] sm:$0xf]
        %v8324 = vld [vmem:[#allocation7 + $0x58] sm:$0xf]
        %v8325 = vld [vmem:[#allocation7 + $0x5c] sm:$0xf]
        %v8326 = vld [vmem:[#allocation7 + $0x60] sm:$0xf]
        %v8327 = vld [vmem:[#allocation7 + $0x64] sm:$0xf]
        %v8328 = vld [vmem:[#allocation7 + $0x68] sm:$0xf]
        %v8329 = vld [vmem:[#allocation7 + $0x6c] sm:$0xf]
        %v8330 = vld [vmem:[#allocation7 + $0x70] sm:$0xf]
        %v8331 = vld [vmem:[#allocation7 + $0x74] sm:$0xf]
        %v8332 = vld [vmem:[#allocation7 + $0x78] sm:$0xf]
        %v8333 = vld [vmem:[#allocation7 + $0x7c] sm:$0xf]
        %v8334 = vld [vmem:[#allocation7 + $0x80] sm:$0xf]
        %v8335 = vld [vmem:[#allocation7 + $0x84] sm:$0xf]
        %v8336 = vld [vmem:[#allocation7 + $0x88] sm:$0xf]
        %v8337 = vld [vmem:[#allocation7 + $0x8c] sm:$0xf]
        %v8338 = vld [vmem:[#allocation7 + $0x90] sm:$0xf]
        %v8339 = vld [vmem:[#allocation7 + $0x94] sm:$0xf]
        %v8340 = vld [vmem:[#allocation7 + $0x98] sm:$0xf]
        %v8341 = vld [vmem:[#allocation7 + $0x9c] sm:$0xf]
        %v8342 = vld [vmem:[#allocation7 + $0xa0] sm:$0xf]
        %v8343 = vld [vmem:[#allocation7 + $0xa4] sm:$0xf]
        %v8344 = vld [vmem:[#allocation7 + $0xa8] sm:$0xf]
        %v8345 = vld [vmem:[#allocation7 + $0xac] sm:$0xf]
        %v8346 = vld [vmem:[#allocation7 + $0xb0] sm:$0xf]
        %v8347 = vld [vmem:[#allocation7 + $0xb4] sm:$0xf]
        %v8348 = vld [vmem:[#allocation7 + $0xb8] sm:$0xf]
        %v8349 = vld [vmem:[#allocation7 + $0xbc] sm:$0xf]
        %v8350 = vld [vmem:[#allocation7 + $0xc0] sm:$0xf]
        %v8351 = vld [vmem:[#allocation7 + $0xc4] sm:$0xf]
        %v8352 = vld [vmem:[#allocation7 + $0xc8] sm:$0xf]
        %v8353 = vld [vmem:[#allocation7 + $0xcc] sm:$0xf]
        %v8354 = vld [vmem:[#allocation7 + $0xd0] sm:$0xf]
        %v8355 = vld [vmem:[#allocation7 + $0xd4] sm:$0xf]
        %v8356 = vld [vmem:[#allocation7 + $0xd8] sm:$0xf]
        %v8357 = vld [vmem:[#allocation7 + $0xdc] sm:$0xf]
        %v8358 = vld [vmem:[#allocation7 + $0xe0] sm:$0xf]
        %v8359 = vld [vmem:[#allocation7 + $0xe4] sm:$0xf]
        %v8360 = vld [vmem:[#allocation7 + $0xe8] sm:$0xf]
        %v8361 = vld [vmem:[#allocation7 + $0xec] sm:$0xf]
        %v8362 = vld [vmem:[#allocation7 + $0xf0] sm:$0xf]
        %v8363 = vld [vmem:[#allocation7 + $0xf4] sm:$0xf]
        %v8364 = vld [vmem:[#allocation7 + $0xf8] sm:$0xf]
        %v8365 = vld [vmem:[#allocation7 + $0xfc] sm:$0xf]
        %v8366 = vld [vmem:[#allocation8] sm:$0x1]
        %v8431 = vunpack.c.l.b16 %v8302
        %v8432 = vunpack.c.l.b16 %v8303
        %v8433 = vunpack.c.l.b16 %v8304
        %v8434 = vunpack.c.l.b16 %v8305
        %v8435 = vunpack.c.l.b16 %v8306
        %v8436 = vunpack.c.l.b16 %v8307
        %v8437 = vunpack.c.l.b16 %v8308
        %v8438 = vunpack.c.l.b16 %v8309
        %v8439 = vunpack.c.l.b16 %v8310
        %v8440 = vunpack.c.l.b16 %v8311
        %v8441 = vunpack.c.l.b16 %v8312
        %v8442 = vunpack.c.l.b16 %v8313
        %v8443 = vunpack.c.l.b16 %v8314
        %v8444 = vunpack.c.l.b16 %v8315
        %v8445 = vunpack.c.l.b16 %v8316
        %v8446 = vunpack.c.l.b16 %v8317
        %v8447 = vunpack.c.l.b16 %v8318
        %v8448 = vunpack.c.l.b16 %v8319
        %v8449 = vunpack.c.l.b16 %v8320
        %v8450 = vunpack.c.l.b16 %v8321
        %v8451 = vunpack.c.l.b16 %v8322
        %v8452 = vunpack.c.l.b16 %v8323
        %v8453 = vunpack.c.l.b16 %v8324
        %v8454 = vunpack.c.l.b16 %v8325
        %v8455 = vunpack.c.l.b16 %v8326
        %v8456 = vunpack.c.l.b16 %v8327
        %v8457 = vunpack.c.l.b16 %v8328
        %v8458 = vunpack.c.l.b16 %v8329
        %v8459 = vunpack.c.l.b16 %v8330
        %v8460 = vunpack.c.l.b16 %v8331
        %v8461 = vunpack.c.l.b16 %v8332
        %v8462 = vunpack.c.l.b16 %v8333
        %v8463 = vunpack.c.l.b16 %v8334
        %v8464 = vunpack.c.l.b16 %v8335
        %v8465 = vunpack.c.l.b16 %v8336
        %v8466 = vunpack.c.l.b16 %v8337
        %v8467 = vunpack.c.l.b16 %v8338
        %v8468 = vunpack.c.l.b16 %v8339
        %v8469 = vunpack.c.l.b16 %v8340
        %v8470 = vunpack.c.l.b16 %v8341
        %v8471 = vunpack.c.l.b16 %v8342
        %v8472 = vunpack.c.l.b16 %v8343
        %v8473 = vunpack.c.l.b16 %v8344
        %v8474 = vunpack.c.l.b16 %v8345
        %v8475 = vunpack.c.l.b16 %v8346
        %v8476 = vunpack.c.l.b16 %v8347
        %v8477 = vunpack.c.l.b16 %v8348
        %v8478 = vunpack.c.l.b16 %v8349
        %v8479 = vunpack.c.l.b16 %v8350
        %v8480 = vunpack.c.l.b16 %v8351
        %v8481 = vunpack.c.l.b16 %v8352
        %v8482 = vunpack.c.l.b16 %v8353
        %v8483 = vunpack.c.l.b16 %v8354
        %v8484 = vunpack.c.l.b16 %v8355
        %v8485 = vunpack.c.l.b16 %v8356
        %v8486 = vunpack.c.l.b16 %v8357
        %v8487 = vunpack.c.l.b16 %v8358
        %v8488 = vunpack.c.l.b16 %v8359
        %v8489 = vunpack.c.l.b16 %v8360
        %v8490 = vunpack.c.l.b16 %v8361
        %v8491 = vunpack.c.l.b16 %v8362
        %v8492 = vunpack.c.l.b16 %v8363
        %v8493 = vunpack.c.l.b16 %v8364
        %v8494 = vunpack.c.l.b16 %v8365
        %v8495 = vpack.c.b16 %v8432, %v8431
        %v8496 = vpack.c.b16 %v8434, %v8433
        %v8497 = vpack.c.b16 %v8436, %v8435
        %v8498 = vpack.c.b16 %v8438, %v8437
        %v8499 = vpack.c.b16 %v8440, %v8439
        %v8500 = vpack.c.b16 %v8442, %v8441
        %v8501 = vpack.c.b16 %v8444, %v8443
        %v8502 = vpack.c.b16 %v8446, %v8445
        %v8503 = vpack.c.b16 %v8448, %v8447
        %v8504 = vpack.c.b16 %v8450, %v8449
        %v8505 = vpack.c.b16 %v8452, %v8451
        %v8506 = vpack.c.b16 %v8454, %v8453
        %v8507 = vpack.c.b16 %v8456, %v8455
        %v8508 = vpack.c.b16 %v8458, %v8457
        %v8509 = vpack.c.b16 %v8460, %v8459
        %v8510 = vpack.c.b16 %v8462, %v8461
        %v8511 = vpack.c.b16 %v8464, %v8463
        %v8512 = vpack.c.b16 %v8466, %v8465
        %v8513 = vpack.c.b16 %v8468, %v8467
        %v8514 = vpack.c.b16 %v8470, %v8469
        %v8515 = vpack.c.b16 %v8472, %v8471
        %v8516 = vpack.c.b16 %v8474, %v8473
        %v8517 = vpack.c.b16 %v8476, %v8475
        %v8518 = vpack.c.b16 %v8478, %v8477
        %v8519 = vpack.c.b16 %v8480, %v8479
        %v8520 = vpack.c.b16 %v8482, %v8481
        %v8521 = vpack.c.b16 %v8484, %v8483
        %v8522 = vpack.c.b16 %v8486, %v8485
        %v8523 = vpack.c.b16 %v8488, %v8487
        %v8524 = vpack.c.b16 %v8490, %v8489
        %v8525 = vpack.c.b16 %v8492, %v8491
        %v8526 = vpack.c.b16 %v8494, %v8493
        %8559 = vmatpush.bf16.msra.mxu0 %v8502
        %8560 = vmatpush.bf16.msra.mxu0 %v8501
        %8561 = vmatpush.bf16.msra.mxu0 %v8500
        %8562 = vmatpush.bf16.msra.mxu0 %v8499
        %8563 = vmatpush.bf16.msra.mxu0 %v8498
        %8564 = vmatpush.bf16.msra.mxu0 %v8497
        %8565 = vmatpush.bf16.msra.mxu0 %v8496
        %8566 = vmatpush.bf16.msra.mxu0 %v8495
        %8567 = vmatmul.bf16.gmra.mxu0 %v8298
        %v8568 = vpop.f32.mrf.mxu0
        %v8569 = vadd.f32 %v8366, %v8568
        %v8570 = vpop.f32.mrf.mxu0
        %8571 = vdwg.mxu0
        %8572 = vmatpush.bf16.msra.mxu0 %v8510
        %8573 = vmatpush.bf16.msra.mxu0 %v8509
        %8574 = vmatpush.bf16.msra.mxu0 %v8508
        %8575 = vmatpush.bf16.msra.mxu0 %v8507
        %8576 = vmatpush.bf16.msra.mxu0 %v8506
        %8577 = vmatpush.bf16.msra.mxu0 %v8505
        %8578 = vmatpush.bf16.msra.mxu0 %v8504
        %8579 = vmatpush.bf16.msra.mxu0 %v8503
        %8580 = vmatmul.bf16.gmra.mxu0 %v8299
        %v8581 = vpop.f32.mrf.mxu0
        %v8582 = vadd.f32 %v8569, %v8581
        %v8583 = vpop.f32.mrf.mxu0
        %8584 = vdwg.mxu0
        %8585 = vmatpush.bf16.msra.mxu0 %v8518
        %8586 = vmatpush.bf16.msra.mxu0 %v8517
        %8587 = vmatpush.bf16.msra.mxu0 %v8516
        %8588 = vmatpush.bf16.msra.mxu0 %v8515
        %8589 = vmatpush.bf16.msra.mxu0 %v8514
        %8590 = vmatpush.bf16.msra.mxu0 %v8513
        %8591 = vmatpush.bf16.msra.mxu0 %v8512
        %8592 = vmatpush.bf16.msra.mxu0 %v8511
        %8593 = vmatmul.bf16.gmra.mxu0 %v8300
        %v8594 = vpop.f32.mrf.mxu0
        %v8595 = vadd.f32 %v8582, %v8594
        %v8596 = vpop.f32.mrf.mxu0
        %8597 = vdwg.mxu0
        %8598 = vmatpush.bf16.msra.mxu0 %v8526
        %8599 = vmatpush.bf16.msra.mxu0 %v8525
        %8600 = vmatpush.bf16.msra.mxu0 %v8524
        %8601 = vmatpush.bf16.msra.mxu0 %v8523
        %8602 = vmatpush.bf16.msra.mxu0 %v8522
        %8603 = vmatpush.bf16.msra.mxu0 %v8521
        %8604 = vmatpush.bf16.msra.mxu0 %v8520
        %8605 = vmatpush.bf16.msra.mxu0 %v8519
        %8606 = vmatmul.bf16.gmra.mxu0 %v8301
        %v8607 = vpop.f32.mrf.mxu0
        %v8608 = vadd.f32 %v8595, %v8607
        %v8609 = vpop.f32.mrf.mxu0
        %8610 = vdwg.mxu0
        %v8611 = vxor.u32 %v8608, 2147483648
        %v8612 = vmul.f32 %v8611, 1.442695
        %v8613 = vpow.pop %v8612
        %v8614 = vadd.f32 %v8613, 1.0
        %v8615 = vrcp.pop %v8614
        %v8616 = vmul.f32 %v8614, %v8615
        %v8617 = vsub.f32 1.0, %v8616
        %v8618 = vmul.f32 %v8615, %v8617
        %v8619 = vadd.f32 %v8615, %v8618
        %vm8620 = vweird.f32 %v8614
        %vm8621 = vweird.f32 %v8615
        %vm8622 = vmor %vm8620, %vm8621
        %v8623 = vsel %vm8622, %v8615, %v8619
        %v8624 = vand.u32 2147483647, %v8614
        %vm8625 = vcmp.eq.f32.partialorder %v8624, 8.507059e+37
        %v8626 = vand.u32 %v8614, 2147483648
        %v8627 = vor.u32 1.1754944e-38, %v8626
        %v8628 = vsel %vm8625, %v8627, %v8623
        %v8629 = vmul.f32 1.0, %v8628
        %8630 = vst [vmem:[%s279] sm:$0x1] %v8629
        %s8631 = sand.u32 %s140, 1
        %s8632 = scalar_lea.sflag [#allocation4], %s8631
        %s8633 = sand.u32 %s140, 1
        %s8634 = scalar_lea.vmem [#allocation10], %s8633
        // Predicated region
        $region57: #{convnet_forward.7} parent=39 // pred_check
          %p8635 = pneg %p150
        $region58: #{convnet_forward.7} parent=39 // pred_check_branch
          %8637 = sbr.rel (%p8635) target = $region60
        $region59: #{convnet_forward.7} parent=39 // pred_region
          %8639 = vsyncadd %s8632, 0
          %s8640 = scalar_lea.hbm %s5, %s22
          %s8642 = sshll.u32 %s8634, 4
          %s8643 = int_to_ptr.vmem [resolvable:$true] %s8642
          %s8644 = sshll.u32 %s8640, 4
          %s8645 = int_to_ptr.hbm [resolvable:$true] %s8644
          %8647 = dma.vmem_to_hbm [thread:$0]  %s8643, 16, %s8645, %s8632
        $region60: #{convnet_forward.7} parent=39 // pred_fallthru
          _
      $region40: #{convnet_forward.7} parent=5 // pred_fallthru
        _
      %p8648 = scmp.le.s32.totalorder 2, %s17
      // Predicated region
      $region61: #{convnet_forward.7} parent=5 // pred_check
        %p8649 = pneg %p8648
      $region62: #{convnet_forward.7} parent=5 // pred_check_branch
        %8651 = sbr.rel (%p8649) target = $region64
      $region63: #{convnet_forward.7} parent=5 // pred_region
        %s8652 = ssub.s32 %s17, 2
        // Predicated region
        $region65: #{convnet_forward.7} parent=63 // pred_check
          %p8653 = pneg %p156
        $region66: #{convnet_forward.7} parent=63 // pred_check_branch
          %8655 = sbr.rel (%p8653) target = $region68
        $region67: #{convnet_forward.7} parent=63 // pred_region
          %s8656 = sand.u32 %s141, 1
          %s8657 = scalar_lea.sflag [#allocation4], %s8656
          %s8658 = sand.u32 %s141, 1
          %s8659 = scalar_lea.vmem [#allocation10], %s8658
          %8661 = dma.done %s8657, 16
        $region68: #{convnet_forward.7} parent=63 // pred_fallthru
          _
      $region64: #{convnet_forward.7} parent=5 // pred_fallthru
        _
    $region6: #{convnet_forward.7} parent=1 // loop_footer
      %s21 = sadd.s32 1, %s17
    $region7: #{convnet_forward.7} parent=1 // loop_footer_branch
      %16 = sbr.rel target = $region3
    $region8: #{convnet_forward.7} parent=1 // loop_exit
      _
    %8662 = vsyncpa [#allocation3], 1
    %s8663 = scalar_lea.sflag [#allocation3], 1
    %8664 = vsyncpa %s8663, 1
    %8665 = vsyncpa [#allocation6], 1
    %8666 = vsyncpa [#allocation9], 1
    %8667 = vsyncpa [#allocation4], 1
    %s8668 = scalar_lea.sflag [#allocation4], 1
    %8669 = vsyncpa %s8668, 1

</llo_original>
